<compile_context>
chip_gen: v7x
topology: tpu7x:2x2x1
jax: 0.10.0
libtpu: 0.0.40
codegen_flags: <defaults>
</compile_context>

<pallas_src>
import jax
import jax.numpy as jnp
from jax.experimental import pallas as pl
from jax.experimental.pallas import tpu as pltpu

EPS = 1e-5
LANES = 128


# --------------------------------------------------------------------------- #
# Helpers
# --------------------------------------------------------------------------- #
def _round_up(n, m):
    return ((n + m - 1) // m) * m


def _pad_axis(a, axis, new):
    pad = new - a.shape[axis]
    if pad == 0:
        return a
    widths = [(0, 0)] * a.ndim
    widths[axis] = (0, pad)
    return jnp.pad(a, widths)


def _pad_last(a, new):
    return _pad_axis(a, a.ndim - 1, new)


def _vmem_limit_bytes():
    """Generation-aware scoped-VMEM request."""
    cap = 64 * 1024 * 1024
    try:
        info = pltpu.get_tpu_info()
        cap = int(getattr(info, "vmem_capacity_bytes", cap) or cap)
    except Exception:
        pass
    if cap >= 128 * 1024 * 1024:         # v5e / v6e: 128 MiB physical VMEM
        return 100 * 1024 * 1024
    return 44 * 1024 * 1024              # v7x: 64 MiB physical VMEM


def _tile_vmem_bytes(nb, th, w, cpad, ppad, n_tiles, xb, cdb):
    """Rough per-step VMEM footprint estimate for tile selection."""
    blk = nb * th * w
    io = 2 * (2 * blk * cpad * xb)                       # x + out, double buffered
    halo = (2 * 2 * w * cpad * xb) if n_tiles > 1 else 0
    weights = (cpad * ppad + 9 * ppad * ppad + ppad * cpad) * cdb \
        + 6 * max(cpad, ppad) * 4                        # single-buffered consts
    h1s = nb * (th + 2) * w * ppad * cdb                 # h1 scratch
    tmp = blk * (9 * ppad * cdb        # x9 im2col buffer
                 + 4 * ppad * cdb      # rolled / shifted h1 copies
                 + 2 * ppad * 4        # conv1 / conv2 f32 accumulators
                 + 2 * cpad * 4        # conv3 accumulator + residual/out f32
                 + cpad * cdb)         # x cast to compute dtype
    return io + halo + weights + h1s + tmp


def _choose_tile_h(h, w, cpad, ppad, xb, cdb, budget):
    """Largest divisor of H whose footprint fits the budget (prefer whole H)."""
    for th in [d for d in range(h, 0, -1) if h % d == 0]:
        if _tile_vmem_bytes(1, th, w, cpad, ppad, h // th, xb, cdb) <= budget:
            return th
    return 1


def _choose_batch_block(n, th, w, cpad, ppad, xb, cdb, budget):
    """Grow the batch block (whole-H tiles only) until M = NB*H*W >= 1024."""
    nb = 1
    for cand in [d for d in range(1, n + 1) if n % d == 0]:
        if _tile_vmem_bytes(cand, th, w, cpad, ppad, 1, xb, cdb) > budget:
            break
        nb = cand
        if cand * th * w >= 1024:
            break
    return nb


# --------------------------------------------------------------------------- #
# Kernel
# --------------------------------------------------------------------------- #
def _make_kernel(*, has_halo, nb, th, w, ppad, cpad, n_tiles, cd):
    def kernel(*refs):
        if has_halo:
            (x_top_ref, x_mid_ref, x_bot_ref,
             w1_ref, s1_ref, b1_ref,
             w2_ref, s2_ref, b2_ref,
             w3_ref, s3_ref, b3_ref,
             out_ref, h1_ref) = refs
        else:
            (x_mid_ref,
             w1_ref, s1_ref, b1_ref,
             w2_ref, s2_ref, b2_ref,
             w3_ref, s3_ref, b3_ref,
             out_ref, h1_ref) = refs

        # ---- conv1 (1x1) + bn1 + relu: one dense dot on the resident tile ---
        x_mid = x_mid_ref[...]                                 # (nb, th, w, cpad)
        xm = x_mid.reshape(nb * th * w, cpad).astype(cd)
        h1m = jnp.dot(xm, w1_ref[...], preferred_element_type=jnp.float32)
        h1m = jnp.maximum(h1m * s1_ref[0] + b1_ref[0], 0.0).astype(cd)
        h1_ref[:, 1:th + 1] = h1m.reshape(nb, th, w, ppad)

        # Halo rows: conv2 zero-pads h1 *after* bn1+relu, so out-of-image rows
        # must be exactly zero in h1.
        h1_ref[:, 0] = jnp.zeros((nb, w, ppad), cd)
        h1_ref[:, th + 1] = jnp.zeros((nb, w, ppad), cd)
        if has_halo:
            # Recompute conv1+bn1+relu only on the two 1-row halo blocks.
            i = pl.program_id(1)
            x_halo = jnp.concatenate([x_top_ref[...], x_bot_ref[...]], axis=1)
            hh = jnp.dot(x_halo.reshape(2 * w, cpad).astype(cd), w1_ref[...],
                         preferred_element_type=jnp.float32)
            hh = jnp.maximum(hh * s1_ref[0] + b1_ref[0], 0.0)
            hh = hh.reshape(2, w, ppad).astype(cd)

            @pl.when(i > 0)
            def _():
                h1_ref[0, 0] = hh[0]

            @pl.when(i < n_tiles - 1)
            def _():
                h1_ref[0, th + 1] = hh[1]

        # ---- conv2 (3x3, stride 1, pad 1) as one im2col matmul ---------------
        h1 = h1_ref[...]                                       # (nb, th+2, w, ppad)
        col = jax.lax.broadcasted_iota(jnp.int32, (1, 1, w, 1), 2)

        def w_shift(a, d):
            if d == 0:
                return a
            rolled = pltpu.roll(a, shift=(-d) % w, axis=2)     # XLU, not VALU
            mask = (col < (w - d)) if d > 0 else (col >= (-d))
            return jnp.where(mask, rolled, jnp.zeros_like(rolled))

        shifted = [w_shift(h1, d) for d in (-1, 0, 1)]         # 2 rolls total
        # im2col pieces ordered (dh major, dw minor) to match the w2 layout;
        # each piece has ppad (multiple of 128) lanes -> aligned lane concat.
        pieces = [shifted[dw][:, dh:dh + th] for dh in range(3) for dw in range(3)]
        x9 = jnp.concatenate(pieces, axis=-1).reshape(nb * th * w, 9 * ppad)
        h2 = jnp.dot(x9, w2_ref[...], preferred_element_type=jnp.float32)
        h2 = jnp.maximum(h2 * s2_ref[0] + b2_ref[0], 0.0).astype(cd)

        # ---- conv3 (1x1) + bn3, residual add (x tile resident), relu ---------
        h3 = jnp.dot(h2, w3_ref[...], preferred_element_type=jnp.float32)
        h3 = h3 * s3_ref[0] + b3_ref[0]
        res = x_mid.reshape(nb * th * w, cpad).astype(jnp.float32)
        out = jnp.maximum(h3 + res, 0.0)
        out_ref[...] = out.reshape(nb, th, w, cpad).astype(out_ref.dtype)

    return kernel


# --------------------------------------------------------------------------- #
# Wrappers
# --------------------------------------------------------------------------- #
def bottleneck_pallas_nhwc(x, params, *, tile_h=None, batch_block=None,
                           compute_dtype=jnp.bfloat16,
                           single_buffer_consts=True):
    """Fused Bottleneck forward (eval-mode BN), NHWC in / NHWC out."""
    N, H, W, Cin = x.shape
    P = params["w1"].shape[1]
    Cout = params["w3"].shape[1]
    assert Cin == Cout, "downsample=None / stride=1 path requires inplanes == planes*4"

    cd = compute_dtype
    xb = jnp.dtype(x.dtype).itemsize
    cdb = jnp.dtype(cd).itemsize

    # Lane-dense layouts: pad the bottleneck width P and in/out channels to
    # multiples of 128 so im2col concat, matmul N dims and output stores are
    # unmasked. (In an end-to-end NHWC model, pre-pad once outside this call.)
    Ppad = _round_up(P, LANES)
    Cpad = _round_up(Cin, LANES)

    w1 = _pad_axis(_pad_axis(params["w1"], 0, Cpad), 1, Ppad).astype(cd)
    w2 = params["w2"].reshape(9, P, P)
    w2 = _pad_axis(_pad_axis(w2, 1, Ppad), 2, Ppad).reshape(9 * Ppad, Ppad).astype(cd)
    w3 = _pad_axis(_pad_axis(params["w3"], 0, Ppad), 1, Cpad).astype(cd)
    s1 = _pad_last(params["s1"], Ppad).astype(jnp.float32)
    b1 = _pad_last(params["b1"], Ppad).astype(jnp.float32)
    s2 = _pad_last(params["s2"], Ppad).astype(jnp.float32)
    b2 = _pad_last(params["b2"], Ppad).astype(jnp.float32)
    s3 = _pad_last(params["s3"], Cpad).astype(jnp.float32)
    b3 = _pad_last(params["b3"], Cpad).astype(jnp.float32)
    xp = _pad_last(x, Cpad)

    vmem_limit = _vmem_limit_bytes()
    budget = (7 * vmem_limit) // 10

    TH = tile_h if tile_h is not None else \
        _choose_tile_h(H, W, Cpad, Ppad, xb, cdb, budget)
    assert H % TH == 0, (H, TH)
    n_tiles = H // TH
    if batch_block is not None:
        NB = batch_block
    else:
        NB = _choose_batch_block(N, TH, W, Cpad, Ppad, xb, cdb, budget) \
            if n_tiles == 1 else 1
    assert N % NB == 0, (N, NB)
    if n_tiles > 1:
        assert NB == 1, "batch blocking requires whole-H row tiles"
    has_halo = n_tiles > 1

    kernel = _make_kernel(has_halo=has_halo, nb=NB, th=TH, w=W,
                          ppad=Ppad, cpad=Cpad, n_tiles=n_tiles, cd=cd)

    x_mid_spec = pl.BlockSpec((NB, TH, W, Cpad), lambda n, i: (n, i, 0, 0))
    out_spec = pl.BlockSpec((NB, TH, W, Cpad), lambda n, i: (n, i, 0, 0))

    def call(sb_consts):
        if sb_consts:
            # Constant-index blocks: single-buffer (double buffering only
            # burns VMEM since their index never changes).
            def const_spec(shape):
                return pl.BlockSpec(shape, lambda n, i: (0,) * len(shape),
                                    pipeline_mode=pl.Buffered(1))
        else:
            def const_spec(shape):
                return pl.BlockSpec(shape, lambda n, i: (0,) * len(shape))

        const_specs = [const_spec(a.shape)
                       for a in (w1, s1, b1, w2, s2, b2, w3, s3, b3)]
        if has_halo:
            # Clamped 1-row halo blocks; out-of-image rows are zeroed in-kernel
            # (keep the clamping and the i>0 / i<n_tiles-1 gates in sync).
            x_top_spec = pl.BlockSpec(
                (1, 1, W, Cpad),
                lambda n, i: (n, jnp.maximum(i * TH - 1, 0), 0, 0))
            x_bot_spec = pl.BlockSpec(
                (1, 1, W, Cpad),
                lambda n, i: (n, jnp.minimum((i + 1) * TH, H - 1), 0, 0))
            in_specs = [x_top_spec, x_mid_spec, x_bot_spec] + const_specs
            args = (xp, xp, xp, w1, s1, b1, w2, s2, b2, w3, s3, b3)
        else:
            in_specs = [x_mid_spec] + const_specs
            args = (xp, w1, s1, b1, w2, s2, b2, w3, s3, b3)

        fn = pl.pallas_call(
            kernel,
            out_shape=jax.ShapeDtypeStruct((N, H, W, Cpad), x.dtype),
            grid=(N // NB, n_tiles),
            in_specs=in_specs,
            out_specs=out_spec,
            scratch_shapes=[pltpu.VMEM((NB, TH + 2, W, Ppad), cd)],
            compiler_params=pltpu.CompilerParams(
                dimension_semantics=("parallel", "parallel"),
                vmem_limit_bytes=vmem_limit),
        )
        return fn(*args)

    if single_buffer_consts:
        try:
            out = call(True)
        except Exception:
            out = call(False)   # fallback if pipeline_mode=pl.Buffered unsupported
    else:
        out = call(False)

    if Cpad != Cout:
        out = out[..., :Cout]
    return out


def bottleneck_pallas(x_nchw, params, **kw):
    """NCHW wrapper for parity with the PyTorch module. In an NHWC end-to-end
    model, call bottleneck_pallas_nhwc directly and these transposes vanish."""
    x = jnp.transpose(x_nchw, (0, 2, 3, 1))
    out = bottleneck_pallas_nhwc(x, params, **kw)
    return jnp.transpose(out, (0, 3, 1, 2))


# --------------------------------------------------------------------------- #
# Parameters + pure-JAX reference (for the self-test)
# --------------------------------------------------------------------------- #
def make_params(key, inplanes, planes):
    """Deterministic synthetic parameters (PyTorch shapes) + kernel layouts."""
    ks = jax.random.split(key, 6)
    expansion = 4
    outplanes = planes * expansion

    w1_oihw = 0.1 * jax.random.normal(ks[0], (planes, inplanes, 1, 1), jnp.float32)
    w2_oihw = 0.1 * jax.random.normal(ks[1], (planes, planes, 3, 3), jnp.float32)
    w3_oihw = 0.1 * jax.random.normal(ks[2], (outplanes, planes, 1, 1), jnp.float32)

    def bn_params(k, c):
        k1, k2, k3, k4 = jax.random.split(k, 4)
        gamma = 1.0 + 0.1 * jax.random.normal(k1, (c,), jnp.float32)
        beta = 0.1 * jax.random.normal(k2, (c,), jnp.float32)
        mean = 0.1 * jax.random.normal(k3, (c,), jnp.float32)
        var = 1.0 + 0.1 * jax.random.uniform(k4, (c,), jnp.float32)
        scale = gamma / jnp.sqrt(var + EPS)
        bias = beta - mean * scale
        return (gamma, beta, mean, var, scale, bias)

    bn1 = bn_params(ks[3], planes)
    bn2 = bn_params(ks[4], planes)
    bn3 = bn_params(ks[5], outplanes)

    torch_params = dict(w1=w1_oihw, w2=w2_oihw, w3=w3_oihw,
                        bn1=bn1, bn2=bn2, bn3=bn3)

    kernel_params = dict(
        w1=jnp.transpose(w1_oihw[:, :, 0, 0], (1, 0)),                 # (Cin, P)
        w2=jnp.transpose(w2_oihw, (2, 3, 1, 0)).reshape(9 * planes, planes),
        w3=jnp.transpose(w3_oihw[:, :, 0, 0], (1, 0)),                 # (P, Cout)
        s1=bn1[4][None, :], b1=bn1[5][None, :],
        s2=bn2[4][None, :], b2=bn2[5][None, :],
        s3=bn3[4][None, :], b3=bn3[5][None, :],
    )
    return torch_params, kernel_params


def bottleneck_ref(x, tp):
    """Pure-JAX reference matching the PyTorch forward (eval-mode BN)."""
    def conv(x, w, pad):
        return jax.lax.conv_general_dilated(
            x, w, window_strides=(1, 1), padding=pad,
            dimension_numbers=("NCHW", "OIHW", "NCHW"))

    def bn(x, p):
        gamma, beta, mean, var, _, _ = p
        inv = gamma / jnp.sqrt(var + EPS)
        return (x - mean[None, :, None, None]) * inv[None, :, None, None] \
            + beta[None, :, None, None]

    residual = x
    out = jnp.maximum(bn(conv(x, tp["w1"], "VALID"), tp["bn1"]), 0.0)
    out = jnp.maximum(bn(conv(out, tp["w2"], [(1, 1), (1, 1)]), tp["bn2"]), 0.0)
    out = bn(conv(out, tp["w3"], "VALID"), tp["bn3"])
    return jnp.maximum(out + residual, 0.0)


if __name__ == "__main__":
    key = jax.random.PRNGKey(0)
    kx, kp = jax.random.split(key)

    # Small shapes: batch=2, inplanes=16, planes=4 (expansion 4 -> out=16),
    # 16x16 spatial.
    N, inplanes, planes, H, W = 2, 16, 4, 16, 16
    x = jax.random.normal(kx, (N, inplanes, H, W), jnp.float32)

    torch_params, kernel_params = make_params(kp, inplanes, planes)
    ref = bottleneck_ref(x, torch_params)

    # Exact-math check, auto tiling (whole-H tile + batch blocking path).
    out_f32 = jax.block_until_ready(
        bottleneck_pallas(x, kernel_params, compute_dtype=jnp.float32))
    assert out_f32.shape == (N, planes * 4, H, W), out_f32.shape
    assert jnp.allclose(out_f32, ref, atol=1e-4, rtol=1e-4), \
        float(jnp.max(jnp.abs(out_f32 - ref)))

    # Exact-math check, forced row tiling (exercises the 1-row halo path).
    out_tiled = jax.block_until_ready(
        bottleneck_pallas(x, kernel_params, tile_h=8,
                          compute_dtype=jnp.float32))
    assert jnp.allclose(out_tiled, ref, atol=1e-4, rtol=1e-4), \
        float(jnp.max(jnp.abs(out_tiled - ref)))

    # Performance configuration (bf16 MXU inputs, f32 accumulation).
    out_bf16 = jax.block_until_ready(
        bottleneck_pallas(x, kernel_params, compute_dtype=jnp.bfloat16))
    assert jnp.allclose(out_bf16, ref, atol=3e-2, rtol=3e-2), \
        float(jnp.max(jnp.abs(out_bf16 - ref)))

    print("KERNEL_OK")
</pallas_src>

<mosaic_0001>
module attributes {stable_mosaic.version = 11 : i64} {
  func.func @kernel(%arg0: i32, %arg1: i32, %arg2: memref<2x16x16x128xf32, #tpu.memory_space<vmem>>, %arg3: memref<128x128xf32, #tpu.memory_space<vmem>>, %arg4: memref<1x128xf32, #tpu.memory_space<vmem>>, %arg5: memref<1x128xf32, #tpu.memory_space<vmem>>, %arg6: memref<1152x128xf32, #tpu.memory_space<vmem>>, %arg7: memref<1x128xf32, #tpu.memory_space<vmem>>, %arg8: memref<1x128xf32, #tpu.memory_space<vmem>>, %arg9: memref<128x128xf32, #tpu.memory_space<vmem>>, %arg10: memref<1x128xf32, #tpu.memory_space<vmem>>, %arg11: memref<1x128xf32, #tpu.memory_space<vmem>>, %arg12: memref<2x16x16x128xf32, #tpu.memory_space<vmem>>, %arg13: memref<2x18x16x128xf32, #tpu.memory_space<vmem>>) attributes {dimension_semantics = [#tpu.dimension_semantics<parallel>, #tpu.dimension_semantics<parallel>], iteration_bounds = array<i64: 1, 1>, scalar_prefetch = 0 : i64, scratch_operands = 1 : i64, tpu.core_type = #tpu.core_type<tc>, window_params = [{transform_indices = @transform_0, window_bounds = array<i64: 2, 16, 16, 128>}, {pipeline_mode = #tpu.pipeline_mode<synchronous>, transform_indices = @transform_1, window_bounds = array<i64: 128, 128>}, {pipeline_mode = #tpu.pipeline_mode<synchronous>, transform_indices = @transform_2, window_bounds = array<i64: 1, 128>}, {pipeline_mode = #tpu.pipeline_mode<synchronous>, transform_indices = @transform_3, window_bounds = array<i64: 1, 128>}, {pipeline_mode = #tpu.pipeline_mode<synchronous>, transform_indices = @transform_4, window_bounds = array<i64: 1152, 128>}, {pipeline_mode = #tpu.pipeline_mode<synchronous>, transform_indices = @transform_5, window_bounds = array<i64: 1, 128>}, {pipeline_mode = #tpu.pipeline_mode<synchronous>, transform_indices = @transform_6, window_bounds = array<i64: 1, 128>}, {pipeline_mode = #tpu.pipeline_mode<synchronous>, transform_indices = @transform_7, window_bounds = array<i64: 128, 128>}, {pipeline_mode = #tpu.pipeline_mode<synchronous>, transform_indices = @transform_8, window_bounds = array<i64: 1, 128>}, {pipeline_mode = #tpu.pipeline_mode<synchronous>, transform_indices = @transform_9, window_bounds = array<i64: 1, 128>}, {transform_indices = @transform_10, window_bounds = array<i64: 2, 16, 16, 128>}]} {
    %c0 = arith.constant 0 : index
    %c0_0 = arith.constant 0 : index
    %c0_1 = arith.constant 0 : index
    %c0_2 = arith.constant 0 : index
    %0 = vector.load %arg2[%c0, %c0_0, %c0_1, %c0_2] : memref<2x16x16x128xf32, #tpu.memory_space<vmem>>, vector<2x16x16x128xf32>
    %1 = vector.shape_cast %0 : vector<2x16x16x128xf32> to vector<512x128xf32>
    %c0_3 = arith.constant 0 : index
    %c0_4 = arith.constant 0 : index
    %2 = vector.load %arg3[%c0_3, %c0_4] : memref<128x128xf32, #tpu.memory_space<vmem>>, vector<128x128xf32>
    %cst = arith.constant dense<0.000000e+00> : vector<512x128xf32>
    %3 = tpu.matmul %1, %2, %cst {dimension_numbers = #tpu.dot_dimension_numbers<[1], [0], [0], [1], [0, 0, 1, 1], [], []>} : vector<512x128xf32>, vector<128x128xf32>, vector<512x128xf32> -> vector<512x128xf32>
    %c0_5 = arith.constant 0 : index
    %c0_6 = arith.constant 0 : index
    %4 = vector.load %arg4[%c0_5, %c0_6] : memref<1x128xf32, #tpu.memory_space<vmem>>, vector<1x128xf32>
    %5 = vector.shape_cast %4 : vector<1x128xf32> to vector<128xf32>
    %6 = vector.shape_cast %5 : vector<128xf32> to vector<1x128xf32>
    %7 = vector.broadcast %6 : vector<1x128xf32> to vector<512x128xf32>
    %8 = arith.mulf %3, %7 : vector<512x128xf32>
    %c0_7 = arith.constant 0 : index
    %c0_8 = arith.constant 0 : index
    %9 = vector.load %arg5[%c0_7, %c0_8] : memref<1x128xf32, #tpu.memory_space<vmem>>, vector<1x128xf32>
    %10 = vector.shape_cast %9 : vector<1x128xf32> to vector<128xf32>
    %11 = vector.shape_cast %10 : vector<128xf32> to vector<1x128xf32>
    %12 = vector.broadcast %11 : vector<1x128xf32> to vector<512x128xf32>
    %13 = arith.addf %8, %12 : vector<512x128xf32>
    %cst_9 = arith.constant 0.000000e+00 : f32
    %14 = vector.broadcast %cst_9 : f32 to vector<512x128xf32>
    %15 = arith.maximumf %13, %14 : vector<512x128xf32>
    %16 = vector.shape_cast %15 : vector<512x128xf32> to vector<2x16x16x128xf32>
    %c0_10 = arith.constant 0 : index
    %c1 = arith.constant 1 : index
    %c0_11 = arith.constant 0 : index
    %c0_12 = arith.constant 0 : index
    %17 = vector.load %arg13[%c0_10, %c1, %c0_11, %c0_12] : memref<2x18x16x128xf32, #tpu.memory_space<vmem>>, vector<2x16x16x128xf32>
    tpu.vector_store %arg13[%c0_10, %c1, %c0_11, %c0_12], %16 {strides = array<i32>} : memref<2x18x16x128xf32, #tpu.memory_space<vmem>>, vector<2x16x16x128xf32>,
    %cst_13 = arith.constant 0.000000e+00 : f32
    %18 = vector.broadcast %cst_13 : f32 to vector<2x16x128xf32>
    %c0_14 = arith.constant 0 : index
    %c0_15 = arith.constant 0 : index
    %c0_16 = arith.constant 0 : index
    %c0_17 = arith.constant 0 : index
    %19 = vector.load %arg13[%c0_14, %c0_15, %c0_16, %c0_17] : memref<2x18x16x128xf32, #tpu.memory_space<vmem>>, vector<2x1x16x128xf32>
    %20 = vector.shape_cast %19 : vector<2x1x16x128xf32> to vector<2x16x128xf32>
    %21 = vector.shape_cast %18 : vector<2x16x128xf32> to vector<2x1x16x128xf32>
    tpu.vector_store %arg13[%c0_14, %c0_15, %c0_16, %c0_17], %21 {strides = array<i32>} : memref<2x18x16x128xf32, #tpu.memory_space<vmem>>, vector<2x1x16x128xf32>,
    %cst_18 = arith.constant 0.000000e+00 : f32
    %22 = vector.broadcast %cst_18 : f32 to vector<2x16x128xf32>
    %c0_19 = arith.constant 0 : index
    %c17 = arith.constant 17 : index
    %c0_20 = arith.constant 0 : index
    %c0_21 = arith.constant 0 : index
    %23 = vector.load %arg13[%c0_19, %c17, %c0_20, %c0_21] : memref<2x18x16x128xf32, #tpu.memory_space<vmem>>, vector<2x1x16x128xf32>
    %24 = vector.shape_cast %23 : vector<2x1x16x128xf32> to vector<2x16x128xf32>
    %25 = vector.shape_cast %22 : vector<2x16x128xf32> to vector<2x1x16x128xf32>
    tpu.vector_store %arg13[%c0_19, %c17, %c0_20, %c0_21], %25 {strides = array<i32>} : memref<2x18x16x128xf32, #tpu.memory_space<vmem>>, vector<2x1x16x128xf32>,
    %c0_22 = arith.constant 0 : index
    %c0_23 = arith.constant 0 : index
    %c0_24 = arith.constant 0 : index
    %c0_25 = arith.constant 0 : index
    %26 = vector.load %arg13[%c0_22, %c0_23, %c0_24, %c0_25] : memref<2x18x16x128xf32, #tpu.memory_space<vmem>>, vector<2x18x16x128xf32>
    %27 = tpu.iota {dimensions = array<i32: 2>} : vector<1x1x16x1xi32>
    %c1_i32 = arith.constant 1 : i32
    %28 = tpu.dynamic_rotate %26 by %c1_i32 dim 2 : vector<2x18x16x128xf32>, i32 -> vector<2x18x16x128xf32>
    %c1_i32_26 = arith.constant 1 : i32
    %29 = vector.broadcast %c1_i32_26 : i32 to vector<1x1x16x1xi32>
    %30 = arith.cmpi sge, %27, %29 : vector<1x1x16x1xi32>
    %cst_27 = arith.constant 0.000000e+00 : f32
    %31 = vector.broadcast %cst_27 : f32 to vector<2x18x16x128xf32>
    %32 = vector.shape_cast %30 : vector<1x1x16x1xi1> to vector<1x1x16x1xi1>
    %33 = vector.broadcast %32 : vector<1x1x16x1xi1> to vector<2x18x16x128xi1>
    %34 = arith.select %33, %28, %31 : vector<2x18x16x128xi1>, vector<2x18x16x128xf32>
    %c15_i32 = arith.constant 15 : i32
    %35 = tpu.dynamic_rotate %26 by %c15_i32 dim 2 : vector<2x18x16x128xf32>, i32 -> vector<2x18x16x128xf32>
    %c15_i32_28 = arith.constant 15 : i32
    %36 = vector.broadcast %c15_i32_28 : i32 to vector<1x1x16x1xi32>
    %37 = arith.cmpi slt, %27, %36 : vector<1x1x16x1xi32>
    %cst_29 = arith.constant 0.000000e+00 : f32
    %38 = vector.broadcast %cst_29 : f32 to vector<2x18x16x128xf32>
    %39 = vector.shape_cast %37 : vector<1x1x16x1xi1> to vector<1x1x16x1xi1>
    %40 = vector.broadcast %39 : vector<1x1x16x1xi1> to vector<2x18x16x128xi1>
    %41 = arith.select %40, %35, %38 : vector<2x18x16x128xi1>, vector<2x18x16x128xf32>
    %42 = vector.extract_strided_slice %34 {offsets = [0, 0, 0, 0], sizes = [2, 16, 16, 128], strides = [1, 1, 1, 1]} : vector<2x18x16x128xf32> to vector<2x16x16x128xf32>
    %43 = vector.extract_strided_slice %26 {offsets = [0, 0, 0, 0], sizes = [2, 16, 16, 128], strides = [1, 1, 1, 1]} : vector<2x18x16x128xf32> to vector<2x16x16x128xf32>
    %44 = vector.extract_strided_slice %41 {offsets = [0, 0, 0, 0], sizes = [2, 16, 16, 128], strides = [1, 1, 1, 1]} : vector<2x18x16x128xf32> to vector<2x16x16x128xf32>
    %45 = vector.extract_strided_slice %34 {offsets = [0, 1, 0, 0], sizes = [2, 16, 16, 128], strides = [1, 1, 1, 1]} : vector<2x18x16x128xf32> to vector<2x16x16x128xf32>
    %46 = vector.extract_strided_slice %26 {offsets = [0, 1, 0, 0], sizes = [2, 16, 16, 128], strides = [1, 1, 1, 1]} : vector<2x18x16x128xf32> to vector<2x16x16x128xf32>
    %47 = vector.extract_strided_slice %41 {offsets = [0, 1, 0, 0], sizes = [2, 16, 16, 128], strides = [1, 1, 1, 1]} : vector<2x18x16x128xf32> to vector<2x16x16x128xf32>
    %48 = vector.extract_strided_slice %34 {offsets = [0, 2, 0, 0], sizes = [2, 16, 16, 128], strides = [1, 1, 1, 1]} : vector<2x18x16x128xf32> to vector<2x16x16x128xf32>
    %49 = vector.extract_strided_slice %26 {offsets = [0, 2, 0, 0], sizes = [2, 16, 16, 128], strides = [1, 1, 1, 1]} : vector<2x18x16x128xf32> to vector<2x16x16x128xf32>
    %50 = vector.extract_strided_slice %41 {offsets = [0, 2, 0, 0], sizes = [2, 16, 16, 128], strides = [1, 1, 1, 1]} : vector<2x18x16x128xf32> to vector<2x16x16x128xf32>
    %51 = tpu.concatenate %42, %43, %44, %45, %46, %47, %48, %49, %50 in 3 : vector<2x16x16x128xf32>, vector<2x16x16x128xf32>, vector<2x16x16x128xf32>, vector<2x16x16x128xf32>, vector<2x16x16x128xf32>, vector<2x16x16x128xf32>, vector<2x16x16x128xf32>, vector<2x16x16x128xf32>, vector<2x16x16x128xf32> -> vector<2x16x16x1152xf32>
    %52 = vector.shape_cast %51 : vector<2x16x16x1152xf32> to vector<512x1152xf32>
    %c0_30 = arith.constant 0 : index
    %c0_31 = arith.constant 0 : index
    %53 = vector.load %arg6[%c0_30, %c0_31] : memref<1152x128xf32, #tpu.memory_space<vmem>>, vector<1152x128xf32>
    %cst_32 = arith.constant dense<0.000000e+00> : vector<512x128xf32>
    %54 = tpu.matmul %52, %53, %cst_32 {dimension_numbers = #tpu.dot_dimension_numbers<[1], [0], [0], [1], [0, 0, 1, 1], [], []>} : vector<512x1152xf32>, vector<1152x128xf32>, vector<512x128xf32> -> vector<512x128xf32>
    %c0_33 = arith.constant 0 : index
    %c0_34 = arith.constant 0 : index
    %55 = vector.load %arg7[%c0_33, %c0_34] : memref<1x128xf32, #tpu.memory_space<vmem>>, vector<1x128xf32>
    %56 = vector.shape_cast %55 : vector<1x128xf32> to vector<128xf32>
    %57 = vector.shape_cast %56 : vector<128xf32> to vector<1x128xf32>
    %58 = vector.broadcast %57 : vector<1x128xf32> to vector<512x128xf32>
    %59 = arith.mulf %54, %58 : vector<512x128xf32>
    %c0_35 = arith.constant 0 : index
    %c0_36 = arith.constant 0 : index
    %60 = vector.load %arg8[%c0_35, %c0_36] : memref<1x128xf32, #tpu.memory_space<vmem>>, vector<1x128xf32>
    %61 = vector.shape_cast %60 : vector<1x128xf32> to vector<128xf32>
    %62 = vector.shape_cast %61 : vector<128xf32> to vector<1x128xf32>
    %63 = vector.broadcast %62 : vector<1x128xf32> to vector<512x128xf32>
    %64 = arith.addf %59, %63 : vector<512x128xf32>
    %cst_37 = arith.constant 0.000000e+00 : f32
    %65 = vector.broadcast %cst_37 : f32 to vector<512x128xf32>
    %66 = arith.maximumf %64, %65 : vector<512x128xf32>
    %c0_38 = arith.constant 0 : index
    %c0_39 = arith.constant 0 : index
    %67 = vector.load %arg9[%c0_38, %c0_39] : memref<128x128xf32, #tpu.memory_space<vmem>>, vector<128x128xf32>
    %cst_40 = arith.constant dense<0.000000e+00> : vector<512x128xf32>
    %68 = tpu.matmul %66, %67, %cst_40 {dimension_numbers = #tpu.dot_dimension_numbers<[1], [0], [0], [1], [0, 0, 1, 1], [], []>} : vector<512x128xf32>, vector<128x128xf32>, vector<512x128xf32> -> vector<512x128xf32>
    %c0_41 = arith.constant 0 : index
    %c0_42 = arith.constant 0 : index
    %69 = vector.load %arg10[%c0_41, %c0_42] : memref<1x128xf32, #tpu.memory_space<vmem>>, vector<1x128xf32>
    %70 = vector.shape_cast %69 : vector<1x128xf32> to vector<128xf32>
    %71 = vector.shape_cast %70 : vector<128xf32> to vector<1x128xf32>
    %72 = vector.broadcast %71 : vector<1x128xf32> to vector<512x128xf32>
    %73 = arith.mulf %68, %72 : vector<512x128xf32>
    %c0_43 = arith.constant 0 : index
    %c0_44 = arith.constant 0 : index
    %74 = vector.load %arg11[%c0_43, %c0_44] : memref<1x128xf32, #tpu.memory_space<vmem>>, vector<1x128xf32>
    %75 = vector.shape_cast %74 : vector<1x128xf32> to vector<128xf32>
    %76 = vector.shape_cast %75 : vector<128xf32> to vector<1x128xf32>
    %77 = vector.broadcast %76 : vector<1x128xf32> to vector<512x128xf32>
    %78 = arith.addf %73, %77 : vector<512x128xf32>
    %79 = vector.shape_cast %0 : vector<2x16x16x128xf32> to vector<512x128xf32>
    %80 = arith.addf %78, %79 : vector<512x128xf32>
    %cst_45 = arith.constant 0.000000e+00 : f32
    %81 = vector.broadcast %cst_45 : f32 to vector<512x128xf32>
    %82 = arith.maximumf %80, %81 : vector<512x128xf32>
    %83 = vector.shape_cast %82 : vector<512x128xf32> to vector<2x16x16x128xf32>
    %c0_46 = arith.constant 0 : index
    %c0_47 = arith.constant 0 : index
    %c0_48 = arith.constant 0 : index
    %c0_49 = arith.constant 0 : index
    %84 = vector.load %arg12[%c0_46, %c0_47, %c0_48, %c0_49] : memref<2x16x16x128xf32, #tpu.memory_space<vmem>>, vector<2x16x16x128xf32>
    tpu.vector_store %arg12[%c0_46, %c0_47, %c0_48, %c0_49], %83 {strides = array<i32>} : memref<2x16x16x128xf32, #tpu.memory_space<vmem>>, vector<2x16x16x128xf32>,
    return
  }
  func.func @transform_0(%arg0: i32, %arg1: i32) -> (i32, i32, i32, i32) {
    %c0_i32 = arith.constant 0 : i32
    %c0_i32_0 = arith.constant 0 : i32
    %c0_i32_1 = arith.constant 0 : i32
    return %arg0, %arg1, %c0_i32, %c0_i32_0 : i32, i32, i32, i32
  }
  func.func @transform_1(%arg0: i32, %arg1: i32) -> (i32, i32) {
    %c0_i32 = arith.constant 0 : i32
    %c0_i32_0 = arith.constant 0 : i32
    %c0_i32_1 = arith.constant 0 : i32
    return %c0_i32, %c0_i32_0 : i32, i32
  }
  func.func @transform_2(%arg0: i32, %arg1: i32) -> (i32, i32) {
    %c0_i32 = arith.constant 0 : i32
    %c0_i32_0 = arith.constant 0 : i32
    %c0_i32_1 = arith.constant 0 : i32
    return %c0_i32, %c0_i32_0 : i32, i32
  }
  func.func @transform_3(%arg0: i32, %arg1: i32) -> (i32, i32) {
    %c0_i32 = arith.constant 0 : i32
    %c0_i32_0 = arith.constant 0 : i32
    %c0_i32_1 = arith.constant 0 : i32
    return %c0_i32, %c0_i32_0 : i32, i32
  }
  func.func @transform_4(%arg0: i32, %arg1: i32) -> (i32, i32) {
    %c0_i32 = arith.constant 0 : i32
    %c0_i32_0 = arith.constant 0 : i32
    %c0_i32_1 = arith.constant 0 : i32
    return %c0_i32, %c0_i32_0 : i32, i32
  }
  func.func @transform_5(%arg0: i32, %arg1: i32) -> (i32, i32) {
    %c0_i32 = arith.constant 0 : i32
    %c0_i32_0 = arith.constant 0 : i32
    %c0_i32_1 = arith.constant 0 : i32
    return %c0_i32, %c0_i32_0 : i32, i32
  }
  func.func @transform_6(%arg0: i32, %arg1: i32) -> (i32, i32) {
    %c0_i32 = arith.constant 0 : i32
    %c0_i32_0 = arith.constant 0 : i32
    %c0_i32_1 = arith.constant 0 : i32
    return %c0_i32, %c0_i32_0 : i32, i32
  }
  func.func @transform_7(%arg0: i32, %arg1: i32) -> (i32, i32) {
    %c0_i32 = arith.constant 0 : i32
    %c0_i32_0 = arith.constant 0 : i32
    %c0_i32_1 = arith.constant 0 : i32
    return %c0_i32, %c0_i32_0 : i32, i32
  }
  func.func @transform_8(%arg0: i32, %arg1: i32) -> (i32, i32) {
    %c0_i32 = arith.constant 0 : i32
    %c0_i32_0 = arith.constant 0 : i32
    %c0_i32_1 = arith.constant 0 : i32
    return %c0_i32, %c0_i32_0 : i32, i32
  }
  func.func @transform_9(%arg0: i32, %arg1: i32) -> (i32, i32) {
    %c0_i32 = arith.constant 0 : i32
    %c0_i32_0 = arith.constant 0 : i32
    %c0_i32_1 = arith.constant 0 : i32
    return %c0_i32, %c0_i32_0 : i32, i32
  }
  func.func @transform_10(%arg0: i32, %arg1: i32) -> (i32, i32, i32, i32) {
    %c0_i32 = arith.constant 0 : i32
    %c0_i32_0 = arith.constant 0 : i32
    %c0_i32_1 = arith.constant 0 : i32
    return %arg0, %arg1, %c0_i32, %c0_i32_0 : i32, i32, i32, i32
  }
}

module attributes {stable_mosaic.version = 11 : i64} {
  func.func @kernel(%arg0: i32, %arg1: i32, %arg2: memref<2x16x16x128xf32, #tpu.memory_space<vmem>>, %arg3: memref<128x128xf32, #tpu.memory_space<vmem>>, %arg4: memref<1x128xf32, #tpu.memory_space<vmem>>, %arg5: memref<1x128xf32, #tpu.memory_space<vmem>>, %arg6: memref<1152x128xf32, #tpu.memory_space<vmem>>, %arg7: memref<1x128xf32, #tpu.memory_space<vmem>>, %arg8: memref<1x128xf32, #tpu.memory_space<vmem>>, %arg9: memref<128x128xf32, #tpu.memory_space<vmem>>, %arg10: memref<1x128xf32, #tpu.memory_space<vmem>>, %arg11: memref<1x128xf32, #tpu.memory_space<vmem>>, %arg12: memref<2x16x16x128xf32, #tpu.memory_space<vmem>>, %arg13: memref<2x18x16x128xf32, #tpu.memory_space<vmem>>) attributes {dimension_semantics = [#tpu.dimension_semantics<parallel>, #tpu.dimension_semantics<parallel>], iteration_bounds = array<i64: 1, 1>, scalar_prefetch = 0 : i64, scratch_operands = 1 : i64, tpu.core_type = #tpu.core_type<tc>, window_params = [{transform_indices = @transform_0, window_bounds = array<i64: 2, 16, 16, 128>}, {pipeline_mode = #tpu.pipeline_mode<synchronous>, transform_indices = @transform_1, window_bounds = array<i64: 128, 128>}, {pipeline_mode = #tpu.pipeline_mode<synchronous>, transform_indices = @transform_2, window_bounds = array<i64: 1, 128>}, {pipeline_mode = #tpu.pipeline_mode<synchronous>, transform_indices = @transform_3, window_bounds = array<i64: 1, 128>}, {pipeline_mode = #tpu.pipeline_mode<synchronous>, transform_indices = @transform_4, window_bounds = array<i64: 1152, 128>}, {pipeline_mode = #tpu.pipeline_mode<synchronous>, transform_indices = @transform_5, window_bounds = array<i64: 1, 128>}, {pipeline_mode = #tpu.pipeline_mode<synchronous>, transform_indices = @transform_6, window_bounds = array<i64: 1, 128>}, {pipeline_mode = #tpu.pipeline_mode<synchronous>, transform_indices = @transform_7, window_bounds = array<i64: 128, 128>}, {pipeline_mode = #tpu.pipeline_mode<synchronous>, transform_indices = @transform_8, window_bounds = array<i64: 1, 128>}, {pipeline_mode = #tpu.pipeline_mode<synchronous>, transform_indices = @transform_9, window_bounds = array<i64: 1, 128>}, {transform_indices = @transform_10, window_bounds = array<i64: 2, 16, 16, 128>}]} {
    %c0 = arith.constant 0 : index
    %c0_0 = arith.constant 0 : index
    %c0_1 = arith.constant 0 : index
    %c0_2 = arith.constant 0 : index
    %0 = vector.load %arg2[%c0, %c0_0, %c0_1, %c0_2] : memref<2x16x16x128xf32, #tpu.memory_space<vmem>>, vector<2x16x16x128xf32>
    %1 = vector.shape_cast %0 : vector<2x16x16x128xf32> to vector<512x128xf32>
    %c0_3 = arith.constant 0 : index
    %c0_4 = arith.constant 0 : index
    %2 = vector.load %arg3[%c0_3, %c0_4] : memref<128x128xf32, #tpu.memory_space<vmem>>, vector<128x128xf32>
    %cst = arith.constant dense<0.000000e+00> : vector<512x128xf32>
    %3 = tpu.matmul %1, %2, %cst {dimension_numbers = #tpu.dot_dimension_numbers<[1], [0], [0], [1], [0, 0, 1, 1], [], []>} : vector<512x128xf32>, vector<128x128xf32>, vector<512x128xf32> -> vector<512x128xf32>
    %c0_5 = arith.constant 0 : index
    %c0_6 = arith.constant 0 : index
    %4 = vector.load %arg4[%c0_5, %c0_6] : memref<1x128xf32, #tpu.memory_space<vmem>>, vector<1x128xf32>
    %5 = vector.shape_cast %4 : vector<1x128xf32> to vector<128xf32>
    %6 = vector.shape_cast %5 : vector<128xf32> to vector<1x128xf32>
    %7 = vector.broadcast %6 : vector<1x128xf32> to vector<512x128xf32>
    %8 = arith.mulf %3, %7 : vector<512x128xf32>
    %c0_7 = arith.constant 0 : index
    %c0_8 = arith.constant 0 : index
    %9 = vector.load %arg5[%c0_7, %c0_8] : memref<1x128xf32, #tpu.memory_space<vmem>>, vector<1x128xf32>
    %10 = vector.shape_cast %9 : vector<1x128xf32> to vector<128xf32>
    %11 = vector.shape_cast %10 : vector<128xf32> to vector<1x128xf32>
    %12 = vector.broadcast %11 : vector<1x128xf32> to vector<512x128xf32>
    %13 = arith.addf %8, %12 : vector<512x128xf32>
    %cst_9 = arith.constant 0.000000e+00 : f32
    %14 = vector.broadcast %cst_9 : f32 to vector<512x128xf32>
    %15 = arith.maximumf %13, %14 : vector<512x128xf32>
    %16 = vector.shape_cast %15 : vector<512x128xf32> to vector<2x16x16x128xf32>
    %c0_10 = arith.constant 0 : index
    %c1 = arith.constant 1 : index
    %c0_11 = arith.constant 0 : index
    %c0_12 = arith.constant 0 : index
    %17 = vector.load %arg13[%c0_10, %c1, %c0_11, %c0_12] : memref<2x18x16x128xf32, #tpu.memory_space<vmem>>, vector<2x16x16x128xf32>
    tpu.vector_store %arg13[%c0_10, %c1, %c0_11, %c0_12], %16 {strides = array<i32>} : memref<2x18x16x128xf32, #tpu.memory_space<vmem>>, vector<2x16x16x128xf32>,
    %cst_13 = arith.constant 0.000000e+00 : f32
    %18 = vector.broadcast %cst_13 : f32 to vector<2x16x128xf32>
    %c0_14 = arith.constant 0 : index
    %c0_15 = arith.constant 0 : index
    %c0_16 = arith.constant 0 : index
    %c0_17 = arith.constant 0 : index
    %19 = vector.load %arg13[%c0_14, %c0_15, %c0_16, %c0_17] : memref<2x18x16x128xf32, #tpu.memory_space<vmem>>, vector<2x1x16x128xf32>
    %20 = vector.shape_cast %19 : vector<2x1x16x128xf32> to vector<2x16x128xf32>
    %21 = vector.shape_cast %18 : vector<2x16x128xf32> to vector<2x1x16x128xf32>
    tpu.vector_store %arg13[%c0_14, %c0_15, %c0_16, %c0_17], %21 {strides = array<i32>} : memref<2x18x16x128xf32, #tpu.memory_space<vmem>>, vector<2x1x16x128xf32>,
    %cst_18 = arith.constant 0.000000e+00 : f32
    %22 = vector.broadcast %cst_18 : f32 to vector<2x16x128xf32>
    %c0_19 = arith.constant 0 : index
    %c17 = arith.constant 17 : index
    %c0_20 = arith.constant 0 : index
    %c0_21 = arith.constant 0 : index
    %23 = vector.load %arg13[%c0_19, %c17, %c0_20, %c0_21] : memref<2x18x16x128xf32, #tpu.memory_space<vmem>>, vector<2x1x16x128xf32>
    %24 = vector.shape_cast %23 : vector<2x1x16x128xf32> to vector<2x16x128xf32>
    %25 = vector.shape_cast %22 : vector<2x16x128xf32> to vector<2x1x16x128xf32>
    tpu.vector_store %arg13[%c0_19, %c17, %c0_20, %c0_21], %25 {strides = array<i32>} : memref<2x18x16x128xf32, #tpu.memory_space<vmem>>, vector<2x1x16x128xf32>,
    %c0_22 = arith.constant 0 : index
    %c0_23 = arith.constant 0 : index
    %c0_24 = arith.constant 0 : index
    %c0_25 = arith.constant 0 : index
    %26 = vector.load %arg13[%c0_22, %c0_23, %c0_24, %c0_25] : memref<2x18x16x128xf32, #tpu.memory_space<vmem>>, vector<2x18x16x128xf32>
    %27 = tpu.iota {dimensions = array<i32: 2>} : vector<1x1x16x1xi32>
    %c1_i32 = arith.constant 1 : i32
    %28 = tpu.dynamic_rotate %26 by %c1_i32 dim 2 : vector<2x18x16x128xf32>, i32 -> vector<2x18x16x128xf32>
    %c1_i32_26 = arith.constant 1 : i32
    %29 = vector.broadcast %c1_i32_26 : i32 to vector<1x1x16x1xi32>
    %30 = arith.cmpi sge, %27, %29 : vector<1x1x16x1xi32>
    %cst_27 = arith.constant 0.000000e+00 : f32
    %31 = vector.broadcast %cst_27 : f32 to vector<2x18x16x128xf32>
    %32 = vector.shape_cast %30 : vector<1x1x16x1xi1> to vector<1x1x16x1xi1>
    %33 = vector.broadcast %32 : vector<1x1x16x1xi1> to vector<2x18x16x128xi1>
    %34 = arith.select %33, %28, %31 : vector<2x18x16x128xi1>, vector<2x18x16x128xf32>
    %c15_i32 = arith.constant 15 : i32
    %35 = tpu.dynamic_rotate %26 by %c15_i32 dim 2 : vector<2x18x16x128xf32>, i32 -> vector<2x18x16x128xf32>
    %c15_i32_28 = arith.constant 15 : i32
    %36 = vector.broadcast %c15_i32_28 : i32 to vector<1x1x16x1xi32>
    %37 = arith.cmpi slt, %27, %36 : vector<1x1x16x1xi32>
    %cst_29 = arith.constant 0.000000e+00 : f32
    %38 = vector.broadcast %cst_29 : f32 to vector<2x18x16x128xf32>
    %39 = vector.shape_cast %37 : vector<1x1x16x1xi1> to vector<1x1x16x1xi1>
    %40 = vector.broadcast %39 : vector<1x1x16x1xi1> to vector<2x18x16x128xi1>
    %41 = arith.select %40, %35, %38 : vector<2x18x16x128xi1>, vector<2x18x16x128xf32>
    %42 = vector.extract_strided_slice %34 {offsets = [0, 0, 0, 0], sizes = [2, 16, 16, 128], strides = [1, 1, 1, 1]} : vector<2x18x16x128xf32> to vector<2x16x16x128xf32>
    %43 = vector.extract_strided_slice %26 {offsets = [0, 0, 0, 0], sizes = [2, 16, 16, 128], strides = [1, 1, 1, 1]} : vector<2x18x16x128xf32> to vector<2x16x16x128xf32>
    %44 = vector.extract_strided_slice %41 {offsets = [0, 0, 0, 0], sizes = [2, 16, 16, 128], strides = [1, 1, 1, 1]} : vector<2x18x16x128xf32> to vector<2x16x16x128xf32>
    %45 = vector.extract_strided_slice %34 {offsets = [0, 1, 0, 0], sizes = [2, 16, 16, 128], strides = [1, 1, 1, 1]} : vector<2x18x16x128xf32> to vector<2x16x16x128xf32>
    %46 = vector.extract_strided_slice %26 {offsets = [0, 1, 0, 0], sizes = [2, 16, 16, 128], strides = [1, 1, 1, 1]} : vector<2x18x16x128xf32> to vector<2x16x16x128xf32>
    %47 = vector.extract_strided_slice %41 {offsets = [0, 1, 0, 0], sizes = [2, 16, 16, 128], strides = [1, 1, 1, 1]} : vector<2x18x16x128xf32> to vector<2x16x16x128xf32>
    %48 = vector.extract_strided_slice %34 {offsets = [0, 2, 0, 0], sizes = [2, 16, 16, 128], strides = [1, 1, 1, 1]} : vector<2x18x16x128xf32> to vector<2x16x16x128xf32>
    %49 = vector.extract_strided_slice %26 {offsets = [0, 2, 0, 0], sizes = [2, 16, 16, 128], strides = [1, 1, 1, 1]} : vector<2x18x16x128xf32> to vector<2x16x16x128xf32>
    %50 = vector.extract_strided_slice %41 {offsets = [0, 2, 0, 0], sizes = [2, 16, 16, 128], strides = [1, 1, 1, 1]} : vector<2x18x16x128xf32> to vector<2x16x16x128xf32>
    %51 = tpu.concatenate %42, %43, %44, %45, %46, %47, %48, %49, %50 in 3 : vector<2x16x16x128xf32>, vector<2x16x16x128xf32>, vector<2x16x16x128xf32>, vector<2x16x16x128xf32>, vector<2x16x16x128xf32>, vector<2x16x16x128xf32>, vector<2x16x16x128xf32>, vector<2x16x16x128xf32>, vector<2x16x16x128xf32> -> vector<2x16x16x1152xf32>
    %52 = vector.shape_cast %51 : vector<2x16x16x1152xf32> to vector<512x1152xf32>
    %c0_30 = arith.constant 0 : index
    %c0_31 = arith.constant 0 : index
    %53 = vector.load %arg6[%c0_30, %c0_31] : memref<1152x128xf32, #tpu.memory_space<vmem>>, vector<1152x128xf32>
    %cst_32 = arith.constant dense<0.000000e+00> : vector<512x128xf32>
    %54 = tpu.matmul %52, %53, %cst_32 {dimension_numbers = #tpu.dot_dimension_numbers<[1], [0], [0], [1], [0, 0, 1, 1], [], []>} : vector<512x1152xf32>, vector<1152x128xf32>, vector<512x128xf32> -> vector<512x128xf32>
    %c0_33 = arith.constant 0 : index
    %c0_34 = arith.constant 0 : index
    %55 = vector.load %arg7[%c0_33, %c0_34] : memref<1x128xf32, #tpu.memory_space<vmem>>, vector<1x128xf32>
    %56 = vector.shape_cast %55 : vector<1x128xf32> to vector<128xf32>
    %57 = vector.shape_cast %56 : vector<128xf32> to vector<1x128xf32>
    %58 = vector.broadcast %57 : vector<1x128xf32> to vector<512x128xf32>
    %59 = arith.mulf %54, %58 : vector<512x128xf32>
    %c0_35 = arith.constant 0 : index
    %c0_36 = arith.constant 0 : index
    %60 = vector.load %arg8[%c0_35, %c0_36] : memref<1x128xf32, #tpu.memory_space<vmem>>, vector<1x128xf32>
    %61 = vector.shape_cast %60 : vector<1x128xf32> to vector<128xf32>
    %62 = vector.shape_cast %61 : vector<128xf32> to vector<1x128xf32>
    %63 = vector.broadcast %62 : vector<1x128xf32> to vector<512x128xf32>
    %64 = arith.addf %59, %63 : vector<512x128xf32>
    %cst_37 = arith.constant 0.000000e+00 : f32
    %65 = vector.broadcast %cst_37 : f32 to vector<512x128xf32>
    %66 = arith.maximumf %64, %65 : vector<512x128xf32>
    %c0_38 = arith.constant 0 : index
    %c0_39 = arith.constant 0 : index
    %67 = vector.load %arg9[%c0_38, %c0_39] : memref<128x128xf32, #tpu.memory_space<vmem>>, vector<128x128xf32>
    %cst_40 = arith.constant dense<0.000000e+00> : vector<512x128xf32>
    %68 = tpu.matmul %66, %67, %cst_40 {dimension_numbers = #tpu.dot_dimension_numbers<[1], [0], [0], [1], [0, 0, 1, 1], [], []>} : vector<512x128xf32>, vector<128x128xf32>, vector<512x128xf32> -> vector<512x128xf32>
    %c0_41 = arith.constant 0 : index
    %c0_42 = arith.constant 0 : index
    %69 = vector.load %arg10[%c0_41, %c0_42] : memref<1x128xf32, #tpu.memory_space<vmem>>, vector<1x128xf32>
    %70 = vector.shape_cast %69 : vector<1x128xf32> to vector<128xf32>
    %71 = vector.shape_cast %70 : vector<128xf32> to vector<1x128xf32>
    %72 = vector.broadcast %71 : vector<1x128xf32> to vector<512x128xf32>
    %73 = arith.mulf %68, %72 : vector<512x128xf32>
    %c0_43 = arith.constant 0 : index
    %c0_44 = arith.constant 0 : index
    %74 = vector.load %arg11[%c0_43, %c0_44] : memref<1x128xf32, #tpu.memory_space<vmem>>, vector<1x128xf32>
    %75 = vector.shape_cast %74 : vector<1x128xf32> to vector<128xf32>
    %76 = vector.shape_cast %75 : vector<128xf32> to vector<1x128xf32>
    %77 = vector.broadcast %76 : vector<1x128xf32> to vector<512x128xf32>
    %78 = arith.addf %73, %77 : vector<512x128xf32>
    %79 = vector.shape_cast %0 : vector<2x16x16x128xf32> to vector<512x128xf32>
    %80 = arith.addf %78, %79 : vector<512x128xf32>
    %cst_45 = arith.constant 0.000000e+00 : f32
    %81 = vector.broadcast %cst_45 : f32 to vector<512x128xf32>
    %82 = arith.maximumf %80, %81 : vector<512x128xf32>
    %83 = vector.shape_cast %82 : vector<512x128xf32> to vector<2x16x16x128xf32>
    %c0_46 = arith.constant 0 : index
    %c0_47 = arith.constant 0 : index
    %c0_48 = arith.constant 0 : index
    %c0_49 = arith.constant 0 : index
    %84 = vector.load %arg12[%c0_46, %c0_47, %c0_48, %c0_49] : memref<2x16x16x128xf32, #tpu.memory_space<vmem>>, vector<2x16x16x128xf32>
    tpu.vector_store %arg12[%c0_46, %c0_47, %c0_48, %c0_49], %83 {strides = array<i32>} : memref<2x16x16x128xf32, #tpu.memory_space<vmem>>, vector<2x16x16x128xf32>,
    return
  }
  func.func @transform_0(%arg0: i32, %arg1: i32) -> (i32, i32, i32, i32) {
    %c0_i32 = arith.constant 0 : i32
    %c0_i32_0 = arith.constant 0 : i32
    %c0_i32_1 = arith.constant 0 : i32
    return %arg0, %arg1, %c0_i32, %c0_i32_0 : i32, i32, i32, i32
  }
  func.func @transform_1(%arg0: i32, %arg1: i32) -> (i32, i32) {
    %c0_i32 = arith.constant 0 : i32
    %c0_i32_0 = arith.constant 0 : i32
    %c0_i32_1 = arith.constant 0 : i32
    return %c0_i32, %c0_i32_0 : i32, i32
  }
  func.func @transform_2(%arg0: i32, %arg1: i32) -> (i32, i32) {
    %c0_i32 = arith.constant 0 : i32
    %c0_i32_0 = arith.constant 0 : i32
    %c0_i32_1 = arith.constant 0 : i32
    return %c0_i32, %c0_i32_0 : i32, i32
  }
  func.func @transform_3(%arg0: i32, %arg1: i32) -> (i32, i32) {
    %c0_i32 = arith.constant 0 : i32
    %c0_i32_0 = arith.constant 0 : i32
    %c0_i32_1 = arith.constant 0 : i32
    return %c0_i32, %c0_i32_0 : i32, i32
  }
  func.func @transform_4(%arg0: i32, %arg1: i32) -> (i32, i32) {
    %c0_i32 = arith.constant 0 : i32
    %c0_i32_0 = arith.constant 0 : i32
    %c0_i32_1 = arith.constant 0 : i32
    return %c0_i32, %c0_i32_0 : i32, i32
  }
  func.func @transform_5(%arg0: i32, %arg1: i32) -> (i32, i32) {
    %c0_i32 = arith.constant 0 : i32
    %c0_i32_0 = arith.constant 0 : i32
    %c0_i32_1 = arith.constant 0 : i32
    return %c0_i32, %c0_i32_0 : i32, i32
  }
  func.func @transform_6(%arg0: i32, %arg1: i32) -> (i32, i32) {
    %c0_i32 = arith.constant 0 : i32
    %c0_i32_0 = arith.constant 0 : i32
    %c0_i32_1 = arith.constant 0 : i32
    return %c0_i32, %c0_i32_0 : i32, i32
  }
  func.func @transform_7(%arg0: i32, %arg1: i32) -> (i32, i32) {
    %c0_i32 = arith.constant 0 : i32
    %c0_i32_0 = arith.constant 0 : i32
    %c0_i32_1 = arith.constant 0 : i32
    return %c0_i32, %c0_i32_0 : i32, i32
  }
  func.func @transform_8(%arg0: i32, %arg1: i32) -> (i32, i32) {
    %c0_i32 = arith.constant 0 : i32
    %c0_i32_0 = arith.constant 0 : i32
    %c0_i32_1 = arith.constant 0 : i32
    return %c0_i32, %c0_i32_0 : i32, i32
  }
  func.func @transform_9(%arg0: i32, %arg1: i32) -> (i32, i32) {
    %c0_i32 = arith.constant 0 : i32
    %c0_i32_0 = arith.constant 0 : i32
    %c0_i32_1 = arith.constant 0 : i32
    return %c0_i32, %c0_i32_0 : i32, i32
  }
  func.func @transform_10(%arg0: i32, %arg1: i32) -> (i32, i32, i32, i32) {
    %c0_i32 = arith.constant 0 : i32
    %c0_i32_0 = arith.constant 0 : i32
    %c0_i32_1 = arith.constant 0 : i32
    return %arg0, %arg1, %c0_i32, %c0_i32_0 : i32, i32, i32, i32
  }
}

</mosaic_0001>

<llo_original>
// kernel: tpu_custom_call.1
$region0: #{tpu_custom_call.1}
  #allocation0 [shape = 'u32[]', space=smem, size = 0x4, offset = 0x4, fixed_abs, tag = 'smem constant byte address 0x4 - core index']
  #allocation1 [shape = 'u32[144,128]{1,0:T(1,128)}', space=vmem, size = 0x12000, scoped, tag = 'internal scratch']
  #allocation2 [shape = 'f32[2,18,16,128]{3,2,1,0:T(8,128)}', space=vmem, size = 0x48000, scoped, tag = 'scratch operand']
  %s0 = inlined_call_operand.hbm [shape: f32[2,16,16,128], index: 0, kind: input, shape index: {}]
  %s1 = inlined_call_operand.hbm [shape: f32[128,128], index: 1, kind: input, shape index: {}]
  %s2 = inlined_call_operand.vmem [shape: f32[1,128], index: 2, kind: input, shape index: {}]
  %s3 = inlined_call_operand.vmem [shape: f32[1,128], index: 3, kind: input, shape index: {}]
  %s4 = inlined_call_operand.hbm [shape: f32[1152,128], index: 4, kind: input, shape index: {}]
  %s5 = inlined_call_operand.vmem [shape: f32[1,128], index: 5, kind: input, shape index: {}]
  %s6 = inlined_call_operand.vmem [shape: f32[1,128], index: 6, kind: input, shape index: {}]
  %s7 = inlined_call_operand.hbm [shape: f32[128,128], index: 7, kind: input, shape index: {}]
  %s8 = inlined_call_operand.vmem [shape: f32[1,128], index: 8, kind: input, shape index: {}]
  %s9 = inlined_call_operand.vmem [shape: f32[1,128], index: 9, kind: input, shape index: {}]
  %s10 = inlined_call_operand.hbm [shape: f32[2,16,16,128], index: 10, kind: output, shape index: {}]
  %s11 = sld [smem:[#allocation0]]
  $region66: #{tpu_custom_call.1} parent=0
    _
  %s13 = ssub.s32 1, %s11
  %s14 = scalar_select 0, %s13, %s11
  $region1: #{tpu_custom_call.1} parent=0
    #allocation3 [shape = 'u8[262144]{0}', space=vmem, size = 0x40000, scoped, tag = 'input window, operand 0, single buffered']
    #allocation4 [shape = 's32[1]{0}', space=sflag, size = 0x4, scoped, tag = 'scoped memory for tpu_custom_call.1']
    #allocation5 [shape = 's32[1]{0}', space=sflag, size = 0x4, scoped, tag = 'scoped memory for tpu_custom_call.1']
    #allocation6 [shape = 'u8[65536]{0}', space=vmem, size = 0x10000, scoped, tag = 'input window, operand 1, single buffered']
    #allocation7 [shape = 's32[1]{0}', space=sflag, size = 0x4, scoped, tag = 'scoped memory for tpu_custom_call.1']
    #allocation8 [shape = 'u8[589824]{0}', space=vmem, size = 0x90000, scoped, tag = 'input window, operand 4, single buffered']
    #allocation9 [shape = 'u8[65536]{0}', space=vmem, size = 0x10000, scoped, tag = 'input window, operand 7, single buffered']
    #allocation10 [shape = 's32[1]{0}', space=sflag, size = 0x4, scoped, tag = 'scoped memory for tpu_custom_call.1']
    #allocation11 [shape = 'u8[262144]{0}', space=vmem, size = 0x40000, scoped, tag = 'output window, operand 0, single buffered']
    %15 = vsyncpa [#allocation4], 0
    %16 = vsyncpa [#allocation7], 0
    %17 = vsyncpa [#allocation10], 0
    %18 = vsyncpa [#allocation5], 0
    // Predicated region
    $region2: #{tpu_custom_call.1} parent=1 // pred_check
      _
    $region3: #{tpu_custom_call.1} parent=1 // pred_check_branch
      %20 = sbr.rel (0) target = $region5
    $region4: #{tpu_custom_call.1} parent=1 // pred_region
      %s22 = ssub.s32 8192, 8192
      %23 = vsyncadd [#allocation4], %s22
      %s24 = sshll.u32 [#allocation3], 4
      %s25 = int_to_ptr.vmem [resolvable:$true] %s24
      %30 = dma.hbm_to_vmem [thread:$0]  %s0, 8192, %s25, [#allocation4], 128, 128, 8
    $region5: #{tpu_custom_call.1} parent=1 // pred_fallthru
      _
    // Predicated region
    $region6: #{tpu_custom_call.1} parent=1 // pred_check
      _
    $region7: #{tpu_custom_call.1} parent=1 // pred_check_branch
      %32 = sbr.rel (0) target = $region9
    $region8: #{tpu_custom_call.1} parent=1 // pred_region
      %s34 = ssub.s32 2048, 2048
      %35 = vsyncadd [#allocation7], %s34
      %s36 = sshll.u32 [#allocation6], 4
      %s37 = int_to_ptr.vmem [resolvable:$true] %s36
      %42 = dma.hbm_to_vmem [thread:$0]  %s1, 2048, %s37, [#allocation7], 128, 128, 8
    $region9: #{tpu_custom_call.1} parent=1 // pred_fallthru
      _
    // Predicated region
    $region10: #{tpu_custom_call.1} parent=1 // pred_check
      _
    $region11: #{tpu_custom_call.1} parent=1 // pred_check_branch
      %44 = sbr.rel (0) target = $region13
    $region12: #{tpu_custom_call.1} parent=1 // pred_region
      _
    $region13: #{tpu_custom_call.1} parent=1 // pred_fallthru
      _
    // Predicated region
    $region14: #{tpu_custom_call.1} parent=1 // pred_check
      _
    $region15: #{tpu_custom_call.1} parent=1 // pred_check_branch
      %46 = sbr.rel (0) target = $region17
    $region16: #{tpu_custom_call.1} parent=1 // pred_region
      _
    $region17: #{tpu_custom_call.1} parent=1 // pred_fallthru
      _
    // Predicated region
    $region18: #{tpu_custom_call.1} parent=1 // pred_check
      _
    $region19: #{tpu_custom_call.1} parent=1 // pred_check_branch
      %48 = sbr.rel (0) target = $region21
    $region20: #{tpu_custom_call.1} parent=1 // pred_region
      %s50 = ssub.s32 18432, 18432
      %51 = vsyncadd [#allocation7], %s50
      %s52 = sshll.u32 [#allocation8], 4
      %s53 = int_to_ptr.vmem [resolvable:$true] %s52
      %58 = dma.hbm_to_vmem [thread:$0]  %s4, 18432, %s53, [#allocation7], 128, 128, 8
    $region21: #{tpu_custom_call.1} parent=1 // pred_fallthru
      _
    // Predicated region
    $region22: #{tpu_custom_call.1} parent=1 // pred_check
      _
    $region23: #{tpu_custom_call.1} parent=1 // pred_check_branch
      %60 = sbr.rel (0) target = $region25
    $region24: #{tpu_custom_call.1} parent=1 // pred_region
      _
    $region25: #{tpu_custom_call.1} parent=1 // pred_fallthru
      _
    // Predicated region
    $region26: #{tpu_custom_call.1} parent=1 // pred_check
      _
    $region27: #{tpu_custom_call.1} parent=1 // pred_check_branch
      %62 = sbr.rel (0) target = $region29
    $region28: #{tpu_custom_call.1} parent=1 // pred_region
      _
    $region29: #{tpu_custom_call.1} parent=1 // pred_fallthru
      _
    // Predicated region
    $region30: #{tpu_custom_call.1} parent=1 // pred_check
      _
    $region31: #{tpu_custom_call.1} parent=1 // pred_check_branch
      %64 = sbr.rel (0) target = $region33
    $region32: #{tpu_custom_call.1} parent=1 // pred_region
      %s66 = ssub.s32 2048, 2048
      %67 = vsyncadd [#allocation10], %s66
      %s68 = sshll.u32 [#allocation9], 4
      %s69 = int_to_ptr.vmem [resolvable:$true] %s68
      %74 = dma.hbm_to_vmem [thread:$0]  %s7, 2048, %s69, [#allocation10], 128, 128, 8
    $region33: #{tpu_custom_call.1} parent=1 // pred_fallthru
      _
    // Predicated region
    $region34: #{tpu_custom_call.1} parent=1 // pred_check
      _
    $region35: #{tpu_custom_call.1} parent=1 // pred_check_branch
      %76 = sbr.rel (0) target = $region37
    $region36: #{tpu_custom_call.1} parent=1 // pred_region
      _
    $region37: #{tpu_custom_call.1} parent=1 // pred_fallthru
      _
    // Predicated region
    $region38: #{tpu_custom_call.1} parent=1 // pred_check
      _
    $region39: #{tpu_custom_call.1} parent=1 // pred_check_branch
      %78 = sbr.rel (0) target = $region41
    $region40: #{tpu_custom_call.1} parent=1 // pred_region
      _
    $region41: #{tpu_custom_call.1} parent=1 // pred_fallthru
      _
    // Predicated region
    $region42: #{tpu_custom_call.1} parent=1 // pred_check
      _
    $region43: #{tpu_custom_call.1} parent=1 // pred_check_branch
      %80 = sbr.rel (0) target = $region45
    $region44: #{tpu_custom_call.1} parent=1 // pred_region
      %81 = dma.done [#allocation4], 8192
    $region45: #{tpu_custom_call.1} parent=1 // pred_fallthru
      _
    // Predicated region
    $region46: #{tpu_custom_call.1} parent=1 // pred_check
      _
    $region47: #{tpu_custom_call.1} parent=1 // pred_check_branch
      %83 = sbr.rel (0) target = $region49
    $region48: #{tpu_custom_call.1} parent=1 // pred_region
      %84 = dma.done [#allocation7], 2048
    $region49: #{tpu_custom_call.1} parent=1 // pred_fallthru
      _
    // Predicated region
    $region50: #{tpu_custom_call.1} parent=1 // pred_check
      _
    $region51: #{tpu_custom_call.1} parent=1 // pred_check_branch
      %86 = sbr.rel (0) target = $region53
    $region52: #{tpu_custom_call.1} parent=1 // pred_region
      %87 = dma.done [#allocation7], 18432
    $region53: #{tpu_custom_call.1} parent=1 // pred_fallthru
      _
    // Predicated region
    $region54: #{tpu_custom_call.1} parent=1 // pred_check
      _
    $region55: #{tpu_custom_call.1} parent=1 // pred_check_branch
      %89 = sbr.rel (0) target = $region57
    $region56: #{tpu_custom_call.1} parent=1 // pred_region
      %90 = dma.done [#allocation10], 2048
    $region57: #{tpu_custom_call.1} parent=1 // pred_fallthru
      _
    %v91 = vld [vmem:[#allocation3] sm:$0xff]
    %v92 = vld [vmem:[#allocation3 + $0x8] sm:$0xff]
    %v93 = vld [vmem:[#allocation3 + $0x10] sm:$0xff]
    %v94 = vld [vmem:[#allocation3 + $0x18] sm:$0xff]
    %v95 = vld [vmem:[#allocation3 + $0x20] sm:$0xff]
    %v96 = vld [vmem:[#allocation3 + $0x28] sm:$0xff]
    %v97 = vld [vmem:[#allocation3 + $0x30] sm:$0xff]
    %v98 = vld [vmem:[#allocation3 + $0x38] sm:$0xff]
    %v99 = vld [vmem:[#allocation3 + $0x40] sm:$0xff]
    %v100 = vld [vmem:[#allocation3 + $0x48] sm:$0xff]
    %v101 = vld [vmem:[#allocation3 + $0x50] sm:$0xff]
    %v102 = vld [vmem:[#allocation3 + $0x58] sm:$0xff]
    %v103 = vld [vmem:[#allocation3 + $0x60] sm:$0xff]
    %v104 = vld [vmem:[#allocation3 + $0x68] sm:$0xff]
    %v105 = vld [vmem:[#allocation3 + $0x70] sm:$0xff]
    %v106 = vld [vmem:[#allocation3 + $0x78] sm:$0xff]
    %v107 = vld [vmem:[#allocation3 + $0x80] sm:$0xff]
    %v108 = vld [vmem:[#allocation3 + $0x88] sm:$0xff]
    %v109 = vld [vmem:[#allocation3 + $0x90] sm:$0xff]
    %v110 = vld [vmem:[#allocation3 + $0x98] sm:$0xff]
    %v111 = vld [vmem:[#allocation3 + $0xa0] sm:$0xff]
    %v112 = vld [vmem:[#allocation3 + $0xa8] sm:$0xff]
    %v113 = vld [vmem:[#allocation3 + $0xb0] sm:$0xff]
    %v114 = vld [vmem:[#allocation3 + $0xb8] sm:$0xff]
    %v115 = vld [vmem:[#allocation3 + $0xc0] sm:$0xff]
    %v116 = vld [vmem:[#allocation3 + $0xc8] sm:$0xff]
    %v117 = vld [vmem:[#allocation3 + $0xd0] sm:$0xff]
    %v118 = vld [vmem:[#allocation3 + $0xd8] sm:$0xff]
    %v119 = vld [vmem:[#allocation3 + $0xe0] sm:$0xff]
    %v120 = vld [vmem:[#allocation3 + $0xe8] sm:$0xff]
    %v121 = vld [vmem:[#allocation3 + $0xf0] sm:$0xff]
    %v122 = vld [vmem:[#allocation3 + $0xf8] sm:$0xff]
    %v123 = vld [vmem:[#allocation3 + $0x100] sm:$0xff]
    %v124 = vld [vmem:[#allocation3 + $0x108] sm:$0xff]
    %v125 = vld [vmem:[#allocation3 + $0x110] sm:$0xff]
    %v126 = vld [vmem:[#allocation3 + $0x118] sm:$0xff]
    %v127 = vld [vmem:[#allocation3 + $0x120] sm:$0xff]
    %v128 = vld [vmem:[#allocation3 + $0x128] sm:$0xff]
    %v129 = vld [vmem:[#allocation3 + $0x130] sm:$0xff]
    %v130 = vld [vmem:[#allocation3 + $0x138] sm:$0xff]
    %v131 = vld [vmem:[#allocation3 + $0x140] sm:$0xff]
    %v132 = vld [vmem:[#allocation3 + $0x148] sm:$0xff]
    %v133 = vld [vmem:[#allocation3 + $0x150] sm:$0xff]
    %v134 = vld [vmem:[#allocation3 + $0x158] sm:$0xff]
    %v135 = vld [vmem:[#allocation3 + $0x160] sm:$0xff]
    %v136 = vld [vmem:[#allocation3 + $0x168] sm:$0xff]
    %v137 = vld [vmem:[#allocation3 + $0x170] sm:$0xff]
    %v138 = vld [vmem:[#allocation3 + $0x178] sm:$0xff]
    %v139 = vld [vmem:[#allocation3 + $0x180] sm:$0xff]
    %v140 = vld [vmem:[#allocation3 + $0x188] sm:$0xff]
    %v141 = vld [vmem:[#allocation3 + $0x190] sm:$0xff]
    %v142 = vld [vmem:[#allocation3 + $0x198] sm:$0xff]
    %v143 = vld [vmem:[#allocation3 + $0x1a0] sm:$0xff]
    %v144 = vld [vmem:[#allocation3 + $0x1a8] sm:$0xff]
    %v145 = vld [vmem:[#allocation3 + $0x1b0] sm:$0xff]
    %v146 = vld [vmem:[#allocation3 + $0x1b8] sm:$0xff]
    %v147 = vld [vmem:[#allocation3 + $0x1c0] sm:$0xff]
    %v148 = vld [vmem:[#allocation3 + $0x1c8] sm:$0xff]
    %v149 = vld [vmem:[#allocation3 + $0x1d0] sm:$0xff]
    %v150 = vld [vmem:[#allocation3 + $0x1d8] sm:$0xff]
    %v151 = vld [vmem:[#allocation3 + $0x1e0] sm:$0xff]
    %v152 = vld [vmem:[#allocation3 + $0x1e8] sm:$0xff]
    %v153 = vld [vmem:[#allocation3 + $0x1f0] sm:$0xff]
    %v154 = vld [vmem:[#allocation3 + $0x1f8] sm:$0xff]
    %v155 = vld [vmem:[#allocation6] sm:$0xff]
    %v156 = vld [vmem:[#allocation6 + $0x8] sm:$0xff]
    %v157 = vld [vmem:[#allocation6 + $0x10] sm:$0xff]
    %v158 = vld [vmem:[#allocation6 + $0x18] sm:$0xff]
    %v159 = vld [vmem:[#allocation6 + $0x20] sm:$0xff]
    %v160 = vld [vmem:[#allocation6 + $0x28] sm:$0xff]
    %v161 = vld [vmem:[#allocation6 + $0x30] sm:$0xff]
    %v162 = vld [vmem:[#allocation6 + $0x38] sm:$0xff]
    %v163 = vld [vmem:[#allocation6 + $0x40] sm:$0xff]
    %v164 = vld [vmem:[#allocation6 + $0x48] sm:$0xff]
    %v165 = vld [vmem:[#allocation6 + $0x50] sm:$0xff]
    %v166 = vld [vmem:[#allocation6 + $0x58] sm:$0xff]
    %v167 = vld [vmem:[#allocation6 + $0x60] sm:$0xff]
    %v168 = vld [vmem:[#allocation6 + $0x68] sm:$0xff]
    %v169 = vld [vmem:[#allocation6 + $0x70] sm:$0xff]
    %v170 = vld [vmem:[#allocation6 + $0x78] sm:$0xff]
    %171 = vmatprep.subr.mxu0 0.0
    %172 = vmatpush1.msra.mxu0 %v155
    %173 = vmatprep.subr.mxu0 0.0
    %174 = vmatpush1.msra.mxu0 %v156
    %175 = vmatprep.subr.mxu0 0.0
    %176 = vmatpush1.msra.mxu0 %v157
    %177 = vmatprep.subr.mxu0 0.0
    %178 = vmatpush1.msra.mxu0 %v158
    %179 = vmatprep.subr.mxu0 0.0
    %180 = vmatpush1.msra.mxu0 %v159
    %181 = vmatprep.subr.mxu0 0.0
    %182 = vmatpush1.msra.mxu0 %v160
    %183 = vmatprep.subr.mxu0 0.0
    %184 = vmatpush1.msra.mxu0 %v161
    %185 = vmatprep.subr.mxu0 0.0
    %186 = vmatpush1.msra.mxu0 %v162
    %187 = vmatprep.subr.mxu0 0.0
    %188 = vmatpush1.msra.mxu0 %v163
    %189 = vmatprep.subr.mxu0 0.0
    %190 = vmatpush1.msra.mxu0 %v164
    %191 = vmatprep.subr.mxu0 0.0
    %192 = vmatpush1.msra.mxu0 %v165
    %193 = vmatprep.subr.mxu0 0.0
    %194 = vmatpush1.msra.mxu0 %v166
    %195 = vmatprep.subr.mxu0 0.0
    %196 = vmatpush1.msra.mxu0 %v167
    %197 = vmatprep.subr.mxu0 0.0
    %198 = vmatpush1.msra.mxu0 %v168
    %199 = vmatprep.subr.mxu0 0.0
    %200 = vmatpush1.msra.mxu0 %v169
    %201 = vmatprep.subr.mxu0 0.0
    %202 = vmatpush1.msra.mxu0 %v170
    %203 = vmatprep.subr.mxu0 0.0
    %204 = vmatpush1.msra.mxu0 0.0
    %205 = vmatprep.subr.mxu0 0.0
    %206 = vmatpush1.msra.mxu0 0.0
    %207 = vmatprep.subr.mxu0 0.0
    %208 = vmatpush1.msra.mxu0 0.0
    %209 = vmatprep.subr.mxu0 0.0
    %210 = vmatpush1.msra.mxu0 0.0
    %211 = vmatprep.subr.mxu0 0.0
    %212 = vmatpush1.msra.mxu0 0.0
    %213 = vmatprep.subr.mxu0 0.0
    %214 = vmatpush1.msra.mxu0 0.0
    %215 = vmatprep.subr.mxu0 0.0
    %216 = vmatpush1.msra.mxu0 0.0
    %217 = vmatprep.subr.mxu0 0.0
    %218 = vmatpush1.msra.mxu0 0.0
    %219 = vmatprep.subr.mxu0 0.0
    %220 = vmatpush1.msra.mxu0 0.0
    %221 = vmatprep.subr.mxu0 0.0
    %222 = vmatpush1.msra.mxu0 0.0
    %223 = vmatprep.subr.mxu0 0.0
    %224 = vmatpush1.msra.mxu0 0.0
    %225 = vmatprep.subr.mxu0 0.0
    %226 = vmatpush1.msra.mxu0 0.0
    %227 = vmatprep.subr.mxu0 0.0
    %228 = vmatpush1.msra.mxu0 0.0
    %229 = vmatprep.subr.mxu0 0.0
    %230 = vmatpush1.msra.mxu0 0.0
    %231 = vmatprep.subr.mxu0 0.0
    %232 = vmatpush1.msra.mxu0 0.0
    %233 = vmatprep.subr.mxu0 0.0
    %234 = vmatpush1.msra.mxu0 0.0
    %235 = vmatprep.mubr.f32.mxu0 0.0
    %236 = vmatmul.mubr.f32.gmra.mrb[0].mxu0 %v91
    %v237 = vpop.f32.mrb[0].mxu0
    %v238 = vadd.f32 0.0, %v237
    %v239 = vpop.f32.mrb[0].mxu0
    %240 = vmatprep.mubr.f32.mxu0 0.0
    %241 = vmatmul.mubr.f32.gmra.mrb[0].mxu0 %v92
    %v242 = vpop.f32.mrb[0].mxu0
    %v243 = vadd.f32 0.0, %v242
    %v244 = vpop.f32.mrb[0].mxu0
    %245 = vmatprep.mubr.f32.mxu0 0.0
    %246 = vmatmul.mubr.f32.gmra.mrb[0].mxu0 %v93
    %v247 = vpop.f32.mrb[0].mxu0
    %v248 = vadd.f32 0.0, %v247
    %v249 = vpop.f32.mrb[0].mxu0
    %250 = vmatprep.mubr.f32.mxu0 0.0
    %251 = vmatmul.mubr.f32.gmra.mrb[0].mxu0 %v94
    %v252 = vpop.f32.mrb[0].mxu0
    %v253 = vadd.f32 0.0, %v252
    %v254 = vpop.f32.mrb[0].mxu0
    %255 = vmatprep.mubr.f32.mxu0 0.0
    %256 = vmatmul.mubr.f32.gmra.mrb[0].mxu0 %v95
    %v257 = vpop.f32.mrb[0].mxu0
    %v258 = vadd.f32 0.0, %v257
    %v259 = vpop.f32.mrb[0].mxu0
    %260 = vmatprep.mubr.f32.mxu0 0.0
    %261 = vmatmul.mubr.f32.gmra.mrb[0].mxu0 %v96
    %v262 = vpop.f32.mrb[0].mxu0
    %v263 = vadd.f32 0.0, %v262
    %v264 = vpop.f32.mrb[0].mxu0
    %265 = vmatprep.mubr.f32.mxu0 0.0
    %266 = vmatmul.mubr.f32.gmra.mrb[0].mxu0 %v97
    %v267 = vpop.f32.mrb[0].mxu0
    %v268 = vadd.f32 0.0, %v267
    %v269 = vpop.f32.mrb[0].mxu0
    %270 = vmatprep.mubr.f32.mxu0 0.0
    %271 = vmatmul.mubr.f32.gmra.mrb[0].mxu0 %v98
    %v272 = vpop.f32.mrb[0].mxu0
    %v273 = vadd.f32 0.0, %v272
    %v274 = vpop.f32.mrb[0].mxu0
    %275 = vmatprep.mubr.f32.mxu0 0.0
    %276 = vmatmul.mubr.f32.gmra.mrb[0].mxu0 %v99
    %v277 = vpop.f32.mrb[0].mxu0
    %v278 = vadd.f32 0.0, %v277
    %v279 = vpop.f32.mrb[0].mxu0
    %280 = vmatprep.mubr.f32.mxu0 0.0
    %281 = vmatmul.mubr.f32.gmra.mrb[0].mxu0 %v100
    %v282 = vpop.f32.mrb[0].mxu0
    %v283 = vadd.f32 0.0, %v282
    %v284 = vpop.f32.mrb[0].mxu0
    %285 = vmatprep.mubr.f32.mxu0 0.0
    %286 = vmatmul.mubr.f32.gmra.mrb[0].mxu0 %v101
    %v287 = vpop.f32.mrb[0].mxu0
    %v288 = vadd.f32 0.0, %v287
    %v289 = vpop.f32.mrb[0].mxu0
    %290 = vmatprep.mubr.f32.mxu0 0.0
    %291 = vmatmul.mubr.f32.gmra.mrb[0].mxu0 %v102
    %v292 = vpop.f32.mrb[0].mxu0
    %v293 = vadd.f32 0.0, %v292
    %v294 = vpop.f32.mrb[0].mxu0
    %295 = vmatprep.mubr.f32.mxu0 0.0
    %296 = vmatmul.mubr.f32.gmra.mrb[0].mxu0 %v103
    %v297 = vpop.f32.mrb[0].mxu0
    %v298 = vadd.f32 0.0, %v297
    %v299 = vpop.f32.mrb[0].mxu0
    %300 = vmatprep.mubr.f32.mxu0 0.0
    %301 = vmatmul.mubr.f32.gmra.mrb[0].mxu0 %v104
    %v302 = vpop.f32.mrb[0].mxu0
    %v303 = vadd.f32 0.0, %v302
    %v304 = vpop.f32.mrb[0].mxu0
    %305 = vmatprep.mubr.f32.mxu0 0.0
    %306 = vmatmul.mubr.f32.gmra.mrb[0].mxu0 %v105
    %v307 = vpop.f32.mrb[0].mxu0
    %v308 = vadd.f32 0.0, %v307
    %v309 = vpop.f32.mrb[0].mxu0
    %310 = vmatprep.mubr.f32.mxu0 0.0
    %311 = vmatmul.mubr.f32.gmra.mrb[0].mxu0 %v106
    %v312 = vpop.f32.mrb[0].mxu0
    %v313 = vadd.f32 0.0, %v312
    %v314 = vpop.f32.mrb[0].mxu0
    %315 = vmatprep.mubr.f32.mxu0 0.0
    %316 = vmatmul.mubr.f32.gmra.mrb[0].mxu0 %v107
    %v317 = vpop.f32.mrb[0].mxu0
    %v318 = vadd.f32 0.0, %v317
    %v319 = vpop.f32.mrb[0].mxu0
    %320 = vmatprep.mubr.f32.mxu0 0.0
    %321 = vmatmul.mubr.f32.gmra.mrb[0].mxu0 %v108
    %v322 = vpop.f32.mrb[0].mxu0
    %v323 = vadd.f32 0.0, %v322
    %v324 = vpop.f32.mrb[0].mxu0
    %325 = vmatprep.mubr.f32.mxu0 0.0
    %326 = vmatmul.mubr.f32.gmra.mrb[0].mxu0 %v109
    %v327 = vpop.f32.mrb[0].mxu0
    %v328 = vadd.f32 0.0, %v327
    %v329 = vpop.f32.mrb[0].mxu0
    %330 = vmatprep.mubr.f32.mxu0 0.0
    %331 = vmatmul.mubr.f32.gmra.mrb[0].mxu0 %v110
    %v332 = vpop.f32.mrb[0].mxu0
    %v333 = vadd.f32 0.0, %v332
    %v334 = vpop.f32.mrb[0].mxu0
    %335 = vmatprep.mubr.f32.mxu0 0.0
    %336 = vmatmul.mubr.f32.gmra.mrb[0].mxu0 %v111
    %v337 = vpop.f32.mrb[0].mxu0
    %v338 = vadd.f32 0.0, %v337
    %v339 = vpop.f32.mrb[0].mxu0
    %340 = vmatprep.mubr.f32.mxu0 0.0
    %341 = vmatmul.mubr.f32.gmra.mrb[0].mxu0 %v112
    %v342 = vpop.f32.mrb[0].mxu0
    %v343 = vadd.f32 0.0, %v342
    %v344 = vpop.f32.mrb[0].mxu0
    %345 = vmatprep.mubr.f32.mxu0 0.0
    %346 = vmatmul.mubr.f32.gmra.mrb[0].mxu0 %v113
    %v347 = vpop.f32.mrb[0].mxu0
    %v348 = vadd.f32 0.0, %v347
    %v349 = vpop.f32.mrb[0].mxu0
    %350 = vmatprep.mubr.f32.mxu0 0.0
    %351 = vmatmul.mubr.f32.gmra.mrb[0].mxu0 %v114
    %v352 = vpop.f32.mrb[0].mxu0
    %v353 = vadd.f32 0.0, %v352
    %v354 = vpop.f32.mrb[0].mxu0
    %355 = vmatprep.mubr.f32.mxu0 0.0
    %356 = vmatmul.mubr.f32.gmra.mrb[0].mxu0 %v115
    %v357 = vpop.f32.mrb[0].mxu0
    %v358 = vadd.f32 0.0, %v357
    %v359 = vpop.f32.mrb[0].mxu0
    %360 = vmatprep.mubr.f32.mxu0 0.0
    %361 = vmatmul.mubr.f32.gmra.mrb[0].mxu0 %v116
    %v362 = vpop.f32.mrb[0].mxu0
    %v363 = vadd.f32 0.0, %v362
    %v364 = vpop.f32.mrb[0].mxu0
    %365 = vmatprep.mubr.f32.mxu0 0.0
    %366 = vmatmul.mubr.f32.gmra.mrb[0].mxu0 %v117
    %v367 = vpop.f32.mrb[0].mxu0
    %v368 = vadd.f32 0.0, %v367
    %v369 = vpop.f32.mrb[0].mxu0
    %370 = vmatprep.mubr.f32.mxu0 0.0
    %371 = vmatmul.mubr.f32.gmra.mrb[0].mxu0 %v118
    %v372 = vpop.f32.mrb[0].mxu0
    %v373 = vadd.f32 0.0, %v372
    %v374 = vpop.f32.mrb[0].mxu0
    %375 = vmatprep.mubr.f32.mxu0 0.0
    %376 = vmatmul.mubr.f32.gmra.mrb[0].mxu0 %v119
    %v377 = vpop.f32.mrb[0].mxu0
    %v378 = vadd.f32 0.0, %v377
    %v379 = vpop.f32.mrb[0].mxu0
    %380 = vmatprep.mubr.f32.mxu0 0.0
    %381 = vmatmul.mubr.f32.gmra.mrb[0].mxu0 %v120
    %v382 = vpop.f32.mrb[0].mxu0
    %v383 = vadd.f32 0.0, %v382
    %v384 = vpop.f32.mrb[0].mxu0
    %385 = vmatprep.mubr.f32.mxu0 0.0
    %386 = vmatmul.mubr.f32.gmra.mrb[0].mxu0 %v121
    %v387 = vpop.f32.mrb[0].mxu0
    %v388 = vadd.f32 0.0, %v387
    %v389 = vpop.f32.mrb[0].mxu0
    %390 = vmatprep.mubr.f32.mxu0 0.0
    %391 = vmatmul.mubr.f32.gmra.mrb[0].mxu0 %v122
    %v392 = vpop.f32.mrb[0].mxu0
    %v393 = vadd.f32 0.0, %v392
    %v394 = vpop.f32.mrb[0].mxu0
    %395 = vmatprep.mubr.f32.mxu0 0.0
    %396 = vmatmul.mubr.f32.gmra.mrb[0].mxu0 %v123
    %v397 = vpop.f32.mrb[0].mxu0
    %v398 = vadd.f32 0.0, %v397
    %v399 = vpop.f32.mrb[0].mxu0
    %400 = vmatprep.mubr.f32.mxu0 0.0
    %401 = vmatmul.mubr.f32.gmra.mrb[0].mxu0 %v124
    %v402 = vpop.f32.mrb[0].mxu0
    %v403 = vadd.f32 0.0, %v402
    %v404 = vpop.f32.mrb[0].mxu0
    %405 = vmatprep.mubr.f32.mxu0 0.0
    %406 = vmatmul.mubr.f32.gmra.mrb[0].mxu0 %v125
    %v407 = vpop.f32.mrb[0].mxu0
    %v408 = vadd.f32 0.0, %v407
    %v409 = vpop.f32.mrb[0].mxu0
    %410 = vmatprep.mubr.f32.mxu0 0.0
    %411 = vmatmul.mubr.f32.gmra.mrb[0].mxu0 %v126
    %v412 = vpop.f32.mrb[0].mxu0
    %v413 = vadd.f32 0.0, %v412
    %v414 = vpop.f32.mrb[0].mxu0
    %415 = vmatprep.mubr.f32.mxu0 0.0
    %416 = vmatmul.mubr.f32.gmra.mrb[0].mxu0 %v127
    %v417 = vpop.f32.mrb[0].mxu0
    %v418 = vadd.f32 0.0, %v417
    %v419 = vpop.f32.mrb[0].mxu0
    %420 = vmatprep.mubr.f32.mxu0 0.0
    %421 = vmatmul.mubr.f32.gmra.mrb[0].mxu0 %v128
    %v422 = vpop.f32.mrb[0].mxu0
    %v423 = vadd.f32 0.0, %v422
    %v424 = vpop.f32.mrb[0].mxu0
    %425 = vmatprep.mubr.f32.mxu0 0.0
    %426 = vmatmul.mubr.f32.gmra.mrb[0].mxu0 %v129
    %v427 = vpop.f32.mrb[0].mxu0
    %v428 = vadd.f32 0.0, %v427
    %v429 = vpop.f32.mrb[0].mxu0
    %430 = vmatprep.mubr.f32.mxu0 0.0
    %431 = vmatmul.mubr.f32.gmra.mrb[0].mxu0 %v130
    %v432 = vpop.f32.mrb[0].mxu0
    %v433 = vadd.f32 0.0, %v432
    %v434 = vpop.f32.mrb[0].mxu0
    %435 = vmatprep.mubr.f32.mxu0 0.0
    %436 = vmatmul.mubr.f32.gmra.mrb[0].mxu0 %v131
    %v437 = vpop.f32.mrb[0].mxu0
    %v438 = vadd.f32 0.0, %v437
    %v439 = vpop.f32.mrb[0].mxu0
    %440 = vmatprep.mubr.f32.mxu0 0.0
    %441 = vmatmul.mubr.f32.gmra.mrb[0].mxu0 %v132
    %v442 = vpop.f32.mrb[0].mxu0
    %v443 = vadd.f32 0.0, %v442
    %v444 = vpop.f32.mrb[0].mxu0
    %445 = vmatprep.mubr.f32.mxu0 0.0
    %446 = vmatmul.mubr.f32.gmra.mrb[0].mxu0 %v133
    %v447 = vpop.f32.mrb[0].mxu0
    %v448 = vadd.f32 0.0, %v447
    %v449 = vpop.f32.mrb[0].mxu0
    %450 = vmatprep.mubr.f32.mxu0 0.0
    %451 = vmatmul.mubr.f32.gmra.mrb[0].mxu0 %v134
    %v452 = vpop.f32.mrb[0].mxu0
    %v453 = vadd.f32 0.0, %v452
    %v454 = vpop.f32.mrb[0].mxu0
    %455 = vmatprep.mubr.f32.mxu0 0.0
    %456 = vmatmul.mubr.f32.gmra.mrb[0].mxu0 %v135
    %v457 = vpop.f32.mrb[0].mxu0
    %v458 = vadd.f32 0.0, %v457
    %v459 = vpop.f32.mrb[0].mxu0
    %460 = vmatprep.mubr.f32.mxu0 0.0
    %461 = vmatmul.mubr.f32.gmra.mrb[0].mxu0 %v136
    %v462 = vpop.f32.mrb[0].mxu0
    %v463 = vadd.f32 0.0, %v462
    %v464 = vpop.f32.mrb[0].mxu0
    %465 = vmatprep.mubr.f32.mxu0 0.0
    %466 = vmatmul.mubr.f32.gmra.mrb[0].mxu0 %v137
    %v467 = vpop.f32.mrb[0].mxu0
    %v468 = vadd.f32 0.0, %v467
    %v469 = vpop.f32.mrb[0].mxu0
    %470 = vmatprep.mubr.f32.mxu0 0.0
    %471 = vmatmul.mubr.f32.gmra.mrb[0].mxu0 %v138
    %v472 = vpop.f32.mrb[0].mxu0
    %v473 = vadd.f32 0.0, %v472
    %v474 = vpop.f32.mrb[0].mxu0
    %475 = vmatprep.mubr.f32.mxu0 0.0
    %476 = vmatmul.mubr.f32.gmra.mrb[0].mxu0 %v139
    %v477 = vpop.f32.mrb[0].mxu0
    %v478 = vadd.f32 0.0, %v477
    %v479 = vpop.f32.mrb[0].mxu0
    %480 = vmatprep.mubr.f32.mxu0 0.0
    %481 = vmatmul.mubr.f32.gmra.mrb[0].mxu0 %v140
    %v482 = vpop.f32.mrb[0].mxu0
    %v483 = vadd.f32 0.0, %v482
    %v484 = vpop.f32.mrb[0].mxu0
    %485 = vmatprep.mubr.f32.mxu0 0.0
    %486 = vmatmul.mubr.f32.gmra.mrb[0].mxu0 %v141
    %v487 = vpop.f32.mrb[0].mxu0
    %v488 = vadd.f32 0.0, %v487
    %v489 = vpop.f32.mrb[0].mxu0
    %490 = vmatprep.mubr.f32.mxu0 0.0
    %491 = vmatmul.mubr.f32.gmra.mrb[0].mxu0 %v142
    %v492 = vpop.f32.mrb[0].mxu0
    %v493 = vadd.f32 0.0, %v492
    %v494 = vpop.f32.mrb[0].mxu0
    %495 = vmatprep.mubr.f32.mxu0 0.0
    %496 = vmatmul.mubr.f32.gmra.mrb[0].mxu0 %v143
    %v497 = vpop.f32.mrb[0].mxu0
    %v498 = vadd.f32 0.0, %v497
    %v499 = vpop.f32.mrb[0].mxu0
    %500 = vmatprep.mubr.f32.mxu0 0.0
    %501 = vmatmul.mubr.f32.gmra.mrb[0].mxu0 %v144
    %v502 = vpop.f32.mrb[0].mxu0
    %v503 = vadd.f32 0.0, %v502
    %v504 = vpop.f32.mrb[0].mxu0
    %505 = vmatprep.mubr.f32.mxu0 0.0
    %506 = vmatmul.mubr.f32.gmra.mrb[0].mxu0 %v145
    %v507 = vpop.f32.mrb[0].mxu0
    %v508 = vadd.f32 0.0, %v507
    %v509 = vpop.f32.mrb[0].mxu0
    %510 = vmatprep.mubr.f32.mxu0 0.0
    %511 = vmatmul.mubr.f32.gmra.mrb[0].mxu0 %v146
    %v512 = vpop.f32.mrb[0].mxu0
    %v513 = vadd.f32 0.0, %v512
    %v514 = vpop.f32.mrb[0].mxu0
    %515 = vmatprep.mubr.f32.mxu0 0.0
    %516 = vmatmul.mubr.f32.gmra.mrb[0].mxu0 %v147
    %v517 = vpop.f32.mrb[0].mxu0
    %v518 = vadd.f32 0.0, %v517
    %v519 = vpop.f32.mrb[0].mxu0
    %520 = vmatprep.mubr.f32.mxu0 0.0
    %521 = vmatmul.mubr.f32.gmra.mrb[0].mxu0 %v148
    %v522 = vpop.f32.mrb[0].mxu0
    %v523 = vadd.f32 0.0, %v522
    %v524 = vpop.f32.mrb[0].mxu0
    %525 = vmatprep.mubr.f32.mxu0 0.0
    %526 = vmatmul.mubr.f32.gmra.mrb[0].mxu0 %v149
    %v527 = vpop.f32.mrb[0].mxu0
    %v528 = vadd.f32 0.0, %v527
    %v529 = vpop.f32.mrb[0].mxu0
    %530 = vmatprep.mubr.f32.mxu0 0.0
    %531 = vmatmul.mubr.f32.gmra.mrb[0].mxu0 %v150
    %v532 = vpop.f32.mrb[0].mxu0
    %v533 = vadd.f32 0.0, %v532
    %v534 = vpop.f32.mrb[0].mxu0
    %535 = vmatprep.mubr.f32.mxu0 0.0
    %536 = vmatmul.mubr.f32.gmra.mrb[0].mxu0 %v151
    %v537 = vpop.f32.mrb[0].mxu0
    %v538 = vadd.f32 0.0, %v537
    %v539 = vpop.f32.mrb[0].mxu0
    %540 = vmatprep.mubr.f32.mxu0 0.0
    %541 = vmatmul.mubr.f32.gmra.mrb[0].mxu0 %v152
    %v542 = vpop.f32.mrb[0].mxu0
    %v543 = vadd.f32 0.0, %v542
    %v544 = vpop.f32.mrb[0].mxu0
    %545 = vmatprep.mubr.f32.mxu0 0.0
    %546 = vmatmul.mubr.f32.gmra.mrb[0].mxu0 %v153
    %v547 = vpop.f32.mrb[0].mxu0
    %v548 = vadd.f32 0.0, %v547
    %v549 = vpop.f32.mrb[0].mxu0
    %550 = vmatprep.mubr.f32.mxu0 0.0
    %551 = vmatmul.mubr.f32.gmra.mrb[0].mxu0 %v154
    %v552 = vpop.f32.mrb[0].mxu0
    %v553 = vadd.f32 0.0, %v552
    %v554 = vpop.f32.mrb[0].mxu0
    %555 = vdwg.mxu0
    %v556 = vld [vmem:[%s2] sm:$0x1]
    %v558 = vlaneseq
    %v559 = vshrl.u32 %v558, 7
    %v560 = vsub.s32 0, %v559
    %v561 = vrot.slane %v556, %v560
    %v563 = vmul.f32 %v238, %v561
    %v564 = vmul.f32 %v243, %v561
    %v565 = vmul.f32 %v248, %v561
    %v566 = vmul.f32 %v253, %v561
    %v567 = vmul.f32 %v258, %v561
    %v568 = vmul.f32 %v263, %v561
    %v569 = vmul.f32 %v268, %v561
    %v570 = vmul.f32 %v273, %v561
    %v571 = vmul.f32 %v278, %v561
    %v572 = vmul.f32 %v283, %v561
    %v573 = vmul.f32 %v288, %v561
    %v574 = vmul.f32 %v293, %v561
    %v575 = vmul.f32 %v298, %v561
    %v576 = vmul.f32 %v303, %v561
    %v577 = vmul.f32 %v308, %v561
    %v578 = vmul.f32 %v313, %v561
    %v579 = vmul.f32 %v318, %v561
    %v580 = vmul.f32 %v323, %v561
    %v581 = vmul.f32 %v328, %v561
    %v582 = vmul.f32 %v333, %v561
    %v583 = vmul.f32 %v338, %v561
    %v584 = vmul.f32 %v343, %v561
    %v585 = vmul.f32 %v348, %v561
    %v586 = vmul.f32 %v353, %v561
    %v587 = vmul.f32 %v358, %v561
    %v588 = vmul.f32 %v363, %v561
    %v589 = vmul.f32 %v368, %v561
    %v590 = vmul.f32 %v373, %v561
    %v591 = vmul.f32 %v378, %v561
    %v592 = vmul.f32 %v383, %v561
    %v593 = vmul.f32 %v388, %v561
    %v594 = vmul.f32 %v393, %v561
    %v595 = vmul.f32 %v398, %v561
    %v596 = vmul.f32 %v403, %v561
    %v597 = vmul.f32 %v408, %v561
    %v598 = vmul.f32 %v413, %v561
    %v599 = vmul.f32 %v418, %v561
    %v600 = vmul.f32 %v423, %v561
    %v601 = vmul.f32 %v428, %v561
    %v602 = vmul.f32 %v433, %v561
    %v603 = vmul.f32 %v438, %v561
    %v604 = vmul.f32 %v443, %v561
    %v605 = vmul.f32 %v448, %v561
    %v606 = vmul.f32 %v453, %v561
    %v607 = vmul.f32 %v458, %v561
    %v608 = vmul.f32 %v463, %v561
    %v609 = vmul.f32 %v468, %v561
    %v610 = vmul.f32 %v473, %v561
    %v611 = vmul.f32 %v478, %v561
    %v612 = vmul.f32 %v483, %v561
    %v613 = vmul.f32 %v488, %v561
    %v614 = vmul.f32 %v493, %v561
    %v615 = vmul.f32 %v498, %v561
    %v616 = vmul.f32 %v503, %v561
    %v617 = vmul.f32 %v508, %v561
    %v618 = vmul.f32 %v513, %v561
    %v619 = vmul.f32 %v518, %v561
    %v620 = vmul.f32 %v523, %v561
    %v621 = vmul.f32 %v528, %v561
    %v622 = vmul.f32 %v533, %v561
    %v623 = vmul.f32 %v538, %v561
    %v624 = vmul.f32 %v543, %v561
    %v625 = vmul.f32 %v548, %v561
    %v626 = vmul.f32 %v553, %v561
    %v627 = vld [vmem:[%s3] sm:$0x1]
    %v629 = vlaneseq
    %v630 = vshrl.u32 %v629, 7
    %v631 = vsub.s32 0, %v630
    %v632 = vrot.slane %v627, %v631
    %v634 = vadd.f32 %v563, %v632
    %v635 = vadd.f32 %v564, %v632
    %v636 = vadd.f32 %v565, %v632
    %v637 = vadd.f32 %v566, %v632
    %v638 = vadd.f32 %v567, %v632
    %v639 = vadd.f32 %v568, %v632
    %v640 = vadd.f32 %v569, %v632
    %v641 = vadd.f32 %v570, %v632
    %v642 = vadd.f32 %v571, %v632
    %v643 = vadd.f32 %v572, %v632
    %v644 = vadd.f32 %v573, %v632
    %v645 = vadd.f32 %v574, %v632
    %v646 = vadd.f32 %v575, %v632
    %v647 = vadd.f32 %v576, %v632
    %v648 = vadd.f32 %v577, %v632
    %v649 = vadd.f32 %v578, %v632
    %v650 = vadd.f32 %v579, %v632
    %v651 = vadd.f32 %v580, %v632
    %v652 = vadd.f32 %v581, %v632
    %v653 = vadd.f32 %v582, %v632
    %v654 = vadd.f32 %v583, %v632
    %v655 = vadd.f32 %v584, %v632
    %v656 = vadd.f32 %v585, %v632
    %v657 = vadd.f32 %v586, %v632
    %v658 = vadd.f32 %v587, %v632
    %v659 = vadd.f32 %v588, %v632
    %v660 = vadd.f32 %v589, %v632
    %v661 = vadd.f32 %v590, %v632
    %v662 = vadd.f32 %v591, %v632
    %v663 = vadd.f32 %v592, %v632
    %v664 = vadd.f32 %v593, %v632
    %v665 = vadd.f32 %v594, %v632
    %v666 = vadd.f32 %v595, %v632
    %v667 = vadd.f32 %v596, %v632
    %v668 = vadd.f32 %v597, %v632
    %v669 = vadd.f32 %v598, %v632
    %v670 = vadd.f32 %v599, %v632
    %v671 = vadd.f32 %v600, %v632
    %v672 = vadd.f32 %v601, %v632
    %v673 = vadd.f32 %v602, %v632
    %v674 = vadd.f32 %v603, %v632
    %v675 = vadd.f32 %v604, %v632
    %v676 = vadd.f32 %v605, %v632
    %v677 = vadd.f32 %v606, %v632
    %v678 = vadd.f32 %v607, %v632
    %v679 = vadd.f32 %v608, %v632
    %v680 = vadd.f32 %v609, %v632
    %v681 = vadd.f32 %v610, %v632
    %v682 = vadd.f32 %v611, %v632
    %v683 = vadd.f32 %v612, %v632
    %v684 = vadd.f32 %v613, %v632
    %v685 = vadd.f32 %v614, %v632
    %v686 = vadd.f32 %v615, %v632
    %v687 = vadd.f32 %v616, %v632
    %v688 = vadd.f32 %v617, %v632
    %v689 = vadd.f32 %v618, %v632
    %v690 = vadd.f32 %v619, %v632
    %v691 = vadd.f32 %v620, %v632
    %v692 = vadd.f32 %v621, %v632
    %v693 = vadd.f32 %v622, %v632
    %v694 = vadd.f32 %v623, %v632
    %v695 = vadd.f32 %v624, %v632
    %v696 = vadd.f32 %v625, %v632
    %v697 = vadd.f32 %v626, %v632
    %v698 = vmax.f32 %v634, 0.0
    %v699 = vmax.f32 %v635, 0.0
    %v700 = vmax.f32 %v636, 0.0
    %v701 = vmax.f32 %v637, 0.0
    %v702 = vmax.f32 %v638, 0.0
    %v703 = vmax.f32 %v639, 0.0
    %v704 = vmax.f32 %v640, 0.0
    %v705 = vmax.f32 %v641, 0.0
    %v706 = vmax.f32 %v642, 0.0
    %v707 = vmax.f32 %v643, 0.0
    %v708 = vmax.f32 %v644, 0.0
    %v709 = vmax.f32 %v645, 0.0
    %v710 = vmax.f32 %v646, 0.0
    %v711 = vmax.f32 %v647, 0.0
    %v712 = vmax.f32 %v648, 0.0
    %v713 = vmax.f32 %v649, 0.0
    %v714 = vmax.f32 %v650, 0.0
    %v715 = vmax.f32 %v651, 0.0
    %v716 = vmax.f32 %v652, 0.0
    %v717 = vmax.f32 %v653, 0.0
    %v718 = vmax.f32 %v654, 0.0
    %v719 = vmax.f32 %v655, 0.0
    %v720 = vmax.f32 %v656, 0.0
    %v721 = vmax.f32 %v657, 0.0
    %v722 = vmax.f32 %v658, 0.0
    %v723 = vmax.f32 %v659, 0.0
    %v724 = vmax.f32 %v660, 0.0
    %v725 = vmax.f32 %v661, 0.0
    %v726 = vmax.f32 %v662, 0.0
    %v727 = vmax.f32 %v663, 0.0
    %v728 = vmax.f32 %v664, 0.0
    %v729 = vmax.f32 %v665, 0.0
    %v730 = vmax.f32 %v666, 0.0
    %v731 = vmax.f32 %v667, 0.0
    %v732 = vmax.f32 %v668, 0.0
    %v733 = vmax.f32 %v669, 0.0
    %v734 = vmax.f32 %v670, 0.0
    %v735 = vmax.f32 %v671, 0.0
    %v736 = vmax.f32 %v672, 0.0
    %v737 = vmax.f32 %v673, 0.0
    %v738 = vmax.f32 %v674, 0.0
    %v739 = vmax.f32 %v675, 0.0
    %v740 = vmax.f32 %v676, 0.0
    %v741 = vmax.f32 %v677, 0.0
    %v742 = vmax.f32 %v678, 0.0
    %v743 = vmax.f32 %v679, 0.0
    %v744 = vmax.f32 %v680, 0.0
    %v745 = vmax.f32 %v681, 0.0
    %v746 = vmax.f32 %v682, 0.0
    %v747 = vmax.f32 %v683, 0.0
    %v748 = vmax.f32 %v684, 0.0
    %v749 = vmax.f32 %v685, 0.0
    %v750 = vmax.f32 %v686, 0.0
    %v751 = vmax.f32 %v687, 0.0
    %v752 = vmax.f32 %v688, 0.0
    %v753 = vmax.f32 %v689, 0.0
    %v754 = vmax.f32 %v690, 0.0
    %v755 = vmax.f32 %v691, 0.0
    %v756 = vmax.f32 %v692, 0.0
    %v757 = vmax.f32 %v693, 0.0
    %v758 = vmax.f32 %v694, 0.0
    %v759 = vmax.f32 %v695, 0.0
    %v760 = vmax.f32 %v696, 0.0
    %v761 = vmax.f32 %v697, 0.0
    %s762 = scalar_lea.vmem [#allocation2], 16
    %763 = vst [vmem:[%s762] sm:$0xff] %v698
    %764 = vst [vmem:[%s762 + $0x8] sm:$0xff] %v699
    %765 = vst [vmem:[%s762 + $0x10] sm:$0xff] %v700
    %766 = vst [vmem:[%s762 + $0x18] sm:$0xff] %v701
    %767 = vst [vmem:[%s762 + $0x20] sm:$0xff] %v702
    %768 = vst [vmem:[%s762 + $0x28] sm:$0xff] %v703
    %769 = vst [vmem:[%s762 + $0x30] sm:$0xff] %v704
    %770 = vst [vmem:[%s762 + $0x38] sm:$0xff] %v705
    %771 = vst [vmem:[%s762 + $0x40] sm:$0xff] %v706
    %772 = vst [vmem:[%s762 + $0x48] sm:$0xff] %v707
    %773 = vst [vmem:[%s762 + $0x50] sm:$0xff] %v708
    %774 = vst [vmem:[%s762 + $0x58] sm:$0xff] %v709
    %775 = vst [vmem:[%s762 + $0x60] sm:$0xff] %v710
    %776 = vst [vmem:[%s762 + $0x68] sm:$0xff] %v711
    %777 = vst [vmem:[%s762 + $0x70] sm:$0xff] %v712
    %778 = vst [vmem:[%s762 + $0x78] sm:$0xff] %v713
    %779 = vst [vmem:[%s762 + $0x80] sm:$0xff] %v714
    %780 = vst [vmem:[%s762 + $0x88] sm:$0xff] %v715
    %781 = vst [vmem:[%s762 + $0x90] sm:$0xff] %v716
    %782 = vst [vmem:[%s762 + $0x98] sm:$0xff] %v717
    %783 = vst [vmem:[%s762 + $0xa0] sm:$0xff] %v718
    %784 = vst [vmem:[%s762 + $0xa8] sm:$0xff] %v719
    %785 = vst [vmem:[%s762 + $0xb0] sm:$0xff] %v720
    %786 = vst [vmem:[%s762 + $0xb8] sm:$0xff] %v721
    %787 = vst [vmem:[%s762 + $0xc0] sm:$0xff] %v722
    %788 = vst [vmem:[%s762 + $0xc8] sm:$0xff] %v723
    %789 = vst [vmem:[%s762 + $0xd0] sm:$0xff] %v724
    %790 = vst [vmem:[%s762 + $0xd8] sm:$0xff] %v725
    %791 = vst [vmem:[%s762 + $0xe0] sm:$0xff] %v726
    %792 = vst [vmem:[%s762 + $0xe8] sm:$0xff] %v727
    %793 = vst [vmem:[%s762 + $0xf0] sm:$0xff] %v728
    %794 = vst [vmem:[%s762 + $0xf8] sm:$0xff] %v729
    %795 = vst [vmem:[%s762 + $0x120] sm:$0xff] %v730
    %796 = vst [vmem:[%s762 + $0x128] sm:$0xff] %v731
    %797 = vst [vmem:[%s762 + $0x130] sm:$0xff] %v732
    %798 = vst [vmem:[%s762 + $0x138] sm:$0xff] %v733
    %799 = vst [vmem:[%s762 + $0x140] sm:$0xff] %v734
    %800 = vst [vmem:[%s762 + $0x148] sm:$0xff] %v735
    %801 = vst [vmem:[%s762 + $0x150] sm:$0xff] %v736
    %802 = vst [vmem:[%s762 + $0x158] sm:$0xff] %v737
    %803 = vst [vmem:[%s762 + $0x160] sm:$0xff] %v738
    %804 = vst [vmem:[%s762 + $0x168] sm:$0xff] %v739
    %805 = vst [vmem:[%s762 + $0x170] sm:$0xff] %v740
    %806 = vst [vmem:[%s762 + $0x178] sm:$0xff] %v741
    %807 = vst [vmem:[%s762 + $0x180] sm:$0xff] %v742
    %808 = vst [vmem:[%s762 + $0x188] sm:$0xff] %v743
    %809 = vst [vmem:[%s762 + $0x190] sm:$0xff] %v744
    %810 = vst [vmem:[%s762 + $0x198] sm:$0xff] %v745
    %811 = vst [vmem:[%s762 + $0x1a0] sm:$0xff] %v746
    %812 = vst [vmem:[%s762 + $0x1a8] sm:$0xff] %v747
    %813 = vst [vmem:[%s762 + $0x1b0] sm:$0xff] %v748
    %814 = vst [vmem:[%s762 + $0x1b8] sm:$0xff] %v749
    %815 = vst [vmem:[%s762 + $0x1c0] sm:$0xff] %v750
    %816 = vst [vmem:[%s762 + $0x1c8] sm:$0xff] %v751
    %817 = vst [vmem:[%s762 + $0x1d0] sm:$0xff] %v752
    %818 = vst [vmem:[%s762 + $0x1d8] sm:$0xff] %v753
    %819 = vst [vmem:[%s762 + $0x1e0] sm:$0xff] %v754
    %820 = vst [vmem:[%s762 + $0x1e8] sm:$0xff] %v755
    %821 = vst [vmem:[%s762 + $0x1f0] sm:$0xff] %v756
    %822 = vst [vmem:[%s762 + $0x1f8] sm:$0xff] %v757
    %823 = vst [vmem:[%s762 + $0x200] sm:$0xff] %v758
    %824 = vst [vmem:[%s762 + $0x208] sm:$0xff] %v759
    %825 = vst [vmem:[%s762 + $0x210] sm:$0xff] %v760
    %826 = vst [vmem:[%s762 + $0x218] sm:$0xff] %v761
    %827 = vst [vmem:[#allocation2] sm:$0xff] 0.0
    %828 = vst [vmem:[#allocation2 + $0x8] sm:$0xff] 0.0
    %829 = vst [vmem:[#allocation2 + $0x120] sm:$0xff] 0.0
    %830 = vst [vmem:[#allocation2 + $0x128] sm:$0xff] 0.0
    %s831 = scalar_lea.vmem [#allocation2], 272
    %832 = vst [vmem:[%s831] sm:$0xff] 0.0
    %833 = vst [vmem:[%s831 + $0x8] sm:$0xff] 0.0
    %834 = vst [vmem:[%s831 + $0x120] sm:$0xff] 0.0
    %835 = vst [vmem:[%s831 + $0x128] sm:$0xff] 0.0
    %v836 = vld [vmem:[#allocation2] sm:$0xff]
    %v837 = vld [vmem:[#allocation2 + $0x8] sm:$0xff]
    %v838 = vld [vmem:[#allocation2 + $0x10] sm:$0xff]
    %v839 = vld [vmem:[#allocation2 + $0x18] sm:$0xff]
    %v840 = vld [vmem:[#allocation2 + $0x20] sm:$0xff]
    %v841 = vld [vmem:[#allocation2 + $0x28] sm:$0xff]
    %v842 = vld [vmem:[#allocation2 + $0x30] sm:$0xff]
    %v843 = vld [vmem:[#allocation2 + $0x38] sm:$0xff]
    %v844 = vld [vmem:[#allocation2 + $0x40] sm:$0xff]
    %v845 = vld [vmem:[#allocation2 + $0x48] sm:$0xff]
    %v846 = vld [vmem:[#allocation2 + $0x50] sm:$0xff]
    %v847 = vld [vmem:[#allocation2 + $0x58] sm:$0xff]
    %v848 = vld [vmem:[#allocation2 + $0x60] sm:$0xff]
    %v849 = vld [vmem:[#allocation2 + $0x68] sm:$0xff]
    %v850 = vld [vmem:[#allocation2 + $0x70] sm:$0xff]
    %v851 = vld [vmem:[#allocation2 + $0x78] sm:$0xff]
    %v852 = vld [vmem:[#allocation2 + $0x80] sm:$0xff]
    %v853 = vld [vmem:[#allocation2 + $0x88] sm:$0xff]
    %v854 = vld [vmem:[#allocation2 + $0x90] sm:$0xff]
    %v855 = vld [vmem:[#allocation2 + $0x98] sm:$0xff]
    %v856 = vld [vmem:[#allocation2 + $0xa0] sm:$0xff]
    %v857 = vld [vmem:[#allocation2 + $0xa8] sm:$0xff]
    %v858 = vld [vmem:[#allocation2 + $0xb0] sm:$0xff]
    %v859 = vld [vmem:[#allocation2 + $0xb8] sm:$0xff]
    %v860 = vld [vmem:[#allocation2 + $0xc0] sm:$0xff]
    %v861 = vld [vmem:[#allocation2 + $0xc8] sm:$0xff]
    %v862 = vld [vmem:[#allocation2 + $0xd0] sm:$0xff]
    %v863 = vld [vmem:[#allocation2 + $0xd8] sm:$0xff]
    %v864 = vld [vmem:[#allocation2 + $0xe0] sm:$0xff]
    %v865 = vld [vmem:[#allocation2 + $0xe8] sm:$0xff]
    %v866 = vld [vmem:[#allocation2 + $0xf0] sm:$0xff]
    %v867 = vld [vmem:[#allocation2 + $0xf8] sm:$0xff]
    %v868 = vld [vmem:[#allocation2 + $0x100] sm:$0xff]
    %v869 = vld [vmem:[#allocation2 + $0x108] sm:$0xff]
    %v870 = vld [vmem:[#allocation2 + $0x110] sm:$0xff]
    %v871 = vld [vmem:[#allocation2 + $0x118] sm:$0xff]
    %v872 = vld [vmem:[#allocation2 + $0x120] sm:$0xff]
    %v873 = vld [vmem:[#allocation2 + $0x128] sm:$0xff]
    %v874 = vld [vmem:[#allocation2 + $0x130] sm:$0xff]
    %v875 = vld [vmem:[#allocation2 + $0x138] sm:$0xff]
    %v876 = vld [vmem:[#allocation2 + $0x140] sm:$0xff]
    %v877 = vld [vmem:[#allocation2 + $0x148] sm:$0xff]
    %v878 = vld [vmem:[#allocation2 + $0x150] sm:$0xff]
    %v879 = vld [vmem:[#allocation2 + $0x158] sm:$0xff]
    %v880 = vld [vmem:[#allocation2 + $0x160] sm:$0xff]
    %v881 = vld [vmem:[#allocation2 + $0x168] sm:$0xff]
    %v882 = vld [vmem:[#allocation2 + $0x170] sm:$0xff]
    %v883 = vld [vmem:[#allocation2 + $0x178] sm:$0xff]
    %v884 = vld [vmem:[#allocation2 + $0x180] sm:$0xff]
    %v885 = vld [vmem:[#allocation2 + $0x188] sm:$0xff]
    %v886 = vld [vmem:[#allocation2 + $0x190] sm:$0xff]
    %v887 = vld [vmem:[#allocation2 + $0x198] sm:$0xff]
    %v888 = vld [vmem:[#allocation2 + $0x1a0] sm:$0xff]
    %v889 = vld [vmem:[#allocation2 + $0x1a8] sm:$0xff]
    %v890 = vld [vmem:[#allocation2 + $0x1b0] sm:$0xff]
    %v891 = vld [vmem:[#allocation2 + $0x1b8] sm:$0xff]
    %v892 = vld [vmem:[#allocation2 + $0x1c0] sm:$0xff]
    %v893 = vld [vmem:[#allocation2 + $0x1c8] sm:$0xff]
    %v894 = vld [vmem:[#allocation2 + $0x1d0] sm:$0xff]
    %v895 = vld [vmem:[#allocation2 + $0x1d8] sm:$0xff]
    %v896 = vld [vmem:[#allocation2 + $0x1e0] sm:$0xff]
    %v897 = vld [vmem:[#allocation2 + $0x1e8] sm:$0xff]
    %v898 = vld [vmem:[#allocation2 + $0x1f0] sm:$0xff]
    %v899 = vld [vmem:[#allocation2 + $0x1f8] sm:$0xff]
    %v900 = vld [vmem:[#allocation2 + $0x200] sm:$0xff]
    %v901 = vld [vmem:[#allocation2 + $0x208] sm:$0xff]
    %v902 = vld [vmem:[#allocation2 + $0x210] sm:$0xff]
    %v903 = vld [vmem:[#allocation2 + $0x218] sm:$0xff]
    %v904 = vld [vmem:[#allocation2 + $0x220] sm:$0xff]
    %v905 = vld [vmem:[#allocation2 + $0x228] sm:$0xff]
    %v906 = vld [vmem:[#allocation2 + $0x230] sm:$0xff]
    %v907 = vld [vmem:[#allocation2 + $0x238] sm:$0xff]
    %v908 = vlaneseq
    %v909 = vshrl.u32 %v908, 7
    %v910 = vadd.s32 %v909, 8
    %v911 = vrot.slane %v836, 7
    %v912 = vrot.slane %v838, 7
    %v913 = vrot.slane %v840, 7
    %v914 = vrot.slane %v842, 7
    %v915 = vrot.slane %v844, 7
    %v916 = vrot.slane %v846, 7
    %v917 = vrot.slane %v848, 7
    %v918 = vrot.slane %v850, 7
    %v919 = vrot.slane %v852, 7
    %v920 = vrot.slane %v854, 7
    %v921 = vrot.slane %v856, 7
    %v922 = vrot.slane %v858, 7
    %v923 = vrot.slane %v860, 7
    %v924 = vrot.slane %v862, 7
    %v925 = vrot.slane %v864, 7
    %v926 = vrot.slane %v866, 7
    %v927 = vrot.slane %v868, 7
    %v928 = vrot.slane %v870, 7
    %v929 = vrot.slane %v872, 7
    %v930 = vrot.slane %v874, 7
    %v931 = vrot.slane %v876, 7
    %v932 = vrot.slane %v878, 7
    %v933 = vrot.slane %v880, 7
    %v934 = vrot.slane %v882, 7
    %v935 = vrot.slane %v884, 7
    %v936 = vrot.slane %v886, 7
    %v937 = vrot.slane %v888, 7
    %v938 = vrot.slane %v890, 7
    %v939 = vrot.slane %v892, 7
    %v940 = vrot.slane %v894, 7
    %v941 = vrot.slane %v896, 7
    %v942 = vrot.slane %v898, 7
    %v943 = vrot.slane %v900, 7
    %v944 = vrot.slane %v902, 7
    %v945 = vrot.slane %v904, 7
    %v946 = vrot.slane %v906, 7
    %v947 = vrot.slane %v837, 7
    %v948 = vrot.slane %v839, 7
    %v949 = vrot.slane %v841, 7
    %v950 = vrot.slane %v843, 7
    %v951 = vrot.slane %v845, 7
    %v952 = vrot.slane %v847, 7
    %v953 = vrot.slane %v849, 7
    %v954 = vrot.slane %v851, 7
    %v955 = vrot.slane %v853, 7
    %v956 = vrot.slane %v855, 7
    %v957 = vrot.slane %v857, 7
    %v958 = vrot.slane %v859, 7
    %v959 = vrot.slane %v861, 7
    %v960 = vrot.slane %v863, 7
    %v961 = vrot.slane %v865, 7
    %v962 = vrot.slane %v867, 7
    %v963 = vrot.slane %v869, 7
    %v964 = vrot.slane %v871, 7
    %v965 = vrot.slane %v873, 7
    %v966 = vrot.slane %v875, 7
    %v967 = vrot.slane %v877, 7
    %v968 = vrot.slane %v879, 7
    %v969 = vrot.slane %v881, 7
    %v970 = vrot.slane %v883, 7
    %v971 = vrot.slane %v885, 7
    %v972 = vrot.slane %v887, 7
    %v973 = vrot.slane %v889, 7
    %v974 = vrot.slane %v891, 7
    %v975 = vrot.slane %v893, 7
    %v976 = vrot.slane %v895, 7
    %v977 = vrot.slane %v897, 7
    %v978 = vrot.slane %v899, 7
    %v979 = vrot.slane %v901, 7
    %v980 = vrot.slane %v903, 7
    %v981 = vrot.slane %v905, 7
    %v982 = vrot.slane %v907, 7
    %vm983 = vcmp.lt.s32.totalorder %v909, 1
    %v984 = vsel %vm983, %v911, %v947
    %v985 = vsel %vm983, %v912, %v948
    %v986 = vsel %vm983, %v913, %v949
    %v987 = vsel %vm983, %v914, %v950
    %v988 = vsel %vm983, %v915, %v951
    %v989 = vsel %vm983, %v916, %v952
    %v990 = vsel %vm983, %v917, %v953
    %v991 = vsel %vm983, %v918, %v954
    %v992 = vsel %vm983, %v919, %v955
    %v993 = vsel %vm983, %v920, %v956
    %v994 = vsel %vm983, %v921, %v957
    %v995 = vsel %vm983, %v922, %v958
    %v996 = vsel %vm983, %v923, %v959
    %v997 = vsel %vm983, %v924, %v960
    %v998 = vsel %vm983, %v925, %v961
    %v999 = vsel %vm983, %v926, %v962
    %v1000 = vsel %vm983, %v927, %v963
    %v1001 = vsel %vm983, %v928, %v964
    %v1002 = vsel %vm983, %v929, %v965
    %v1003 = vsel %vm983, %v930, %v966
    %v1004 = vsel %vm983, %v931, %v967
    %v1005 = vsel %vm983, %v932, %v968
    %v1006 = vsel %vm983, %v933, %v969
    %v1007 = vsel %vm983, %v934, %v970
    %v1008 = vsel %vm983, %v935, %v971
    %v1009 = vsel %vm983, %v936, %v972
    %v1010 = vsel %vm983, %v937, %v973
    %v1011 = vsel %vm983, %v938, %v974
    %v1012 = vsel %vm983, %v939, %v975
    %v1013 = vsel %vm983, %v940, %v976
    %v1014 = vsel %vm983, %v941, %v977
    %v1015 = vsel %vm983, %v942, %v978
    %v1016 = vsel %vm983, %v943, %v979
    %v1017 = vsel %vm983, %v944, %v980
    %v1018 = vsel %vm983, %v945, %v981
    %v1019 = vsel %vm983, %v946, %v982
    %v1020 = vsel %vm983, %v947, %v911
    %v1021 = vsel %vm983, %v948, %v912
    %v1022 = vsel %vm983, %v949, %v913
    %v1023 = vsel %vm983, %v950, %v914
    %v1024 = vsel %vm983, %v951, %v915
    %v1025 = vsel %vm983, %v952, %v916
    %v1026 = vsel %vm983, %v953, %v917
    %v1027 = vsel %vm983, %v954, %v918
    %v1028 = vsel %vm983, %v955, %v919
    %v1029 = vsel %vm983, %v956, %v920
    %v1030 = vsel %vm983, %v957, %v921
    %v1031 = vsel %vm983, %v958, %v922
    %v1032 = vsel %vm983, %v959, %v923
    %v1033 = vsel %vm983, %v960, %v924
    %v1034 = vsel %vm983, %v961, %v925
    %v1035 = vsel %vm983, %v962, %v926
    %v1036 = vsel %vm983, %v963, %v927
    %v1037 = vsel %vm983, %v964, %v928
    %v1038 = vsel %vm983, %v965, %v929
    %v1039 = vsel %vm983, %v966, %v930
    %v1040 = vsel %vm983, %v967, %v931
    %v1041 = vsel %vm983, %v968, %v932
    %v1042 = vsel %vm983, %v969, %v933
    %v1043 = vsel %vm983, %v970, %v934
    %v1044 = vsel %vm983, %v971, %v935
    %v1045 = vsel %vm983, %v972, %v936
    %v1046 = vsel %vm983, %v973, %v937
    %v1047 = vsel %vm983, %v974, %v938
    %v1048 = vsel %vm983, %v975, %v939
    %v1049 = vsel %vm983, %v976, %v940
    %v1050 = vsel %vm983, %v977, %v941
    %v1051 = vsel %vm983, %v978, %v942
    %v1052 = vsel %vm983, %v979, %v943
    %v1053 = vsel %vm983, %v980, %v944
    %v1054 = vsel %vm983, %v981, %v945
    %v1055 = vsel %vm983, %v982, %v946
    %vm1056 = vcmp.ge.s32.totalorder %v909, 1
    %vm1057 = vcmp.ge.s32.totalorder %v910, 1
    %v1058 = vsel %vm1056, 1, 0
    %v1059 = vsel %vm1057, 1, 0
    %vm1060 = vcmp.eq.s32.totalorder %v1058, 1
    %vm1061 = vcmp.eq.s32.totalorder %v1059, 1
    %v1062 = vsel %vm1060, %v1020, 0.0
    %v1063 = vsel %vm1061, %v984, 0.0
    %v1064 = vsel %vm1060, %v1021, 0.0
    %v1065 = vsel %vm1061, %v985, 0.0
    %v1066 = vsel %vm1060, %v1022, 0.0
    %v1067 = vsel %vm1061, %v986, 0.0
    %v1068 = vsel %vm1060, %v1023, 0.0
    %v1069 = vsel %vm1061, %v987, 0.0
    %v1070 = vsel %vm1060, %v1024, 0.0
    %v1071 = vsel %vm1061, %v988, 0.0
    %v1072 = vsel %vm1060, %v1025, 0.0
    %v1073 = vsel %vm1061, %v989, 0.0
    %v1074 = vsel %vm1060, %v1026, 0.0
    %v1075 = vsel %vm1061, %v990, 0.0
    %v1076 = vsel %vm1060, %v1027, 0.0
    %v1077 = vsel %vm1061, %v991, 0.0
    %v1078 = vsel %vm1060, %v1028, 0.0
    %v1079 = vsel %vm1061, %v992, 0.0
    %v1080 = vsel %vm1060, %v1029, 0.0
    %v1081 = vsel %vm1061, %v993, 0.0
    %v1082 = vsel %vm1060, %v1030, 0.0
    %v1083 = vsel %vm1061, %v994, 0.0
    %v1084 = vsel %vm1060, %v1031, 0.0
    %v1085 = vsel %vm1061, %v995, 0.0
    %v1086 = vsel %vm1060, %v1032, 0.0
    %v1087 = vsel %vm1061, %v996, 0.0
    %v1088 = vsel %vm1060, %v1033, 0.0
    %v1089 = vsel %vm1061, %v997, 0.0
    %v1090 = vsel %vm1060, %v1034, 0.0
    %v1091 = vsel %vm1061, %v998, 0.0
    %v1092 = vsel %vm1060, %v1035, 0.0
    %v1093 = vsel %vm1061, %v999, 0.0
    %v1094 = vsel %vm1060, %v1036, 0.0
    %v1095 = vsel %vm1061, %v1000, 0.0
    %v1096 = vsel %vm1060, %v1037, 0.0
    %v1097 = vsel %vm1061, %v1001, 0.0
    %v1098 = vsel %vm1060, %v1038, 0.0
    %v1099 = vsel %vm1061, %v1002, 0.0
    %v1100 = vsel %vm1060, %v1039, 0.0
    %v1101 = vsel %vm1061, %v1003, 0.0
    %v1102 = vsel %vm1060, %v1040, 0.0
    %v1103 = vsel %vm1061, %v1004, 0.0
    %v1104 = vsel %vm1060, %v1041, 0.0
    %v1105 = vsel %vm1061, %v1005, 0.0
    %v1106 = vsel %vm1060, %v1042, 0.0
    %v1107 = vsel %vm1061, %v1006, 0.0
    %v1108 = vsel %vm1060, %v1043, 0.0
    %v1109 = vsel %vm1061, %v1007, 0.0
    %v1110 = vsel %vm1060, %v1044, 0.0
    %v1111 = vsel %vm1061, %v1008, 0.0
    %v1112 = vsel %vm1060, %v1045, 0.0
    %v1113 = vsel %vm1061, %v1009, 0.0
    %v1114 = vsel %vm1060, %v1046, 0.0
    %v1115 = vsel %vm1061, %v1010, 0.0
    %v1116 = vsel %vm1060, %v1047, 0.0
    %v1117 = vsel %vm1061, %v1011, 0.0
    %v1118 = vsel %vm1060, %v1048, 0.0
    %v1119 = vsel %vm1061, %v1012, 0.0
    %v1120 = vsel %vm1060, %v1049, 0.0
    %v1121 = vsel %vm1061, %v1013, 0.0
    %v1122 = vsel %vm1060, %v1050, 0.0
    %v1123 = vsel %vm1061, %v1014, 0.0
    %v1124 = vsel %vm1060, %v1051, 0.0
    %v1125 = vsel %vm1061, %v1015, 0.0
    %v1126 = vsel %vm1060, %v1052, 0.0
    %v1127 = vsel %vm1061, %v1016, 0.0
    %v1128 = vsel %vm1060, %v1053, 0.0
    %v1129 = vsel %vm1061, %v1017, 0.0
    %v1130 = vsel %vm1060, %v1054, 0.0
    %v1131 = vsel %vm1061, %v1018, 0.0
    %v1132 = vsel %vm1060, %v1055, 0.0
    %v1133 = vsel %vm1061, %v1019, 0.0
    %v1134 = vrot.slane %v836, 1
    %v1135 = vrot.slane %v838, 1
    %v1136 = vrot.slane %v840, 1
    %v1137 = vrot.slane %v842, 1
    %v1138 = vrot.slane %v844, 1
    %v1139 = vrot.slane %v846, 1
    %v1140 = vrot.slane %v848, 1
    %v1141 = vrot.slane %v850, 1
    %v1142 = vrot.slane %v852, 1
    %v1143 = vrot.slane %v854, 1
    %v1144 = vrot.slane %v856, 1
    %v1145 = vrot.slane %v858, 1
    %v1146 = vrot.slane %v860, 1
    %v1147 = vrot.slane %v862, 1
    %v1148 = vrot.slane %v864, 1
    %v1149 = vrot.slane %v866, 1
    %v1150 = vrot.slane %v868, 1
    %v1151 = vrot.slane %v870, 1
    %v1152 = vrot.slane %v872, 1
    %v1153 = vrot.slane %v874, 1
    %v1154 = vrot.slane %v876, 1
    %v1155 = vrot.slane %v878, 1
    %v1156 = vrot.slane %v880, 1
    %v1157 = vrot.slane %v882, 1
    %v1158 = vrot.slane %v884, 1
    %v1159 = vrot.slane %v886, 1
    %v1160 = vrot.slane %v888, 1
    %v1161 = vrot.slane %v890, 1
    %v1162 = vrot.slane %v892, 1
    %v1163 = vrot.slane %v894, 1
    %v1164 = vrot.slane %v896, 1
    %v1165 = vrot.slane %v898, 1
    %v1166 = vrot.slane %v900, 1
    %v1167 = vrot.slane %v902, 1
    %v1168 = vrot.slane %v904, 1
    %v1169 = vrot.slane %v906, 1
    %v1170 = vrot.slane %v837, 1
    %v1171 = vrot.slane %v839, 1
    %v1172 = vrot.slane %v841, 1
    %v1173 = vrot.slane %v843, 1
    %v1174 = vrot.slane %v845, 1
    %v1175 = vrot.slane %v847, 1
    %v1176 = vrot.slane %v849, 1
    %v1177 = vrot.slane %v851, 1
    %v1178 = vrot.slane %v853, 1
    %v1179 = vrot.slane %v855, 1
    %v1180 = vrot.slane %v857, 1
    %v1181 = vrot.slane %v859, 1
    %v1182 = vrot.slane %v861, 1
    %v1183 = vrot.slane %v863, 1
    %v1184 = vrot.slane %v865, 1
    %v1185 = vrot.slane %v867, 1
    %v1186 = vrot.slane %v869, 1
    %v1187 = vrot.slane %v871, 1
    %v1188 = vrot.slane %v873, 1
    %v1189 = vrot.slane %v875, 1
    %v1190 = vrot.slane %v877, 1
    %v1191 = vrot.slane %v879, 1
    %v1192 = vrot.slane %v881, 1
    %v1193 = vrot.slane %v883, 1
    %v1194 = vrot.slane %v885, 1
    %v1195 = vrot.slane %v887, 1
    %v1196 = vrot.slane %v889, 1
    %v1197 = vrot.slane %v891, 1
    %v1198 = vrot.slane %v893, 1
    %v1199 = vrot.slane %v895, 1
    %v1200 = vrot.slane %v897, 1
    %v1201 = vrot.slane %v899, 1
    %v1202 = vrot.slane %v901, 1
    %v1203 = vrot.slane %v903, 1
    %v1204 = vrot.slane %v905, 1
    %v1205 = vrot.slane %v907, 1
    %vm1206 = vcmp.lt.s32.totalorder %v909, 7
    %v1207 = vsel %vm1206, %v1134, %v1170
    %v1208 = vsel %vm1206, %v1135, %v1171
    %v1209 = vsel %vm1206, %v1136, %v1172
    %v1210 = vsel %vm1206, %v1137, %v1173
    %v1211 = vsel %vm1206, %v1138, %v1174
    %v1212 = vsel %vm1206, %v1139, %v1175
    %v1213 = vsel %vm1206, %v1140, %v1176
    %v1214 = vsel %vm1206, %v1141, %v1177
    %v1215 = vsel %vm1206, %v1142, %v1178
    %v1216 = vsel %vm1206, %v1143, %v1179
    %v1217 = vsel %vm1206, %v1144, %v1180
    %v1218 = vsel %vm1206, %v1145, %v1181
    %v1219 = vsel %vm1206, %v1146, %v1182
    %v1220 = vsel %vm1206, %v1147, %v1183
    %v1221 = vsel %vm1206, %v1148, %v1184
    %v1222 = vsel %vm1206, %v1149, %v1185
    %v1223 = vsel %vm1206, %v1150, %v1186
    %v1224 = vsel %vm1206, %v1151, %v1187
    %v1225 = vsel %vm1206, %v1152, %v1188
    %v1226 = vsel %vm1206, %v1153, %v1189
    %v1227 = vsel %vm1206, %v1154, %v1190
    %v1228 = vsel %vm1206, %v1155, %v1191
    %v1229 = vsel %vm1206, %v1156, %v1192
    %v1230 = vsel %vm1206, %v1157, %v1193
    %v1231 = vsel %vm1206, %v1158, %v1194
    %v1232 = vsel %vm1206, %v1159, %v1195
    %v1233 = vsel %vm1206, %v1160, %v1196
    %v1234 = vsel %vm1206, %v1161, %v1197
    %v1235 = vsel %vm1206, %v1162, %v1198
    %v1236 = vsel %vm1206, %v1163, %v1199
    %v1237 = vsel %vm1206, %v1164, %v1200
    %v1238 = vsel %vm1206, %v1165, %v1201
    %v1239 = vsel %vm1206, %v1166, %v1202
    %v1240 = vsel %vm1206, %v1167, %v1203
    %v1241 = vsel %vm1206, %v1168, %v1204
    %v1242 = vsel %vm1206, %v1169, %v1205
    %v1243 = vsel %vm1206, %v1170, %v1134
    %v1244 = vsel %vm1206, %v1171, %v1135
    %v1245 = vsel %vm1206, %v1172, %v1136
    %v1246 = vsel %vm1206, %v1173, %v1137
    %v1247 = vsel %vm1206, %v1174, %v1138
    %v1248 = vsel %vm1206, %v1175, %v1139
    %v1249 = vsel %vm1206, %v1176, %v1140
    %v1250 = vsel %vm1206, %v1177, %v1141
    %v1251 = vsel %vm1206, %v1178, %v1142
    %v1252 = vsel %vm1206, %v1179, %v1143
    %v1253 = vsel %vm1206, %v1180, %v1144
    %v1254 = vsel %vm1206, %v1181, %v1145
    %v1255 = vsel %vm1206, %v1182, %v1146
    %v1256 = vsel %vm1206, %v1183, %v1147
    %v1257 = vsel %vm1206, %v1184, %v1148
    %v1258 = vsel %vm1206, %v1185, %v1149
    %v1259 = vsel %vm1206, %v1186, %v1150
    %v1260 = vsel %vm1206, %v1187, %v1151
    %v1261 = vsel %vm1206, %v1188, %v1152
    %v1262 = vsel %vm1206, %v1189, %v1153
    %v1263 = vsel %vm1206, %v1190, %v1154
    %v1264 = vsel %vm1206, %v1191, %v1155
    %v1265 = vsel %vm1206, %v1192, %v1156
    %v1266 = vsel %vm1206, %v1193, %v1157
    %v1267 = vsel %vm1206, %v1194, %v1158
    %v1268 = vsel %vm1206, %v1195, %v1159
    %v1269 = vsel %vm1206, %v1196, %v1160
    %v1270 = vsel %vm1206, %v1197, %v1161
    %v1271 = vsel %vm1206, %v1198, %v1162
    %v1272 = vsel %vm1206, %v1199, %v1163
    %v1273 = vsel %vm1206, %v1200, %v1164
    %v1274 = vsel %vm1206, %v1201, %v1165
    %v1275 = vsel %vm1206, %v1202, %v1166
    %v1276 = vsel %vm1206, %v1203, %v1167
    %v1277 = vsel %vm1206, %v1204, %v1168
    %v1278 = vsel %vm1206, %v1205, %v1169
    %vm1279 = vcmp.lt.s32.totalorder %v909, 15
    %vm1280 = vcmp.lt.s32.totalorder %v910, 15
    %v1281 = vsel %vm1279, 1, 0
    %v1282 = vsel %vm1280, 1, 0
    %vm1283 = vcmp.eq.s32.totalorder %v1281, 1
    %vm1284 = vcmp.eq.s32.totalorder %v1282, 1
    %v1285 = vsel %vm1283, %v1207, 0.0
    %v1286 = vsel %vm1284, %v1243, 0.0
    %v1287 = vsel %vm1283, %v1208, 0.0
    %v1288 = vsel %vm1284, %v1244, 0.0
    %v1289 = vsel %vm1283, %v1209, 0.0
    %v1290 = vsel %vm1284, %v1245, 0.0
    %v1291 = vsel %vm1283, %v1210, 0.0
    %v1292 = vsel %vm1284, %v1246, 0.0
    %v1293 = vsel %vm1283, %v1211, 0.0
    %v1294 = vsel %vm1284, %v1247, 0.0
    %v1295 = vsel %vm1283, %v1212, 0.0
    %v1296 = vsel %vm1284, %v1248, 0.0
    %v1297 = vsel %vm1283, %v1213, 0.0
    %v1298 = vsel %vm1284, %v1249, 0.0
    %v1299 = vsel %vm1283, %v1214, 0.0
    %v1300 = vsel %vm1284, %v1250, 0.0
    %v1301 = vsel %vm1283, %v1215, 0.0
    %v1302 = vsel %vm1284, %v1251, 0.0
    %v1303 = vsel %vm1283, %v1216, 0.0
    %v1304 = vsel %vm1284, %v1252, 0.0
    %v1305 = vsel %vm1283, %v1217, 0.0
    %v1306 = vsel %vm1284, %v1253, 0.0
    %v1307 = vsel %vm1283, %v1218, 0.0
    %v1308 = vsel %vm1284, %v1254, 0.0
    %v1309 = vsel %vm1283, %v1219, 0.0
    %v1310 = vsel %vm1284, %v1255, 0.0
    %v1311 = vsel %vm1283, %v1220, 0.0
    %v1312 = vsel %vm1284, %v1256, 0.0
    %v1313 = vsel %vm1283, %v1221, 0.0
    %v1314 = vsel %vm1284, %v1257, 0.0
    %v1315 = vsel %vm1283, %v1222, 0.0
    %v1316 = vsel %vm1284, %v1258, 0.0
    %v1317 = vsel %vm1283, %v1223, 0.0
    %v1318 = vsel %vm1284, %v1259, 0.0
    %v1319 = vsel %vm1283, %v1224, 0.0
    %v1320 = vsel %vm1284, %v1260, 0.0
    %v1321 = vsel %vm1283, %v1225, 0.0
    %v1322 = vsel %vm1284, %v1261, 0.0
    %v1323 = vsel %vm1283, %v1226, 0.0
    %v1324 = vsel %vm1284, %v1262, 0.0
    %v1325 = vsel %vm1283, %v1227, 0.0
    %v1326 = vsel %vm1284, %v1263, 0.0
    %v1327 = vsel %vm1283, %v1228, 0.0
    %v1328 = vsel %vm1284, %v1264, 0.0
    %v1329 = vsel %vm1283, %v1229, 0.0
    %v1330 = vsel %vm1284, %v1265, 0.0
    %v1331 = vsel %vm1283, %v1230, 0.0
    %v1332 = vsel %vm1284, %v1266, 0.0
    %v1333 = vsel %vm1283, %v1231, 0.0
    %v1334 = vsel %vm1284, %v1267, 0.0
    %v1335 = vsel %vm1283, %v1232, 0.0
    %v1336 = vsel %vm1284, %v1268, 0.0
    %v1337 = vsel %vm1283, %v1233, 0.0
    %v1338 = vsel %vm1284, %v1269, 0.0
    %v1339 = vsel %vm1283, %v1234, 0.0
    %v1340 = vsel %vm1284, %v1270, 0.0
    %v1341 = vsel %vm1283, %v1235, 0.0
    %v1342 = vsel %vm1284, %v1271, 0.0
    %v1343 = vsel %vm1283, %v1236, 0.0
    %v1344 = vsel %vm1284, %v1272, 0.0
    %v1345 = vsel %vm1283, %v1237, 0.0
    %v1346 = vsel %vm1284, %v1273, 0.0
    %v1347 = vsel %vm1283, %v1238, 0.0
    %v1348 = vsel %vm1284, %v1274, 0.0
    %v1349 = vsel %vm1283, %v1239, 0.0
    %v1350 = vsel %vm1284, %v1275, 0.0
    %v1351 = vsel %vm1283, %v1240, 0.0
    %v1352 = vsel %vm1284, %v1276, 0.0
    %v1353 = vsel %vm1283, %v1241, 0.0
    %v1354 = vsel %vm1284, %v1277, 0.0
    %v1355 = vsel %vm1283, %v1242, 0.0
    %v1356 = vsel %vm1284, %v1278, 0.0
    %v1357 = vld [vmem:[#allocation8] sm:$0xff]
    %v1358 = vld [vmem:[#allocation8 + $0x8] sm:$0xff]
    %v1359 = vld [vmem:[#allocation8 + $0x10] sm:$0xff]
    %v1360 = vld [vmem:[#allocation8 + $0x18] sm:$0xff]
    %v1361 = vld [vmem:[#allocation8 + $0x20] sm:$0xff]
    %v1362 = vld [vmem:[#allocation8 + $0x28] sm:$0xff]
    %v1363 = vld [vmem:[#allocation8 + $0x30] sm:$0xff]
    %v1364 = vld [vmem:[#allocation8 + $0x38] sm:$0xff]
    %v1365 = vld [vmem:[#allocation8 + $0x40] sm:$0xff]
    %v1366 = vld [vmem:[#allocation8 + $0x48] sm:$0xff]
    %v1367 = vld [vmem:[#allocation8 + $0x50] sm:$0xff]
    %v1368 = vld [vmem:[#allocation8 + $0x58] sm:$0xff]
    %v1369 = vld [vmem:[#allocation8 + $0x60] sm:$0xff]
    %v1370 = vld [vmem:[#allocation8 + $0x68] sm:$0xff]
    %v1371 = vld [vmem:[#allocation8 + $0x70] sm:$0xff]
    %v1372 = vld [vmem:[#allocation8 + $0x78] sm:$0xff]
    %v1373 = vld [vmem:[#allocation8 + $0x80] sm:$0xff]
    %v1374 = vld [vmem:[#allocation8 + $0x88] sm:$0xff]
    %v1375 = vld [vmem:[#allocation8 + $0x90] sm:$0xff]
    %v1376 = vld [vmem:[#allocation8 + $0x98] sm:$0xff]
    %v1377 = vld [vmem:[#allocation8 + $0xa0] sm:$0xff]
    %v1378 = vld [vmem:[#allocation8 + $0xa8] sm:$0xff]
    %v1379 = vld [vmem:[#allocation8 + $0xb0] sm:$0xff]
    %v1380 = vld [vmem:[#allocation8 + $0xb8] sm:$0xff]
    %v1381 = vld [vmem:[#allocation8 + $0xc0] sm:$0xff]
    %v1382 = vld [vmem:[#allocation8 + $0xc8] sm:$0xff]
    %v1383 = vld [vmem:[#allocation8 + $0xd0] sm:$0xff]
    %v1384 = vld [vmem:[#allocation8 + $0xd8] sm:$0xff]
    %v1385 = vld [vmem:[#allocation8 + $0xe0] sm:$0xff]
    %v1386 = vld [vmem:[#allocation8 + $0xe8] sm:$0xff]
    %v1387 = vld [vmem:[#allocation8 + $0xf0] sm:$0xff]
    %v1388 = vld [vmem:[#allocation8 + $0xf8] sm:$0xff]
    %v1389 = vld [vmem:[#allocation8 + $0x100] sm:$0xff]
    %v1390 = vld [vmem:[#allocation8 + $0x108] sm:$0xff]
    %v1391 = vld [vmem:[#allocation8 + $0x110] sm:$0xff]
    %v1392 = vld [vmem:[#allocation8 + $0x118] sm:$0xff]
    %v1393 = vld [vmem:[#allocation8 + $0x120] sm:$0xff]
    %v1394 = vld [vmem:[#allocation8 + $0x128] sm:$0xff]
    %v1395 = vld [vmem:[#allocation8 + $0x130] sm:$0xff]
    %v1396 = vld [vmem:[#allocation8 + $0x138] sm:$0xff]
    %v1397 = vld [vmem:[#allocation8 + $0x140] sm:$0xff]
    %v1398 = vld [vmem:[#allocation8 + $0x148] sm:$0xff]
    %v1399 = vld [vmem:[#allocation8 + $0x150] sm:$0xff]
    %v1400 = vld [vmem:[#allocation8 + $0x158] sm:$0xff]
    %v1401 = vld [vmem:[#allocation8 + $0x160] sm:$0xff]
    %v1402 = vld [vmem:[#allocation8 + $0x168] sm:$0xff]
    %v1403 = vld [vmem:[#allocation8 + $0x170] sm:$0xff]
    %v1404 = vld [vmem:[#allocation8 + $0x178] sm:$0xff]
    %v1405 = vld [vmem:[#allocation8 + $0x180] sm:$0xff]
    %v1406 = vld [vmem:[#allocation8 + $0x188] sm:$0xff]
    %v1407 = vld [vmem:[#allocation8 + $0x190] sm:$0xff]
    %v1408 = vld [vmem:[#allocation8 + $0x198] sm:$0xff]
    %v1409 = vld [vmem:[#allocation8 + $0x1a0] sm:$0xff]
    %v1410 = vld [vmem:[#allocation8 + $0x1a8] sm:$0xff]
    %v1411 = vld [vmem:[#allocation8 + $0x1b0] sm:$0xff]
    %v1412 = vld [vmem:[#allocation8 + $0x1b8] sm:$0xff]
    %v1413 = vld [vmem:[#allocation8 + $0x1c0] sm:$0xff]
    %v1414 = vld [vmem:[#allocation8 + $0x1c8] sm:$0xff]
    %v1415 = vld [vmem:[#allocation8 + $0x1d0] sm:$0xff]
    %v1416 = vld [vmem:[#allocation8 + $0x1d8] sm:$0xff]
    %v1417 = vld [vmem:[#allocation8 + $0x1e0] sm:$0xff]
    %v1418 = vld [vmem:[#allocation8 + $0x1e8] sm:$0xff]
    %v1419 = vld [vmem:[#allocation8 + $0x1f0] sm:$0xff]
    %v1420 = vld [vmem:[#allocation8 + $0x1f8] sm:$0xff]
    %v1421 = vld [vmem:[#allocation8 + $0x200] sm:$0xff]
    %v1422 = vld [vmem:[#allocation8 + $0x208] sm:$0xff]
    %v1423 = vld [vmem:[#allocation8 + $0x210] sm:$0xff]
    %v1424 = vld [vmem:[#allocation8 + $0x218] sm:$0xff]
    %v1425 = vld [vmem:[#allocation8 + $0x220] sm:$0xff]
    %v1426 = vld [vmem:[#allocation8 + $0x228] sm:$0xff]
    %v1427 = vld [vmem:[#allocation8 + $0x230] sm:$0xff]
    %v1428 = vld [vmem:[#allocation8 + $0x238] sm:$0xff]
    %v1429 = vld [vmem:[#allocation8 + $0x240] sm:$0xff]
    %v1430 = vld [vmem:[#allocation8 + $0x248] sm:$0xff]
    %v1431 = vld [vmem:[#allocation8 + $0x250] sm:$0xff]
    %v1432 = vld [vmem:[#allocation8 + $0x258] sm:$0xff]
    %v1433 = vld [vmem:[#allocation8 + $0x260] sm:$0xff]
    %v1434 = vld [vmem:[#allocation8 + $0x268] sm:$0xff]
    %v1435 = vld [vmem:[#allocation8 + $0x270] sm:$0xff]
    %v1436 = vld [vmem:[#allocation8 + $0x278] sm:$0xff]
    %v1437 = vld [vmem:[#allocation8 + $0x280] sm:$0xff]
    %v1438 = vld [vmem:[#allocation8 + $0x288] sm:$0xff]
    %v1439 = vld [vmem:[#allocation8 + $0x290] sm:$0xff]
    %v1440 = vld [vmem:[#allocation8 + $0x298] sm:$0xff]
    %v1441 = vld [vmem:[#allocation8 + $0x2a0] sm:$0xff]
    %v1442 = vld [vmem:[#allocation8 + $0x2a8] sm:$0xff]
    %v1443 = vld [vmem:[#allocation8 + $0x2b0] sm:$0xff]
    %v1444 = vld [vmem:[#allocation8 + $0x2b8] sm:$0xff]
    %v1445 = vld [vmem:[#allocation8 + $0x2c0] sm:$0xff]
    %v1446 = vld [vmem:[#allocation8 + $0x2c8] sm:$0xff]
    %v1447 = vld [vmem:[#allocation8 + $0x2d0] sm:$0xff]
    %v1448 = vld [vmem:[#allocation8 + $0x2d8] sm:$0xff]
    %v1449 = vld [vmem:[#allocation8 + $0x2e0] sm:$0xff]
    %v1450 = vld [vmem:[#allocation8 + $0x2e8] sm:$0xff]
    %v1451 = vld [vmem:[#allocation8 + $0x2f0] sm:$0xff]
    %v1452 = vld [vmem:[#allocation8 + $0x2f8] sm:$0xff]
    %v1453 = vld [vmem:[#allocation8 + $0x300] sm:$0xff]
    %v1454 = vld [vmem:[#allocation8 + $0x308] sm:$0xff]
    %v1455 = vld [vmem:[#allocation8 + $0x310] sm:$0xff]
    %v1456 = vld [vmem:[#allocation8 + $0x318] sm:$0xff]
    %v1457 = vld [vmem:[#allocation8 + $0x320] sm:$0xff]
    %v1458 = vld [vmem:[#allocation8 + $0x328] sm:$0xff]
    %v1459 = vld [vmem:[#allocation8 + $0x330] sm:$0xff]
    %v1460 = vld [vmem:[#allocation8 + $0x338] sm:$0xff]
    %v1461 = vld [vmem:[#allocation8 + $0x340] sm:$0xff]
    %v1462 = vld [vmem:[#allocation8 + $0x348] sm:$0xff]
    %v1463 = vld [vmem:[#allocation8 + $0x350] sm:$0xff]
    %v1464 = vld [vmem:[#allocation8 + $0x358] sm:$0xff]
    %v1465 = vld [vmem:[#allocation8 + $0x360] sm:$0xff]
    %v1466 = vld [vmem:[#allocation8 + $0x368] sm:$0xff]
    %v1467 = vld [vmem:[#allocation8 + $0x370] sm:$0xff]
    %v1468 = vld [vmem:[#allocation8 + $0x378] sm:$0xff]
    %v1469 = vld [vmem:[#allocation8 + $0x380] sm:$0xff]
    %v1470 = vld [vmem:[#allocation8 + $0x388] sm:$0xff]
    %v1471 = vld [vmem:[#allocation8 + $0x390] sm:$0xff]
    %v1472 = vld [vmem:[#allocation8 + $0x398] sm:$0xff]
    %v1473 = vld [vmem:[#allocation8 + $0x3a0] sm:$0xff]
    %v1474 = vld [vmem:[#allocation8 + $0x3a8] sm:$0xff]
    %v1475 = vld [vmem:[#allocation8 + $0x3b0] sm:$0xff]
    %v1476 = vld [vmem:[#allocation8 + $0x3b8] sm:$0xff]
    %v1477 = vld [vmem:[#allocation8 + $0x3c0] sm:$0xff]
    %v1478 = vld [vmem:[#allocation8 + $0x3c8] sm:$0xff]
    %v1479 = vld [vmem:[#allocation8 + $0x3d0] sm:$0xff]
    %v1480 = vld [vmem:[#allocation8 + $0x3d8] sm:$0xff]
    %v1481 = vld [vmem:[#allocation8 + $0x3e0] sm:$0xff]
    %v1482 = vld [vmem:[#allocation8 + $0x3e8] sm:$0xff]
    %v1483 = vld [vmem:[#allocation8 + $0x3f0] sm:$0xff]
    %v1484 = vld [vmem:[#allocation8 + $0x3f8] sm:$0xff]
    %v1485 = vld [vmem:[#allocation8 + $0x400] sm:$0xff]
    %v1486 = vld [vmem:[#allocation8 + $0x408] sm:$0xff]
    %v1487 = vld [vmem:[#allocation8 + $0x410] sm:$0xff]
    %v1488 = vld [vmem:[#allocation8 + $0x418] sm:$0xff]
    %v1489 = vld [vmem:[#allocation8 + $0x420] sm:$0xff]
    %v1490 = vld [vmem:[#allocation8 + $0x428] sm:$0xff]
    %v1491 = vld [vmem:[#allocation8 + $0x430] sm:$0xff]
    %v1492 = vld [vmem:[#allocation8 + $0x438] sm:$0xff]
    %v1493 = vld [vmem:[#allocation8 + $0x440] sm:$0xff]
    %v1494 = vld [vmem:[#allocation8 + $0x448] sm:$0xff]
    %v1495 = vld [vmem:[#allocation8 + $0x450] sm:$0xff]
    %v1496 = vld [vmem:[#allocation8 + $0x458] sm:$0xff]
    %v1497 = vld [vmem:[#allocation8 + $0x460] sm:$0xff]
    %v1498 = vld [vmem:[#allocation8 + $0x468] sm:$0xff]
    %v1499 = vld [vmem:[#allocation8 + $0x470] sm:$0xff]
    %v1500 = vld [vmem:[#allocation8 + $0x478] sm:$0xff]
    %1501 = vmatprep.subr.mxu0 0.0
    %1502 = vmatpush1.msra.mxu0 %v1357
    %1503 = vmatprep.subr.mxu0 0.0
    %1504 = vmatpush1.msra.mxu0 %v1358
    %1505 = vmatprep.subr.mxu0 0.0
    %1506 = vmatpush1.msra.mxu0 %v1359
    %1507 = vmatprep.subr.mxu0 0.0
    %1508 = vmatpush1.msra.mxu0 %v1360
    %1509 = vmatprep.subr.mxu0 0.0
    %1510 = vmatpush1.msra.mxu0 %v1361
    %1511 = vmatprep.subr.mxu0 0.0
    %1512 = vmatpush1.msra.mxu0 %v1362
    %1513 = vmatprep.subr.mxu0 0.0
    %1514 = vmatpush1.msra.mxu0 %v1363
    %1515 = vmatprep.subr.mxu0 0.0
    %1516 = vmatpush1.msra.mxu0 %v1364
    %1517 = vmatprep.subr.mxu0 0.0
    %1518 = vmatpush1.msra.mxu0 %v1365
    %1519 = vmatprep.subr.mxu0 0.0
    %1520 = vmatpush1.msra.mxu0 %v1366
    %1521 = vmatprep.subr.mxu0 0.0
    %1522 = vmatpush1.msra.mxu0 %v1367
    %1523 = vmatprep.subr.mxu0 0.0
    %1524 = vmatpush1.msra.mxu0 %v1368
    %1525 = vmatprep.subr.mxu0 0.0
    %1526 = vmatpush1.msra.mxu0 %v1369
    %1527 = vmatprep.subr.mxu0 0.0
    %1528 = vmatpush1.msra.mxu0 %v1370
    %1529 = vmatprep.subr.mxu0 0.0
    %1530 = vmatpush1.msra.mxu0 %v1371
    %1531 = vmatprep.subr.mxu0 0.0
    %1532 = vmatpush1.msra.mxu0 %v1372
    %1533 = vmatprep.subr.mxu0 0.0
    %1534 = vmatpush1.msra.mxu0 %v1373
    %1535 = vmatprep.subr.mxu0 0.0
    %1536 = vmatpush1.msra.mxu0 %v1374
    %1537 = vmatprep.subr.mxu0 0.0
    %1538 = vmatpush1.msra.mxu0 %v1375
    %1539 = vmatprep.subr.mxu0 0.0
    %1540 = vmatpush1.msra.mxu0 %v1376
    %1541 = vmatprep.subr.mxu0 0.0
    %1542 = vmatpush1.msra.mxu0 %v1377
    %1543 = vmatprep.subr.mxu0 0.0
    %1544 = vmatpush1.msra.mxu0 %v1378
    %1545 = vmatprep.subr.mxu0 0.0
    %1546 = vmatpush1.msra.mxu0 %v1379
    %1547 = vmatprep.subr.mxu0 0.0
    %1548 = vmatpush1.msra.mxu0 %v1380
    %1549 = vmatprep.subr.mxu0 0.0
    %1550 = vmatpush1.msra.mxu0 %v1381
    %1551 = vmatprep.subr.mxu0 0.0
    %1552 = vmatpush1.msra.mxu0 %v1382
    %1553 = vmatprep.subr.mxu0 0.0
    %1554 = vmatpush1.msra.mxu0 %v1383
    %1555 = vmatprep.subr.mxu0 0.0
    %1556 = vmatpush1.msra.mxu0 %v1384
    %1557 = vmatprep.subr.mxu0 0.0
    %1558 = vmatpush1.msra.mxu0 %v1385
    %1559 = vmatprep.subr.mxu0 0.0
    %1560 = vmatpush1.msra.mxu0 %v1386
    %1561 = vmatprep.subr.mxu0 0.0
    %1562 = vmatpush1.msra.mxu0 %v1387
    %1563 = vmatprep.subr.mxu0 0.0
    %1564 = vmatpush1.msra.mxu0 %v1388
    %1565 = vmatprep.mubr.f32.mxu0 %v836
    %1566 = vmatmul.mubr.f32.gmra.mrb[0].mxu0 %v1062
    %v1567 = vpop.f32.mrb[0].mxu0
    %v1568 = vadd.f32 0.0, %v1567
    %v1569 = vpop.f32.mrb[0].mxu0
    %1570 = vmatprep.mubr.f32.mxu0 %v837
    %1571 = vmatmul.mubr.f32.gmra.mrb[0].mxu0 %v1063
    %v1572 = vpop.f32.mrb[0].mxu0
    %v1573 = vadd.f32 0.0, %v1572
    %v1574 = vpop.f32.mrb[0].mxu0
    %1575 = vmatprep.mubr.f32.mxu0 %v838
    %1576 = vmatmul.mubr.f32.gmra.mrb[0].mxu0 %v1064
    %v1577 = vpop.f32.mrb[0].mxu0
    %v1578 = vadd.f32 0.0, %v1577
    %v1579 = vpop.f32.mrb[0].mxu0
    %1580 = vmatprep.mubr.f32.mxu0 %v839
    %1581 = vmatmul.mubr.f32.gmra.mrb[0].mxu0 %v1065
    %v1582 = vpop.f32.mrb[0].mxu0
    %v1583 = vadd.f32 0.0, %v1582
    %v1584 = vpop.f32.mrb[0].mxu0
    %1585 = vmatprep.mubr.f32.mxu0 %v840
    %1586 = vmatmul.mubr.f32.gmra.mrb[0].mxu0 %v1066
    %v1587 = vpop.f32.mrb[0].mxu0
    %v1588 = vadd.f32 0.0, %v1587
    %v1589 = vpop.f32.mrb[0].mxu0
    %1590 = vmatprep.mubr.f32.mxu0 %v841
    %1591 = vmatmul.mubr.f32.gmra.mrb[0].mxu0 %v1067
    %v1592 = vpop.f32.mrb[0].mxu0
    %v1593 = vadd.f32 0.0, %v1592
    %v1594 = vpop.f32.mrb[0].mxu0
    %1595 = vmatprep.mubr.f32.mxu0 %v842
    %1596 = vmatmul.mubr.f32.gmra.mrb[0].mxu0 %v1068
    %v1597 = vpop.f32.mrb[0].mxu0
    %v1598 = vadd.f32 0.0, %v1597
    %v1599 = vpop.f32.mrb[0].mxu0
    %1600 = vmatprep.mubr.f32.mxu0 %v843
    %1601 = vmatmul.mubr.f32.gmra.mrb[0].mxu0 %v1069
    %v1602 = vpop.f32.mrb[0].mxu0
    %v1603 = vadd.f32 0.0, %v1602
    %v1604 = vpop.f32.mrb[0].mxu0
    %1605 = vmatprep.mubr.f32.mxu0 %v844
    %1606 = vmatmul.mubr.f32.gmra.mrb[0].mxu0 %v1070
    %v1607 = vpop.f32.mrb[0].mxu0
    %v1608 = vadd.f32 0.0, %v1607
    %v1609 = vpop.f32.mrb[0].mxu0
    %1610 = vmatprep.mubr.f32.mxu0 %v845
    %1611 = vmatmul.mubr.f32.gmra.mrb[0].mxu0 %v1071
    %v1612 = vpop.f32.mrb[0].mxu0
    %v1613 = vadd.f32 0.0, %v1612
    %v1614 = vpop.f32.mrb[0].mxu0
    %1615 = vmatprep.mubr.f32.mxu0 %v846
    %1616 = vmatmul.mubr.f32.gmra.mrb[0].mxu0 %v1072
    %v1617 = vpop.f32.mrb[0].mxu0
    %v1618 = vadd.f32 0.0, %v1617
    %v1619 = vpop.f32.mrb[0].mxu0
    %1620 = vmatprep.mubr.f32.mxu0 %v847
    %1621 = vmatmul.mubr.f32.gmra.mrb[0].mxu0 %v1073
    %v1622 = vpop.f32.mrb[0].mxu0
    %v1623 = vadd.f32 0.0, %v1622
    %v1624 = vpop.f32.mrb[0].mxu0
    %1625 = vmatprep.mubr.f32.mxu0 %v848
    %1626 = vmatmul.mubr.f32.gmra.mrb[0].mxu0 %v1074
    %v1627 = vpop.f32.mrb[0].mxu0
    %v1628 = vadd.f32 0.0, %v1627
    %v1629 = vpop.f32.mrb[0].mxu0
    %1630 = vmatprep.mubr.f32.mxu0 %v849
    %1631 = vmatmul.mubr.f32.gmra.mrb[0].mxu0 %v1075
    %v1632 = vpop.f32.mrb[0].mxu0
    %v1633 = vadd.f32 0.0, %v1632
    %v1634 = vpop.f32.mrb[0].mxu0
    %1635 = vmatprep.mubr.f32.mxu0 %v850
    %1636 = vmatmul.mubr.f32.gmra.mrb[0].mxu0 %v1076
    %v1637 = vpop.f32.mrb[0].mxu0
    %v1638 = vadd.f32 0.0, %v1637
    %v1639 = vpop.f32.mrb[0].mxu0
    %1640 = vmatprep.mubr.f32.mxu0 %v851
    %1641 = vmatmul.mubr.f32.gmra.mrb[0].mxu0 %v1077
    %v1642 = vpop.f32.mrb[0].mxu0
    %v1643 = vadd.f32 0.0, %v1642
    %v1644 = vpop.f32.mrb[0].mxu0
    %1645 = vmatprep.mubr.f32.mxu0 %v852
    %1646 = vmatmul.mubr.f32.gmra.mrb[0].mxu0 %v1078
    %v1647 = vpop.f32.mrb[0].mxu0
    %v1648 = vadd.f32 0.0, %v1647
    %v1649 = vpop.f32.mrb[0].mxu0
    %1650 = vmatprep.mubr.f32.mxu0 %v853
    %1651 = vmatmul.mubr.f32.gmra.mrb[0].mxu0 %v1079
    %v1652 = vpop.f32.mrb[0].mxu0
    %v1653 = vadd.f32 0.0, %v1652
    %v1654 = vpop.f32.mrb[0].mxu0
    %1655 = vmatprep.mubr.f32.mxu0 %v854
    %1656 = vmatmul.mubr.f32.gmra.mrb[0].mxu0 %v1080
    %v1657 = vpop.f32.mrb[0].mxu0
    %v1658 = vadd.f32 0.0, %v1657
    %v1659 = vpop.f32.mrb[0].mxu0
    %1660 = vmatprep.mubr.f32.mxu0 %v855
    %1661 = vmatmul.mubr.f32.gmra.mrb[0].mxu0 %v1081
    %v1662 = vpop.f32.mrb[0].mxu0
    %v1663 = vadd.f32 0.0, %v1662
    %v1664 = vpop.f32.mrb[0].mxu0
    %1665 = vmatprep.mubr.f32.mxu0 %v856
    %1666 = vmatmul.mubr.f32.gmra.mrb[0].mxu0 %v1082
    %v1667 = vpop.f32.mrb[0].mxu0
    %v1668 = vadd.f32 0.0, %v1667
    %v1669 = vpop.f32.mrb[0].mxu0
    %1670 = vmatprep.mubr.f32.mxu0 %v857
    %1671 = vmatmul.mubr.f32.gmra.mrb[0].mxu0 %v1083
    %v1672 = vpop.f32.mrb[0].mxu0
    %v1673 = vadd.f32 0.0, %v1672
    %v1674 = vpop.f32.mrb[0].mxu0
    %1675 = vmatprep.mubr.f32.mxu0 %v858
    %1676 = vmatmul.mubr.f32.gmra.mrb[0].mxu0 %v1084
    %v1677 = vpop.f32.mrb[0].mxu0
    %v1678 = vadd.f32 0.0, %v1677
    %v1679 = vpop.f32.mrb[0].mxu0
    %1680 = vmatprep.mubr.f32.mxu0 %v859
    %1681 = vmatmul.mubr.f32.gmra.mrb[0].mxu0 %v1085
    %v1682 = vpop.f32.mrb[0].mxu0
    %v1683 = vadd.f32 0.0, %v1682
    %v1684 = vpop.f32.mrb[0].mxu0
    %1685 = vmatprep.mubr.f32.mxu0 %v860
    %1686 = vmatmul.mubr.f32.gmra.mrb[0].mxu0 %v1086
    %v1687 = vpop.f32.mrb[0].mxu0
    %v1688 = vadd.f32 0.0, %v1687
    %v1689 = vpop.f32.mrb[0].mxu0
    %1690 = vmatprep.mubr.f32.mxu0 %v861
    %1691 = vmatmul.mubr.f32.gmra.mrb[0].mxu0 %v1087
    %v1692 = vpop.f32.mrb[0].mxu0
    %v1693 = vadd.f32 0.0, %v1692
    %v1694 = vpop.f32.mrb[0].mxu0
    %1695 = vmatprep.mubr.f32.mxu0 %v862
    %1696 = vmatmul.mubr.f32.gmra.mrb[0].mxu0 %v1088
    %v1697 = vpop.f32.mrb[0].mxu0
    %v1698 = vadd.f32 0.0, %v1697
    %v1699 = vpop.f32.mrb[0].mxu0
    %1700 = vmatprep.mubr.f32.mxu0 %v863
    %1701 = vmatmul.mubr.f32.gmra.mrb[0].mxu0 %v1089
    %v1702 = vpop.f32.mrb[0].mxu0
    %v1703 = vadd.f32 0.0, %v1702
    %v1704 = vpop.f32.mrb[0].mxu0
    %1705 = vmatprep.mubr.f32.mxu0 %v864
    %1706 = vmatmul.mubr.f32.gmra.mrb[0].mxu0 %v1090
    %v1707 = vpop.f32.mrb[0].mxu0
    %v1708 = vadd.f32 0.0, %v1707
    %v1709 = vpop.f32.mrb[0].mxu0
    %1710 = vmatprep.mubr.f32.mxu0 %v865
    %1711 = vmatmul.mubr.f32.gmra.mrb[0].mxu0 %v1091
    %v1712 = vpop.f32.mrb[0].mxu0
    %v1713 = vadd.f32 0.0, %v1712
    %v1714 = vpop.f32.mrb[0].mxu0
    %1715 = vmatprep.mubr.f32.mxu0 %v866
    %1716 = vmatmul.mubr.f32.gmra.mrb[0].mxu0 %v1092
    %v1717 = vpop.f32.mrb[0].mxu0
    %v1718 = vadd.f32 0.0, %v1717
    %v1719 = vpop.f32.mrb[0].mxu0
    %1720 = vmatprep.mubr.f32.mxu0 %v867
    %1721 = vmatmul.mubr.f32.gmra.mrb[0].mxu0 %v1093
    %v1722 = vpop.f32.mrb[0].mxu0
    %v1723 = vadd.f32 0.0, %v1722
    %v1724 = vpop.f32.mrb[0].mxu0
    %1725 = vmatprep.mubr.f32.mxu0 %v872
    %1726 = vmatmul.mubr.f32.gmra.mrb[0].mxu0 %v1098
    %v1727 = vpop.f32.mrb[0].mxu0
    %v1728 = vadd.f32 0.0, %v1727
    %v1729 = vpop.f32.mrb[0].mxu0
    %1730 = vmatprep.mubr.f32.mxu0 %v873
    %1731 = vmatmul.mubr.f32.gmra.mrb[0].mxu0 %v1099
    %v1732 = vpop.f32.mrb[0].mxu0
    %v1733 = vadd.f32 0.0, %v1732
    %v1734 = vpop.f32.mrb[0].mxu0
    %1735 = vmatprep.mubr.f32.mxu0 %v874
    %1736 = vmatmul.mubr.f32.gmra.mrb[0].mxu0 %v1100
    %v1737 = vpop.f32.mrb[0].mxu0
    %v1738 = vadd.f32 0.0, %v1737
    %v1739 = vpop.f32.mrb[0].mxu0
    %1740 = vmatprep.mubr.f32.mxu0 %v875
    %1741 = vmatmul.mubr.f32.gmra.mrb[0].mxu0 %v1101
    %v1742 = vpop.f32.mrb[0].mxu0
    %v1743 = vadd.f32 0.0, %v1742
    %v1744 = vpop.f32.mrb[0].mxu0
    %1745 = vmatprep.mubr.f32.mxu0 %v876
    %1746 = vmatmul.mubr.f32.gmra.mrb[0].mxu0 %v1102
    %v1747 = vpop.f32.mrb[0].mxu0
    %v1748 = vadd.f32 0.0, %v1747
    %v1749 = vpop.f32.mrb[0].mxu0
    %1750 = vmatprep.mubr.f32.mxu0 %v877
    %1751 = vmatmul.mubr.f32.gmra.mrb[0].mxu0 %v1103
    %v1752 = vpop.f32.mrb[0].mxu0
    %v1753 = vadd.f32 0.0, %v1752
    %v1754 = vpop.f32.mrb[0].mxu0
    %1755 = vmatprep.mubr.f32.mxu0 %v878
    %1756 = vmatmul.mubr.f32.gmra.mrb[0].mxu0 %v1104
    %v1757 = vpop.f32.mrb[0].mxu0
    %v1758 = vadd.f32 0.0, %v1757
    %v1759 = vpop.f32.mrb[0].mxu0
    %1760 = vmatprep.mubr.f32.mxu0 %v879
    %1761 = vmatmul.mubr.f32.gmra.mrb[0].mxu0 %v1105
    %v1762 = vpop.f32.mrb[0].mxu0
    %v1763 = vadd.f32 0.0, %v1762
    %v1764 = vpop.f32.mrb[0].mxu0
    %1765 = vmatprep.mubr.f32.mxu0 %v880
    %1766 = vmatmul.mubr.f32.gmra.mrb[0].mxu0 %v1106
    %v1767 = vpop.f32.mrb[0].mxu0
    %v1768 = vadd.f32 0.0, %v1767
    %v1769 = vpop.f32.mrb[0].mxu0
    %1770 = vmatprep.mubr.f32.mxu0 %v881
    %1771 = vmatmul.mubr.f32.gmra.mrb[0].mxu0 %v1107
    %v1772 = vpop.f32.mrb[0].mxu0
    %v1773 = vadd.f32 0.0, %v1772
    %v1774 = vpop.f32.mrb[0].mxu0
    %1775 = vmatprep.mubr.f32.mxu0 %v882
    %1776 = vmatmul.mubr.f32.gmra.mrb[0].mxu0 %v1108
    %v1777 = vpop.f32.mrb[0].mxu0
    %v1778 = vadd.f32 0.0, %v1777
    %v1779 = vpop.f32.mrb[0].mxu0
    %1780 = vmatprep.mubr.f32.mxu0 %v883
    %1781 = vmatmul.mubr.f32.gmra.mrb[0].mxu0 %v1109
    %v1782 = vpop.f32.mrb[0].mxu0
    %v1783 = vadd.f32 0.0, %v1782
    %v1784 = vpop.f32.mrb[0].mxu0
    %1785 = vmatprep.mubr.f32.mxu0 %v884
    %1786 = vmatmul.mubr.f32.gmra.mrb[0].mxu0 %v1110
    %v1787 = vpop.f32.mrb[0].mxu0
    %v1788 = vadd.f32 0.0, %v1787
    %v1789 = vpop.f32.mrb[0].mxu0
    %1790 = vmatprep.mubr.f32.mxu0 %v885
    %1791 = vmatmul.mubr.f32.gmra.mrb[0].mxu0 %v1111
    %v1792 = vpop.f32.mrb[0].mxu0
    %v1793 = vadd.f32 0.0, %v1792
    %v1794 = vpop.f32.mrb[0].mxu0
    %1795 = vmatprep.mubr.f32.mxu0 %v886
    %1796 = vmatmul.mubr.f32.gmra.mrb[0].mxu0 %v1112
    %v1797 = vpop.f32.mrb[0].mxu0
    %v1798 = vadd.f32 0.0, %v1797
    %v1799 = vpop.f32.mrb[0].mxu0
    %1800 = vmatprep.mubr.f32.mxu0 %v887
    %1801 = vmatmul.mubr.f32.gmra.mrb[0].mxu0 %v1113
    %v1802 = vpop.f32.mrb[0].mxu0
    %v1803 = vadd.f32 0.0, %v1802
    %v1804 = vpop.f32.mrb[0].mxu0
    %1805 = vmatprep.mubr.f32.mxu0 %v888
    %1806 = vmatmul.mubr.f32.gmra.mrb[0].mxu0 %v1114
    %v1807 = vpop.f32.mrb[0].mxu0
    %v1808 = vadd.f32 0.0, %v1807
    %v1809 = vpop.f32.mrb[0].mxu0
    %1810 = vmatprep.mubr.f32.mxu0 %v889
    %1811 = vmatmul.mubr.f32.gmra.mrb[0].mxu0 %v1115
    %v1812 = vpop.f32.mrb[0].mxu0
    %v1813 = vadd.f32 0.0, %v1812
    %v1814 = vpop.f32.mrb[0].mxu0
    %1815 = vmatprep.mubr.f32.mxu0 %v890
    %1816 = vmatmul.mubr.f32.gmra.mrb[0].mxu0 %v1116
    %v1817 = vpop.f32.mrb[0].mxu0
    %v1818 = vadd.f32 0.0, %v1817
    %v1819 = vpop.f32.mrb[0].mxu0
    %1820 = vmatprep.mubr.f32.mxu0 %v891
    %1821 = vmatmul.mubr.f32.gmra.mrb[0].mxu0 %v1117
    %v1822 = vpop.f32.mrb[0].mxu0
    %v1823 = vadd.f32 0.0, %v1822
    %v1824 = vpop.f32.mrb[0].mxu0
    %1825 = vmatprep.mubr.f32.mxu0 %v892
    %1826 = vmatmul.mubr.f32.gmra.mrb[0].mxu0 %v1118
    %v1827 = vpop.f32.mrb[0].mxu0
    %v1828 = vadd.f32 0.0, %v1827
    %v1829 = vpop.f32.mrb[0].mxu0
    %1830 = vmatprep.mubr.f32.mxu0 %v893
    %1831 = vmatmul.mubr.f32.gmra.mrb[0].mxu0 %v1119
    %v1832 = vpop.f32.mrb[0].mxu0
    %v1833 = vadd.f32 0.0, %v1832
    %v1834 = vpop.f32.mrb[0].mxu0
    %1835 = vmatprep.mubr.f32.mxu0 %v894
    %1836 = vmatmul.mubr.f32.gmra.mrb[0].mxu0 %v1120
    %v1837 = vpop.f32.mrb[0].mxu0
    %v1838 = vadd.f32 0.0, %v1837
    %v1839 = vpop.f32.mrb[0].mxu0
    %1840 = vmatprep.mubr.f32.mxu0 %v895
    %1841 = vmatmul.mubr.f32.gmra.mrb[0].mxu0 %v1121
    %v1842 = vpop.f32.mrb[0].mxu0
    %v1843 = vadd.f32 0.0, %v1842
    %v1844 = vpop.f32.mrb[0].mxu0
    %1845 = vmatprep.mubr.f32.mxu0 %v896
    %1846 = vmatmul.mubr.f32.gmra.mrb[0].mxu0 %v1122
    %v1847 = vpop.f32.mrb[0].mxu0
    %v1848 = vadd.f32 0.0, %v1847
    %v1849 = vpop.f32.mrb[0].mxu0
    %1850 = vmatprep.mubr.f32.mxu0 %v897
    %1851 = vmatmul.mubr.f32.gmra.mrb[0].mxu0 %v1123
    %v1852 = vpop.f32.mrb[0].mxu0
    %v1853 = vadd.f32 0.0, %v1852
    %v1854 = vpop.f32.mrb[0].mxu0
    %1855 = vmatprep.mubr.f32.mxu0 %v898
    %1856 = vmatmul.mubr.f32.gmra.mrb[0].mxu0 %v1124
    %v1857 = vpop.f32.mrb[0].mxu0
    %v1858 = vadd.f32 0.0, %v1857
    %v1859 = vpop.f32.mrb[0].mxu0
    %1860 = vmatprep.mubr.f32.mxu0 %v899
    %1861 = vmatmul.mubr.f32.gmra.mrb[0].mxu0 %v1125
    %v1862 = vpop.f32.mrb[0].mxu0
    %v1863 = vadd.f32 0.0, %v1862
    %v1864 = vpop.f32.mrb[0].mxu0
    %1865 = vmatprep.mubr.f32.mxu0 %v900
    %1866 = vmatmul.mubr.f32.gmra.mrb[0].mxu0 %v1126
    %v1867 = vpop.f32.mrb[0].mxu0
    %v1868 = vadd.f32 0.0, %v1867
    %v1869 = vpop.f32.mrb[0].mxu0
    %1870 = vmatprep.mubr.f32.mxu0 %v901
    %1871 = vmatmul.mubr.f32.gmra.mrb[0].mxu0 %v1127
    %v1872 = vpop.f32.mrb[0].mxu0
    %v1873 = vadd.f32 0.0, %v1872
    %v1874 = vpop.f32.mrb[0].mxu0
    %1875 = vmatprep.mubr.f32.mxu0 %v902
    %1876 = vmatmul.mubr.f32.gmra.mrb[0].mxu0 %v1128
    %v1877 = vpop.f32.mrb[0].mxu0
    %v1878 = vadd.f32 0.0, %v1877
    %v1879 = vpop.f32.mrb[0].mxu0
    %1880 = vmatprep.mubr.f32.mxu0 %v903
    %1881 = vmatmul.mubr.f32.gmra.mrb[0].mxu0 %v1129
    %v1882 = vpop.f32.mrb[0].mxu0
    %v1883 = vadd.f32 0.0, %v1882
    %v1884 = vpop.f32.mrb[0].mxu0
    %1885 = vdwg.mxu0
    %1886 = vmatprep.subr.mxu0 0.0
    %1887 = vmatpush1.msra.mxu0 %v1389
    %1888 = vmatprep.subr.mxu0 0.0
    %1889 = vmatpush1.msra.mxu0 %v1390
    %1890 = vmatprep.subr.mxu0 0.0
    %1891 = vmatpush1.msra.mxu0 %v1391
    %1892 = vmatprep.subr.mxu0 0.0
    %1893 = vmatpush1.msra.mxu0 %v1392
    %1894 = vmatprep.subr.mxu0 0.0
    %1895 = vmatpush1.msra.mxu0 %v1393
    %1896 = vmatprep.subr.mxu0 0.0
    %1897 = vmatpush1.msra.mxu0 %v1394
    %1898 = vmatprep.subr.mxu0 0.0
    %1899 = vmatpush1.msra.mxu0 %v1395
    %1900 = vmatprep.subr.mxu0 0.0
    %1901 = vmatpush1.msra.mxu0 %v1396
    %1902 = vmatprep.subr.mxu0 0.0
    %1903 = vmatpush1.msra.mxu0 %v1397
    %1904 = vmatprep.subr.mxu0 0.0
    %1905 = vmatpush1.msra.mxu0 %v1398
    %1906 = vmatprep.subr.mxu0 0.0
    %1907 = vmatpush1.msra.mxu0 %v1399
    %1908 = vmatprep.subr.mxu0 0.0
    %1909 = vmatpush1.msra.mxu0 %v1400
    %1910 = vmatprep.subr.mxu0 0.0
    %1911 = vmatpush1.msra.mxu0 %v1401
    %1912 = vmatprep.subr.mxu0 0.0
    %1913 = vmatpush1.msra.mxu0 %v1402
    %1914 = vmatprep.subr.mxu0 0.0
    %1915 = vmatpush1.msra.mxu0 %v1403
    %1916 = vmatprep.subr.mxu0 0.0
    %1917 = vmatpush1.msra.mxu0 %v1404
    %1918 = vmatprep.subr.mxu0 0.0
    %1919 = vmatpush1.msra.mxu0 %v1405
    %1920 = vmatprep.subr.mxu0 0.0
    %1921 = vmatpush1.msra.mxu0 %v1406
    %1922 = vmatprep.subr.mxu0 0.0
    %1923 = vmatpush1.msra.mxu0 %v1407
    %1924 = vmatprep.subr.mxu0 0.0
    %1925 = vmatpush1.msra.mxu0 %v1408
    %1926 = vmatprep.subr.mxu0 0.0
    %1927 = vmatpush1.msra.mxu0 %v1409
    %1928 = vmatprep.subr.mxu0 0.0
    %1929 = vmatpush1.msra.mxu0 %v1410
    %1930 = vmatprep.subr.mxu0 0.0
    %1931 = vmatpush1.msra.mxu0 %v1411
    %1932 = vmatprep.subr.mxu0 0.0
    %1933 = vmatpush1.msra.mxu0 %v1412
    %1934 = vmatprep.subr.mxu0 0.0
    %1935 = vmatpush1.msra.mxu0 %v1413
    %1936 = vmatprep.subr.mxu0 0.0
    %1937 = vmatpush1.msra.mxu0 %v1414
    %1938 = vmatprep.subr.mxu0 0.0
    %1939 = vmatpush1.msra.mxu0 %v1415
    %1940 = vmatprep.subr.mxu0 0.0
    %1941 = vmatpush1.msra.mxu0 %v1416
    %1942 = vmatprep.subr.mxu0 0.0
    %1943 = vmatpush1.msra.mxu0 %v1417
    %1944 = vmatprep.subr.mxu0 0.0
    %1945 = vmatpush1.msra.mxu0 %v1418
    %1946 = vmatprep.subr.mxu0 0.0
    %1947 = vmatpush1.msra.mxu0 %v1419
    %1948 = vmatprep.subr.mxu0 0.0
    %1949 = vmatpush1.msra.mxu0 %v1420
    %1950 = vmatprep.mubr.f32.mxu0 %v1064
    %1951 = vmatmul.mubr.f32.gmra.mrb[0].mxu0 %v1285
    %v1952 = vpop.f32.mrb[0].mxu0
    %v1953 = vadd.f32 %v1568, %v1952
    %v1954 = vpop.f32.mrb[0].mxu0
    %1955 = vmatprep.mubr.f32.mxu0 %v1065
    %1956 = vmatmul.mubr.f32.gmra.mrb[0].mxu0 %v1286
    %v1957 = vpop.f32.mrb[0].mxu0
    %v1958 = vadd.f32 %v1573, %v1957
    %v1959 = vpop.f32.mrb[0].mxu0
    %1960 = vmatprep.mubr.f32.mxu0 %v1066
    %1961 = vmatmul.mubr.f32.gmra.mrb[0].mxu0 %v1287
    %v1962 = vpop.f32.mrb[0].mxu0
    %v1963 = vadd.f32 %v1578, %v1962
    %v1964 = vpop.f32.mrb[0].mxu0
    %1965 = vmatprep.mubr.f32.mxu0 %v1067
    %1966 = vmatmul.mubr.f32.gmra.mrb[0].mxu0 %v1288
    %v1967 = vpop.f32.mrb[0].mxu0
    %v1968 = vadd.f32 %v1583, %v1967
    %v1969 = vpop.f32.mrb[0].mxu0
    %1970 = vmatprep.mubr.f32.mxu0 %v1068
    %1971 = vmatmul.mubr.f32.gmra.mrb[0].mxu0 %v1289
    %v1972 = vpop.f32.mrb[0].mxu0
    %v1973 = vadd.f32 %v1588, %v1972
    %v1974 = vpop.f32.mrb[0].mxu0
    %1975 = vmatprep.mubr.f32.mxu0 %v1069
    %1976 = vmatmul.mubr.f32.gmra.mrb[0].mxu0 %v1290
    %v1977 = vpop.f32.mrb[0].mxu0
    %v1978 = vadd.f32 %v1593, %v1977
    %v1979 = vpop.f32.mrb[0].mxu0
    %1980 = vmatprep.mubr.f32.mxu0 %v1070
    %1981 = vmatmul.mubr.f32.gmra.mrb[0].mxu0 %v1291
    %v1982 = vpop.f32.mrb[0].mxu0
    %v1983 = vadd.f32 %v1598, %v1982
    %v1984 = vpop.f32.mrb[0].mxu0
    %1985 = vmatprep.mubr.f32.mxu0 %v1071
    %1986 = vmatmul.mubr.f32.gmra.mrb[0].mxu0 %v1292
    %v1987 = vpop.f32.mrb[0].mxu0
    %v1988 = vadd.f32 %v1603, %v1987
    %v1989 = vpop.f32.mrb[0].mxu0
    %1990 = vmatprep.mubr.f32.mxu0 %v1072
    %1991 = vmatmul.mubr.f32.gmra.mrb[0].mxu0 %v1293
    %v1992 = vpop.f32.mrb[0].mxu0
    %v1993 = vadd.f32 %v1608, %v1992
    %v1994 = vpop.f32.mrb[0].mxu0
    %1995 = vmatprep.mubr.f32.mxu0 %v1073
    %1996 = vmatmul.mubr.f32.gmra.mrb[0].mxu0 %v1294
    %v1997 = vpop.f32.mrb[0].mxu0
    %v1998 = vadd.f32 %v1613, %v1997
    %v1999 = vpop.f32.mrb[0].mxu0
    %2000 = vmatprep.mubr.f32.mxu0 %v1074
    %2001 = vmatmul.mubr.f32.gmra.mrb[0].mxu0 %v1295
    %v2002 = vpop.f32.mrb[0].mxu0
    %v2003 = vadd.f32 %v1618, %v2002
    %v2004 = vpop.f32.mrb[0].mxu0
    %2005 = vmatprep.mubr.f32.mxu0 %v1075
    %2006 = vmatmul.mubr.f32.gmra.mrb[0].mxu0 %v1296
    %v2007 = vpop.f32.mrb[0].mxu0
    %v2008 = vadd.f32 %v1623, %v2007
    %v2009 = vpop.f32.mrb[0].mxu0
    %2010 = vmatprep.mubr.f32.mxu0 %v1076
    %2011 = vmatmul.mubr.f32.gmra.mrb[0].mxu0 %v1297
    %v2012 = vpop.f32.mrb[0].mxu0
    %v2013 = vadd.f32 %v1628, %v2012
    %v2014 = vpop.f32.mrb[0].mxu0
    %2015 = vmatprep.mubr.f32.mxu0 %v1077
    %2016 = vmatmul.mubr.f32.gmra.mrb[0].mxu0 %v1298
    %v2017 = vpop.f32.mrb[0].mxu0
    %v2018 = vadd.f32 %v1633, %v2017
    %v2019 = vpop.f32.mrb[0].mxu0
    %2020 = vmatprep.mubr.f32.mxu0 %v1078
    %2021 = vmatmul.mubr.f32.gmra.mrb[0].mxu0 %v1299
    %v2022 = vpop.f32.mrb[0].mxu0
    %v2023 = vadd.f32 %v1638, %v2022
    %v2024 = vpop.f32.mrb[0].mxu0
    %2025 = vmatprep.mubr.f32.mxu0 %v1079
    %2026 = vmatmul.mubr.f32.gmra.mrb[0].mxu0 %v1300
    %v2027 = vpop.f32.mrb[0].mxu0
    %v2028 = vadd.f32 %v1643, %v2027
    %v2029 = vpop.f32.mrb[0].mxu0
    %2030 = vmatprep.mubr.f32.mxu0 %v1080
    %2031 = vmatmul.mubr.f32.gmra.mrb[0].mxu0 %v1301
    %v2032 = vpop.f32.mrb[0].mxu0
    %v2033 = vadd.f32 %v1648, %v2032
    %v2034 = vpop.f32.mrb[0].mxu0
    %2035 = vmatprep.mubr.f32.mxu0 %v1081
    %2036 = vmatmul.mubr.f32.gmra.mrb[0].mxu0 %v1302
    %v2037 = vpop.f32.mrb[0].mxu0
    %v2038 = vadd.f32 %v1653, %v2037
    %v2039 = vpop.f32.mrb[0].mxu0
    %2040 = vmatprep.mubr.f32.mxu0 %v1082
    %2041 = vmatmul.mubr.f32.gmra.mrb[0].mxu0 %v1303
    %v2042 = vpop.f32.mrb[0].mxu0
    %v2043 = vadd.f32 %v1658, %v2042
    %v2044 = vpop.f32.mrb[0].mxu0
    %2045 = vmatprep.mubr.f32.mxu0 %v1083
    %2046 = vmatmul.mubr.f32.gmra.mrb[0].mxu0 %v1304
    %v2047 = vpop.f32.mrb[0].mxu0
    %v2048 = vadd.f32 %v1663, %v2047
    %v2049 = vpop.f32.mrb[0].mxu0
    %2050 = vmatprep.mubr.f32.mxu0 %v1084
    %2051 = vmatmul.mubr.f32.gmra.mrb[0].mxu0 %v1305
    %v2052 = vpop.f32.mrb[0].mxu0
    %v2053 = vadd.f32 %v1668, %v2052
    %v2054 = vpop.f32.mrb[0].mxu0
    %2055 = vmatprep.mubr.f32.mxu0 %v1085
    %2056 = vmatmul.mubr.f32.gmra.mrb[0].mxu0 %v1306
    %v2057 = vpop.f32.mrb[0].mxu0
    %v2058 = vadd.f32 %v1673, %v2057
    %v2059 = vpop.f32.mrb[0].mxu0
    %2060 = vmatprep.mubr.f32.mxu0 %v1086
    %2061 = vmatmul.mubr.f32.gmra.mrb[0].mxu0 %v1307
    %v2062 = vpop.f32.mrb[0].mxu0
    %v2063 = vadd.f32 %v1678, %v2062
    %v2064 = vpop.f32.mrb[0].mxu0
    %2065 = vmatprep.mubr.f32.mxu0 %v1087
    %2066 = vmatmul.mubr.f32.gmra.mrb[0].mxu0 %v1308
    %v2067 = vpop.f32.mrb[0].mxu0
    %v2068 = vadd.f32 %v1683, %v2067
    %v2069 = vpop.f32.mrb[0].mxu0
    %2070 = vmatprep.mubr.f32.mxu0 %v1088
    %2071 = vmatmul.mubr.f32.gmra.mrb[0].mxu0 %v1309
    %v2072 = vpop.f32.mrb[0].mxu0
    %v2073 = vadd.f32 %v1688, %v2072
    %v2074 = vpop.f32.mrb[0].mxu0
    %2075 = vmatprep.mubr.f32.mxu0 %v1089
    %2076 = vmatmul.mubr.f32.gmra.mrb[0].mxu0 %v1310
    %v2077 = vpop.f32.mrb[0].mxu0
    %v2078 = vadd.f32 %v1693, %v2077
    %v2079 = vpop.f32.mrb[0].mxu0
    %2080 = vmatprep.mubr.f32.mxu0 %v1090
    %2081 = vmatmul.mubr.f32.gmra.mrb[0].mxu0 %v1311
    %v2082 = vpop.f32.mrb[0].mxu0
    %v2083 = vadd.f32 %v1698, %v2082
    %v2084 = vpop.f32.mrb[0].mxu0
    %2085 = vmatprep.mubr.f32.mxu0 %v1091
    %2086 = vmatmul.mubr.f32.gmra.mrb[0].mxu0 %v1312
    %v2087 = vpop.f32.mrb[0].mxu0
    %v2088 = vadd.f32 %v1703, %v2087
    %v2089 = vpop.f32.mrb[0].mxu0
    %2090 = vmatprep.mubr.f32.mxu0 %v1092
    %2091 = vmatmul.mubr.f32.gmra.mrb[0].mxu0 %v1313
    %v2092 = vpop.f32.mrb[0].mxu0
    %v2093 = vadd.f32 %v1708, %v2092
    %v2094 = vpop.f32.mrb[0].mxu0
    %2095 = vmatprep.mubr.f32.mxu0 %v1093
    %2096 = vmatmul.mubr.f32.gmra.mrb[0].mxu0 %v1314
    %v2097 = vpop.f32.mrb[0].mxu0
    %v2098 = vadd.f32 %v1713, %v2097
    %v2099 = vpop.f32.mrb[0].mxu0
    %2100 = vmatprep.mubr.f32.mxu0 %v1094
    %2101 = vmatmul.mubr.f32.gmra.mrb[0].mxu0 %v1315
    %v2102 = vpop.f32.mrb[0].mxu0
    %v2103 = vadd.f32 %v1718, %v2102
    %v2104 = vpop.f32.mrb[0].mxu0
    %2105 = vmatprep.mubr.f32.mxu0 %v1095
    %2106 = vmatmul.mubr.f32.gmra.mrb[0].mxu0 %v1316
    %v2107 = vpop.f32.mrb[0].mxu0
    %v2108 = vadd.f32 %v1723, %v2107
    %v2109 = vpop.f32.mrb[0].mxu0
    %2110 = vmatprep.mubr.f32.mxu0 %v1100
    %2111 = vmatmul.mubr.f32.gmra.mrb[0].mxu0 %v1321
    %v2112 = vpop.f32.mrb[0].mxu0
    %v2113 = vadd.f32 %v1728, %v2112
    %v2114 = vpop.f32.mrb[0].mxu0
    %2115 = vmatprep.mubr.f32.mxu0 %v1101
    %2116 = vmatmul.mubr.f32.gmra.mrb[0].mxu0 %v1322
    %v2117 = vpop.f32.mrb[0].mxu0
    %v2118 = vadd.f32 %v1733, %v2117
    %v2119 = vpop.f32.mrb[0].mxu0
    %2120 = vmatprep.mubr.f32.mxu0 %v1102
    %2121 = vmatmul.mubr.f32.gmra.mrb[0].mxu0 %v1323
    %v2122 = vpop.f32.mrb[0].mxu0
    %v2123 = vadd.f32 %v1738, %v2122
    %v2124 = vpop.f32.mrb[0].mxu0
    %2125 = vmatprep.mubr.f32.mxu0 %v1103
    %2126 = vmatmul.mubr.f32.gmra.mrb[0].mxu0 %v1324
    %v2127 = vpop.f32.mrb[0].mxu0
    %v2128 = vadd.f32 %v1743, %v2127
    %v2129 = vpop.f32.mrb[0].mxu0
    %2130 = vmatprep.mubr.f32.mxu0 %v1104
    %2131 = vmatmul.mubr.f32.gmra.mrb[0].mxu0 %v1325
    %v2132 = vpop.f32.mrb[0].mxu0
    %v2133 = vadd.f32 %v1748, %v2132
    %v2134 = vpop.f32.mrb[0].mxu0
    %2135 = vmatprep.mubr.f32.mxu0 %v1105
    %2136 = vmatmul.mubr.f32.gmra.mrb[0].mxu0 %v1326
    %v2137 = vpop.f32.mrb[0].mxu0
    %v2138 = vadd.f32 %v1753, %v2137
    %v2139 = vpop.f32.mrb[0].mxu0
    %2140 = vmatprep.mubr.f32.mxu0 %v1106
    %2141 = vmatmul.mubr.f32.gmra.mrb[0].mxu0 %v1327
    %v2142 = vpop.f32.mrb[0].mxu0
    %v2143 = vadd.f32 %v1758, %v2142
    %v2144 = vpop.f32.mrb[0].mxu0
    %2145 = vmatprep.mubr.f32.mxu0 %v1107
    %2146 = vmatmul.mubr.f32.gmra.mrb[0].mxu0 %v1328
    %v2147 = vpop.f32.mrb[0].mxu0
    %v2148 = vadd.f32 %v1763, %v2147
    %v2149 = vpop.f32.mrb[0].mxu0
    %2150 = vmatprep.mubr.f32.mxu0 %v1108
    %2151 = vmatmul.mubr.f32.gmra.mrb[0].mxu0 %v1329
    %v2152 = vpop.f32.mrb[0].mxu0
    %v2153 = vadd.f32 %v1768, %v2152
    %v2154 = vpop.f32.mrb[0].mxu0
    %2155 = vmatprep.mubr.f32.mxu0 %v1109
    %2156 = vmatmul.mubr.f32.gmra.mrb[0].mxu0 %v1330
    %v2157 = vpop.f32.mrb[0].mxu0
    %v2158 = vadd.f32 %v1773, %v2157
    %v2159 = vpop.f32.mrb[0].mxu0
    %2160 = vmatprep.mubr.f32.mxu0 %v1110
    %2161 = vmatmul.mubr.f32.gmra.mrb[0].mxu0 %v1331
    %v2162 = vpop.f32.mrb[0].mxu0
    %v2163 = vadd.f32 %v1778, %v2162
    %v2164 = vpop.f32.mrb[0].mxu0
    %2165 = vmatprep.mubr.f32.mxu0 %v1111
    %2166 = vmatmul.mubr.f32.gmra.mrb[0].mxu0 %v1332
    %v2167 = vpop.f32.mrb[0].mxu0
    %v2168 = vadd.f32 %v1783, %v2167
    %v2169 = vpop.f32.mrb[0].mxu0
    %2170 = vmatprep.mubr.f32.mxu0 %v1112
    %2171 = vmatmul.mubr.f32.gmra.mrb[0].mxu0 %v1333
    %v2172 = vpop.f32.mrb[0].mxu0
    %v2173 = vadd.f32 %v1788, %v2172
    %v2174 = vpop.f32.mrb[0].mxu0
    %2175 = vmatprep.mubr.f32.mxu0 %v1113
    %2176 = vmatmul.mubr.f32.gmra.mrb[0].mxu0 %v1334
    %v2177 = vpop.f32.mrb[0].mxu0
    %v2178 = vadd.f32 %v1793, %v2177
    %v2179 = vpop.f32.mrb[0].mxu0
    %2180 = vmatprep.mubr.f32.mxu0 %v1114
    %2181 = vmatmul.mubr.f32.gmra.mrb[0].mxu0 %v1335
    %v2182 = vpop.f32.mrb[0].mxu0
    %v2183 = vadd.f32 %v1798, %v2182
    %v2184 = vpop.f32.mrb[0].mxu0
    %2185 = vmatprep.mubr.f32.mxu0 %v1115
    %2186 = vmatmul.mubr.f32.gmra.mrb[0].mxu0 %v1336
    %v2187 = vpop.f32.mrb[0].mxu0
    %v2188 = vadd.f32 %v1803, %v2187
    %v2189 = vpop.f32.mrb[0].mxu0
    %2190 = vmatprep.mubr.f32.mxu0 %v1116
    %2191 = vmatmul.mubr.f32.gmra.mrb[0].mxu0 %v1337
    %v2192 = vpop.f32.mrb[0].mxu0
    %v2193 = vadd.f32 %v1808, %v2192
    %v2194 = vpop.f32.mrb[0].mxu0
    %2195 = vmatprep.mubr.f32.mxu0 %v1117
    %2196 = vmatmul.mubr.f32.gmra.mrb[0].mxu0 %v1338
    %v2197 = vpop.f32.mrb[0].mxu0
    %v2198 = vadd.f32 %v1813, %v2197
    %v2199 = vpop.f32.mrb[0].mxu0
    %2200 = vmatprep.mubr.f32.mxu0 %v1118
    %2201 = vmatmul.mubr.f32.gmra.mrb[0].mxu0 %v1339
    %v2202 = vpop.f32.mrb[0].mxu0
    %v2203 = vadd.f32 %v1818, %v2202
    %v2204 = vpop.f32.mrb[0].mxu0
    %2205 = vmatprep.mubr.f32.mxu0 %v1119
    %2206 = vmatmul.mubr.f32.gmra.mrb[0].mxu0 %v1340
    %v2207 = vpop.f32.mrb[0].mxu0
    %v2208 = vadd.f32 %v1823, %v2207
    %v2209 = vpop.f32.mrb[0].mxu0
    %2210 = vmatprep.mubr.f32.mxu0 %v1120
    %2211 = vmatmul.mubr.f32.gmra.mrb[0].mxu0 %v1341
    %v2212 = vpop.f32.mrb[0].mxu0
    %v2213 = vadd.f32 %v1828, %v2212
    %v2214 = vpop.f32.mrb[0].mxu0
    %2215 = vmatprep.mubr.f32.mxu0 %v1121
    %2216 = vmatmul.mubr.f32.gmra.mrb[0].mxu0 %v1342
    %v2217 = vpop.f32.mrb[0].mxu0
    %v2218 = vadd.f32 %v1833, %v2217
    %v2219 = vpop.f32.mrb[0].mxu0
    %2220 = vmatprep.mubr.f32.mxu0 %v1122
    %2221 = vmatmul.mubr.f32.gmra.mrb[0].mxu0 %v1343
    %v2222 = vpop.f32.mrb[0].mxu0
    %v2223 = vadd.f32 %v1838, %v2222
    %v2224 = vpop.f32.mrb[0].mxu0
    %2225 = vmatprep.mubr.f32.mxu0 %v1123
    %2226 = vmatmul.mubr.f32.gmra.mrb[0].mxu0 %v1344
    %v2227 = vpop.f32.mrb[0].mxu0
    %v2228 = vadd.f32 %v1843, %v2227
    %v2229 = vpop.f32.mrb[0].mxu0
    %2230 = vmatprep.mubr.f32.mxu0 %v1124
    %2231 = vmatmul.mubr.f32.gmra.mrb[0].mxu0 %v1345
    %v2232 = vpop.f32.mrb[0].mxu0
    %v2233 = vadd.f32 %v1848, %v2232
    %v2234 = vpop.f32.mrb[0].mxu0
    %2235 = vmatprep.mubr.f32.mxu0 %v1125
    %2236 = vmatmul.mubr.f32.gmra.mrb[0].mxu0 %v1346
    %v2237 = vpop.f32.mrb[0].mxu0
    %v2238 = vadd.f32 %v1853, %v2237
    %v2239 = vpop.f32.mrb[0].mxu0
    %2240 = vmatprep.mubr.f32.mxu0 %v1126
    %2241 = vmatmul.mubr.f32.gmra.mrb[0].mxu0 %v1347
    %v2242 = vpop.f32.mrb[0].mxu0
    %v2243 = vadd.f32 %v1858, %v2242
    %v2244 = vpop.f32.mrb[0].mxu0
    %2245 = vmatprep.mubr.f32.mxu0 %v1127
    %2246 = vmatmul.mubr.f32.gmra.mrb[0].mxu0 %v1348
    %v2247 = vpop.f32.mrb[0].mxu0
    %v2248 = vadd.f32 %v1863, %v2247
    %v2249 = vpop.f32.mrb[0].mxu0
    %2250 = vmatprep.mubr.f32.mxu0 %v1128
    %2251 = vmatmul.mubr.f32.gmra.mrb[0].mxu0 %v1349
    %v2252 = vpop.f32.mrb[0].mxu0
    %v2253 = vadd.f32 %v1868, %v2252
    %v2254 = vpop.f32.mrb[0].mxu0
    %2255 = vmatprep.mubr.f32.mxu0 %v1129
    %2256 = vmatmul.mubr.f32.gmra.mrb[0].mxu0 %v1350
    %v2257 = vpop.f32.mrb[0].mxu0
    %v2258 = vadd.f32 %v1873, %v2257
    %v2259 = vpop.f32.mrb[0].mxu0
    %2260 = vmatprep.mubr.f32.mxu0 %v1130
    %2261 = vmatmul.mubr.f32.gmra.mrb[0].mxu0 %v1351
    %v2262 = vpop.f32.mrb[0].mxu0
    %v2263 = vadd.f32 %v1878, %v2262
    %v2264 = vpop.f32.mrb[0].mxu0
    %2265 = vmatprep.mubr.f32.mxu0 %v1131
    %2266 = vmatmul.mubr.f32.gmra.mrb[0].mxu0 %v1352
    %v2267 = vpop.f32.mrb[0].mxu0
    %v2268 = vadd.f32 %v1883, %v2267
    %v2269 = vpop.f32.mrb[0].mxu0
    %2270 = vdwg.mxu0
    %2271 = vmatprep.subr.mxu0 0.0
    %2272 = vmatpush1.msra.mxu0 %v1421
    %2273 = vmatprep.subr.mxu0 0.0
    %2274 = vmatpush1.msra.mxu0 %v1422
    %2275 = vmatprep.subr.mxu0 0.0
    %2276 = vmatpush1.msra.mxu0 %v1423
    %2277 = vmatprep.subr.mxu0 0.0
    %2278 = vmatpush1.msra.mxu0 %v1424
    %2279 = vmatprep.subr.mxu0 0.0
    %2280 = vmatpush1.msra.mxu0 %v1425
    %2281 = vmatprep.subr.mxu0 0.0
    %2282 = vmatpush1.msra.mxu0 %v1426
    %2283 = vmatprep.subr.mxu0 0.0
    %2284 = vmatpush1.msra.mxu0 %v1427
    %2285 = vmatprep.subr.mxu0 0.0
    %2286 = vmatpush1.msra.mxu0 %v1428
    %2287 = vmatprep.subr.mxu0 0.0
    %2288 = vmatpush1.msra.mxu0 %v1429
    %2289 = vmatprep.subr.mxu0 0.0
    %2290 = vmatpush1.msra.mxu0 %v1430
    %2291 = vmatprep.subr.mxu0 0.0
    %2292 = vmatpush1.msra.mxu0 %v1431
    %2293 = vmatprep.subr.mxu0 0.0
    %2294 = vmatpush1.msra.mxu0 %v1432
    %2295 = vmatprep.subr.mxu0 0.0
    %2296 = vmatpush1.msra.mxu0 %v1433
    %2297 = vmatprep.subr.mxu0 0.0
    %2298 = vmatpush1.msra.mxu0 %v1434
    %2299 = vmatprep.subr.mxu0 0.0
    %2300 = vmatpush1.msra.mxu0 %v1435
    %2301 = vmatprep.subr.mxu0 0.0
    %2302 = vmatpush1.msra.mxu0 %v1436
    %2303 = vmatprep.subr.mxu0 0.0
    %2304 = vmatpush1.msra.mxu0 %v1437
    %2305 = vmatprep.subr.mxu0 0.0
    %2306 = vmatpush1.msra.mxu0 %v1438
    %2307 = vmatprep.subr.mxu0 0.0
    %2308 = vmatpush1.msra.mxu0 %v1439
    %2309 = vmatprep.subr.mxu0 0.0
    %2310 = vmatpush1.msra.mxu0 %v1440
    %2311 = vmatprep.subr.mxu0 0.0
    %2312 = vmatpush1.msra.mxu0 %v1441
    %2313 = vmatprep.subr.mxu0 0.0
    %2314 = vmatpush1.msra.mxu0 %v1442
    %2315 = vmatprep.subr.mxu0 0.0
    %2316 = vmatpush1.msra.mxu0 %v1443
    %2317 = vmatprep.subr.mxu0 0.0
    %2318 = vmatpush1.msra.mxu0 %v1444
    %2319 = vmatprep.subr.mxu0 0.0
    %2320 = vmatpush1.msra.mxu0 %v1445
    %2321 = vmatprep.subr.mxu0 0.0
    %2322 = vmatpush1.msra.mxu0 %v1446
    %2323 = vmatprep.subr.mxu0 0.0
    %2324 = vmatpush1.msra.mxu0 %v1447
    %2325 = vmatprep.subr.mxu0 0.0
    %2326 = vmatpush1.msra.mxu0 %v1448
    %2327 = vmatprep.subr.mxu0 0.0
    %2328 = vmatpush1.msra.mxu0 %v1449
    %2329 = vmatprep.subr.mxu0 0.0
    %2330 = vmatpush1.msra.mxu0 %v1450
    %2331 = vmatprep.subr.mxu0 0.0
    %2332 = vmatpush1.msra.mxu0 %v1451
    %2333 = vmatprep.subr.mxu0 0.0
    %2334 = vmatpush1.msra.mxu0 %v1452
    %2335 = vmatprep.mubr.f32.mxu0 %v1287
    %2336 = vmatmul.mubr.f32.gmra.mrb[0].mxu0 %v838
    %v2337 = vpop.f32.mrb[0].mxu0
    %v2338 = vadd.f32 %v1953, %v2337
    %v2339 = vpop.f32.mrb[0].mxu0
    %2340 = vmatprep.mubr.f32.mxu0 %v1288
    %2341 = vmatmul.mubr.f32.gmra.mrb[0].mxu0 %v839
    %v2342 = vpop.f32.mrb[0].mxu0
    %v2343 = vadd.f32 %v1958, %v2342
    %v2344 = vpop.f32.mrb[0].mxu0
    %2345 = vmatprep.mubr.f32.mxu0 %v1289
    %2346 = vmatmul.mubr.f32.gmra.mrb[0].mxu0 %v840
    %v2347 = vpop.f32.mrb[0].mxu0
    %v2348 = vadd.f32 %v1963, %v2347
    %v2349 = vpop.f32.mrb[0].mxu0
    %2350 = vmatprep.mubr.f32.mxu0 %v1290
    %2351 = vmatmul.mubr.f32.gmra.mrb[0].mxu0 %v841
    %v2352 = vpop.f32.mrb[0].mxu0
    %v2353 = vadd.f32 %v1968, %v2352
    %v2354 = vpop.f32.mrb[0].mxu0
    %2355 = vmatprep.mubr.f32.mxu0 %v1291
    %2356 = vmatmul.mubr.f32.gmra.mrb[0].mxu0 %v842
    %v2357 = vpop.f32.mrb[0].mxu0
    %v2358 = vadd.f32 %v1973, %v2357
    %v2359 = vpop.f32.mrb[0].mxu0
    %2360 = vmatprep.mubr.f32.mxu0 %v1292
    %2361 = vmatmul.mubr.f32.gmra.mrb[0].mxu0 %v843
    %v2362 = vpop.f32.mrb[0].mxu0
    %v2363 = vadd.f32 %v1978, %v2362
    %v2364 = vpop.f32.mrb[0].mxu0
    %2365 = vmatprep.mubr.f32.mxu0 %v1293
    %2366 = vmatmul.mubr.f32.gmra.mrb[0].mxu0 %v844
    %v2367 = vpop.f32.mrb[0].mxu0
    %v2368 = vadd.f32 %v1983, %v2367
    %v2369 = vpop.f32.mrb[0].mxu0
    %2370 = vmatprep.mubr.f32.mxu0 %v1294
    %2371 = vmatmul.mubr.f32.gmra.mrb[0].mxu0 %v845
    %v2372 = vpop.f32.mrb[0].mxu0
    %v2373 = vadd.f32 %v1988, %v2372
    %v2374 = vpop.f32.mrb[0].mxu0
    %2375 = vmatprep.mubr.f32.mxu0 %v1295
    %2376 = vmatmul.mubr.f32.gmra.mrb[0].mxu0 %v846
    %v2377 = vpop.f32.mrb[0].mxu0
    %v2378 = vadd.f32 %v1993, %v2377
    %v2379 = vpop.f32.mrb[0].mxu0
    %2380 = vmatprep.mubr.f32.mxu0 %v1296
    %2381 = vmatmul.mubr.f32.gmra.mrb[0].mxu0 %v847
    %v2382 = vpop.f32.mrb[0].mxu0
    %v2383 = vadd.f32 %v1998, %v2382
    %v2384 = vpop.f32.mrb[0].mxu0
    %2385 = vmatprep.mubr.f32.mxu0 %v1297
    %2386 = vmatmul.mubr.f32.gmra.mrb[0].mxu0 %v848
    %v2387 = vpop.f32.mrb[0].mxu0
    %v2388 = vadd.f32 %v2003, %v2387
    %v2389 = vpop.f32.mrb[0].mxu0
    %2390 = vmatprep.mubr.f32.mxu0 %v1298
    %2391 = vmatmul.mubr.f32.gmra.mrb[0].mxu0 %v849
    %v2392 = vpop.f32.mrb[0].mxu0
    %v2393 = vadd.f32 %v2008, %v2392
    %v2394 = vpop.f32.mrb[0].mxu0
    %2395 = vmatprep.mubr.f32.mxu0 %v1299
    %2396 = vmatmul.mubr.f32.gmra.mrb[0].mxu0 %v850
    %v2397 = vpop.f32.mrb[0].mxu0
    %v2398 = vadd.f32 %v2013, %v2397
    %v2399 = vpop.f32.mrb[0].mxu0
    %2400 = vmatprep.mubr.f32.mxu0 %v1300
    %2401 = vmatmul.mubr.f32.gmra.mrb[0].mxu0 %v851
    %v2402 = vpop.f32.mrb[0].mxu0
    %v2403 = vadd.f32 %v2018, %v2402
    %v2404 = vpop.f32.mrb[0].mxu0
    %2405 = vmatprep.mubr.f32.mxu0 %v1301
    %2406 = vmatmul.mubr.f32.gmra.mrb[0].mxu0 %v852
    %v2407 = vpop.f32.mrb[0].mxu0
    %v2408 = vadd.f32 %v2023, %v2407
    %v2409 = vpop.f32.mrb[0].mxu0
    %2410 = vmatprep.mubr.f32.mxu0 %v1302
    %2411 = vmatmul.mubr.f32.gmra.mrb[0].mxu0 %v853
    %v2412 = vpop.f32.mrb[0].mxu0
    %v2413 = vadd.f32 %v2028, %v2412
    %v2414 = vpop.f32.mrb[0].mxu0
    %2415 = vmatprep.mubr.f32.mxu0 %v1303
    %2416 = vmatmul.mubr.f32.gmra.mrb[0].mxu0 %v854
    %v2417 = vpop.f32.mrb[0].mxu0
    %v2418 = vadd.f32 %v2033, %v2417
    %v2419 = vpop.f32.mrb[0].mxu0
    %2420 = vmatprep.mubr.f32.mxu0 %v1304
    %2421 = vmatmul.mubr.f32.gmra.mrb[0].mxu0 %v855
    %v2422 = vpop.f32.mrb[0].mxu0
    %v2423 = vadd.f32 %v2038, %v2422
    %v2424 = vpop.f32.mrb[0].mxu0
    %2425 = vmatprep.mubr.f32.mxu0 %v1305
    %2426 = vmatmul.mubr.f32.gmra.mrb[0].mxu0 %v856
    %v2427 = vpop.f32.mrb[0].mxu0
    %v2428 = vadd.f32 %v2043, %v2427
    %v2429 = vpop.f32.mrb[0].mxu0
    %2430 = vmatprep.mubr.f32.mxu0 %v1306
    %2431 = vmatmul.mubr.f32.gmra.mrb[0].mxu0 %v857
    %v2432 = vpop.f32.mrb[0].mxu0
    %v2433 = vadd.f32 %v2048, %v2432
    %v2434 = vpop.f32.mrb[0].mxu0
    %2435 = vmatprep.mubr.f32.mxu0 %v1307
    %2436 = vmatmul.mubr.f32.gmra.mrb[0].mxu0 %v858
    %v2437 = vpop.f32.mrb[0].mxu0
    %v2438 = vadd.f32 %v2053, %v2437
    %v2439 = vpop.f32.mrb[0].mxu0
    %2440 = vmatprep.mubr.f32.mxu0 %v1308
    %2441 = vmatmul.mubr.f32.gmra.mrb[0].mxu0 %v859
    %v2442 = vpop.f32.mrb[0].mxu0
    %v2443 = vadd.f32 %v2058, %v2442
    %v2444 = vpop.f32.mrb[0].mxu0
    %2445 = vmatprep.mubr.f32.mxu0 %v1309
    %2446 = vmatmul.mubr.f32.gmra.mrb[0].mxu0 %v860
    %v2447 = vpop.f32.mrb[0].mxu0
    %v2448 = vadd.f32 %v2063, %v2447
    %v2449 = vpop.f32.mrb[0].mxu0
    %2450 = vmatprep.mubr.f32.mxu0 %v1310
    %2451 = vmatmul.mubr.f32.gmra.mrb[0].mxu0 %v861
    %v2452 = vpop.f32.mrb[0].mxu0
    %v2453 = vadd.f32 %v2068, %v2452
    %v2454 = vpop.f32.mrb[0].mxu0
    %2455 = vmatprep.mubr.f32.mxu0 %v1311
    %2456 = vmatmul.mubr.f32.gmra.mrb[0].mxu0 %v862
    %v2457 = vpop.f32.mrb[0].mxu0
    %v2458 = vadd.f32 %v2073, %v2457
    %v2459 = vpop.f32.mrb[0].mxu0
    %2460 = vmatprep.mubr.f32.mxu0 %v1312
    %2461 = vmatmul.mubr.f32.gmra.mrb[0].mxu0 %v863
    %v2462 = vpop.f32.mrb[0].mxu0
    %v2463 = vadd.f32 %v2078, %v2462
    %v2464 = vpop.f32.mrb[0].mxu0
    %2465 = vmatprep.mubr.f32.mxu0 %v1313
    %2466 = vmatmul.mubr.f32.gmra.mrb[0].mxu0 %v864
    %v2467 = vpop.f32.mrb[0].mxu0
    %v2468 = vadd.f32 %v2083, %v2467
    %v2469 = vpop.f32.mrb[0].mxu0
    %2470 = vmatprep.mubr.f32.mxu0 %v1314
    %2471 = vmatmul.mubr.f32.gmra.mrb[0].mxu0 %v865
    %v2472 = vpop.f32.mrb[0].mxu0
    %v2473 = vadd.f32 %v2088, %v2472
    %v2474 = vpop.f32.mrb[0].mxu0
    %2475 = vmatprep.mubr.f32.mxu0 %v1315
    %2476 = vmatmul.mubr.f32.gmra.mrb[0].mxu0 %v866
    %v2477 = vpop.f32.mrb[0].mxu0
    %v2478 = vadd.f32 %v2093, %v2477
    %v2479 = vpop.f32.mrb[0].mxu0
    %2480 = vmatprep.mubr.f32.mxu0 %v1316
    %2481 = vmatmul.mubr.f32.gmra.mrb[0].mxu0 %v867
    %v2482 = vpop.f32.mrb[0].mxu0
    %v2483 = vadd.f32 %v2098, %v2482
    %v2484 = vpop.f32.mrb[0].mxu0
    %2485 = vmatprep.mubr.f32.mxu0 %v1317
    %2486 = vmatmul.mubr.f32.gmra.mrb[0].mxu0 %v868
    %v2487 = vpop.f32.mrb[0].mxu0
    %v2488 = vadd.f32 %v2103, %v2487
    %v2489 = vpop.f32.mrb[0].mxu0
    %2490 = vmatprep.mubr.f32.mxu0 %v1318
    %2491 = vmatmul.mubr.f32.gmra.mrb[0].mxu0 %v869
    %v2492 = vpop.f32.mrb[0].mxu0
    %v2493 = vadd.f32 %v2108, %v2492
    %v2494 = vpop.f32.mrb[0].mxu0
    %2495 = vmatprep.mubr.f32.mxu0 %v1323
    %2496 = vmatmul.mubr.f32.gmra.mrb[0].mxu0 %v874
    %v2497 = vpop.f32.mrb[0].mxu0
    %v2498 = vadd.f32 %v2113, %v2497
    %v2499 = vpop.f32.mrb[0].mxu0
    %2500 = vmatprep.mubr.f32.mxu0 %v1324
    %2501 = vmatmul.mubr.f32.gmra.mrb[0].mxu0 %v875
    %v2502 = vpop.f32.mrb[0].mxu0
    %v2503 = vadd.f32 %v2118, %v2502
    %v2504 = vpop.f32.mrb[0].mxu0
    %2505 = vmatprep.mubr.f32.mxu0 %v1325
    %2506 = vmatmul.mubr.f32.gmra.mrb[0].mxu0 %v876
    %v2507 = vpop.f32.mrb[0].mxu0
    %v2508 = vadd.f32 %v2123, %v2507
    %v2509 = vpop.f32.mrb[0].mxu0
    %2510 = vmatprep.mubr.f32.mxu0 %v1326
    %2511 = vmatmul.mubr.f32.gmra.mrb[0].mxu0 %v877
    %v2512 = vpop.f32.mrb[0].mxu0
    %v2513 = vadd.f32 %v2128, %v2512
    %v2514 = vpop.f32.mrb[0].mxu0
    %2515 = vmatprep.mubr.f32.mxu0 %v1327
    %2516 = vmatmul.mubr.f32.gmra.mrb[0].mxu0 %v878
    %v2517 = vpop.f32.mrb[0].mxu0
    %v2518 = vadd.f32 %v2133, %v2517
    %v2519 = vpop.f32.mrb[0].mxu0
    %2520 = vmatprep.mubr.f32.mxu0 %v1328
    %2521 = vmatmul.mubr.f32.gmra.mrb[0].mxu0 %v879
    %v2522 = vpop.f32.mrb[0].mxu0
    %v2523 = vadd.f32 %v2138, %v2522
    %v2524 = vpop.f32.mrb[0].mxu0
    %2525 = vmatprep.mubr.f32.mxu0 %v1329
    %2526 = vmatmul.mubr.f32.gmra.mrb[0].mxu0 %v880
    %v2527 = vpop.f32.mrb[0].mxu0
    %v2528 = vadd.f32 %v2143, %v2527
    %v2529 = vpop.f32.mrb[0].mxu0
    %2530 = vmatprep.mubr.f32.mxu0 %v1330
    %2531 = vmatmul.mubr.f32.gmra.mrb[0].mxu0 %v881
    %v2532 = vpop.f32.mrb[0].mxu0
    %v2533 = vadd.f32 %v2148, %v2532
    %v2534 = vpop.f32.mrb[0].mxu0
    %2535 = vmatprep.mubr.f32.mxu0 %v1331
    %2536 = vmatmul.mubr.f32.gmra.mrb[0].mxu0 %v882
    %v2537 = vpop.f32.mrb[0].mxu0
    %v2538 = vadd.f32 %v2153, %v2537
    %v2539 = vpop.f32.mrb[0].mxu0
    %2540 = vmatprep.mubr.f32.mxu0 %v1332
    %2541 = vmatmul.mubr.f32.gmra.mrb[0].mxu0 %v883
    %v2542 = vpop.f32.mrb[0].mxu0
    %v2543 = vadd.f32 %v2158, %v2542
    %v2544 = vpop.f32.mrb[0].mxu0
    %2545 = vmatprep.mubr.f32.mxu0 %v1333
    %2546 = vmatmul.mubr.f32.gmra.mrb[0].mxu0 %v884
    %v2547 = vpop.f32.mrb[0].mxu0
    %v2548 = vadd.f32 %v2163, %v2547
    %v2549 = vpop.f32.mrb[0].mxu0
    %2550 = vmatprep.mubr.f32.mxu0 %v1334
    %2551 = vmatmul.mubr.f32.gmra.mrb[0].mxu0 %v885
    %v2552 = vpop.f32.mrb[0].mxu0
    %v2553 = vadd.f32 %v2168, %v2552
    %v2554 = vpop.f32.mrb[0].mxu0
    %2555 = vmatprep.mubr.f32.mxu0 %v1335
    %2556 = vmatmul.mubr.f32.gmra.mrb[0].mxu0 %v886
    %v2557 = vpop.f32.mrb[0].mxu0
    %v2558 = vadd.f32 %v2173, %v2557
    %v2559 = vpop.f32.mrb[0].mxu0
    %2560 = vmatprep.mubr.f32.mxu0 %v1336
    %2561 = vmatmul.mubr.f32.gmra.mrb[0].mxu0 %v887
    %v2562 = vpop.f32.mrb[0].mxu0
    %v2563 = vadd.f32 %v2178, %v2562
    %v2564 = vpop.f32.mrb[0].mxu0
    %2565 = vmatprep.mubr.f32.mxu0 %v1337
    %2566 = vmatmul.mubr.f32.gmra.mrb[0].mxu0 %v888
    %v2567 = vpop.f32.mrb[0].mxu0
    %v2568 = vadd.f32 %v2183, %v2567
    %v2569 = vpop.f32.mrb[0].mxu0
    %2570 = vmatprep.mubr.f32.mxu0 %v1338
    %2571 = vmatmul.mubr.f32.gmra.mrb[0].mxu0 %v889
    %v2572 = vpop.f32.mrb[0].mxu0
    %v2573 = vadd.f32 %v2188, %v2572
    %v2574 = vpop.f32.mrb[0].mxu0
    %2575 = vmatprep.mubr.f32.mxu0 %v1339
    %2576 = vmatmul.mubr.f32.gmra.mrb[0].mxu0 %v890
    %v2577 = vpop.f32.mrb[0].mxu0
    %v2578 = vadd.f32 %v2193, %v2577
    %v2579 = vpop.f32.mrb[0].mxu0
    %2580 = vmatprep.mubr.f32.mxu0 %v1340
    %2581 = vmatmul.mubr.f32.gmra.mrb[0].mxu0 %v891
    %v2582 = vpop.f32.mrb[0].mxu0
    %v2583 = vadd.f32 %v2198, %v2582
    %v2584 = vpop.f32.mrb[0].mxu0
    %2585 = vmatprep.mubr.f32.mxu0 %v1341
    %2586 = vmatmul.mubr.f32.gmra.mrb[0].mxu0 %v892
    %v2587 = vpop.f32.mrb[0].mxu0
    %v2588 = vadd.f32 %v2203, %v2587
    %v2589 = vpop.f32.mrb[0].mxu0
    %2590 = vmatprep.mubr.f32.mxu0 %v1342
    %2591 = vmatmul.mubr.f32.gmra.mrb[0].mxu0 %v893
    %v2592 = vpop.f32.mrb[0].mxu0
    %v2593 = vadd.f32 %v2208, %v2592
    %v2594 = vpop.f32.mrb[0].mxu0
    %2595 = vmatprep.mubr.f32.mxu0 %v1343
    %2596 = vmatmul.mubr.f32.gmra.mrb[0].mxu0 %v894
    %v2597 = vpop.f32.mrb[0].mxu0
    %v2598 = vadd.f32 %v2213, %v2597
    %v2599 = vpop.f32.mrb[0].mxu0
    %2600 = vmatprep.mubr.f32.mxu0 %v1344
    %2601 = vmatmul.mubr.f32.gmra.mrb[0].mxu0 %v895
    %v2602 = vpop.f32.mrb[0].mxu0
    %v2603 = vadd.f32 %v2218, %v2602
    %v2604 = vpop.f32.mrb[0].mxu0
    %2605 = vmatprep.mubr.f32.mxu0 %v1345
    %2606 = vmatmul.mubr.f32.gmra.mrb[0].mxu0 %v896
    %v2607 = vpop.f32.mrb[0].mxu0
    %v2608 = vadd.f32 %v2223, %v2607
    %v2609 = vpop.f32.mrb[0].mxu0
    %2610 = vmatprep.mubr.f32.mxu0 %v1346
    %2611 = vmatmul.mubr.f32.gmra.mrb[0].mxu0 %v897
    %v2612 = vpop.f32.mrb[0].mxu0
    %v2613 = vadd.f32 %v2228, %v2612
    %v2614 = vpop.f32.mrb[0].mxu0
    %2615 = vmatprep.mubr.f32.mxu0 %v1347
    %2616 = vmatmul.mubr.f32.gmra.mrb[0].mxu0 %v898
    %v2617 = vpop.f32.mrb[0].mxu0
    %v2618 = vadd.f32 %v2233, %v2617
    %v2619 = vpop.f32.mrb[0].mxu0
    %2620 = vmatprep.mubr.f32.mxu0 %v1348
    %2621 = vmatmul.mubr.f32.gmra.mrb[0].mxu0 %v899
    %v2622 = vpop.f32.mrb[0].mxu0
    %v2623 = vadd.f32 %v2238, %v2622
    %v2624 = vpop.f32.mrb[0].mxu0
    %2625 = vmatprep.mubr.f32.mxu0 %v1349
    %2626 = vmatmul.mubr.f32.gmra.mrb[0].mxu0 %v900
    %v2627 = vpop.f32.mrb[0].mxu0
    %v2628 = vadd.f32 %v2243, %v2627
    %v2629 = vpop.f32.mrb[0].mxu0
    %2630 = vmatprep.mubr.f32.mxu0 %v1350
    %2631 = vmatmul.mubr.f32.gmra.mrb[0].mxu0 %v901
    %v2632 = vpop.f32.mrb[0].mxu0
    %v2633 = vadd.f32 %v2248, %v2632
    %v2634 = vpop.f32.mrb[0].mxu0
    %2635 = vmatprep.mubr.f32.mxu0 %v1351
    %2636 = vmatmul.mubr.f32.gmra.mrb[0].mxu0 %v902
    %v2637 = vpop.f32.mrb[0].mxu0
    %v2638 = vadd.f32 %v2253, %v2637
    %v2639 = vpop.f32.mrb[0].mxu0
    %2640 = vmatprep.mubr.f32.mxu0 %v1352
    %2641 = vmatmul.mubr.f32.gmra.mrb[0].mxu0 %v903
    %v2642 = vpop.f32.mrb[0].mxu0
    %v2643 = vadd.f32 %v2258, %v2642
    %v2644 = vpop.f32.mrb[0].mxu0
    %2645 = vmatprep.mubr.f32.mxu0 %v1353
    %2646 = vmatmul.mubr.f32.gmra.mrb[0].mxu0 %v904
    %v2647 = vpop.f32.mrb[0].mxu0
    %v2648 = vadd.f32 %v2263, %v2647
    %v2649 = vpop.f32.mrb[0].mxu0
    %2650 = vmatprep.mubr.f32.mxu0 %v1354
    %2651 = vmatmul.mubr.f32.gmra.mrb[0].mxu0 %v905
    %v2652 = vpop.f32.mrb[0].mxu0
    %v2653 = vadd.f32 %v2268, %v2652
    %v2654 = vpop.f32.mrb[0].mxu0
    %2655 = vdwg.mxu0
    %2656 = vmatprep.subr.mxu0 0.0
    %2657 = vmatpush1.msra.mxu0 %v1453
    %2658 = vmatprep.subr.mxu0 0.0
    %2659 = vmatpush1.msra.mxu0 %v1454
    %2660 = vmatprep.subr.mxu0 0.0
    %2661 = vmatpush1.msra.mxu0 %v1455
    %2662 = vmatprep.subr.mxu0 0.0
    %2663 = vmatpush1.msra.mxu0 %v1456
    %2664 = vmatprep.subr.mxu0 0.0
    %2665 = vmatpush1.msra.mxu0 %v1457
    %2666 = vmatprep.subr.mxu0 0.0
    %2667 = vmatpush1.msra.mxu0 %v1458
    %2668 = vmatprep.subr.mxu0 0.0
    %2669 = vmatpush1.msra.mxu0 %v1459
    %2670 = vmatprep.subr.mxu0 0.0
    %2671 = vmatpush1.msra.mxu0 %v1460
    %2672 = vmatprep.subr.mxu0 0.0
    %2673 = vmatpush1.msra.mxu0 %v1461
    %2674 = vmatprep.subr.mxu0 0.0
    %2675 = vmatpush1.msra.mxu0 %v1462
    %2676 = vmatprep.subr.mxu0 0.0
    %2677 = vmatpush1.msra.mxu0 %v1463
    %2678 = vmatprep.subr.mxu0 0.0
    %2679 = vmatpush1.msra.mxu0 %v1464
    %2680 = vmatprep.subr.mxu0 0.0
    %2681 = vmatpush1.msra.mxu0 %v1465
    %2682 = vmatprep.subr.mxu0 0.0
    %2683 = vmatpush1.msra.mxu0 %v1466
    %2684 = vmatprep.subr.mxu0 0.0
    %2685 = vmatpush1.msra.mxu0 %v1467
    %2686 = vmatprep.subr.mxu0 0.0
    %2687 = vmatpush1.msra.mxu0 %v1468
    %2688 = vmatprep.subr.mxu0 0.0
    %2689 = vmatpush1.msra.mxu0 %v1469
    %2690 = vmatprep.subr.mxu0 0.0
    %2691 = vmatpush1.msra.mxu0 %v1470
    %2692 = vmatprep.subr.mxu0 0.0
    %2693 = vmatpush1.msra.mxu0 %v1471
    %2694 = vmatprep.subr.mxu0 0.0
    %2695 = vmatpush1.msra.mxu0 %v1472
    %2696 = vmatprep.subr.mxu0 0.0
    %2697 = vmatpush1.msra.mxu0 %v1473
    %2698 = vmatprep.subr.mxu0 0.0
    %2699 = vmatpush1.msra.mxu0 %v1474
    %2700 = vmatprep.subr.mxu0 0.0
    %2701 = vmatpush1.msra.mxu0 %v1475
    %2702 = vmatprep.subr.mxu0 0.0
    %2703 = vmatpush1.msra.mxu0 %v1476
    %2704 = vmatprep.subr.mxu0 0.0
    %2705 = vmatpush1.msra.mxu0 %v1477
    %2706 = vmatprep.subr.mxu0 0.0
    %2707 = vmatpush1.msra.mxu0 %v1478
    %2708 = vmatprep.subr.mxu0 0.0
    %2709 = vmatpush1.msra.mxu0 %v1479
    %2710 = vmatprep.subr.mxu0 0.0
    %2711 = vmatpush1.msra.mxu0 %v1480
    %2712 = vmatprep.subr.mxu0 0.0
    %2713 = vmatpush1.msra.mxu0 %v1481
    %2714 = vmatprep.subr.mxu0 0.0
    %2715 = vmatpush1.msra.mxu0 %v1482
    %2716 = vmatprep.subr.mxu0 0.0
    %2717 = vmatpush1.msra.mxu0 %v1483
    %2718 = vmatprep.subr.mxu0 0.0
    %2719 = vmatpush1.msra.mxu0 %v1484
    %2720 = vmatprep.mubr.f32.mxu0 %v840
    %2721 = vmatmul.mubr.f32.gmra.mrb[0].mxu0 %v1066
    %v2722 = vpop.f32.mrb[0].mxu0
    %v2723 = vadd.f32 %v2338, %v2722
    %v2724 = vpop.f32.mrb[0].mxu0
    %2725 = vmatprep.mubr.f32.mxu0 %v841
    %2726 = vmatmul.mubr.f32.gmra.mrb[0].mxu0 %v1067
    %v2727 = vpop.f32.mrb[0].mxu0
    %v2728 = vadd.f32 %v2343, %v2727
    %v2729 = vpop.f32.mrb[0].mxu0
    %2730 = vmatprep.mubr.f32.mxu0 %v842
    %2731 = vmatmul.mubr.f32.gmra.mrb[0].mxu0 %v1068
    %v2732 = vpop.f32.mrb[0].mxu0
    %v2733 = vadd.f32 %v2348, %v2732
    %v2734 = vpop.f32.mrb[0].mxu0
    %2735 = vmatprep.mubr.f32.mxu0 %v843
    %2736 = vmatmul.mubr.f32.gmra.mrb[0].mxu0 %v1069
    %v2737 = vpop.f32.mrb[0].mxu0
    %v2738 = vadd.f32 %v2353, %v2737
    %v2739 = vpop.f32.mrb[0].mxu0
    %2740 = vmatprep.mubr.f32.mxu0 %v844
    %2741 = vmatmul.mubr.f32.gmra.mrb[0].mxu0 %v1070
    %v2742 = vpop.f32.mrb[0].mxu0
    %v2743 = vadd.f32 %v2358, %v2742
    %v2744 = vpop.f32.mrb[0].mxu0
    %2745 = vmatprep.mubr.f32.mxu0 %v845
    %2746 = vmatmul.mubr.f32.gmra.mrb[0].mxu0 %v1071
    %v2747 = vpop.f32.mrb[0].mxu0
    %v2748 = vadd.f32 %v2363, %v2747
    %v2749 = vpop.f32.mrb[0].mxu0
    %2750 = vmatprep.mubr.f32.mxu0 %v846
    %2751 = vmatmul.mubr.f32.gmra.mrb[0].mxu0 %v1072
    %v2752 = vpop.f32.mrb[0].mxu0
    %v2753 = vadd.f32 %v2368, %v2752
    %v2754 = vpop.f32.mrb[0].mxu0
    %2755 = vmatprep.mubr.f32.mxu0 %v847
    %2756 = vmatmul.mubr.f32.gmra.mrb[0].mxu0 %v1073
    %v2757 = vpop.f32.mrb[0].mxu0
    %v2758 = vadd.f32 %v2373, %v2757
    %v2759 = vpop.f32.mrb[0].mxu0
    %2760 = vmatprep.mubr.f32.mxu0 %v848
    %2761 = vmatmul.mubr.f32.gmra.mrb[0].mxu0 %v1074
    %v2762 = vpop.f32.mrb[0].mxu0
    %v2763 = vadd.f32 %v2378, %v2762
    %v2764 = vpop.f32.mrb[0].mxu0
    %2765 = vmatprep.mubr.f32.mxu0 %v849
    %2766 = vmatmul.mubr.f32.gmra.mrb[0].mxu0 %v1075
    %v2767 = vpop.f32.mrb[0].mxu0
    %v2768 = vadd.f32 %v2383, %v2767
    %v2769 = vpop.f32.mrb[0].mxu0
    %2770 = vmatprep.mubr.f32.mxu0 %v850
    %2771 = vmatmul.mubr.f32.gmra.mrb[0].mxu0 %v1076
    %v2772 = vpop.f32.mrb[0].mxu0
    %v2773 = vadd.f32 %v2388, %v2772
    %v2774 = vpop.f32.mrb[0].mxu0
    %2775 = vmatprep.mubr.f32.mxu0 %v851
    %2776 = vmatmul.mubr.f32.gmra.mrb[0].mxu0 %v1077
    %v2777 = vpop.f32.mrb[0].mxu0
    %v2778 = vadd.f32 %v2393, %v2777
    %v2779 = vpop.f32.mrb[0].mxu0
    %2780 = vmatprep.mubr.f32.mxu0 %v852
    %2781 = vmatmul.mubr.f32.gmra.mrb[0].mxu0 %v1078
    %v2782 = vpop.f32.mrb[0].mxu0
    %v2783 = vadd.f32 %v2398, %v2782
    %v2784 = vpop.f32.mrb[0].mxu0
    %2785 = vmatprep.mubr.f32.mxu0 %v853
    %2786 = vmatmul.mubr.f32.gmra.mrb[0].mxu0 %v1079
    %v2787 = vpop.f32.mrb[0].mxu0
    %v2788 = vadd.f32 %v2403, %v2787
    %v2789 = vpop.f32.mrb[0].mxu0
    %2790 = vmatprep.mubr.f32.mxu0 %v854
    %2791 = vmatmul.mubr.f32.gmra.mrb[0].mxu0 %v1080
    %v2792 = vpop.f32.mrb[0].mxu0
    %v2793 = vadd.f32 %v2408, %v2792
    %v2794 = vpop.f32.mrb[0].mxu0
    %2795 = vmatprep.mubr.f32.mxu0 %v855
    %2796 = vmatmul.mubr.f32.gmra.mrb[0].mxu0 %v1081
    %v2797 = vpop.f32.mrb[0].mxu0
    %v2798 = vadd.f32 %v2413, %v2797
    %v2799 = vpop.f32.mrb[0].mxu0
    %2800 = vmatprep.mubr.f32.mxu0 %v856
    %2801 = vmatmul.mubr.f32.gmra.mrb[0].mxu0 %v1082
    %v2802 = vpop.f32.mrb[0].mxu0
    %v2803 = vadd.f32 %v2418, %v2802
    %v2804 = vpop.f32.mrb[0].mxu0
    %2805 = vmatprep.mubr.f32.mxu0 %v857
    %2806 = vmatmul.mubr.f32.gmra.mrb[0].mxu0 %v1083
    %v2807 = vpop.f32.mrb[0].mxu0
    %v2808 = vadd.f32 %v2423, %v2807
    %v2809 = vpop.f32.mrb[0].mxu0
    %2810 = vmatprep.mubr.f32.mxu0 %v858
    %2811 = vmatmul.mubr.f32.gmra.mrb[0].mxu0 %v1084
    %v2812 = vpop.f32.mrb[0].mxu0
    %v2813 = vadd.f32 %v2428, %v2812
    %v2814 = vpop.f32.mrb[0].mxu0
    %2815 = vmatprep.mubr.f32.mxu0 %v859
    %2816 = vmatmul.mubr.f32.gmra.mrb[0].mxu0 %v1085
    %v2817 = vpop.f32.mrb[0].mxu0
    %v2818 = vadd.f32 %v2433, %v2817
    %v2819 = vpop.f32.mrb[0].mxu0
    %2820 = vmatprep.mubr.f32.mxu0 %v860
    %2821 = vmatmul.mubr.f32.gmra.mrb[0].mxu0 %v1086
    %v2822 = vpop.f32.mrb[0].mxu0
    %v2823 = vadd.f32 %v2438, %v2822
    %v2824 = vpop.f32.mrb[0].mxu0
    %2825 = vmatprep.mubr.f32.mxu0 %v861
    %2826 = vmatmul.mubr.f32.gmra.mrb[0].mxu0 %v1087
    %v2827 = vpop.f32.mrb[0].mxu0
    %v2828 = vadd.f32 %v2443, %v2827
    %v2829 = vpop.f32.mrb[0].mxu0
    %2830 = vmatprep.mubr.f32.mxu0 %v862
    %2831 = vmatmul.mubr.f32.gmra.mrb[0].mxu0 %v1088
    %v2832 = vpop.f32.mrb[0].mxu0
    %v2833 = vadd.f32 %v2448, %v2832
    %v2834 = vpop.f32.mrb[0].mxu0
    %2835 = vmatprep.mubr.f32.mxu0 %v863
    %2836 = vmatmul.mubr.f32.gmra.mrb[0].mxu0 %v1089
    %v2837 = vpop.f32.mrb[0].mxu0
    %v2838 = vadd.f32 %v2453, %v2837
    %v2839 = vpop.f32.mrb[0].mxu0
    %2840 = vmatprep.mubr.f32.mxu0 %v864
    %2841 = vmatmul.mubr.f32.gmra.mrb[0].mxu0 %v1090
    %v2842 = vpop.f32.mrb[0].mxu0
    %v2843 = vadd.f32 %v2458, %v2842
    %v2844 = vpop.f32.mrb[0].mxu0
    %2845 = vmatprep.mubr.f32.mxu0 %v865
    %2846 = vmatmul.mubr.f32.gmra.mrb[0].mxu0 %v1091
    %v2847 = vpop.f32.mrb[0].mxu0
    %v2848 = vadd.f32 %v2463, %v2847
    %v2849 = vpop.f32.mrb[0].mxu0
    %2850 = vmatprep.mubr.f32.mxu0 %v866
    %2851 = vmatmul.mubr.f32.gmra.mrb[0].mxu0 %v1092
    %v2852 = vpop.f32.mrb[0].mxu0
    %v2853 = vadd.f32 %v2468, %v2852
    %v2854 = vpop.f32.mrb[0].mxu0
    %2855 = vmatprep.mubr.f32.mxu0 %v867
    %2856 = vmatmul.mubr.f32.gmra.mrb[0].mxu0 %v1093
    %v2857 = vpop.f32.mrb[0].mxu0
    %v2858 = vadd.f32 %v2473, %v2857
    %v2859 = vpop.f32.mrb[0].mxu0
    %2860 = vmatprep.mubr.f32.mxu0 %v868
    %2861 = vmatmul.mubr.f32.gmra.mrb[0].mxu0 %v1094
    %v2862 = vpop.f32.mrb[0].mxu0
    %v2863 = vadd.f32 %v2478, %v2862
    %v2864 = vpop.f32.mrb[0].mxu0
    %2865 = vmatprep.mubr.f32.mxu0 %v869
    %2866 = vmatmul.mubr.f32.gmra.mrb[0].mxu0 %v1095
    %v2867 = vpop.f32.mrb[0].mxu0
    %v2868 = vadd.f32 %v2483, %v2867
    %v2869 = vpop.f32.mrb[0].mxu0
    %2870 = vmatprep.mubr.f32.mxu0 %v870
    %2871 = vmatmul.mubr.f32.gmra.mrb[0].mxu0 %v1096
    %v2872 = vpop.f32.mrb[0].mxu0
    %v2873 = vadd.f32 %v2488, %v2872
    %v2874 = vpop.f32.mrb[0].mxu0
    %2875 = vmatprep.mubr.f32.mxu0 %v871
    %2876 = vmatmul.mubr.f32.gmra.mrb[0].mxu0 %v1097
    %v2877 = vpop.f32.mrb[0].mxu0
    %v2878 = vadd.f32 %v2493, %v2877
    %v2879 = vpop.f32.mrb[0].mxu0
    %2880 = vmatprep.mubr.f32.mxu0 %v876
    %2881 = vmatmul.mubr.f32.gmra.mrb[0].mxu0 %v1102
    %v2882 = vpop.f32.mrb[0].mxu0
    %v2883 = vadd.f32 %v2498, %v2882
    %v2884 = vpop.f32.mrb[0].mxu0
    %2885 = vmatprep.mubr.f32.mxu0 %v877
    %2886 = vmatmul.mubr.f32.gmra.mrb[0].mxu0 %v1103
    %v2887 = vpop.f32.mrb[0].mxu0
    %v2888 = vadd.f32 %v2503, %v2887
    %v2889 = vpop.f32.mrb[0].mxu0
    %2890 = vmatprep.mubr.f32.mxu0 %v878
    %2891 = vmatmul.mubr.f32.gmra.mrb[0].mxu0 %v1104
    %v2892 = vpop.f32.mrb[0].mxu0
    %v2893 = vadd.f32 %v2508, %v2892
    %v2894 = vpop.f32.mrb[0].mxu0
    %2895 = vmatprep.mubr.f32.mxu0 %v879
    %2896 = vmatmul.mubr.f32.gmra.mrb[0].mxu0 %v1105
    %v2897 = vpop.f32.mrb[0].mxu0
    %v2898 = vadd.f32 %v2513, %v2897
    %v2899 = vpop.f32.mrb[0].mxu0
    %2900 = vmatprep.mubr.f32.mxu0 %v880
    %2901 = vmatmul.mubr.f32.gmra.mrb[0].mxu0 %v1106
    %v2902 = vpop.f32.mrb[0].mxu0
    %v2903 = vadd.f32 %v2518, %v2902
    %v2904 = vpop.f32.mrb[0].mxu0
    %2905 = vmatprep.mubr.f32.mxu0 %v881
    %2906 = vmatmul.mubr.f32.gmra.mrb[0].mxu0 %v1107
    %v2907 = vpop.f32.mrb[0].mxu0
    %v2908 = vadd.f32 %v2523, %v2907
    %v2909 = vpop.f32.mrb[0].mxu0
    %2910 = vmatprep.mubr.f32.mxu0 %v882
    %2911 = vmatmul.mubr.f32.gmra.mrb[0].mxu0 %v1108
    %v2912 = vpop.f32.mrb[0].mxu0
    %v2913 = vadd.f32 %v2528, %v2912
    %v2914 = vpop.f32.mrb[0].mxu0
    %2915 = vmatprep.mubr.f32.mxu0 %v883
    %2916 = vmatmul.mubr.f32.gmra.mrb[0].mxu0 %v1109
    %v2917 = vpop.f32.mrb[0].mxu0
    %v2918 = vadd.f32 %v2533, %v2917
    %v2919 = vpop.f32.mrb[0].mxu0
    %2920 = vmatprep.mubr.f32.mxu0 %v884
    %2921 = vmatmul.mubr.f32.gmra.mrb[0].mxu0 %v1110
    %v2922 = vpop.f32.mrb[0].mxu0
    %v2923 = vadd.f32 %v2538, %v2922
    %v2924 = vpop.f32.mrb[0].mxu0
    %2925 = vmatprep.mubr.f32.mxu0 %v885
    %2926 = vmatmul.mubr.f32.gmra.mrb[0].mxu0 %v1111
    %v2927 = vpop.f32.mrb[0].mxu0
    %v2928 = vadd.f32 %v2543, %v2927
    %v2929 = vpop.f32.mrb[0].mxu0
    %2930 = vmatprep.mubr.f32.mxu0 %v886
    %2931 = vmatmul.mubr.f32.gmra.mrb[0].mxu0 %v1112
    %v2932 = vpop.f32.mrb[0].mxu0
    %v2933 = vadd.f32 %v2548, %v2932
    %v2934 = vpop.f32.mrb[0].mxu0
    %2935 = vmatprep.mubr.f32.mxu0 %v887
    %2936 = vmatmul.mubr.f32.gmra.mrb[0].mxu0 %v1113
    %v2937 = vpop.f32.mrb[0].mxu0
    %v2938 = vadd.f32 %v2553, %v2937
    %v2939 = vpop.f32.mrb[0].mxu0
    %2940 = vmatprep.mubr.f32.mxu0 %v888
    %2941 = vmatmul.mubr.f32.gmra.mrb[0].mxu0 %v1114
    %v2942 = vpop.f32.mrb[0].mxu0
    %v2943 = vadd.f32 %v2558, %v2942
    %v2944 = vpop.f32.mrb[0].mxu0
    %2945 = vmatprep.mubr.f32.mxu0 %v889
    %2946 = vmatmul.mubr.f32.gmra.mrb[0].mxu0 %v1115
    %v2947 = vpop.f32.mrb[0].mxu0
    %v2948 = vadd.f32 %v2563, %v2947
    %v2949 = vpop.f32.mrb[0].mxu0
    %2950 = vmatprep.mubr.f32.mxu0 %v890
    %2951 = vmatmul.mubr.f32.gmra.mrb[0].mxu0 %v1116
    %v2952 = vpop.f32.mrb[0].mxu0
    %v2953 = vadd.f32 %v2568, %v2952
    %v2954 = vpop.f32.mrb[0].mxu0
    %2955 = vmatprep.mubr.f32.mxu0 %v891
    %2956 = vmatmul.mubr.f32.gmra.mrb[0].mxu0 %v1117
    %v2957 = vpop.f32.mrb[0].mxu0
    %v2958 = vadd.f32 %v2573, %v2957
    %v2959 = vpop.f32.mrb[0].mxu0
    %2960 = vmatprep.mubr.f32.mxu0 %v892
    %2961 = vmatmul.mubr.f32.gmra.mrb[0].mxu0 %v1118
    %v2962 = vpop.f32.mrb[0].mxu0
    %v2963 = vadd.f32 %v2578, %v2962
    %v2964 = vpop.f32.mrb[0].mxu0
    %2965 = vmatprep.mubr.f32.mxu0 %v893
    %2966 = vmatmul.mubr.f32.gmra.mrb[0].mxu0 %v1119
    %v2967 = vpop.f32.mrb[0].mxu0
    %v2968 = vadd.f32 %v2583, %v2967
    %v2969 = vpop.f32.mrb[0].mxu0
    %2970 = vmatprep.mubr.f32.mxu0 %v894
    %2971 = vmatmul.mubr.f32.gmra.mrb[0].mxu0 %v1120
    %v2972 = vpop.f32.mrb[0].mxu0
    %v2973 = vadd.f32 %v2588, %v2972
    %v2974 = vpop.f32.mrb[0].mxu0
    %2975 = vmatprep.mubr.f32.mxu0 %v895
    %2976 = vmatmul.mubr.f32.gmra.mrb[0].mxu0 %v1121
    %v2977 = vpop.f32.mrb[0].mxu0
    %v2978 = vadd.f32 %v2593, %v2977
    %v2979 = vpop.f32.mrb[0].mxu0
    %2980 = vmatprep.mubr.f32.mxu0 %v896
    %2981 = vmatmul.mubr.f32.gmra.mrb[0].mxu0 %v1122
    %v2982 = vpop.f32.mrb[0].mxu0
    %v2983 = vadd.f32 %v2598, %v2982
    %v2984 = vpop.f32.mrb[0].mxu0
    %2985 = vmatprep.mubr.f32.mxu0 %v897
    %2986 = vmatmul.mubr.f32.gmra.mrb[0].mxu0 %v1123
    %v2987 = vpop.f32.mrb[0].mxu0
    %v2988 = vadd.f32 %v2603, %v2987
    %v2989 = vpop.f32.mrb[0].mxu0
    %2990 = vmatprep.mubr.f32.mxu0 %v898
    %2991 = vmatmul.mubr.f32.gmra.mrb[0].mxu0 %v1124
    %v2992 = vpop.f32.mrb[0].mxu0
    %v2993 = vadd.f32 %v2608, %v2992
    %v2994 = vpop.f32.mrb[0].mxu0
    %2995 = vmatprep.mubr.f32.mxu0 %v899
    %2996 = vmatmul.mubr.f32.gmra.mrb[0].mxu0 %v1125
    %v2997 = vpop.f32.mrb[0].mxu0
    %v2998 = vadd.f32 %v2613, %v2997
    %v2999 = vpop.f32.mrb[0].mxu0
    %3000 = vmatprep.mubr.f32.mxu0 %v900
    %3001 = vmatmul.mubr.f32.gmra.mrb[0].mxu0 %v1126
    %v3002 = vpop.f32.mrb[0].mxu0
    %v3003 = vadd.f32 %v2618, %v3002
    %v3004 = vpop.f32.mrb[0].mxu0
    %3005 = vmatprep.mubr.f32.mxu0 %v901
    %3006 = vmatmul.mubr.f32.gmra.mrb[0].mxu0 %v1127
    %v3007 = vpop.f32.mrb[0].mxu0
    %v3008 = vadd.f32 %v2623, %v3007
    %v3009 = vpop.f32.mrb[0].mxu0
    %3010 = vmatprep.mubr.f32.mxu0 %v902
    %3011 = vmatmul.mubr.f32.gmra.mrb[0].mxu0 %v1128
    %v3012 = vpop.f32.mrb[0].mxu0
    %v3013 = vadd.f32 %v2628, %v3012
    %v3014 = vpop.f32.mrb[0].mxu0
    %3015 = vmatprep.mubr.f32.mxu0 %v903
    %3016 = vmatmul.mubr.f32.gmra.mrb[0].mxu0 %v1129
    %v3017 = vpop.f32.mrb[0].mxu0
    %v3018 = vadd.f32 %v2633, %v3017
    %v3019 = vpop.f32.mrb[0].mxu0
    %3020 = vmatprep.mubr.f32.mxu0 %v904
    %3021 = vmatmul.mubr.f32.gmra.mrb[0].mxu0 %v1130
    %v3022 = vpop.f32.mrb[0].mxu0
    %v3023 = vadd.f32 %v2638, %v3022
    %v3024 = vpop.f32.mrb[0].mxu0
    %3025 = vmatprep.mubr.f32.mxu0 %v905
    %3026 = vmatmul.mubr.f32.gmra.mrb[0].mxu0 %v1131
    %v3027 = vpop.f32.mrb[0].mxu0
    %v3028 = vadd.f32 %v2643, %v3027
    %v3029 = vpop.f32.mrb[0].mxu0
    %3030 = vmatprep.mubr.f32.mxu0 %v906
    %3031 = vmatmul.mubr.f32.gmra.mrb[0].mxu0 %v1132
    %v3032 = vpop.f32.mrb[0].mxu0
    %v3033 = vadd.f32 %v2648, %v3032
    %v3034 = vpop.f32.mrb[0].mxu0
    %3035 = vmatprep.mubr.f32.mxu0 %v907
    %3036 = vmatmul.mubr.f32.gmra.mrb[0].mxu0 %v1133
    %v3037 = vpop.f32.mrb[0].mxu0
    %v3038 = vadd.f32 %v2653, %v3037
    %v3039 = vpop.f32.mrb[0].mxu0
    %3040 = vdwg.mxu0
    %3041 = vmatprep.subr.mxu0 0.0
    %3042 = vmatpush1.msra.mxu0 %v1485
    %3043 = vmatprep.subr.mxu0 0.0
    %3044 = vmatpush1.msra.mxu0 %v1486
    %3045 = vmatprep.subr.mxu0 0.0
    %3046 = vmatpush1.msra.mxu0 %v1487
    %3047 = vmatprep.subr.mxu0 0.0
    %3048 = vmatpush1.msra.mxu0 %v1488
    %3049 = vmatprep.subr.mxu0 0.0
    %3050 = vmatpush1.msra.mxu0 %v1489
    %3051 = vmatprep.subr.mxu0 0.0
    %3052 = vmatpush1.msra.mxu0 %v1490
    %3053 = vmatprep.subr.mxu0 0.0
    %3054 = vmatpush1.msra.mxu0 %v1491
    %3055 = vmatprep.subr.mxu0 0.0
    %3056 = vmatpush1.msra.mxu0 %v1492
    %3057 = vmatprep.subr.mxu0 0.0
    %3058 = vmatpush1.msra.mxu0 %v1493
    %3059 = vmatprep.subr.mxu0 0.0
    %3060 = vmatpush1.msra.mxu0 %v1494
    %3061 = vmatprep.subr.mxu0 0.0
    %3062 = vmatpush1.msra.mxu0 %v1495
    %3063 = vmatprep.subr.mxu0 0.0
    %3064 = vmatpush1.msra.mxu0 %v1496
    %3065 = vmatprep.subr.mxu0 0.0
    %3066 = vmatpush1.msra.mxu0 %v1497
    %3067 = vmatprep.subr.mxu0 0.0
    %3068 = vmatpush1.msra.mxu0 %v1498
    %3069 = vmatprep.subr.mxu0 0.0
    %3070 = vmatpush1.msra.mxu0 %v1499
    %3071 = vmatprep.subr.mxu0 0.0
    %3072 = vmatpush1.msra.mxu0 %v1500
    %3073 = vmatprep.subr.mxu0 0.0
    %3074 = vmatpush1.msra.mxu0 0.0
    %3075 = vmatprep.subr.mxu0 0.0
    %3076 = vmatpush1.msra.mxu0 0.0
    %3077 = vmatprep.subr.mxu0 0.0
    %3078 = vmatpush1.msra.mxu0 0.0
    %3079 = vmatprep.subr.mxu0 0.0
    %3080 = vmatpush1.msra.mxu0 0.0
    %3081 = vmatprep.subr.mxu0 0.0
    %3082 = vmatpush1.msra.mxu0 0.0
    %3083 = vmatprep.subr.mxu0 0.0
    %3084 = vmatpush1.msra.mxu0 0.0
    %3085 = vmatprep.subr.mxu0 0.0
    %3086 = vmatpush1.msra.mxu0 0.0
    %3087 = vmatprep.subr.mxu0 0.0
    %3088 = vmatpush1.msra.mxu0 0.0
    %3089 = vmatprep.subr.mxu0 0.0
    %3090 = vmatpush1.msra.mxu0 0.0
    %3091 = vmatprep.subr.mxu0 0.0
    %3092 = vmatpush1.msra.mxu0 0.0
    %3093 = vmatprep.subr.mxu0 0.0
    %3094 = vmatpush1.msra.mxu0 0.0
    %3095 = vmatprep.subr.mxu0 0.0
    %3096 = vmatpush1.msra.mxu0 0.0
    %3097 = vmatprep.subr.mxu0 0.0
    %3098 = vmatpush1.msra.mxu0 0.0
    %3099 = vmatprep.subr.mxu0 0.0
    %3100 = vmatpush1.msra.mxu0 0.0
    %3101 = vmatprep.subr.mxu0 0.0
    %3102 = vmatpush1.msra.mxu0 0.0
    %3103 = vmatprep.subr.mxu0 0.0
    %3104 = vmatpush1.msra.mxu0 0.0
    %3105 = vmatprep.mubr.f32.mxu0 0.0
    %3106 = vmatmul.mubr.f32.gmra.mrb[0].mxu0 %v1289
    %v3107 = vpop.f32.mrb[0].mxu0
    %v3108 = vadd.f32 %v2723, %v3107
    %v3109 = vpop.f32.mrb[0].mxu0
    %3110 = vmatprep.mubr.f32.mxu0 0.0
    %3111 = vmatmul.mubr.f32.gmra.mrb[0].mxu0 %v1290
    %v3112 = vpop.f32.mrb[0].mxu0
    %v3113 = vadd.f32 %v2728, %v3112
    %v3114 = vpop.f32.mrb[0].mxu0
    %3115 = vmatprep.mubr.f32.mxu0 0.0
    %3116 = vmatmul.mubr.f32.gmra.mrb[0].mxu0 %v1291
    %v3117 = vpop.f32.mrb[0].mxu0
    %v3118 = vadd.f32 %v2733, %v3117
    %v3119 = vpop.f32.mrb[0].mxu0
    %3120 = vmatprep.mubr.f32.mxu0 0.0
    %3121 = vmatmul.mubr.f32.gmra.mrb[0].mxu0 %v1292
    %v3122 = vpop.f32.mrb[0].mxu0
    %v3123 = vadd.f32 %v2738, %v3122
    %v3124 = vpop.f32.mrb[0].mxu0
    %3125 = vmatprep.mubr.f32.mxu0 0.0
    %3126 = vmatmul.mubr.f32.gmra.mrb[0].mxu0 %v1293
    %v3127 = vpop.f32.mrb[0].mxu0
    %v3128 = vadd.f32 %v2743, %v3127
    %v3129 = vpop.f32.mrb[0].mxu0
    %3130 = vmatprep.mubr.f32.mxu0 0.0
    %3131 = vmatmul.mubr.f32.gmra.mrb[0].mxu0 %v1294
    %v3132 = vpop.f32.mrb[0].mxu0
    %v3133 = vadd.f32 %v2748, %v3132
    %v3134 = vpop.f32.mrb[0].mxu0
    %3135 = vmatprep.mubr.f32.mxu0 0.0
    %3136 = vmatmul.mubr.f32.gmra.mrb[0].mxu0 %v1295
    %v3137 = vpop.f32.mrb[0].mxu0
    %v3138 = vadd.f32 %v2753, %v3137
    %v3139 = vpop.f32.mrb[0].mxu0
    %3140 = vmatprep.mubr.f32.mxu0 0.0
    %3141 = vmatmul.mubr.f32.gmra.mrb[0].mxu0 %v1296
    %v3142 = vpop.f32.mrb[0].mxu0
    %v3143 = vadd.f32 %v2758, %v3142
    %v3144 = vpop.f32.mrb[0].mxu0
    %3145 = vmatprep.mubr.f32.mxu0 0.0
    %3146 = vmatmul.mubr.f32.gmra.mrb[0].mxu0 %v1297
    %v3147 = vpop.f32.mrb[0].mxu0
    %v3148 = vadd.f32 %v2763, %v3147
    %v3149 = vpop.f32.mrb[0].mxu0
    %3150 = vmatprep.mubr.f32.mxu0 0.0
    %3151 = vmatmul.mubr.f32.gmra.mrb[0].mxu0 %v1298
    %v3152 = vpop.f32.mrb[0].mxu0
    %v3153 = vadd.f32 %v2768, %v3152
    %v3154 = vpop.f32.mrb[0].mxu0
    %3155 = vmatprep.mubr.f32.mxu0 0.0
    %3156 = vmatmul.mubr.f32.gmra.mrb[0].mxu0 %v1299
    %v3157 = vpop.f32.mrb[0].mxu0
    %v3158 = vadd.f32 %v2773, %v3157
    %v3159 = vpop.f32.mrb[0].mxu0
    %3160 = vmatprep.mubr.f32.mxu0 0.0
    %3161 = vmatmul.mubr.f32.gmra.mrb[0].mxu0 %v1300
    %v3162 = vpop.f32.mrb[0].mxu0
    %v3163 = vadd.f32 %v2778, %v3162
    %v3164 = vpop.f32.mrb[0].mxu0
    %3165 = vmatprep.mubr.f32.mxu0 0.0
    %3166 = vmatmul.mubr.f32.gmra.mrb[0].mxu0 %v1301
    %v3167 = vpop.f32.mrb[0].mxu0
    %v3168 = vadd.f32 %v2783, %v3167
    %v3169 = vpop.f32.mrb[0].mxu0
    %3170 = vmatprep.mubr.f32.mxu0 0.0
    %3171 = vmatmul.mubr.f32.gmra.mrb[0].mxu0 %v1302
    %v3172 = vpop.f32.mrb[0].mxu0
    %v3173 = vadd.f32 %v2788, %v3172
    %v3174 = vpop.f32.mrb[0].mxu0
    %3175 = vmatprep.mubr.f32.mxu0 0.0
    %3176 = vmatmul.mubr.f32.gmra.mrb[0].mxu0 %v1303
    %v3177 = vpop.f32.mrb[0].mxu0
    %v3178 = vadd.f32 %v2793, %v3177
    %v3179 = vpop.f32.mrb[0].mxu0
    %3180 = vmatprep.mubr.f32.mxu0 0.0
    %3181 = vmatmul.mubr.f32.gmra.mrb[0].mxu0 %v1304
    %v3182 = vpop.f32.mrb[0].mxu0
    %v3183 = vadd.f32 %v2798, %v3182
    %v3184 = vpop.f32.mrb[0].mxu0
    %3185 = vmatprep.mubr.f32.mxu0 0.0
    %3186 = vmatmul.mubr.f32.gmra.mrb[0].mxu0 %v1305
    %v3187 = vpop.f32.mrb[0].mxu0
    %v3188 = vadd.f32 %v2803, %v3187
    %v3189 = vpop.f32.mrb[0].mxu0
    %3190 = vmatprep.mubr.f32.mxu0 0.0
    %3191 = vmatmul.mubr.f32.gmra.mrb[0].mxu0 %v1306
    %v3192 = vpop.f32.mrb[0].mxu0
    %v3193 = vadd.f32 %v2808, %v3192
    %v3194 = vpop.f32.mrb[0].mxu0
    %3195 = vmatprep.mubr.f32.mxu0 0.0
    %3196 = vmatmul.mubr.f32.gmra.mrb[0].mxu0 %v1307
    %v3197 = vpop.f32.mrb[0].mxu0
    %v3198 = vadd.f32 %v2813, %v3197
    %v3199 = vpop.f32.mrb[0].mxu0
    %3200 = vmatprep.mubr.f32.mxu0 0.0
    %3201 = vmatmul.mubr.f32.gmra.mrb[0].mxu0 %v1308
    %v3202 = vpop.f32.mrb[0].mxu0
    %v3203 = vadd.f32 %v2818, %v3202
    %v3204 = vpop.f32.mrb[0].mxu0
    %3205 = vmatprep.mubr.f32.mxu0 0.0
    %3206 = vmatmul.mubr.f32.gmra.mrb[0].mxu0 %v1309
    %v3207 = vpop.f32.mrb[0].mxu0
    %v3208 = vadd.f32 %v2823, %v3207
    %v3209 = vpop.f32.mrb[0].mxu0
    %3210 = vmatprep.mubr.f32.mxu0 0.0
    %3211 = vmatmul.mubr.f32.gmra.mrb[0].mxu0 %v1310
    %v3212 = vpop.f32.mrb[0].mxu0
    %v3213 = vadd.f32 %v2828, %v3212
    %v3214 = vpop.f32.mrb[0].mxu0
    %3215 = vmatprep.mubr.f32.mxu0 0.0
    %3216 = vmatmul.mubr.f32.gmra.mrb[0].mxu0 %v1311
    %v3217 = vpop.f32.mrb[0].mxu0
    %v3218 = vadd.f32 %v2833, %v3217
    %v3219 = vpop.f32.mrb[0].mxu0
    %3220 = vmatprep.mubr.f32.mxu0 0.0
    %3221 = vmatmul.mubr.f32.gmra.mrb[0].mxu0 %v1312
    %v3222 = vpop.f32.mrb[0].mxu0
    %v3223 = vadd.f32 %v2838, %v3222
    %v3224 = vpop.f32.mrb[0].mxu0
    %3225 = vmatprep.mubr.f32.mxu0 0.0
    %3226 = vmatmul.mubr.f32.gmra.mrb[0].mxu0 %v1313
    %v3227 = vpop.f32.mrb[0].mxu0
    %v3228 = vadd.f32 %v2843, %v3227
    %v3229 = vpop.f32.mrb[0].mxu0
    %3230 = vmatprep.mubr.f32.mxu0 0.0
    %3231 = vmatmul.mubr.f32.gmra.mrb[0].mxu0 %v1314
    %v3232 = vpop.f32.mrb[0].mxu0
    %v3233 = vadd.f32 %v2848, %v3232
    %v3234 = vpop.f32.mrb[0].mxu0
    %3235 = vmatprep.mubr.f32.mxu0 0.0
    %3236 = vmatmul.mubr.f32.gmra.mrb[0].mxu0 %v1315
    %v3237 = vpop.f32.mrb[0].mxu0
    %v3238 = vadd.f32 %v2853, %v3237
    %v3239 = vpop.f32.mrb[0].mxu0
    %3240 = vmatprep.mubr.f32.mxu0 0.0
    %3241 = vmatmul.mubr.f32.gmra.mrb[0].mxu0 %v1316
    %v3242 = vpop.f32.mrb[0].mxu0
    %v3243 = vadd.f32 %v2858, %v3242
    %v3244 = vpop.f32.mrb[0].mxu0
    %3245 = vmatprep.mubr.f32.mxu0 0.0
    %3246 = vmatmul.mubr.f32.gmra.mrb[0].mxu0 %v1317
    %v3247 = vpop.f32.mrb[0].mxu0
    %v3248 = vadd.f32 %v2863, %v3247
    %v3249 = vpop.f32.mrb[0].mxu0
    %3250 = vmatprep.mubr.f32.mxu0 0.0
    %3251 = vmatmul.mubr.f32.gmra.mrb[0].mxu0 %v1318
    %v3252 = vpop.f32.mrb[0].mxu0
    %v3253 = vadd.f32 %v2868, %v3252
    %v3254 = vpop.f32.mrb[0].mxu0
    %3255 = vmatprep.mubr.f32.mxu0 0.0
    %3256 = vmatmul.mubr.f32.gmra.mrb[0].mxu0 %v1319
    %v3257 = vpop.f32.mrb[0].mxu0
    %v3258 = vadd.f32 %v2873, %v3257
    %v3259 = vpop.f32.mrb[0].mxu0
    %3260 = vmatprep.mubr.f32.mxu0 0.0
    %3261 = vmatmul.mubr.f32.gmra.mrb[0].mxu0 %v1320
    %v3262 = vpop.f32.mrb[0].mxu0
    %v3263 = vadd.f32 %v2878, %v3262
    %v3264 = vpop.f32.mrb[0].mxu0
    %3265 = vmatprep.mubr.f32.mxu0 0.0
    %3266 = vmatmul.mubr.f32.gmra.mrb[0].mxu0 %v1325
    %v3267 = vpop.f32.mrb[0].mxu0
    %v3268 = vadd.f32 %v2883, %v3267
    %v3269 = vpop.f32.mrb[0].mxu0
    %3270 = vmatprep.mubr.f32.mxu0 0.0
    %3271 = vmatmul.mubr.f32.gmra.mrb[0].mxu0 %v1326
    %v3272 = vpop.f32.mrb[0].mxu0
    %v3273 = vadd.f32 %v2888, %v3272
    %v3274 = vpop.f32.mrb[0].mxu0
    %3275 = vmatprep.mubr.f32.mxu0 0.0
    %3276 = vmatmul.mubr.f32.gmra.mrb[0].mxu0 %v1327
    %v3277 = vpop.f32.mrb[0].mxu0
    %v3278 = vadd.f32 %v2893, %v3277
    %v3279 = vpop.f32.mrb[0].mxu0
    %3280 = vmatprep.mubr.f32.mxu0 0.0
    %3281 = vmatmul.mubr.f32.gmra.mrb[0].mxu0 %v1328
    %v3282 = vpop.f32.mrb[0].mxu0
    %v3283 = vadd.f32 %v2898, %v3282
    %v3284 = vpop.f32.mrb[0].mxu0
    %3285 = vmatprep.mubr.f32.mxu0 0.0
    %3286 = vmatmul.mubr.f32.gmra.mrb[0].mxu0 %v1329
    %v3287 = vpop.f32.mrb[0].mxu0
    %v3288 = vadd.f32 %v2903, %v3287
    %v3289 = vpop.f32.mrb[0].mxu0
    %3290 = vmatprep.mubr.f32.mxu0 0.0
    %3291 = vmatmul.mubr.f32.gmra.mrb[0].mxu0 %v1330
    %v3292 = vpop.f32.mrb[0].mxu0
    %v3293 = vadd.f32 %v2908, %v3292
    %v3294 = vpop.f32.mrb[0].mxu0
    %3295 = vmatprep.mubr.f32.mxu0 0.0
    %3296 = vmatmul.mubr.f32.gmra.mrb[0].mxu0 %v1331
    %v3297 = vpop.f32.mrb[0].mxu0
    %v3298 = vadd.f32 %v2913, %v3297
    %v3299 = vpop.f32.mrb[0].mxu0
    %3300 = vmatprep.mubr.f32.mxu0 0.0
    %3301 = vmatmul.mubr.f32.gmra.mrb[0].mxu0 %v1332
    %v3302 = vpop.f32.mrb[0].mxu0
    %v3303 = vadd.f32 %v2918, %v3302
    %v3304 = vpop.f32.mrb[0].mxu0
    %3305 = vmatprep.mubr.f32.mxu0 0.0
    %3306 = vmatmul.mubr.f32.gmra.mrb[0].mxu0 %v1333
    %v3307 = vpop.f32.mrb[0].mxu0
    %v3308 = vadd.f32 %v2923, %v3307
    %v3309 = vpop.f32.mrb[0].mxu0
    %3310 = vmatprep.mubr.f32.mxu0 0.0
    %3311 = vmatmul.mubr.f32.gmra.mrb[0].mxu0 %v1334
    %v3312 = vpop.f32.mrb[0].mxu0
    %v3313 = vadd.f32 %v2928, %v3312
    %v3314 = vpop.f32.mrb[0].mxu0
    %3315 = vmatprep.mubr.f32.mxu0 0.0
    %3316 = vmatmul.mubr.f32.gmra.mrb[0].mxu0 %v1335
    %v3317 = vpop.f32.mrb[0].mxu0
    %v3318 = vadd.f32 %v2933, %v3317
    %v3319 = vpop.f32.mrb[0].mxu0
    %3320 = vmatprep.mubr.f32.mxu0 0.0
    %3321 = vmatmul.mubr.f32.gmra.mrb[0].mxu0 %v1336
    %v3322 = vpop.f32.mrb[0].mxu0
    %v3323 = vadd.f32 %v2938, %v3322
    %v3324 = vpop.f32.mrb[0].mxu0
    %3325 = vmatprep.mubr.f32.mxu0 0.0
    %3326 = vmatmul.mubr.f32.gmra.mrb[0].mxu0 %v1337
    %v3327 = vpop.f32.mrb[0].mxu0
    %v3328 = vadd.f32 %v2943, %v3327
    %v3329 = vpop.f32.mrb[0].mxu0
    %3330 = vmatprep.mubr.f32.mxu0 0.0
    %3331 = vmatmul.mubr.f32.gmra.mrb[0].mxu0 %v1338
    %v3332 = vpop.f32.mrb[0].mxu0
    %v3333 = vadd.f32 %v2948, %v3332
    %v3334 = vpop.f32.mrb[0].mxu0
    %3335 = vmatprep.mubr.f32.mxu0 0.0
    %3336 = vmatmul.mubr.f32.gmra.mrb[0].mxu0 %v1339
    %v3337 = vpop.f32.mrb[0].mxu0
    %v3338 = vadd.f32 %v2953, %v3337
    %v3339 = vpop.f32.mrb[0].mxu0
    %3340 = vmatprep.mubr.f32.mxu0 0.0
    %3341 = vmatmul.mubr.f32.gmra.mrb[0].mxu0 %v1340
    %v3342 = vpop.f32.mrb[0].mxu0
    %v3343 = vadd.f32 %v2958, %v3342
    %v3344 = vpop.f32.mrb[0].mxu0
    %3345 = vmatprep.mubr.f32.mxu0 0.0
    %3346 = vmatmul.mubr.f32.gmra.mrb[0].mxu0 %v1341
    %v3347 = vpop.f32.mrb[0].mxu0
    %v3348 = vadd.f32 %v2963, %v3347
    %v3349 = vpop.f32.mrb[0].mxu0
    %3350 = vmatprep.mubr.f32.mxu0 0.0
    %3351 = vmatmul.mubr.f32.gmra.mrb[0].mxu0 %v1342
    %v3352 = vpop.f32.mrb[0].mxu0
    %v3353 = vadd.f32 %v2968, %v3352
    %v3354 = vpop.f32.mrb[0].mxu0
    %3355 = vmatprep.mubr.f32.mxu0 0.0
    %3356 = vmatmul.mubr.f32.gmra.mrb[0].mxu0 %v1343
    %v3357 = vpop.f32.mrb[0].mxu0
    %v3358 = vadd.f32 %v2973, %v3357
    %v3359 = vpop.f32.mrb[0].mxu0
    %3360 = vmatprep.mubr.f32.mxu0 0.0
    %3361 = vmatmul.mubr.f32.gmra.mrb[0].mxu0 %v1344
    %v3362 = vpop.f32.mrb[0].mxu0
    %v3363 = vadd.f32 %v2978, %v3362
    %v3364 = vpop.f32.mrb[0].mxu0
    %3365 = vmatprep.mubr.f32.mxu0 0.0
    %3366 = vmatmul.mubr.f32.gmra.mrb[0].mxu0 %v1345
    %v3367 = vpop.f32.mrb[0].mxu0
    %v3368 = vadd.f32 %v2983, %v3367
    %v3369 = vpop.f32.mrb[0].mxu0
    %3370 = vmatprep.mubr.f32.mxu0 0.0
    %3371 = vmatmul.mubr.f32.gmra.mrb[0].mxu0 %v1346
    %v3372 = vpop.f32.mrb[0].mxu0
    %v3373 = vadd.f32 %v2988, %v3372
    %v3374 = vpop.f32.mrb[0].mxu0
    %3375 = vmatprep.mubr.f32.mxu0 0.0
    %3376 = vmatmul.mubr.f32.gmra.mrb[0].mxu0 %v1347
    %v3377 = vpop.f32.mrb[0].mxu0
    %v3378 = vadd.f32 %v2993, %v3377
    %v3379 = vpop.f32.mrb[0].mxu0
    %3380 = vmatprep.mubr.f32.mxu0 0.0
    %3381 = vmatmul.mubr.f32.gmra.mrb[0].mxu0 %v1348
    %v3382 = vpop.f32.mrb[0].mxu0
    %v3383 = vadd.f32 %v2998, %v3382
    %v3384 = vpop.f32.mrb[0].mxu0
    %3385 = vmatprep.mubr.f32.mxu0 0.0
    %3386 = vmatmul.mubr.f32.gmra.mrb[0].mxu0 %v1349
    %v3387 = vpop.f32.mrb[0].mxu0
    %v3388 = vadd.f32 %v3003, %v3387
    %v3389 = vpop.f32.mrb[0].mxu0
    %3390 = vmatprep.mubr.f32.mxu0 0.0
    %3391 = vmatmul.mubr.f32.gmra.mrb[0].mxu0 %v1350
    %v3392 = vpop.f32.mrb[0].mxu0
    %v3393 = vadd.f32 %v3008, %v3392
    %v3394 = vpop.f32.mrb[0].mxu0
    %3395 = vmatprep.mubr.f32.mxu0 0.0
    %3396 = vmatmul.mubr.f32.gmra.mrb[0].mxu0 %v1351
    %v3397 = vpop.f32.mrb[0].mxu0
    %v3398 = vadd.f32 %v3013, %v3397
    %v3399 = vpop.f32.mrb[0].mxu0
    %3400 = vmatprep.mubr.f32.mxu0 0.0
    %3401 = vmatmul.mubr.f32.gmra.mrb[0].mxu0 %v1352
    %v3402 = vpop.f32.mrb[0].mxu0
    %v3403 = vadd.f32 %v3018, %v3402
    %v3404 = vpop.f32.mrb[0].mxu0
    %3405 = vmatprep.mubr.f32.mxu0 0.0
    %3406 = vmatmul.mubr.f32.gmra.mrb[0].mxu0 %v1353
    %v3407 = vpop.f32.mrb[0].mxu0
    %v3408 = vadd.f32 %v3023, %v3407
    %v3409 = vpop.f32.mrb[0].mxu0
    %3410 = vmatprep.mubr.f32.mxu0 0.0
    %3411 = vmatmul.mubr.f32.gmra.mrb[0].mxu0 %v1354
    %v3412 = vpop.f32.mrb[0].mxu0
    %v3413 = vadd.f32 %v3028, %v3412
    %v3414 = vpop.f32.mrb[0].mxu0
    %3415 = vmatprep.mubr.f32.mxu0 0.0
    %3416 = vmatmul.mubr.f32.gmra.mrb[0].mxu0 %v1355
    %v3417 = vpop.f32.mrb[0].mxu0
    %v3418 = vadd.f32 %v3033, %v3417
    %v3419 = vpop.f32.mrb[0].mxu0
    %3420 = vmatprep.mubr.f32.mxu0 0.0
    %3421 = vmatmul.mubr.f32.gmra.mrb[0].mxu0 %v1356
    %v3422 = vpop.f32.mrb[0].mxu0
    %v3423 = vadd.f32 %v3038, %v3422
    %v3424 = vpop.f32.mrb[0].mxu0
    %3425 = vdwg.mxu0
    %v3426 = vld [vmem:[%s5] sm:$0x1]
    %v3428 = vlaneseq
    %v3429 = vshrl.u32 %v3428, 7
    %v3430 = vsub.s32 0, %v3429
    %v3431 = vrot.slane %v3426, %v3430
    %v3433 = vmul.f32 %v3108, %v3431
    %v3434 = vmul.f32 %v3113, %v3431
    %v3435 = vmul.f32 %v3118, %v3431
    %v3436 = vmul.f32 %v3123, %v3431
    %v3437 = vmul.f32 %v3128, %v3431
    %v3438 = vmul.f32 %v3133, %v3431
    %v3439 = vmul.f32 %v3138, %v3431
    %v3440 = vmul.f32 %v3143, %v3431
    %v3441 = vmul.f32 %v3148, %v3431
    %v3442 = vmul.f32 %v3153, %v3431
    %v3443 = vmul.f32 %v3158, %v3431
    %v3444 = vmul.f32 %v3163, %v3431
    %v3445 = vmul.f32 %v3168, %v3431
    %v3446 = vmul.f32 %v3173, %v3431
    %v3447 = vmul.f32 %v3178, %v3431
    %v3448 = vmul.f32 %v3183, %v3431
    %v3449 = vmul.f32 %v3188, %v3431
    %v3450 = vmul.f32 %v3193, %v3431
    %v3451 = vmul.f32 %v3198, %v3431
    %v3452 = vmul.f32 %v3203, %v3431
    %v3453 = vmul.f32 %v3208, %v3431
    %v3454 = vmul.f32 %v3213, %v3431
    %v3455 = vmul.f32 %v3218, %v3431
    %v3456 = vmul.f32 %v3223, %v3431
    %v3457 = vmul.f32 %v3228, %v3431
    %v3458 = vmul.f32 %v3233, %v3431
    %v3459 = vmul.f32 %v3238, %v3431
    %v3460 = vmul.f32 %v3243, %v3431
    %v3461 = vmul.f32 %v3248, %v3431
    %v3462 = vmul.f32 %v3253, %v3431
    %v3463 = vmul.f32 %v3258, %v3431
    %v3464 = vmul.f32 %v3263, %v3431
    %v3465 = vmul.f32 %v3268, %v3431
    %v3466 = vmul.f32 %v3273, %v3431
    %v3467 = vmul.f32 %v3278, %v3431
    %v3468 = vmul.f32 %v3283, %v3431
    %v3469 = vmul.f32 %v3288, %v3431
    %v3470 = vmul.f32 %v3293, %v3431
    %v3471 = vmul.f32 %v3298, %v3431
    %v3472 = vmul.f32 %v3303, %v3431
    %v3473 = vmul.f32 %v3308, %v3431
    %v3474 = vmul.f32 %v3313, %v3431
    %v3475 = vmul.f32 %v3318, %v3431
    %v3476 = vmul.f32 %v3323, %v3431
    %v3477 = vmul.f32 %v3328, %v3431
    %v3478 = vmul.f32 %v3333, %v3431
    %v3479 = vmul.f32 %v3338, %v3431
    %v3480 = vmul.f32 %v3343, %v3431
    %v3481 = vmul.f32 %v3348, %v3431
    %v3482 = vmul.f32 %v3353, %v3431
    %v3483 = vmul.f32 %v3358, %v3431
    %v3484 = vmul.f32 %v3363, %v3431
    %v3485 = vmul.f32 %v3368, %v3431
    %v3486 = vmul.f32 %v3373, %v3431
    %v3487 = vmul.f32 %v3378, %v3431
    %v3488 = vmul.f32 %v3383, %v3431
    %v3489 = vmul.f32 %v3388, %v3431
    %v3490 = vmul.f32 %v3393, %v3431
    %v3491 = vmul.f32 %v3398, %v3431
    %v3492 = vmul.f32 %v3403, %v3431
    %v3493 = vmul.f32 %v3408, %v3431
    %v3494 = vmul.f32 %v3413, %v3431
    %v3495 = vmul.f32 %v3418, %v3431
    %v3496 = vmul.f32 %v3423, %v3431
    %v3497 = vld [vmem:[%s6] sm:$0x1]
    %v3499 = vlaneseq
    %v3500 = vshrl.u32 %v3499, 7
    %v3501 = vsub.s32 0, %v3500
    %v3502 = vrot.slane %v3497, %v3501
    %v3504 = vadd.f32 %v3433, %v3502
    %v3505 = vadd.f32 %v3434, %v3502
    %v3506 = vadd.f32 %v3435, %v3502
    %v3507 = vadd.f32 %v3436, %v3502
    %v3508 = vadd.f32 %v3437, %v3502
    %v3509 = vadd.f32 %v3438, %v3502
    %v3510 = vadd.f32 %v3439, %v3502
    %v3511 = vadd.f32 %v3440, %v3502
    %v3512 = vadd.f32 %v3441, %v3502
    %v3513 = vadd.f32 %v3442, %v3502
    %v3514 = vadd.f32 %v3443, %v3502
    %v3515 = vadd.f32 %v3444, %v3502
    %v3516 = vadd.f32 %v3445, %v3502
    %v3517 = vadd.f32 %v3446, %v3502
    %v3518 = vadd.f32 %v3447, %v3502
    %v3519 = vadd.f32 %v3448, %v3502
    %v3520 = vadd.f32 %v3449, %v3502
    %v3521 = vadd.f32 %v3450, %v3502
    %v3522 = vadd.f32 %v3451, %v3502
    %v3523 = vadd.f32 %v3452, %v3502
    %v3524 = vadd.f32 %v3453, %v3502
    %v3525 = vadd.f32 %v3454, %v3502
    %v3526 = vadd.f32 %v3455, %v3502
    %v3527 = vadd.f32 %v3456, %v3502
    %v3528 = vadd.f32 %v3457, %v3502
    %v3529 = vadd.f32 %v3458, %v3502
    %v3530 = vadd.f32 %v3459, %v3502
    %v3531 = vadd.f32 %v3460, %v3502
    %v3532 = vadd.f32 %v3461, %v3502
    %v3533 = vadd.f32 %v3462, %v3502
    %v3534 = vadd.f32 %v3463, %v3502
    %v3535 = vadd.f32 %v3464, %v3502
    %v3536 = vadd.f32 %v3465, %v3502
    %v3537 = vadd.f32 %v3466, %v3502
    %v3538 = vadd.f32 %v3467, %v3502
    %v3539 = vadd.f32 %v3468, %v3502
    %v3540 = vadd.f32 %v3469, %v3502
    %v3541 = vadd.f32 %v3470, %v3502
    %v3542 = vadd.f32 %v3471, %v3502
    %v3543 = vadd.f32 %v3472, %v3502
    %v3544 = vadd.f32 %v3473, %v3502
    %v3545 = vadd.f32 %v3474, %v3502
    %v3546 = vadd.f32 %v3475, %v3502
    %v3547 = vadd.f32 %v3476, %v3502
    %v3548 = vadd.f32 %v3477, %v3502
    %v3549 = vadd.f32 %v3478, %v3502
    %v3550 = vadd.f32 %v3479, %v3502
    %v3551 = vadd.f32 %v3480, %v3502
    %v3552 = vadd.f32 %v3481, %v3502
    %v3553 = vadd.f32 %v3482, %v3502
    %v3554 = vadd.f32 %v3483, %v3502
    %v3555 = vadd.f32 %v3484, %v3502
    %v3556 = vadd.f32 %v3485, %v3502
    %v3557 = vadd.f32 %v3486, %v3502
    %v3558 = vadd.f32 %v3487, %v3502
    %v3559 = vadd.f32 %v3488, %v3502
    %v3560 = vadd.f32 %v3489, %v3502
    %v3561 = vadd.f32 %v3490, %v3502
    %v3562 = vadd.f32 %v3491, %v3502
    %v3563 = vadd.f32 %v3492, %v3502
    %v3564 = vadd.f32 %v3493, %v3502
    %v3565 = vadd.f32 %v3494, %v3502
    %v3566 = vadd.f32 %v3495, %v3502
    %v3567 = vadd.f32 %v3496, %v3502
    %v3568 = vmax.f32 %v3504, 0.0
    %v3569 = vmax.f32 %v3505, 0.0
    %v3570 = vmax.f32 %v3506, 0.0
    %v3571 = vmax.f32 %v3507, 0.0
    %v3572 = vmax.f32 %v3508, 0.0
    %v3573 = vmax.f32 %v3509, 0.0
    %v3574 = vmax.f32 %v3510, 0.0
    %v3575 = vmax.f32 %v3511, 0.0
    %v3576 = vmax.f32 %v3512, 0.0
    %v3577 = vmax.f32 %v3513, 0.0
    %v3578 = vmax.f32 %v3514, 0.0
    %v3579 = vmax.f32 %v3515, 0.0
    %v3580 = vmax.f32 %v3516, 0.0
    %v3581 = vmax.f32 %v3517, 0.0
    %v3582 = vmax.f32 %v3518, 0.0
    %v3583 = vmax.f32 %v3519, 0.0
    %v3584 = vmax.f32 %v3520, 0.0
    %v3585 = vmax.f32 %v3521, 0.0
    %v3586 = vmax.f32 %v3522, 0.0
    %v3587 = vmax.f32 %v3523, 0.0
    %v3588 = vmax.f32 %v3524, 0.0
    %v3589 = vmax.f32 %v3525, 0.0
    %v3590 = vmax.f32 %v3526, 0.0
    %v3591 = vmax.f32 %v3527, 0.0
    %v3592 = vmax.f32 %v3528, 0.0
    %v3593 = vmax.f32 %v3529, 0.0
    %v3594 = vmax.f32 %v3530, 0.0
    %v3595 = vmax.f32 %v3531, 0.0
    %v3596 = vmax.f32 %v3532, 0.0
    %v3597 = vmax.f32 %v3533, 0.0
    %v3598 = vmax.f32 %v3534, 0.0
    %v3599 = vmax.f32 %v3535, 0.0
    %v3600 = vmax.f32 %v3536, 0.0
    %v3601 = vmax.f32 %v3537, 0.0
    %v3602 = vmax.f32 %v3538, 0.0
    %v3603 = vmax.f32 %v3539, 0.0
    %v3604 = vmax.f32 %v3540, 0.0
    %v3605 = vmax.f32 %v3541, 0.0
    %v3606 = vmax.f32 %v3542, 0.0
    %v3607 = vmax.f32 %v3543, 0.0
    %v3608 = vmax.f32 %v3544, 0.0
    %v3609 = vmax.f32 %v3545, 0.0
    %v3610 = vmax.f32 %v3546, 0.0
    %v3611 = vmax.f32 %v3547, 0.0
    %v3612 = vmax.f32 %v3548, 0.0
    %v3613 = vmax.f32 %v3549, 0.0
    %v3614 = vmax.f32 %v3550, 0.0
    %v3615 = vmax.f32 %v3551, 0.0
    %v3616 = vmax.f32 %v3552, 0.0
    %v3617 = vmax.f32 %v3553, 0.0
    %v3618 = vmax.f32 %v3554, 0.0
    %v3619 = vmax.f32 %v3555, 0.0
    %v3620 = vmax.f32 %v3556, 0.0
    %v3621 = vmax.f32 %v3557, 0.0
    %v3622 = vmax.f32 %v3558, 0.0
    %v3623 = vmax.f32 %v3559, 0.0
    %v3624 = vmax.f32 %v3560, 0.0
    %v3625 = vmax.f32 %v3561, 0.0
    %v3626 = vmax.f32 %v3562, 0.0
    %v3627 = vmax.f32 %v3563, 0.0
    %v3628 = vmax.f32 %v3564, 0.0
    %v3629 = vmax.f32 %v3565, 0.0
    %v3630 = vmax.f32 %v3566, 0.0
    %v3631 = vmax.f32 %v3567, 0.0
    %v3632 = vld [vmem:[#allocation9] sm:$0xff]
    %v3633 = vld [vmem:[#allocation9 + $0x8] sm:$0xff]
    %v3634 = vld [vmem:[#allocation9 + $0x10] sm:$0xff]
    %v3635 = vld [vmem:[#allocation9 + $0x18] sm:$0xff]
    %v3636 = vld [vmem:[#allocation9 + $0x20] sm:$0xff]
    %v3637 = vld [vmem:[#allocation9 + $0x28] sm:$0xff]
    %v3638 = vld [vmem:[#allocation9 + $0x30] sm:$0xff]
    %v3639 = vld [vmem:[#allocation9 + $0x38] sm:$0xff]
    %v3640 = vld [vmem:[#allocation9 + $0x40] sm:$0xff]
    %v3641 = vld [vmem:[#allocation9 + $0x48] sm:$0xff]
    %v3642 = vld [vmem:[#allocation9 + $0x50] sm:$0xff]
    %v3643 = vld [vmem:[#allocation9 + $0x58] sm:$0xff]
    %v3644 = vld [vmem:[#allocation9 + $0x60] sm:$0xff]
    %v3645 = vld [vmem:[#allocation9 + $0x68] sm:$0xff]
    %v3646 = vld [vmem:[#allocation9 + $0x70] sm:$0xff]
    %v3647 = vld [vmem:[#allocation9 + $0x78] sm:$0xff]
    %3648 = vmatprep.subr.mxu0 0.0
    %3649 = vmatpush1.msra.mxu0 %v3632
    %3650 = vmatprep.subr.mxu0 0.0
    %3651 = vmatpush1.msra.mxu0 %v3633
    %3652 = vmatprep.subr.mxu0 0.0
    %3653 = vmatpush1.msra.mxu0 %v3634
    %3654 = vmatprep.subr.mxu0 0.0
    %3655 = vmatpush1.msra.mxu0 %v3635
    %3656 = vmatprep.subr.mxu0 0.0
    %3657 = vmatpush1.msra.mxu0 %v3636
    %3658 = vmatprep.subr.mxu0 0.0
    %3659 = vmatpush1.msra.mxu0 %v3637
    %3660 = vmatprep.subr.mxu0 0.0
    %3661 = vmatpush1.msra.mxu0 %v3638
    %3662 = vmatprep.subr.mxu0 0.0
    %3663 = vmatpush1.msra.mxu0 %v3639
    %3664 = vmatprep.subr.mxu0 0.0
    %3665 = vmatpush1.msra.mxu0 %v3640
    %3666 = vmatprep.subr.mxu0 0.0
    %3667 = vmatpush1.msra.mxu0 %v3641
    %3668 = vmatprep.subr.mxu0 0.0
    %3669 = vmatpush1.msra.mxu0 %v3642
    %3670 = vmatprep.subr.mxu0 0.0
    %3671 = vmatpush1.msra.mxu0 %v3643
    %3672 = vmatprep.subr.mxu0 0.0
    %3673 = vmatpush1.msra.mxu0 %v3644
    %3674 = vmatprep.subr.mxu0 0.0
    %3675 = vmatpush1.msra.mxu0 %v3645
    %3676 = vmatprep.subr.mxu0 0.0
    %3677 = vmatpush1.msra.mxu0 %v3646
    %3678 = vmatprep.subr.mxu0 0.0
    %3679 = vmatpush1.msra.mxu0 %v3647
    %3680 = vmatprep.subr.mxu0 0.0
    %3681 = vmatpush1.msra.mxu0 0.0
    %3682 = vmatprep.subr.mxu0 0.0
    %3683 = vmatpush1.msra.mxu0 0.0
    %3684 = vmatprep.subr.mxu0 0.0
    %3685 = vmatpush1.msra.mxu0 0.0
    %3686 = vmatprep.subr.mxu0 0.0
    %3687 = vmatpush1.msra.mxu0 0.0
    %3688 = vmatprep.subr.mxu0 0.0
    %3689 = vmatpush1.msra.mxu0 0.0
    %3690 = vmatprep.subr.mxu0 0.0
    %3691 = vmatpush1.msra.mxu0 0.0
    %3692 = vmatprep.subr.mxu0 0.0
    %3693 = vmatpush1.msra.mxu0 0.0
    %3694 = vmatprep.subr.mxu0 0.0
    %3695 = vmatpush1.msra.mxu0 0.0
    %3696 = vmatprep.subr.mxu0 0.0
    %3697 = vmatpush1.msra.mxu0 0.0
    %3698 = vmatprep.subr.mxu0 0.0
    %3699 = vmatpush1.msra.mxu0 0.0
    %3700 = vmatprep.subr.mxu0 0.0
    %3701 = vmatpush1.msra.mxu0 0.0
    %3702 = vmatprep.subr.mxu0 0.0
    %3703 = vmatpush1.msra.mxu0 0.0
    %3704 = vmatprep.subr.mxu0 0.0
    %3705 = vmatpush1.msra.mxu0 0.0
    %3706 = vmatprep.subr.mxu0 0.0
    %3707 = vmatpush1.msra.mxu0 0.0
    %3708 = vmatprep.subr.mxu0 0.0
    %3709 = vmatpush1.msra.mxu0 0.0
    %3710 = vmatprep.subr.mxu0 0.0
    %3711 = vmatpush1.msra.mxu0 0.0
    %3712 = vmatprep.mubr.f32.mxu0 0.0
    %3713 = vmatmul.mubr.f32.gmra.mrb[0].mxu0 %v3568
    %v3714 = vpop.f32.mrb[0].mxu0
    %v3715 = vadd.f32 0.0, %v3714
    %v3716 = vpop.f32.mrb[0].mxu0
    %3717 = vmatprep.mubr.f32.mxu0 0.0
    %3718 = vmatmul.mubr.f32.gmra.mrb[0].mxu0 %v3569
    %v3719 = vpop.f32.mrb[0].mxu0
    %v3720 = vadd.f32 0.0, %v3719
    %v3721 = vpop.f32.mrb[0].mxu0
    %3722 = vmatprep.mubr.f32.mxu0 0.0
    %3723 = vmatmul.mubr.f32.gmra.mrb[0].mxu0 %v3570
    %v3724 = vpop.f32.mrb[0].mxu0
    %v3725 = vadd.f32 0.0, %v3724
    %v3726 = vpop.f32.mrb[0].mxu0
    %3727 = vmatprep.mubr.f32.mxu0 0.0
    %3728 = vmatmul.mubr.f32.gmra.mrb[0].mxu0 %v3571
    %v3729 = vpop.f32.mrb[0].mxu0
    %v3730 = vadd.f32 0.0, %v3729
    %v3731 = vpop.f32.mrb[0].mxu0
    %3732 = vmatprep.mubr.f32.mxu0 0.0
    %3733 = vmatmul.mubr.f32.gmra.mrb[0].mxu0 %v3572
    %v3734 = vpop.f32.mrb[0].mxu0
    %v3735 = vadd.f32 0.0, %v3734
    %v3736 = vpop.f32.mrb[0].mxu0
    %3737 = vmatprep.mubr.f32.mxu0 0.0
    %3738 = vmatmul.mubr.f32.gmra.mrb[0].mxu0 %v3573
    %v3739 = vpop.f32.mrb[0].mxu0
    %v3740 = vadd.f32 0.0, %v3739
    %v3741 = vpop.f32.mrb[0].mxu0
    %3742 = vmatprep.mubr.f32.mxu0 0.0
    %3743 = vmatmul.mubr.f32.gmra.mrb[0].mxu0 %v3574
    %v3744 = vpop.f32.mrb[0].mxu0
    %v3745 = vadd.f32 0.0, %v3744
    %v3746 = vpop.f32.mrb[0].mxu0
    %3747 = vmatprep.mubr.f32.mxu0 0.0
    %3748 = vmatmul.mubr.f32.gmra.mrb[0].mxu0 %v3575
    %v3749 = vpop.f32.mrb[0].mxu0
    %v3750 = vadd.f32 0.0, %v3749
    %v3751 = vpop.f32.mrb[0].mxu0
    %3752 = vmatprep.mubr.f32.mxu0 0.0
    %3753 = vmatmul.mubr.f32.gmra.mrb[0].mxu0 %v3576
    %v3754 = vpop.f32.mrb[0].mxu0
    %v3755 = vadd.f32 0.0, %v3754
    %v3756 = vpop.f32.mrb[0].mxu0
    %3757 = vmatprep.mubr.f32.mxu0 0.0
    %3758 = vmatmul.mubr.f32.gmra.mrb[0].mxu0 %v3577
    %v3759 = vpop.f32.mrb[0].mxu0
    %v3760 = vadd.f32 0.0, %v3759
    %v3761 = vpop.f32.mrb[0].mxu0
    %3762 = vmatprep.mubr.f32.mxu0 0.0
    %3763 = vmatmul.mubr.f32.gmra.mrb[0].mxu0 %v3578
    %v3764 = vpop.f32.mrb[0].mxu0
    %v3765 = vadd.f32 0.0, %v3764
    %v3766 = vpop.f32.mrb[0].mxu0
    %3767 = vmatprep.mubr.f32.mxu0 0.0
    %3768 = vmatmul.mubr.f32.gmra.mrb[0].mxu0 %v3579
    %v3769 = vpop.f32.mrb[0].mxu0
    %v3770 = vadd.f32 0.0, %v3769
    %v3771 = vpop.f32.mrb[0].mxu0
    %3772 = vmatprep.mubr.f32.mxu0 0.0
    %3773 = vmatmul.mubr.f32.gmra.mrb[0].mxu0 %v3580
    %v3774 = vpop.f32.mrb[0].mxu0
    %v3775 = vadd.f32 0.0, %v3774
    %v3776 = vpop.f32.mrb[0].mxu0
    %3777 = vmatprep.mubr.f32.mxu0 0.0
    %3778 = vmatmul.mubr.f32.gmra.mrb[0].mxu0 %v3581
    %v3779 = vpop.f32.mrb[0].mxu0
    %v3780 = vadd.f32 0.0, %v3779
    %v3781 = vpop.f32.mrb[0].mxu0
    %3782 = vmatprep.mubr.f32.mxu0 0.0
    %3783 = vmatmul.mubr.f32.gmra.mrb[0].mxu0 %v3582
    %v3784 = vpop.f32.mrb[0].mxu0
    %v3785 = vadd.f32 0.0, %v3784
    %v3786 = vpop.f32.mrb[0].mxu0
    %3787 = vmatprep.mubr.f32.mxu0 0.0
    %3788 = vmatmul.mubr.f32.gmra.mrb[0].mxu0 %v3583
    %v3789 = vpop.f32.mrb[0].mxu0
    %v3790 = vadd.f32 0.0, %v3789
    %v3791 = vpop.f32.mrb[0].mxu0
    %3792 = vmatprep.mubr.f32.mxu0 0.0
    %3793 = vmatmul.mubr.f32.gmra.mrb[0].mxu0 %v3584
    %v3794 = vpop.f32.mrb[0].mxu0
    %v3795 = vadd.f32 0.0, %v3794
    %v3796 = vpop.f32.mrb[0].mxu0
    %3797 = vmatprep.mubr.f32.mxu0 0.0
    %3798 = vmatmul.mubr.f32.gmra.mrb[0].mxu0 %v3585
    %v3799 = vpop.f32.mrb[0].mxu0
    %v3800 = vadd.f32 0.0, %v3799
    %v3801 = vpop.f32.mrb[0].mxu0
    %3802 = vmatprep.mubr.f32.mxu0 0.0
    %3803 = vmatmul.mubr.f32.gmra.mrb[0].mxu0 %v3586
    %v3804 = vpop.f32.mrb[0].mxu0
    %v3805 = vadd.f32 0.0, %v3804
    %v3806 = vpop.f32.mrb[0].mxu0
    %3807 = vmatprep.mubr.f32.mxu0 0.0
    %3808 = vmatmul.mubr.f32.gmra.mrb[0].mxu0 %v3587
    %v3809 = vpop.f32.mrb[0].mxu0
    %v3810 = vadd.f32 0.0, %v3809
    %v3811 = vpop.f32.mrb[0].mxu0
    %3812 = vmatprep.mubr.f32.mxu0 0.0
    %3813 = vmatmul.mubr.f32.gmra.mrb[0].mxu0 %v3588
    %v3814 = vpop.f32.mrb[0].mxu0
    %v3815 = vadd.f32 0.0, %v3814
    %v3816 = vpop.f32.mrb[0].mxu0
    %3817 = vmatprep.mubr.f32.mxu0 0.0
    %3818 = vmatmul.mubr.f32.gmra.mrb[0].mxu0 %v3589
    %v3819 = vpop.f32.mrb[0].mxu0
    %v3820 = vadd.f32 0.0, %v3819
    %v3821 = vpop.f32.mrb[0].mxu0
    %3822 = vmatprep.mubr.f32.mxu0 0.0
    %3823 = vmatmul.mubr.f32.gmra.mrb[0].mxu0 %v3590
    %v3824 = vpop.f32.mrb[0].mxu0
    %v3825 = vadd.f32 0.0, %v3824
    %v3826 = vpop.f32.mrb[0].mxu0
    %3827 = vmatprep.mubr.f32.mxu0 0.0
    %3828 = vmatmul.mubr.f32.gmra.mrb[0].mxu0 %v3591
    %v3829 = vpop.f32.mrb[0].mxu0
    %v3830 = vadd.f32 0.0, %v3829
    %v3831 = vpop.f32.mrb[0].mxu0
    %3832 = vmatprep.mubr.f32.mxu0 0.0
    %3833 = vmatmul.mubr.f32.gmra.mrb[0].mxu0 %v3592
    %v3834 = vpop.f32.mrb[0].mxu0
    %v3835 = vadd.f32 0.0, %v3834
    %v3836 = vpop.f32.mrb[0].mxu0
    %3837 = vmatprep.mubr.f32.mxu0 0.0
    %3838 = vmatmul.mubr.f32.gmra.mrb[0].mxu0 %v3593
    %v3839 = vpop.f32.mrb[0].mxu0
    %v3840 = vadd.f32 0.0, %v3839
    %v3841 = vpop.f32.mrb[0].mxu0
    %3842 = vmatprep.mubr.f32.mxu0 0.0
    %3843 = vmatmul.mubr.f32.gmra.mrb[0].mxu0 %v3594
    %v3844 = vpop.f32.mrb[0].mxu0
    %v3845 = vadd.f32 0.0, %v3844
    %v3846 = vpop.f32.mrb[0].mxu0
    %3847 = vmatprep.mubr.f32.mxu0 0.0
    %3848 = vmatmul.mubr.f32.gmra.mrb[0].mxu0 %v3595
    %v3849 = vpop.f32.mrb[0].mxu0
    %v3850 = vadd.f32 0.0, %v3849
    %v3851 = vpop.f32.mrb[0].mxu0
    %3852 = vmatprep.mubr.f32.mxu0 0.0
    %3853 = vmatmul.mubr.f32.gmra.mrb[0].mxu0 %v3596
    %v3854 = vpop.f32.mrb[0].mxu0
    %v3855 = vadd.f32 0.0, %v3854
    %v3856 = vpop.f32.mrb[0].mxu0
    %3857 = vmatprep.mubr.f32.mxu0 0.0
    %3858 = vmatmul.mubr.f32.gmra.mrb[0].mxu0 %v3597
    %v3859 = vpop.f32.mrb[0].mxu0
    %v3860 = vadd.f32 0.0, %v3859
    %v3861 = vpop.f32.mrb[0].mxu0
    %3862 = vmatprep.mubr.f32.mxu0 0.0
    %3863 = vmatmul.mubr.f32.gmra.mrb[0].mxu0 %v3598
    %v3864 = vpop.f32.mrb[0].mxu0
    %v3865 = vadd.f32 0.0, %v3864
    %v3866 = vpop.f32.mrb[0].mxu0
    %3867 = vmatprep.mubr.f32.mxu0 0.0
    %3868 = vmatmul.mubr.f32.gmra.mrb[0].mxu0 %v3599
    %v3869 = vpop.f32.mrb[0].mxu0
    %v3870 = vadd.f32 0.0, %v3869
    %v3871 = vpop.f32.mrb[0].mxu0
    %3872 = vmatprep.mubr.f32.mxu0 0.0
    %3873 = vmatmul.mubr.f32.gmra.mrb[0].mxu0 %v3600
    %v3874 = vpop.f32.mrb[0].mxu0
    %v3875 = vadd.f32 0.0, %v3874
    %v3876 = vpop.f32.mrb[0].mxu0
    %3877 = vmatprep.mubr.f32.mxu0 0.0
    %3878 = vmatmul.mubr.f32.gmra.mrb[0].mxu0 %v3601
    %v3879 = vpop.f32.mrb[0].mxu0
    %v3880 = vadd.f32 0.0, %v3879
    %v3881 = vpop.f32.mrb[0].mxu0
    %3882 = vmatprep.mubr.f32.mxu0 0.0
    %3883 = vmatmul.mubr.f32.gmra.mrb[0].mxu0 %v3602
    %v3884 = vpop.f32.mrb[0].mxu0
    %v3885 = vadd.f32 0.0, %v3884
    %v3886 = vpop.f32.mrb[0].mxu0
    %3887 = vmatprep.mubr.f32.mxu0 0.0
    %3888 = vmatmul.mubr.f32.gmra.mrb[0].mxu0 %v3603
    %v3889 = vpop.f32.mrb[0].mxu0
    %v3890 = vadd.f32 0.0, %v3889
    %v3891 = vpop.f32.mrb[0].mxu0
    %3892 = vmatprep.mubr.f32.mxu0 0.0
    %3893 = vmatmul.mubr.f32.gmra.mrb[0].mxu0 %v3604
    %v3894 = vpop.f32.mrb[0].mxu0
    %v3895 = vadd.f32 0.0, %v3894
    %v3896 = vpop.f32.mrb[0].mxu0
    %3897 = vmatprep.mubr.f32.mxu0 0.0
    %3898 = vmatmul.mubr.f32.gmra.mrb[0].mxu0 %v3605
    %v3899 = vpop.f32.mrb[0].mxu0
    %v3900 = vadd.f32 0.0, %v3899
    %v3901 = vpop.f32.mrb[0].mxu0
    %3902 = vmatprep.mubr.f32.mxu0 0.0
    %3903 = vmatmul.mubr.f32.gmra.mrb[0].mxu0 %v3606
    %v3904 = vpop.f32.mrb[0].mxu0
    %v3905 = vadd.f32 0.0, %v3904
    %v3906 = vpop.f32.mrb[0].mxu0
    %3907 = vmatprep.mubr.f32.mxu0 0.0
    %3908 = vmatmul.mubr.f32.gmra.mrb[0].mxu0 %v3607
    %v3909 = vpop.f32.mrb[0].mxu0
    %v3910 = vadd.f32 0.0, %v3909
    %v3911 = vpop.f32.mrb[0].mxu0
    %3912 = vmatprep.mubr.f32.mxu0 0.0
    %3913 = vmatmul.mubr.f32.gmra.mrb[0].mxu0 %v3608
    %v3914 = vpop.f32.mrb[0].mxu0
    %v3915 = vadd.f32 0.0, %v3914
    %v3916 = vpop.f32.mrb[0].mxu0
    %3917 = vmatprep.mubr.f32.mxu0 0.0
    %3918 = vmatmul.mubr.f32.gmra.mrb[0].mxu0 %v3609
    %v3919 = vpop.f32.mrb[0].mxu0
    %v3920 = vadd.f32 0.0, %v3919
    %v3921 = vpop.f32.mrb[0].mxu0
    %3922 = vmatprep.mubr.f32.mxu0 0.0
    %3923 = vmatmul.mubr.f32.gmra.mrb[0].mxu0 %v3610
    %v3924 = vpop.f32.mrb[0].mxu0
    %v3925 = vadd.f32 0.0, %v3924
    %v3926 = vpop.f32.mrb[0].mxu0
    %3927 = vmatprep.mubr.f32.mxu0 0.0
    %3928 = vmatmul.mubr.f32.gmra.mrb[0].mxu0 %v3611
    %v3929 = vpop.f32.mrb[0].mxu0
    %v3930 = vadd.f32 0.0, %v3929
    %v3931 = vpop.f32.mrb[0].mxu0
    %3932 = vmatprep.mubr.f32.mxu0 0.0
    %3933 = vmatmul.mubr.f32.gmra.mrb[0].mxu0 %v3612
    %v3934 = vpop.f32.mrb[0].mxu0
    %v3935 = vadd.f32 0.0, %v3934
    %v3936 = vpop.f32.mrb[0].mxu0
    %3937 = vmatprep.mubr.f32.mxu0 0.0
    %3938 = vmatmul.mubr.f32.gmra.mrb[0].mxu0 %v3613
    %v3939 = vpop.f32.mrb[0].mxu0
    %v3940 = vadd.f32 0.0, %v3939
    %v3941 = vpop.f32.mrb[0].mxu0
    %3942 = vmatprep.mubr.f32.mxu0 0.0
    %3943 = vmatmul.mubr.f32.gmra.mrb[0].mxu0 %v3614
    %v3944 = vpop.f32.mrb[0].mxu0
    %v3945 = vadd.f32 0.0, %v3944
    %v3946 = vpop.f32.mrb[0].mxu0
    %3947 = vmatprep.mubr.f32.mxu0 0.0
    %3948 = vmatmul.mubr.f32.gmra.mrb[0].mxu0 %v3615
    %v3949 = vpop.f32.mrb[0].mxu0
    %v3950 = vadd.f32 0.0, %v3949
    %v3951 = vpop.f32.mrb[0].mxu0
    %3952 = vmatprep.mubr.f32.mxu0 0.0
    %3953 = vmatmul.mubr.f32.gmra.mrb[0].mxu0 %v3616
    %v3954 = vpop.f32.mrb[0].mxu0
    %v3955 = vadd.f32 0.0, %v3954
    %v3956 = vpop.f32.mrb[0].mxu0
    %3957 = vmatprep.mubr.f32.mxu0 0.0
    %3958 = vmatmul.mubr.f32.gmra.mrb[0].mxu0 %v3617
    %v3959 = vpop.f32.mrb[0].mxu0
    %v3960 = vadd.f32 0.0, %v3959
    %v3961 = vpop.f32.mrb[0].mxu0
    %3962 = vmatprep.mubr.f32.mxu0 0.0
    %3963 = vmatmul.mubr.f32.gmra.mrb[0].mxu0 %v3618
    %v3964 = vpop.f32.mrb[0].mxu0
    %v3965 = vadd.f32 0.0, %v3964
    %v3966 = vpop.f32.mrb[0].mxu0
    %3967 = vmatprep.mubr.f32.mxu0 0.0
    %3968 = vmatmul.mubr.f32.gmra.mrb[0].mxu0 %v3619
    %v3969 = vpop.f32.mrb[0].mxu0
    %v3970 = vadd.f32 0.0, %v3969
    %v3971 = vpop.f32.mrb[0].mxu0
    %3972 = vmatprep.mubr.f32.mxu0 0.0
    %3973 = vmatmul.mubr.f32.gmra.mrb[0].mxu0 %v3620
    %v3974 = vpop.f32.mrb[0].mxu0
    %v3975 = vadd.f32 0.0, %v3974
    %v3976 = vpop.f32.mrb[0].mxu0
    %3977 = vmatprep.mubr.f32.mxu0 0.0
    %3978 = vmatmul.mubr.f32.gmra.mrb[0].mxu0 %v3621
    %v3979 = vpop.f32.mrb[0].mxu0
    %v3980 = vadd.f32 0.0, %v3979
    %v3981 = vpop.f32.mrb[0].mxu0
    %3982 = vmatprep.mubr.f32.mxu0 0.0
    %3983 = vmatmul.mubr.f32.gmra.mrb[0].mxu0 %v3622
    %v3984 = vpop.f32.mrb[0].mxu0
    %v3985 = vadd.f32 0.0, %v3984
    %v3986 = vpop.f32.mrb[0].mxu0
    %3987 = vmatprep.mubr.f32.mxu0 0.0
    %3988 = vmatmul.mubr.f32.gmra.mrb[0].mxu0 %v3623
    %v3989 = vpop.f32.mrb[0].mxu0
    %v3990 = vadd.f32 0.0, %v3989
    %v3991 = vpop.f32.mrb[0].mxu0
    %3992 = vmatprep.mubr.f32.mxu0 0.0
    %3993 = vmatmul.mubr.f32.gmra.mrb[0].mxu0 %v3624
    %v3994 = vpop.f32.mrb[0].mxu0
    %v3995 = vadd.f32 0.0, %v3994
    %v3996 = vpop.f32.mrb[0].mxu0
    %3997 = vmatprep.mubr.f32.mxu0 0.0
    %3998 = vmatmul.mubr.f32.gmra.mrb[0].mxu0 %v3625
    %v3999 = vpop.f32.mrb[0].mxu0
    %v4000 = vadd.f32 0.0, %v3999
    %v4001 = vpop.f32.mrb[0].mxu0
    %4002 = vmatprep.mubr.f32.mxu0 0.0
    %4003 = vmatmul.mubr.f32.gmra.mrb[0].mxu0 %v3626
    %v4004 = vpop.f32.mrb[0].mxu0
    %v4005 = vadd.f32 0.0, %v4004
    %v4006 = vpop.f32.mrb[0].mxu0
    %4007 = vmatprep.mubr.f32.mxu0 0.0
    %4008 = vmatmul.mubr.f32.gmra.mrb[0].mxu0 %v3627
    %v4009 = vpop.f32.mrb[0].mxu0
    %v4010 = vadd.f32 0.0, %v4009
    %v4011 = vpop.f32.mrb[0].mxu0
    %4012 = vmatprep.mubr.f32.mxu0 0.0
    %4013 = vmatmul.mubr.f32.gmra.mrb[0].mxu0 %v3628
    %v4014 = vpop.f32.mrb[0].mxu0
    %v4015 = vadd.f32 0.0, %v4014
    %v4016 = vpop.f32.mrb[0].mxu0
    %4017 = vmatprep.mubr.f32.mxu0 0.0
    %4018 = vmatmul.mubr.f32.gmra.mrb[0].mxu0 %v3629
    %v4019 = vpop.f32.mrb[0].mxu0
    %v4020 = vadd.f32 0.0, %v4019
    %v4021 = vpop.f32.mrb[0].mxu0
    %4022 = vmatprep.mubr.f32.mxu0 0.0
    %4023 = vmatmul.mubr.f32.gmra.mrb[0].mxu0 %v3630
    %v4024 = vpop.f32.mrb[0].mxu0
    %v4025 = vadd.f32 0.0, %v4024
    %v4026 = vpop.f32.mrb[0].mxu0
    %4027 = vmatprep.mubr.f32.mxu0 0.0
    %4028 = vmatmul.mubr.f32.gmra.mrb[0].mxu0 %v3631
    %v4029 = vpop.f32.mrb[0].mxu0
    %v4030 = vadd.f32 0.0, %v4029
    %v4031 = vpop.f32.mrb[0].mxu0
    %4032 = vdwg.mxu0
    %v4033 = vld [vmem:[%s8] sm:$0x1]
    %v4035 = vlaneseq
    %v4036 = vshrl.u32 %v4035, 7
    %v4037 = vsub.s32 0, %v4036
    %v4038 = vrot.slane %v4033, %v4037
    %v4040 = vmul.f32 %v3715, %v4038
    %v4041 = vmul.f32 %v3720, %v4038
    %v4042 = vmul.f32 %v3725, %v4038
    %v4043 = vmul.f32 %v3730, %v4038
    %v4044 = vmul.f32 %v3735, %v4038
    %v4045 = vmul.f32 %v3740, %v4038
    %v4046 = vmul.f32 %v3745, %v4038
    %v4047 = vmul.f32 %v3750, %v4038
    %v4048 = vmul.f32 %v3755, %v4038
    %v4049 = vmul.f32 %v3760, %v4038
    %v4050 = vmul.f32 %v3765, %v4038
    %v4051 = vmul.f32 %v3770, %v4038
    %v4052 = vmul.f32 %v3775, %v4038
    %v4053 = vmul.f32 %v3780, %v4038
    %v4054 = vmul.f32 %v3785, %v4038
    %v4055 = vmul.f32 %v3790, %v4038
    %v4056 = vmul.f32 %v3795, %v4038
    %v4057 = vmul.f32 %v3800, %v4038
    %v4058 = vmul.f32 %v3805, %v4038
    %v4059 = vmul.f32 %v3810, %v4038
    %v4060 = vmul.f32 %v3815, %v4038
    %v4061 = vmul.f32 %v3820, %v4038
    %v4062 = vmul.f32 %v3825, %v4038
    %v4063 = vmul.f32 %v3830, %v4038
    %v4064 = vmul.f32 %v3835, %v4038
    %v4065 = vmul.f32 %v3840, %v4038
    %v4066 = vmul.f32 %v3845, %v4038
    %v4067 = vmul.f32 %v3850, %v4038
    %v4068 = vmul.f32 %v3855, %v4038
    %v4069 = vmul.f32 %v3860, %v4038
    %v4070 = vmul.f32 %v3865, %v4038
    %v4071 = vmul.f32 %v3870, %v4038
    %v4072 = vmul.f32 %v3875, %v4038
    %v4073 = vmul.f32 %v3880, %v4038
    %v4074 = vmul.f32 %v3885, %v4038
    %v4075 = vmul.f32 %v3890, %v4038
    %v4076 = vmul.f32 %v3895, %v4038
    %v4077 = vmul.f32 %v3900, %v4038
    %v4078 = vmul.f32 %v3905, %v4038
    %v4079 = vmul.f32 %v3910, %v4038
    %v4080 = vmul.f32 %v3915, %v4038
    %v4081 = vmul.f32 %v3920, %v4038
    %v4082 = vmul.f32 %v3925, %v4038
    %v4083 = vmul.f32 %v3930, %v4038
    %v4084 = vmul.f32 %v3935, %v4038
    %v4085 = vmul.f32 %v3940, %v4038
    %v4086 = vmul.f32 %v3945, %v4038
    %v4087 = vmul.f32 %v3950, %v4038
    %v4088 = vmul.f32 %v3955, %v4038
    %v4089 = vmul.f32 %v3960, %v4038
    %v4090 = vmul.f32 %v3965, %v4038
    %v4091 = vmul.f32 %v3970, %v4038
    %v4092 = vmul.f32 %v3975, %v4038
    %v4093 = vmul.f32 %v3980, %v4038
    %v4094 = vmul.f32 %v3985, %v4038
    %v4095 = vmul.f32 %v3990, %v4038
    %v4096 = vmul.f32 %v3995, %v4038
    %v4097 = vmul.f32 %v4000, %v4038
    %v4098 = vmul.f32 %v4005, %v4038
    %v4099 = vmul.f32 %v4010, %v4038
    %v4100 = vmul.f32 %v4015, %v4038
    %v4101 = vmul.f32 %v4020, %v4038
    %v4102 = vmul.f32 %v4025, %v4038
    %v4103 = vmul.f32 %v4030, %v4038
    %v4104 = vld [vmem:[%s9] sm:$0x1]
    %v4106 = vlaneseq
    %v4107 = vshrl.u32 %v4106, 7
    %v4108 = vsub.s32 0, %v4107
    %v4109 = vrot.slane %v4104, %v4108
    %v4111 = vadd.f32 %v4040, %v4109
    %v4112 = vadd.f32 %v4041, %v4109
    %v4113 = vadd.f32 %v4042, %v4109
    %v4114 = vadd.f32 %v4043, %v4109
    %v4115 = vadd.f32 %v4044, %v4109
    %v4116 = vadd.f32 %v4045, %v4109
    %v4117 = vadd.f32 %v4046, %v4109
    %v4118 = vadd.f32 %v4047, %v4109
    %v4119 = vadd.f32 %v4048, %v4109
    %v4120 = vadd.f32 %v4049, %v4109
    %v4121 = vadd.f32 %v4050, %v4109
    %v4122 = vadd.f32 %v4051, %v4109
    %v4123 = vadd.f32 %v4052, %v4109
    %v4124 = vadd.f32 %v4053, %v4109
    %v4125 = vadd.f32 %v4054, %v4109
    %v4126 = vadd.f32 %v4055, %v4109
    %v4127 = vadd.f32 %v4056, %v4109
    %v4128 = vadd.f32 %v4057, %v4109
    %v4129 = vadd.f32 %v4058, %v4109
    %v4130 = vadd.f32 %v4059, %v4109
    %v4131 = vadd.f32 %v4060, %v4109
    %v4132 = vadd.f32 %v4061, %v4109
    %v4133 = vadd.f32 %v4062, %v4109
    %v4134 = vadd.f32 %v4063, %v4109
    %v4135 = vadd.f32 %v4064, %v4109
    %v4136 = vadd.f32 %v4065, %v4109
    %v4137 = vadd.f32 %v4066, %v4109
    %v4138 = vadd.f32 %v4067, %v4109
    %v4139 = vadd.f32 %v4068, %v4109
    %v4140 = vadd.f32 %v4069, %v4109
    %v4141 = vadd.f32 %v4070, %v4109
    %v4142 = vadd.f32 %v4071, %v4109
    %v4143 = vadd.f32 %v4072, %v4109
    %v4144 = vadd.f32 %v4073, %v4109
    %v4145 = vadd.f32 %v4074, %v4109
    %v4146 = vadd.f32 %v4075, %v4109
    %v4147 = vadd.f32 %v4076, %v4109
    %v4148 = vadd.f32 %v4077, %v4109
    %v4149 = vadd.f32 %v4078, %v4109
    %v4150 = vadd.f32 %v4079, %v4109
    %v4151 = vadd.f32 %v4080, %v4109
    %v4152 = vadd.f32 %v4081, %v4109
    %v4153 = vadd.f32 %v4082, %v4109
    %v4154 = vadd.f32 %v4083, %v4109
    %v4155 = vadd.f32 %v4084, %v4109
    %v4156 = vadd.f32 %v4085, %v4109
    %v4157 = vadd.f32 %v4086, %v4109
    %v4158 = vadd.f32 %v4087, %v4109
    %v4159 = vadd.f32 %v4088, %v4109
    %v4160 = vadd.f32 %v4089, %v4109
    %v4161 = vadd.f32 %v4090, %v4109
    %v4162 = vadd.f32 %v4091, %v4109
    %v4163 = vadd.f32 %v4092, %v4109
    %v4164 = vadd.f32 %v4093, %v4109
    %v4165 = vadd.f32 %v4094, %v4109
    %v4166 = vadd.f32 %v4095, %v4109
    %v4167 = vadd.f32 %v4096, %v4109
    %v4168 = vadd.f32 %v4097, %v4109
    %v4169 = vadd.f32 %v4098, %v4109
    %v4170 = vadd.f32 %v4099, %v4109
    %v4171 = vadd.f32 %v4100, %v4109
    %v4172 = vadd.f32 %v4101, %v4109
    %v4173 = vadd.f32 %v4102, %v4109
    %v4174 = vadd.f32 %v4103, %v4109
    %v4175 = vadd.f32 %v4111, %v91
    %v4176 = vadd.f32 %v4112, %v92
    %v4177 = vadd.f32 %v4113, %v93
    %v4178 = vadd.f32 %v4114, %v94
    %v4179 = vadd.f32 %v4115, %v95
    %v4180 = vadd.f32 %v4116, %v96
    %v4181 = vadd.f32 %v4117, %v97
    %v4182 = vadd.f32 %v4118, %v98
    %v4183 = vadd.f32 %v4119, %v99
    %v4184 = vadd.f32 %v4120, %v100
    %v4185 = vadd.f32 %v4121, %v101
    %v4186 = vadd.f32 %v4122, %v102
    %v4187 = vadd.f32 %v4123, %v103
    %v4188 = vadd.f32 %v4124, %v104
    %v4189 = vadd.f32 %v4125, %v105
    %v4190 = vadd.f32 %v4126, %v106
    %v4191 = vadd.f32 %v4127, %v107
    %v4192 = vadd.f32 %v4128, %v108
    %v4193 = vadd.f32 %v4129, %v109
    %v4194 = vadd.f32 %v4130, %v110
    %v4195 = vadd.f32 %v4131, %v111
    %v4196 = vadd.f32 %v4132, %v112
    %v4197 = vadd.f32 %v4133, %v113
    %v4198 = vadd.f32 %v4134, %v114
    %v4199 = vadd.f32 %v4135, %v115
    %v4200 = vadd.f32 %v4136, %v116
    %v4201 = vadd.f32 %v4137, %v117
    %v4202 = vadd.f32 %v4138, %v118
    %v4203 = vadd.f32 %v4139, %v119
    %v4204 = vadd.f32 %v4140, %v120
    %v4205 = vadd.f32 %v4141, %v121
    %v4206 = vadd.f32 %v4142, %v122
    %v4207 = vadd.f32 %v4143, %v123
    %v4208 = vadd.f32 %v4144, %v124
    %v4209 = vadd.f32 %v4145, %v125
    %v4210 = vadd.f32 %v4146, %v126
    %v4211 = vadd.f32 %v4147, %v127
    %v4212 = vadd.f32 %v4148, %v128
    %v4213 = vadd.f32 %v4149, %v129
    %v4214 = vadd.f32 %v4150, %v130
    %v4215 = vadd.f32 %v4151, %v131
    %v4216 = vadd.f32 %v4152, %v132
    %v4217 = vadd.f32 %v4153, %v133
    %v4218 = vadd.f32 %v4154, %v134
    %v4219 = vadd.f32 %v4155, %v135
    %v4220 = vadd.f32 %v4156, %v136
    %v4221 = vadd.f32 %v4157, %v137
    %v4222 = vadd.f32 %v4158, %v138
    %v4223 = vadd.f32 %v4159, %v139
    %v4224 = vadd.f32 %v4160, %v140
    %v4225 = vadd.f32 %v4161, %v141
    %v4226 = vadd.f32 %v4162, %v142
    %v4227 = vadd.f32 %v4163, %v143
    %v4228 = vadd.f32 %v4164, %v144
    %v4229 = vadd.f32 %v4165, %v145
    %v4230 = vadd.f32 %v4166, %v146
    %v4231 = vadd.f32 %v4167, %v147
    %v4232 = vadd.f32 %v4168, %v148
    %v4233 = vadd.f32 %v4169, %v149
    %v4234 = vadd.f32 %v4170, %v150
    %v4235 = vadd.f32 %v4171, %v151
    %v4236 = vadd.f32 %v4172, %v152
    %v4237 = vadd.f32 %v4173, %v153
    %v4238 = vadd.f32 %v4174, %v154
    %v4239 = vmax.f32 %v4175, 0.0
    %v4240 = vmax.f32 %v4176, 0.0
    %v4241 = vmax.f32 %v4177, 0.0
    %v4242 = vmax.f32 %v4178, 0.0
    %v4243 = vmax.f32 %v4179, 0.0
    %v4244 = vmax.f32 %v4180, 0.0
    %v4245 = vmax.f32 %v4181, 0.0
    %v4246 = vmax.f32 %v4182, 0.0
    %v4247 = vmax.f32 %v4183, 0.0
    %v4248 = vmax.f32 %v4184, 0.0
    %v4249 = vmax.f32 %v4185, 0.0
    %v4250 = vmax.f32 %v4186, 0.0
    %v4251 = vmax.f32 %v4187, 0.0
    %v4252 = vmax.f32 %v4188, 0.0
    %v4253 = vmax.f32 %v4189, 0.0
    %v4254 = vmax.f32 %v4190, 0.0
    %v4255 = vmax.f32 %v4191, 0.0
    %v4256 = vmax.f32 %v4192, 0.0
    %v4257 = vmax.f32 %v4193, 0.0
    %v4258 = vmax.f32 %v4194, 0.0
    %v4259 = vmax.f32 %v4195, 0.0
    %v4260 = vmax.f32 %v4196, 0.0
    %v4261 = vmax.f32 %v4197, 0.0
    %v4262 = vmax.f32 %v4198, 0.0
    %v4263 = vmax.f32 %v4199, 0.0
    %v4264 = vmax.f32 %v4200, 0.0
    %v4265 = vmax.f32 %v4201, 0.0
    %v4266 = vmax.f32 %v4202, 0.0
    %v4267 = vmax.f32 %v4203, 0.0
    %v4268 = vmax.f32 %v4204, 0.0
    %v4269 = vmax.f32 %v4205, 0.0
    %v4270 = vmax.f32 %v4206, 0.0
    %v4271 = vmax.f32 %v4207, 0.0
    %v4272 = vmax.f32 %v4208, 0.0
    %v4273 = vmax.f32 %v4209, 0.0
    %v4274 = vmax.f32 %v4210, 0.0
    %v4275 = vmax.f32 %v4211, 0.0
    %v4276 = vmax.f32 %v4212, 0.0
    %v4277 = vmax.f32 %v4213, 0.0
    %v4278 = vmax.f32 %v4214, 0.0
    %v4279 = vmax.f32 %v4215, 0.0
    %v4280 = vmax.f32 %v4216, 0.0
    %v4281 = vmax.f32 %v4217, 0.0
    %v4282 = vmax.f32 %v4218, 0.0
    %v4283 = vmax.f32 %v4219, 0.0
    %v4284 = vmax.f32 %v4220, 0.0
    %v4285 = vmax.f32 %v4221, 0.0
    %v4286 = vmax.f32 %v4222, 0.0
    %v4287 = vmax.f32 %v4223, 0.0
    %v4288 = vmax.f32 %v4224, 0.0
    %v4289 = vmax.f32 %v4225, 0.0
    %v4290 = vmax.f32 %v4226, 0.0
    %v4291 = vmax.f32 %v4227, 0.0
    %v4292 = vmax.f32 %v4228, 0.0
    %v4293 = vmax.f32 %v4229, 0.0
    %v4294 = vmax.f32 %v4230, 0.0
    %v4295 = vmax.f32 %v4231, 0.0
    %v4296 = vmax.f32 %v4232, 0.0
    %v4297 = vmax.f32 %v4233, 0.0
    %v4298 = vmax.f32 %v4234, 0.0
    %v4299 = vmax.f32 %v4235, 0.0
    %v4300 = vmax.f32 %v4236, 0.0
    %v4301 = vmax.f32 %v4237, 0.0
    %v4302 = vmax.f32 %v4238, 0.0
    %4303 = vst [vmem:[#allocation11] sm:$0xff] %v4239
    %4304 = vst [vmem:[#allocation11 + $0x8] sm:$0xff] %v4240
    %4305 = vst [vmem:[#allocation11 + $0x10] sm:$0xff] %v4241
    %4306 = vst [vmem:[#allocation11 + $0x18] sm:$0xff] %v4242
    %4307 = vst [vmem:[#allocation11 + $0x20] sm:$0xff] %v4243
    %4308 = vst [vmem:[#allocation11 + $0x28] sm:$0xff] %v4244
    %4309 = vst [vmem:[#allocation11 + $0x30] sm:$0xff] %v4245
    %4310 = vst [vmem:[#allocation11 + $0x38] sm:$0xff] %v4246
    %4311 = vst [vmem:[#allocation11 + $0x40] sm:$0xff] %v4247
    %4312 = vst [vmem:[#allocation11 + $0x48] sm:$0xff] %v4248
    %4313 = vst [vmem:[#allocation11 + $0x50] sm:$0xff] %v4249
    %4314 = vst [vmem:[#allocation11 + $0x58] sm:$0xff] %v4250
    %4315 = vst [vmem:[#allocation11 + $0x60] sm:$0xff] %v4251
    %4316 = vst [vmem:[#allocation11 + $0x68] sm:$0xff] %v4252
    %4317 = vst [vmem:[#allocation11 + $0x70] sm:$0xff] %v4253
    %4318 = vst [vmem:[#allocation11 + $0x78] sm:$0xff] %v4254
    %4319 = vst [vmem:[#allocation11 + $0x80] sm:$0xff] %v4255
    %4320 = vst [vmem:[#allocation11 + $0x88] sm:$0xff] %v4256
    %4321 = vst [vmem:[#allocation11 + $0x90] sm:$0xff] %v4257
    %4322 = vst [vmem:[#allocation11 + $0x98] sm:$0xff] %v4258
    %4323 = vst [vmem:[#allocation11 + $0xa0] sm:$0xff] %v4259
    %4324 = vst [vmem:[#allocation11 + $0xa8] sm:$0xff] %v4260
    %4325 = vst [vmem:[#allocation11 + $0xb0] sm:$0xff] %v4261
    %4326 = vst [vmem:[#allocation11 + $0xb8] sm:$0xff] %v4262
    %4327 = vst [vmem:[#allocation11 + $0xc0] sm:$0xff] %v4263
    %4328 = vst [vmem:[#allocation11 + $0xc8] sm:$0xff] %v4264
    %4329 = vst [vmem:[#allocation11 + $0xd0] sm:$0xff] %v4265
    %4330 = vst [vmem:[#allocation11 + $0xd8] sm:$0xff] %v4266
    %4331 = vst [vmem:[#allocation11 + $0xe0] sm:$0xff] %v4267
    %4332 = vst [vmem:[#allocation11 + $0xe8] sm:$0xff] %v4268
    %4333 = vst [vmem:[#allocation11 + $0xf0] sm:$0xff] %v4269
    %4334 = vst [vmem:[#allocation11 + $0xf8] sm:$0xff] %v4270
    %4335 = vst [vmem:[#allocation11 + $0x100] sm:$0xff] %v4271
    %4336 = vst [vmem:[#allocation11 + $0x108] sm:$0xff] %v4272
    %4337 = vst [vmem:[#allocation11 + $0x110] sm:$0xff] %v4273
    %4338 = vst [vmem:[#allocation11 + $0x118] sm:$0xff] %v4274
    %4339 = vst [vmem:[#allocation11 + $0x120] sm:$0xff] %v4275
    %4340 = vst [vmem:[#allocation11 + $0x128] sm:$0xff] %v4276
    %4341 = vst [vmem:[#allocation11 + $0x130] sm:$0xff] %v4277
    %4342 = vst [vmem:[#allocation11 + $0x138] sm:$0xff] %v4278
    %4343 = vst [vmem:[#allocation11 + $0x140] sm:$0xff] %v4279
    %4344 = vst [vmem:[#allocation11 + $0x148] sm:$0xff] %v4280
    %4345 = vst [vmem:[#allocation11 + $0x150] sm:$0xff] %v4281
    %4346 = vst [vmem:[#allocation11 + $0x158] sm:$0xff] %v4282
    %4347 = vst [vmem:[#allocation11 + $0x160] sm:$0xff] %v4283
    %4348 = vst [vmem:[#allocation11 + $0x168] sm:$0xff] %v4284
    %4349 = vst [vmem:[#allocation11 + $0x170] sm:$0xff] %v4285
    %4350 = vst [vmem:[#allocation11 + $0x178] sm:$0xff] %v4286
    %4351 = vst [vmem:[#allocation11 + $0x180] sm:$0xff] %v4287
    %4352 = vst [vmem:[#allocation11 + $0x188] sm:$0xff] %v4288
    %4353 = vst [vmem:[#allocation11 + $0x190] sm:$0xff] %v4289
    %4354 = vst [vmem:[#allocation11 + $0x198] sm:$0xff] %v4290
    %4355 = vst [vmem:[#allocation11 + $0x1a0] sm:$0xff] %v4291
    %4356 = vst [vmem:[#allocation11 + $0x1a8] sm:$0xff] %v4292
    %4357 = vst [vmem:[#allocation11 + $0x1b0] sm:$0xff] %v4293
    %4358 = vst [vmem:[#allocation11 + $0x1b8] sm:$0xff] %v4294
    %4359 = vst [vmem:[#allocation11 + $0x1c0] sm:$0xff] %v4295
    %4360 = vst [vmem:[#allocation11 + $0x1c8] sm:$0xff] %v4296
    %4361 = vst [vmem:[#allocation11 + $0x1d0] sm:$0xff] %v4297
    %4362 = vst [vmem:[#allocation11 + $0x1d8] sm:$0xff] %v4298
    %4363 = vst [vmem:[#allocation11 + $0x1e0] sm:$0xff] %v4299
    %4364 = vst [vmem:[#allocation11 + $0x1e8] sm:$0xff] %v4300
    %4365 = vst [vmem:[#allocation11 + $0x1f0] sm:$0xff] %v4301
    %4366 = vst [vmem:[#allocation11 + $0x1f8] sm:$0xff] %v4302
    // Predicated region
    $region58: #{tpu_custom_call.1} parent=1 // pred_check
      _
    $region59: #{tpu_custom_call.1} parent=1 // pred_check_branch
      %4368 = sbr.rel (0) target = $region61
    $region60: #{tpu_custom_call.1} parent=1 // pred_region
      %s4370 = ssub.s32 8192, 8192
      %4371 = vsyncadd [#allocation5], %s4370
      %s4372 = sshll.u32 [#allocation11], 4
      %s4373 = int_to_ptr.vmem [resolvable:$true] %s4372
      %4378 = dma.vmem_to_hbm [thread:$0]  %s4373, 8192, %s10, [#allocation5], 128, 128, 8
    $region61: #{tpu_custom_call.1} parent=1 // pred_fallthru
      _
    // Predicated region
    $region62: #{tpu_custom_call.1} parent=1 // pred_check
      _
    $region63: #{tpu_custom_call.1} parent=1 // pred_check_branch
      %4380 = sbr.rel (0) target = $region65
    $region64: #{tpu_custom_call.1} parent=1 // pred_region
      %4381 = dma.done [#allocation5], 8192
    $region65: #{tpu_custom_call.1} parent=1 // pred_fallthru
      _
    %4382 = vsyncpa [#allocation4], 1
    %4383 = vsyncpa [#allocation7], 1
    %4384 = vsyncpa [#allocation10], 1
    %4385 = vsyncpa [#allocation5], 1

// kernel: tpu_custom_call.1
$region0: #{tpu_custom_call.1}
  #allocation0 [shape = 'u32[]', space=smem, size = 0x4, offset = 0x4, fixed_abs, tag = 'smem constant byte address 0x4 - core index']
  #allocation1 [shape = 'u32[144,128]{1,0:T(1,128)}', space=vmem, size = 0x12000, scoped, tag = 'internal scratch']
  #allocation2 [shape = 'f32[2,18,16,128]{3,2,1,0:T(8,128)}', space=vmem, size = 0x48000, scoped, tag = 'scratch operand']
  %s0 = inlined_call_operand.hbm [shape: f32[2,16,16,128], index: 0, kind: input, shape index: {}]
  %s1 = inlined_call_operand.hbm [shape: f32[128,128], index: 1, kind: input, shape index: {}]
  %s2 = inlined_call_operand.vmem [shape: f32[1,128], index: 2, kind: input, shape index: {}]
  %s3 = inlined_call_operand.vmem [shape: f32[1,128], index: 3, kind: input, shape index: {}]
  %s4 = inlined_call_operand.hbm [shape: f32[1152,128], index: 4, kind: input, shape index: {}]
  %s5 = inlined_call_operand.vmem [shape: f32[1,128], index: 5, kind: input, shape index: {}]
  %s6 = inlined_call_operand.vmem [shape: f32[1,128], index: 6, kind: input, shape index: {}]
  %s7 = inlined_call_operand.hbm [shape: f32[128,128], index: 7, kind: input, shape index: {}]
  %s8 = inlined_call_operand.vmem [shape: f32[1,128], index: 8, kind: input, shape index: {}]
  %s9 = inlined_call_operand.vmem [shape: f32[1,128], index: 9, kind: input, shape index: {}]
  %s10 = inlined_call_operand.hbm [shape: f32[2,16,16,128], index: 10, kind: output, shape index: {}]
  %s11 = sld [smem:[#allocation0]]
  $region66: #{tpu_custom_call.1} parent=0
    _
  %s13 = ssub.s32 1, %s11
  %s14 = scalar_select 0, %s13, %s11
  $region1: #{tpu_custom_call.1} parent=0
    #allocation3 [shape = 'u8[262144]{0}', space=vmem, size = 0x40000, scoped, tag = 'input window, operand 0, single buffered']
    #allocation4 [shape = 's32[1]{0}', space=sflag, size = 0x4, scoped, tag = 'scoped memory for tpu_custom_call.1']
    #allocation5 [shape = 's32[1]{0}', space=sflag, size = 0x4, scoped, tag = 'scoped memory for tpu_custom_call.1']
    #allocation6 [shape = 'u8[65536]{0}', space=vmem, size = 0x10000, scoped, tag = 'input window, operand 1, single buffered']
    #allocation7 [shape = 's32[1]{0}', space=sflag, size = 0x4, scoped, tag = 'scoped memory for tpu_custom_call.1']
    #allocation8 [shape = 'u8[589824]{0}', space=vmem, size = 0x90000, scoped, tag = 'input window, operand 4, single buffered']
    #allocation9 [shape = 'u8[65536]{0}', space=vmem, size = 0x10000, scoped, tag = 'input window, operand 7, single buffered']
    #allocation10 [shape = 's32[1]{0}', space=sflag, size = 0x4, scoped, tag = 'scoped memory for tpu_custom_call.1']
    #allocation11 [shape = 'u8[262144]{0}', space=vmem, size = 0x40000, scoped, tag = 'output window, operand 0, single buffered']
    %15 = vsyncpa [#allocation4], 0
    %16 = vsyncpa [#allocation7], 0
    %17 = vsyncpa [#allocation10], 0
    %18 = vsyncpa [#allocation5], 0
    // Predicated region
    $region2: #{tpu_custom_call.1} parent=1 // pred_check
      _
    $region3: #{tpu_custom_call.1} parent=1 // pred_check_branch
      %20 = sbr.rel (0) target = $region5
    $region4: #{tpu_custom_call.1} parent=1 // pred_region
      %s22 = ssub.s32 8192, 8192
      %23 = vsyncadd [#allocation4], %s22
      %s24 = sshll.u32 [#allocation3], 4
      %s25 = int_to_ptr.vmem [resolvable:$true] %s24
      %30 = dma.hbm_to_vmem [thread:$0]  %s0, 8192, %s25, [#allocation4], 128, 128, 8
    $region5: #{tpu_custom_call.1} parent=1 // pred_fallthru
      _
    // Predicated region
    $region6: #{tpu_custom_call.1} parent=1 // pred_check
      _
    $region7: #{tpu_custom_call.1} parent=1 // pred_check_branch
      %32 = sbr.rel (0) target = $region9
    $region8: #{tpu_custom_call.1} parent=1 // pred_region
      %s34 = ssub.s32 2048, 2048
      %35 = vsyncadd [#allocation7], %s34
      %s36 = sshll.u32 [#allocation6], 4
      %s37 = int_to_ptr.vmem [resolvable:$true] %s36
      %42 = dma.hbm_to_vmem [thread:$0]  %s1, 2048, %s37, [#allocation7], 128, 128, 8
    $region9: #{tpu_custom_call.1} parent=1 // pred_fallthru
      _
    // Predicated region
    $region10: #{tpu_custom_call.1} parent=1 // pred_check
      _
    $region11: #{tpu_custom_call.1} parent=1 // pred_check_branch
      %44 = sbr.rel (0) target = $region13
    $region12: #{tpu_custom_call.1} parent=1 // pred_region
      _
    $region13: #{tpu_custom_call.1} parent=1 // pred_fallthru
      _
    // Predicated region
    $region14: #{tpu_custom_call.1} parent=1 // pred_check
      _
    $region15: #{tpu_custom_call.1} parent=1 // pred_check_branch
      %46 = sbr.rel (0) target = $region17
    $region16: #{tpu_custom_call.1} parent=1 // pred_region
      _
    $region17: #{tpu_custom_call.1} parent=1 // pred_fallthru
      _
    // Predicated region
    $region18: #{tpu_custom_call.1} parent=1 // pred_check
      _
    $region19: #{tpu_custom_call.1} parent=1 // pred_check_branch
      %48 = sbr.rel (0) target = $region21
    $region20: #{tpu_custom_call.1} parent=1 // pred_region
      %s50 = ssub.s32 18432, 18432
      %51 = vsyncadd [#allocation7], %s50
      %s52 = sshll.u32 [#allocation8], 4
      %s53 = int_to_ptr.vmem [resolvable:$true] %s52
      %58 = dma.hbm_to_vmem [thread:$0]  %s4, 18432, %s53, [#allocation7], 128, 128, 8
    $region21: #{tpu_custom_call.1} parent=1 // pred_fallthru
      _
    // Predicated region
    $region22: #{tpu_custom_call.1} parent=1 // pred_check
      _
    $region23: #{tpu_custom_call.1} parent=1 // pred_check_branch
      %60 = sbr.rel (0) target = $region25
    $region24: #{tpu_custom_call.1} parent=1 // pred_region
      _
    $region25: #{tpu_custom_call.1} parent=1 // pred_fallthru
      _
    // Predicated region
    $region26: #{tpu_custom_call.1} parent=1 // pred_check
      _
    $region27: #{tpu_custom_call.1} parent=1 // pred_check_branch
      %62 = sbr.rel (0) target = $region29
    $region28: #{tpu_custom_call.1} parent=1 // pred_region
      _
    $region29: #{tpu_custom_call.1} parent=1 // pred_fallthru
      _
    // Predicated region
    $region30: #{tpu_custom_call.1} parent=1 // pred_check
      _
    $region31: #{tpu_custom_call.1} parent=1 // pred_check_branch
      %64 = sbr.rel (0) target = $region33
    $region32: #{tpu_custom_call.1} parent=1 // pred_region
      %s66 = ssub.s32 2048, 2048
      %67 = vsyncadd [#allocation10], %s66
      %s68 = sshll.u32 [#allocation9], 4
      %s69 = int_to_ptr.vmem [resolvable:$true] %s68
      %74 = dma.hbm_to_vmem [thread:$0]  %s7, 2048, %s69, [#allocation10], 128, 128, 8
    $region33: #{tpu_custom_call.1} parent=1 // pred_fallthru
      _
    // Predicated region
    $region34: #{tpu_custom_call.1} parent=1 // pred_check
      _
    $region35: #{tpu_custom_call.1} parent=1 // pred_check_branch
      %76 = sbr.rel (0) target = $region37
    $region36: #{tpu_custom_call.1} parent=1 // pred_region
      _
    $region37: #{tpu_custom_call.1} parent=1 // pred_fallthru
      _
    // Predicated region
    $region38: #{tpu_custom_call.1} parent=1 // pred_check
      _
    $region39: #{tpu_custom_call.1} parent=1 // pred_check_branch
      %78 = sbr.rel (0) target = $region41
    $region40: #{tpu_custom_call.1} parent=1 // pred_region
      _
    $region41: #{tpu_custom_call.1} parent=1 // pred_fallthru
      _
    // Predicated region
    $region42: #{tpu_custom_call.1} parent=1 // pred_check
      _
    $region43: #{tpu_custom_call.1} parent=1 // pred_check_branch
      %80 = sbr.rel (0) target = $region45
    $region44: #{tpu_custom_call.1} parent=1 // pred_region
      %81 = dma.done [#allocation4], 8192
    $region45: #{tpu_custom_call.1} parent=1 // pred_fallthru
      _
    // Predicated region
    $region46: #{tpu_custom_call.1} parent=1 // pred_check
      _
    $region47: #{tpu_custom_call.1} parent=1 // pred_check_branch
      %83 = sbr.rel (0) target = $region49
    $region48: #{tpu_custom_call.1} parent=1 // pred_region
      %84 = dma.done [#allocation7], 2048
    $region49: #{tpu_custom_call.1} parent=1 // pred_fallthru
      _
    // Predicated region
    $region50: #{tpu_custom_call.1} parent=1 // pred_check
      _
    $region51: #{tpu_custom_call.1} parent=1 // pred_check_branch
      %86 = sbr.rel (0) target = $region53
    $region52: #{tpu_custom_call.1} parent=1 // pred_region
      %87 = dma.done [#allocation7], 18432
    $region53: #{tpu_custom_call.1} parent=1 // pred_fallthru
      _
    // Predicated region
    $region54: #{tpu_custom_call.1} parent=1 // pred_check
      _
    $region55: #{tpu_custom_call.1} parent=1 // pred_check_branch
      %89 = sbr.rel (0) target = $region57
    $region56: #{tpu_custom_call.1} parent=1 // pred_region
      %90 = dma.done [#allocation10], 2048
    $region57: #{tpu_custom_call.1} parent=1 // pred_fallthru
      _
    %v91 = vld [vmem:[#allocation3] sm:$0xff]
    %v92 = vld [vmem:[#allocation3 + $0x8] sm:$0xff]
    %v93 = vld [vmem:[#allocation3 + $0x10] sm:$0xff]
    %v94 = vld [vmem:[#allocation3 + $0x18] sm:$0xff]
    %v95 = vld [vmem:[#allocation3 + $0x20] sm:$0xff]
    %v96 = vld [vmem:[#allocation3 + $0x28] sm:$0xff]
    %v97 = vld [vmem:[#allocation3 + $0x30] sm:$0xff]
    %v98 = vld [vmem:[#allocation3 + $0x38] sm:$0xff]
    %v99 = vld [vmem:[#allocation3 + $0x40] sm:$0xff]
    %v100 = vld [vmem:[#allocation3 + $0x48] sm:$0xff]
    %v101 = vld [vmem:[#allocation3 + $0x50] sm:$0xff]
    %v102 = vld [vmem:[#allocation3 + $0x58] sm:$0xff]
    %v103 = vld [vmem:[#allocation3 + $0x60] sm:$0xff]
    %v104 = vld [vmem:[#allocation3 + $0x68] sm:$0xff]
    %v105 = vld [vmem:[#allocation3 + $0x70] sm:$0xff]
    %v106 = vld [vmem:[#allocation3 + $0x78] sm:$0xff]
    %v107 = vld [vmem:[#allocation3 + $0x80] sm:$0xff]
    %v108 = vld [vmem:[#allocation3 + $0x88] sm:$0xff]
    %v109 = vld [vmem:[#allocation3 + $0x90] sm:$0xff]
    %v110 = vld [vmem:[#allocation3 + $0x98] sm:$0xff]
    %v111 = vld [vmem:[#allocation3 + $0xa0] sm:$0xff]
    %v112 = vld [vmem:[#allocation3 + $0xa8] sm:$0xff]
    %v113 = vld [vmem:[#allocation3 + $0xb0] sm:$0xff]
    %v114 = vld [vmem:[#allocation3 + $0xb8] sm:$0xff]
    %v115 = vld [vmem:[#allocation3 + $0xc0] sm:$0xff]
    %v116 = vld [vmem:[#allocation3 + $0xc8] sm:$0xff]
    %v117 = vld [vmem:[#allocation3 + $0xd0] sm:$0xff]
    %v118 = vld [vmem:[#allocation3 + $0xd8] sm:$0xff]
    %v119 = vld [vmem:[#allocation3 + $0xe0] sm:$0xff]
    %v120 = vld [vmem:[#allocation3 + $0xe8] sm:$0xff]
    %v121 = vld [vmem:[#allocation3 + $0xf0] sm:$0xff]
    %v122 = vld [vmem:[#allocation3 + $0xf8] sm:$0xff]
    %v123 = vld [vmem:[#allocation3 + $0x100] sm:$0xff]
    %v124 = vld [vmem:[#allocation3 + $0x108] sm:$0xff]
    %v125 = vld [vmem:[#allocation3 + $0x110] sm:$0xff]
    %v126 = vld [vmem:[#allocation3 + $0x118] sm:$0xff]
    %v127 = vld [vmem:[#allocation3 + $0x120] sm:$0xff]
    %v128 = vld [vmem:[#allocation3 + $0x128] sm:$0xff]
    %v129 = vld [vmem:[#allocation3 + $0x130] sm:$0xff]
    %v130 = vld [vmem:[#allocation3 + $0x138] sm:$0xff]
    %v131 = vld [vmem:[#allocation3 + $0x140] sm:$0xff]
    %v132 = vld [vmem:[#allocation3 + $0x148] sm:$0xff]
    %v133 = vld [vmem:[#allocation3 + $0x150] sm:$0xff]
    %v134 = vld [vmem:[#allocation3 + $0x158] sm:$0xff]
    %v135 = vld [vmem:[#allocation3 + $0x160] sm:$0xff]
    %v136 = vld [vmem:[#allocation3 + $0x168] sm:$0xff]
    %v137 = vld [vmem:[#allocation3 + $0x170] sm:$0xff]
    %v138 = vld [vmem:[#allocation3 + $0x178] sm:$0xff]
    %v139 = vld [vmem:[#allocation3 + $0x180] sm:$0xff]
    %v140 = vld [vmem:[#allocation3 + $0x188] sm:$0xff]
    %v141 = vld [vmem:[#allocation3 + $0x190] sm:$0xff]
    %v142 = vld [vmem:[#allocation3 + $0x198] sm:$0xff]
    %v143 = vld [vmem:[#allocation3 + $0x1a0] sm:$0xff]
    %v144 = vld [vmem:[#allocation3 + $0x1a8] sm:$0xff]
    %v145 = vld [vmem:[#allocation3 + $0x1b0] sm:$0xff]
    %v146 = vld [vmem:[#allocation3 + $0x1b8] sm:$0xff]
    %v147 = vld [vmem:[#allocation3 + $0x1c0] sm:$0xff]
    %v148 = vld [vmem:[#allocation3 + $0x1c8] sm:$0xff]
    %v149 = vld [vmem:[#allocation3 + $0x1d0] sm:$0xff]
    %v150 = vld [vmem:[#allocation3 + $0x1d8] sm:$0xff]
    %v151 = vld [vmem:[#allocation3 + $0x1e0] sm:$0xff]
    %v152 = vld [vmem:[#allocation3 + $0x1e8] sm:$0xff]
    %v153 = vld [vmem:[#allocation3 + $0x1f0] sm:$0xff]
    %v154 = vld [vmem:[#allocation3 + $0x1f8] sm:$0xff]
    %v155 = vld [vmem:[#allocation6] sm:$0xff]
    %v156 = vld [vmem:[#allocation6 + $0x8] sm:$0xff]
    %v157 = vld [vmem:[#allocation6 + $0x10] sm:$0xff]
    %v158 = vld [vmem:[#allocation6 + $0x18] sm:$0xff]
    %v159 = vld [vmem:[#allocation6 + $0x20] sm:$0xff]
    %v160 = vld [vmem:[#allocation6 + $0x28] sm:$0xff]
    %v161 = vld [vmem:[#allocation6 + $0x30] sm:$0xff]
    %v162 = vld [vmem:[#allocation6 + $0x38] sm:$0xff]
    %v163 = vld [vmem:[#allocation6 + $0x40] sm:$0xff]
    %v164 = vld [vmem:[#allocation6 + $0x48] sm:$0xff]
    %v165 = vld [vmem:[#allocation6 + $0x50] sm:$0xff]
    %v166 = vld [vmem:[#allocation6 + $0x58] sm:$0xff]
    %v167 = vld [vmem:[#allocation6 + $0x60] sm:$0xff]
    %v168 = vld [vmem:[#allocation6 + $0x68] sm:$0xff]
    %v169 = vld [vmem:[#allocation6 + $0x70] sm:$0xff]
    %v170 = vld [vmem:[#allocation6 + $0x78] sm:$0xff]
    %171 = vmatprep.subr.mxu0 0.0
    %172 = vmatpush1.msra.mxu0 %v155
    %173 = vmatprep.subr.mxu0 0.0
    %174 = vmatpush1.msra.mxu0 %v156
    %175 = vmatprep.subr.mxu0 0.0
    %176 = vmatpush1.msra.mxu0 %v157
    %177 = vmatprep.subr.mxu0 0.0
    %178 = vmatpush1.msra.mxu0 %v158
    %179 = vmatprep.subr.mxu0 0.0
    %180 = vmatpush1.msra.mxu0 %v159
    %181 = vmatprep.subr.mxu0 0.0
    %182 = vmatpush1.msra.mxu0 %v160
    %183 = vmatprep.subr.mxu0 0.0
    %184 = vmatpush1.msra.mxu0 %v161
    %185 = vmatprep.subr.mxu0 0.0
    %186 = vmatpush1.msra.mxu0 %v162
    %187 = vmatprep.subr.mxu0 0.0
    %188 = vmatpush1.msra.mxu0 %v163
    %189 = vmatprep.subr.mxu0 0.0
    %190 = vmatpush1.msra.mxu0 %v164
    %191 = vmatprep.subr.mxu0 0.0
    %192 = vmatpush1.msra.mxu0 %v165
    %193 = vmatprep.subr.mxu0 0.0
    %194 = vmatpush1.msra.mxu0 %v166
    %195 = vmatprep.subr.mxu0 0.0
    %196 = vmatpush1.msra.mxu0 %v167
    %197 = vmatprep.subr.mxu0 0.0
    %198 = vmatpush1.msra.mxu0 %v168
    %199 = vmatprep.subr.mxu0 0.0
    %200 = vmatpush1.msra.mxu0 %v169
    %201 = vmatprep.subr.mxu0 0.0
    %202 = vmatpush1.msra.mxu0 %v170
    %203 = vmatprep.subr.mxu0 0.0
    %204 = vmatpush1.msra.mxu0 0.0
    %205 = vmatprep.subr.mxu0 0.0
    %206 = vmatpush1.msra.mxu0 0.0
    %207 = vmatprep.subr.mxu0 0.0
    %208 = vmatpush1.msra.mxu0 0.0
    %209 = vmatprep.subr.mxu0 0.0
    %210 = vmatpush1.msra.mxu0 0.0
    %211 = vmatprep.subr.mxu0 0.0
    %212 = vmatpush1.msra.mxu0 0.0
    %213 = vmatprep.subr.mxu0 0.0
    %214 = vmatpush1.msra.mxu0 0.0
    %215 = vmatprep.subr.mxu0 0.0
    %216 = vmatpush1.msra.mxu0 0.0
    %217 = vmatprep.subr.mxu0 0.0
    %218 = vmatpush1.msra.mxu0 0.0
    %219 = vmatprep.subr.mxu0 0.0
    %220 = vmatpush1.msra.mxu0 0.0
    %221 = vmatprep.subr.mxu0 0.0
    %222 = vmatpush1.msra.mxu0 0.0
    %223 = vmatprep.subr.mxu0 0.0
    %224 = vmatpush1.msra.mxu0 0.0
    %225 = vmatprep.subr.mxu0 0.0
    %226 = vmatpush1.msra.mxu0 0.0
    %227 = vmatprep.subr.mxu0 0.0
    %228 = vmatpush1.msra.mxu0 0.0
    %229 = vmatprep.subr.mxu0 0.0
    %230 = vmatpush1.msra.mxu0 0.0
    %231 = vmatprep.subr.mxu0 0.0
    %232 = vmatpush1.msra.mxu0 0.0
    %233 = vmatprep.subr.mxu0 0.0
    %234 = vmatpush1.msra.mxu0 0.0
    %235 = vmatprep.mubr.f32.mxu0 0.0
    %236 = vmatmul.mubr.f32.gmra.mrb[0].mxu0 %v91
    %v237 = vpop.f32.mrb[0].mxu0
    %v238 = vadd.f32 0.0, %v237
    %v239 = vpop.f32.mrb[0].mxu0
    %240 = vmatprep.mubr.f32.mxu0 0.0
    %241 = vmatmul.mubr.f32.gmra.mrb[0].mxu0 %v92
    %v242 = vpop.f32.mrb[0].mxu0
    %v243 = vadd.f32 0.0, %v242
    %v244 = vpop.f32.mrb[0].mxu0
    %245 = vmatprep.mubr.f32.mxu0 0.0
    %246 = vmatmul.mubr.f32.gmra.mrb[0].mxu0 %v93
    %v247 = vpop.f32.mrb[0].mxu0
    %v248 = vadd.f32 0.0, %v247
    %v249 = vpop.f32.mrb[0].mxu0
    %250 = vmatprep.mubr.f32.mxu0 0.0
    %251 = vmatmul.mubr.f32.gmra.mrb[0].mxu0 %v94
    %v252 = vpop.f32.mrb[0].mxu0
    %v253 = vadd.f32 0.0, %v252
    %v254 = vpop.f32.mrb[0].mxu0
    %255 = vmatprep.mubr.f32.mxu0 0.0
    %256 = vmatmul.mubr.f32.gmra.mrb[0].mxu0 %v95
    %v257 = vpop.f32.mrb[0].mxu0
    %v258 = vadd.f32 0.0, %v257
    %v259 = vpop.f32.mrb[0].mxu0
    %260 = vmatprep.mubr.f32.mxu0 0.0
    %261 = vmatmul.mubr.f32.gmra.mrb[0].mxu0 %v96
    %v262 = vpop.f32.mrb[0].mxu0
    %v263 = vadd.f32 0.0, %v262
    %v264 = vpop.f32.mrb[0].mxu0
    %265 = vmatprep.mubr.f32.mxu0 0.0
    %266 = vmatmul.mubr.f32.gmra.mrb[0].mxu0 %v97
    %v267 = vpop.f32.mrb[0].mxu0
    %v268 = vadd.f32 0.0, %v267
    %v269 = vpop.f32.mrb[0].mxu0
    %270 = vmatprep.mubr.f32.mxu0 0.0
    %271 = vmatmul.mubr.f32.gmra.mrb[0].mxu0 %v98
    %v272 = vpop.f32.mrb[0].mxu0
    %v273 = vadd.f32 0.0, %v272
    %v274 = vpop.f32.mrb[0].mxu0
    %275 = vmatprep.mubr.f32.mxu0 0.0
    %276 = vmatmul.mubr.f32.gmra.mrb[0].mxu0 %v99
    %v277 = vpop.f32.mrb[0].mxu0
    %v278 = vadd.f32 0.0, %v277
    %v279 = vpop.f32.mrb[0].mxu0
    %280 = vmatprep.mubr.f32.mxu0 0.0
    %281 = vmatmul.mubr.f32.gmra.mrb[0].mxu0 %v100
    %v282 = vpop.f32.mrb[0].mxu0
    %v283 = vadd.f32 0.0, %v282
    %v284 = vpop.f32.mrb[0].mxu0
    %285 = vmatprep.mubr.f32.mxu0 0.0
    %286 = vmatmul.mubr.f32.gmra.mrb[0].mxu0 %v101
    %v287 = vpop.f32.mrb[0].mxu0
    %v288 = vadd.f32 0.0, %v287
    %v289 = vpop.f32.mrb[0].mxu0
    %290 = vmatprep.mubr.f32.mxu0 0.0
    %291 = vmatmul.mubr.f32.gmra.mrb[0].mxu0 %v102
    %v292 = vpop.f32.mrb[0].mxu0
    %v293 = vadd.f32 0.0, %v292
    %v294 = vpop.f32.mrb[0].mxu0
    %295 = vmatprep.mubr.f32.mxu0 0.0
    %296 = vmatmul.mubr.f32.gmra.mrb[0].mxu0 %v103
    %v297 = vpop.f32.mrb[0].mxu0
    %v298 = vadd.f32 0.0, %v297
    %v299 = vpop.f32.mrb[0].mxu0
    %300 = vmatprep.mubr.f32.mxu0 0.0
    %301 = vmatmul.mubr.f32.gmra.mrb[0].mxu0 %v104
    %v302 = vpop.f32.mrb[0].mxu0
    %v303 = vadd.f32 0.0, %v302
    %v304 = vpop.f32.mrb[0].mxu0
    %305 = vmatprep.mubr.f32.mxu0 0.0
    %306 = vmatmul.mubr.f32.gmra.mrb[0].mxu0 %v105
    %v307 = vpop.f32.mrb[0].mxu0
    %v308 = vadd.f32 0.0, %v307
    %v309 = vpop.f32.mrb[0].mxu0
    %310 = vmatprep.mubr.f32.mxu0 0.0
    %311 = vmatmul.mubr.f32.gmra.mrb[0].mxu0 %v106
    %v312 = vpop.f32.mrb[0].mxu0
    %v313 = vadd.f32 0.0, %v312
    %v314 = vpop.f32.mrb[0].mxu0
    %315 = vmatprep.mubr.f32.mxu0 0.0
    %316 = vmatmul.mubr.f32.gmra.mrb[0].mxu0 %v107
    %v317 = vpop.f32.mrb[0].mxu0
    %v318 = vadd.f32 0.0, %v317
    %v319 = vpop.f32.mrb[0].mxu0
    %320 = vmatprep.mubr.f32.mxu0 0.0
    %321 = vmatmul.mubr.f32.gmra.mrb[0].mxu0 %v108
    %v322 = vpop.f32.mrb[0].mxu0
    %v323 = vadd.f32 0.0, %v322
    %v324 = vpop.f32.mrb[0].mxu0
    %325 = vmatprep.mubr.f32.mxu0 0.0
    %326 = vmatmul.mubr.f32.gmra.mrb[0].mxu0 %v109
    %v327 = vpop.f32.mrb[0].mxu0
    %v328 = vadd.f32 0.0, %v327
    %v329 = vpop.f32.mrb[0].mxu0
    %330 = vmatprep.mubr.f32.mxu0 0.0
    %331 = vmatmul.mubr.f32.gmra.mrb[0].mxu0 %v110
    %v332 = vpop.f32.mrb[0].mxu0
    %v333 = vadd.f32 0.0, %v332
    %v334 = vpop.f32.mrb[0].mxu0
    %335 = vmatprep.mubr.f32.mxu0 0.0
    %336 = vmatmul.mubr.f32.gmra.mrb[0].mxu0 %v111
    %v337 = vpop.f32.mrb[0].mxu0
    %v338 = vadd.f32 0.0, %v337
    %v339 = vpop.f32.mrb[0].mxu0
    %340 = vmatprep.mubr.f32.mxu0 0.0
    %341 = vmatmul.mubr.f32.gmra.mrb[0].mxu0 %v112
    %v342 = vpop.f32.mrb[0].mxu0
    %v343 = vadd.f32 0.0, %v342
    %v344 = vpop.f32.mrb[0].mxu0
    %345 = vmatprep.mubr.f32.mxu0 0.0
    %346 = vmatmul.mubr.f32.gmra.mrb[0].mxu0 %v113
    %v347 = vpop.f32.mrb[0].mxu0
    %v348 = vadd.f32 0.0, %v347
    %v349 = vpop.f32.mrb[0].mxu0
    %350 = vmatprep.mubr.f32.mxu0 0.0
    %351 = vmatmul.mubr.f32.gmra.mrb[0].mxu0 %v114
    %v352 = vpop.f32.mrb[0].mxu0
    %v353 = vadd.f32 0.0, %v352
    %v354 = vpop.f32.mrb[0].mxu0
    %355 = vmatprep.mubr.f32.mxu0 0.0
    %356 = vmatmul.mubr.f32.gmra.mrb[0].mxu0 %v115
    %v357 = vpop.f32.mrb[0].mxu0
    %v358 = vadd.f32 0.0, %v357
    %v359 = vpop.f32.mrb[0].mxu0
    %360 = vmatprep.mubr.f32.mxu0 0.0
    %361 = vmatmul.mubr.f32.gmra.mrb[0].mxu0 %v116
    %v362 = vpop.f32.mrb[0].mxu0
    %v363 = vadd.f32 0.0, %v362
    %v364 = vpop.f32.mrb[0].mxu0
    %365 = vmatprep.mubr.f32.mxu0 0.0
    %366 = vmatmul.mubr.f32.gmra.mrb[0].mxu0 %v117
    %v367 = vpop.f32.mrb[0].mxu0
    %v368 = vadd.f32 0.0, %v367
    %v369 = vpop.f32.mrb[0].mxu0
    %370 = vmatprep.mubr.f32.mxu0 0.0
    %371 = vmatmul.mubr.f32.gmra.mrb[0].mxu0 %v118
    %v372 = vpop.f32.mrb[0].mxu0
    %v373 = vadd.f32 0.0, %v372
    %v374 = vpop.f32.mrb[0].mxu0
    %375 = vmatprep.mubr.f32.mxu0 0.0
    %376 = vmatmul.mubr.f32.gmra.mrb[0].mxu0 %v119
    %v377 = vpop.f32.mrb[0].mxu0
    %v378 = vadd.f32 0.0, %v377
    %v379 = vpop.f32.mrb[0].mxu0
    %380 = vmatprep.mubr.f32.mxu0 0.0
    %381 = vmatmul.mubr.f32.gmra.mrb[0].mxu0 %v120
    %v382 = vpop.f32.mrb[0].mxu0
    %v383 = vadd.f32 0.0, %v382
    %v384 = vpop.f32.mrb[0].mxu0
    %385 = vmatprep.mubr.f32.mxu0 0.0
    %386 = vmatmul.mubr.f32.gmra.mrb[0].mxu0 %v121
    %v387 = vpop.f32.mrb[0].mxu0
    %v388 = vadd.f32 0.0, %v387
    %v389 = vpop.f32.mrb[0].mxu0
    %390 = vmatprep.mubr.f32.mxu0 0.0
    %391 = vmatmul.mubr.f32.gmra.mrb[0].mxu0 %v122
    %v392 = vpop.f32.mrb[0].mxu0
    %v393 = vadd.f32 0.0, %v392
    %v394 = vpop.f32.mrb[0].mxu0
    %395 = vmatprep.mubr.f32.mxu0 0.0
    %396 = vmatmul.mubr.f32.gmra.mrb[0].mxu0 %v123
    %v397 = vpop.f32.mrb[0].mxu0
    %v398 = vadd.f32 0.0, %v397
    %v399 = vpop.f32.mrb[0].mxu0
    %400 = vmatprep.mubr.f32.mxu0 0.0
    %401 = vmatmul.mubr.f32.gmra.mrb[0].mxu0 %v124
    %v402 = vpop.f32.mrb[0].mxu0
    %v403 = vadd.f32 0.0, %v402
    %v404 = vpop.f32.mrb[0].mxu0
    %405 = vmatprep.mubr.f32.mxu0 0.0
    %406 = vmatmul.mubr.f32.gmra.mrb[0].mxu0 %v125
    %v407 = vpop.f32.mrb[0].mxu0
    %v408 = vadd.f32 0.0, %v407
    %v409 = vpop.f32.mrb[0].mxu0
    %410 = vmatprep.mubr.f32.mxu0 0.0
    %411 = vmatmul.mubr.f32.gmra.mrb[0].mxu0 %v126
    %v412 = vpop.f32.mrb[0].mxu0
    %v413 = vadd.f32 0.0, %v412
    %v414 = vpop.f32.mrb[0].mxu0
    %415 = vmatprep.mubr.f32.mxu0 0.0
    %416 = vmatmul.mubr.f32.gmra.mrb[0].mxu0 %v127
    %v417 = vpop.f32.mrb[0].mxu0
    %v418 = vadd.f32 0.0, %v417
    %v419 = vpop.f32.mrb[0].mxu0
    %420 = vmatprep.mubr.f32.mxu0 0.0
    %421 = vmatmul.mubr.f32.gmra.mrb[0].mxu0 %v128
    %v422 = vpop.f32.mrb[0].mxu0
    %v423 = vadd.f32 0.0, %v422
    %v424 = vpop.f32.mrb[0].mxu0
    %425 = vmatprep.mubr.f32.mxu0 0.0
    %426 = vmatmul.mubr.f32.gmra.mrb[0].mxu0 %v129
    %v427 = vpop.f32.mrb[0].mxu0
    %v428 = vadd.f32 0.0, %v427
    %v429 = vpop.f32.mrb[0].mxu0
    %430 = vmatprep.mubr.f32.mxu0 0.0
    %431 = vmatmul.mubr.f32.gmra.mrb[0].mxu0 %v130
    %v432 = vpop.f32.mrb[0].mxu0
    %v433 = vadd.f32 0.0, %v432
    %v434 = vpop.f32.mrb[0].mxu0
    %435 = vmatprep.mubr.f32.mxu0 0.0
    %436 = vmatmul.mubr.f32.gmra.mrb[0].mxu0 %v131
    %v437 = vpop.f32.mrb[0].mxu0
    %v438 = vadd.f32 0.0, %v437
    %v439 = vpop.f32.mrb[0].mxu0
    %440 = vmatprep.mubr.f32.mxu0 0.0
    %441 = vmatmul.mubr.f32.gmra.mrb[0].mxu0 %v132
    %v442 = vpop.f32.mrb[0].mxu0
    %v443 = vadd.f32 0.0, %v442
    %v444 = vpop.f32.mrb[0].mxu0
    %445 = vmatprep.mubr.f32.mxu0 0.0
    %446 = vmatmul.mubr.f32.gmra.mrb[0].mxu0 %v133
    %v447 = vpop.f32.mrb[0].mxu0
    %v448 = vadd.f32 0.0, %v447
    %v449 = vpop.f32.mrb[0].mxu0
    %450 = vmatprep.mubr.f32.mxu0 0.0
    %451 = vmatmul.mubr.f32.gmra.mrb[0].mxu0 %v134
    %v452 = vpop.f32.mrb[0].mxu0
    %v453 = vadd.f32 0.0, %v452
    %v454 = vpop.f32.mrb[0].mxu0
    %455 = vmatprep.mubr.f32.mxu0 0.0
    %456 = vmatmul.mubr.f32.gmra.mrb[0].mxu0 %v135
    %v457 = vpop.f32.mrb[0].mxu0
    %v458 = vadd.f32 0.0, %v457
    %v459 = vpop.f32.mrb[0].mxu0
    %460 = vmatprep.mubr.f32.mxu0 0.0
    %461 = vmatmul.mubr.f32.gmra.mrb[0].mxu0 %v136
    %v462 = vpop.f32.mrb[0].mxu0
    %v463 = vadd.f32 0.0, %v462
    %v464 = vpop.f32.mrb[0].mxu0
    %465 = vmatprep.mubr.f32.mxu0 0.0
    %466 = vmatmul.mubr.f32.gmra.mrb[0].mxu0 %v137
    %v467 = vpop.f32.mrb[0].mxu0
    %v468 = vadd.f32 0.0, %v467
    %v469 = vpop.f32.mrb[0].mxu0
    %470 = vmatprep.mubr.f32.mxu0 0.0
    %471 = vmatmul.mubr.f32.gmra.mrb[0].mxu0 %v138
    %v472 = vpop.f32.mrb[0].mxu0
    %v473 = vadd.f32 0.0, %v472
    %v474 = vpop.f32.mrb[0].mxu0
    %475 = vmatprep.mubr.f32.mxu0 0.0
    %476 = vmatmul.mubr.f32.gmra.mrb[0].mxu0 %v139
    %v477 = vpop.f32.mrb[0].mxu0
    %v478 = vadd.f32 0.0, %v477
    %v479 = vpop.f32.mrb[0].mxu0
    %480 = vmatprep.mubr.f32.mxu0 0.0
    %481 = vmatmul.mubr.f32.gmra.mrb[0].mxu0 %v140
    %v482 = vpop.f32.mrb[0].mxu0
    %v483 = vadd.f32 0.0, %v482
    %v484 = vpop.f32.mrb[0].mxu0
    %485 = vmatprep.mubr.f32.mxu0 0.0
    %486 = vmatmul.mubr.f32.gmra.mrb[0].mxu0 %v141
    %v487 = vpop.f32.mrb[0].mxu0
    %v488 = vadd.f32 0.0, %v487
    %v489 = vpop.f32.mrb[0].mxu0
    %490 = vmatprep.mubr.f32.mxu0 0.0
    %491 = vmatmul.mubr.f32.gmra.mrb[0].mxu0 %v142
    %v492 = vpop.f32.mrb[0].mxu0
    %v493 = vadd.f32 0.0, %v492
    %v494 = vpop.f32.mrb[0].mxu0
    %495 = vmatprep.mubr.f32.mxu0 0.0
    %496 = vmatmul.mubr.f32.gmra.mrb[0].mxu0 %v143
    %v497 = vpop.f32.mrb[0].mxu0
    %v498 = vadd.f32 0.0, %v497
    %v499 = vpop.f32.mrb[0].mxu0
    %500 = vmatprep.mubr.f32.mxu0 0.0
    %501 = vmatmul.mubr.f32.gmra.mrb[0].mxu0 %v144
    %v502 = vpop.f32.mrb[0].mxu0
    %v503 = vadd.f32 0.0, %v502
    %v504 = vpop.f32.mrb[0].mxu0
    %505 = vmatprep.mubr.f32.mxu0 0.0
    %506 = vmatmul.mubr.f32.gmra.mrb[0].mxu0 %v145
    %v507 = vpop.f32.mrb[0].mxu0
    %v508 = vadd.f32 0.0, %v507
    %v509 = vpop.f32.mrb[0].mxu0
    %510 = vmatprep.mubr.f32.mxu0 0.0
    %511 = vmatmul.mubr.f32.gmra.mrb[0].mxu0 %v146
    %v512 = vpop.f32.mrb[0].mxu0
    %v513 = vadd.f32 0.0, %v512
    %v514 = vpop.f32.mrb[0].mxu0
    %515 = vmatprep.mubr.f32.mxu0 0.0
    %516 = vmatmul.mubr.f32.gmra.mrb[0].mxu0 %v147
    %v517 = vpop.f32.mrb[0].mxu0
    %v518 = vadd.f32 0.0, %v517
    %v519 = vpop.f32.mrb[0].mxu0
    %520 = vmatprep.mubr.f32.mxu0 0.0
    %521 = vmatmul.mubr.f32.gmra.mrb[0].mxu0 %v148
    %v522 = vpop.f32.mrb[0].mxu0
    %v523 = vadd.f32 0.0, %v522
    %v524 = vpop.f32.mrb[0].mxu0
    %525 = vmatprep.mubr.f32.mxu0 0.0
    %526 = vmatmul.mubr.f32.gmra.mrb[0].mxu0 %v149
    %v527 = vpop.f32.mrb[0].mxu0
    %v528 = vadd.f32 0.0, %v527
    %v529 = vpop.f32.mrb[0].mxu0
    %530 = vmatprep.mubr.f32.mxu0 0.0
    %531 = vmatmul.mubr.f32.gmra.mrb[0].mxu0 %v150
    %v532 = vpop.f32.mrb[0].mxu0
    %v533 = vadd.f32 0.0, %v532
    %v534 = vpop.f32.mrb[0].mxu0
    %535 = vmatprep.mubr.f32.mxu0 0.0
    %536 = vmatmul.mubr.f32.gmra.mrb[0].mxu0 %v151
    %v537 = vpop.f32.mrb[0].mxu0
    %v538 = vadd.f32 0.0, %v537
    %v539 = vpop.f32.mrb[0].mxu0
    %540 = vmatprep.mubr.f32.mxu0 0.0
    %541 = vmatmul.mubr.f32.gmra.mrb[0].mxu0 %v152
    %v542 = vpop.f32.mrb[0].mxu0
    %v543 = vadd.f32 0.0, %v542
    %v544 = vpop.f32.mrb[0].mxu0
    %545 = vmatprep.mubr.f32.mxu0 0.0
    %546 = vmatmul.mubr.f32.gmra.mrb[0].mxu0 %v153
    %v547 = vpop.f32.mrb[0].mxu0
    %v548 = vadd.f32 0.0, %v547
    %v549 = vpop.f32.mrb[0].mxu0
    %550 = vmatprep.mubr.f32.mxu0 0.0
    %551 = vmatmul.mubr.f32.gmra.mrb[0].mxu0 %v154
    %v552 = vpop.f32.mrb[0].mxu0
    %v553 = vadd.f32 0.0, %v552
    %v554 = vpop.f32.mrb[0].mxu0
    %555 = vdwg.mxu0
    %v556 = vld [vmem:[%s2] sm:$0x1]
    %v558 = vlaneseq
    %v559 = vshrl.u32 %v558, 7
    %v560 = vsub.s32 0, %v559
    %v561 = vrot.slane %v556, %v560
    %v563 = vmul.f32 %v238, %v561
    %v564 = vmul.f32 %v243, %v561
    %v565 = vmul.f32 %v248, %v561
    %v566 = vmul.f32 %v253, %v561
    %v567 = vmul.f32 %v258, %v561
    %v568 = vmul.f32 %v263, %v561
    %v569 = vmul.f32 %v268, %v561
    %v570 = vmul.f32 %v273, %v561
    %v571 = vmul.f32 %v278, %v561
    %v572 = vmul.f32 %v283, %v561
    %v573 = vmul.f32 %v288, %v561
    %v574 = vmul.f32 %v293, %v561
    %v575 = vmul.f32 %v298, %v561
    %v576 = vmul.f32 %v303, %v561
    %v577 = vmul.f32 %v308, %v561
    %v578 = vmul.f32 %v313, %v561
    %v579 = vmul.f32 %v318, %v561
    %v580 = vmul.f32 %v323, %v561
    %v581 = vmul.f32 %v328, %v561
    %v582 = vmul.f32 %v333, %v561
    %v583 = vmul.f32 %v338, %v561
    %v584 = vmul.f32 %v343, %v561
    %v585 = vmul.f32 %v348, %v561
    %v586 = vmul.f32 %v353, %v561
    %v587 = vmul.f32 %v358, %v561
    %v588 = vmul.f32 %v363, %v561
    %v589 = vmul.f32 %v368, %v561
    %v590 = vmul.f32 %v373, %v561
    %v591 = vmul.f32 %v378, %v561
    %v592 = vmul.f32 %v383, %v561
    %v593 = vmul.f32 %v388, %v561
    %v594 = vmul.f32 %v393, %v561
    %v595 = vmul.f32 %v398, %v561
    %v596 = vmul.f32 %v403, %v561
    %v597 = vmul.f32 %v408, %v561
    %v598 = vmul.f32 %v413, %v561
    %v599 = vmul.f32 %v418, %v561
    %v600 = vmul.f32 %v423, %v561
    %v601 = vmul.f32 %v428, %v561
    %v602 = vmul.f32 %v433, %v561
    %v603 = vmul.f32 %v438, %v561
    %v604 = vmul.f32 %v443, %v561
    %v605 = vmul.f32 %v448, %v561
    %v606 = vmul.f32 %v453, %v561
    %v607 = vmul.f32 %v458, %v561
    %v608 = vmul.f32 %v463, %v561
    %v609 = vmul.f32 %v468, %v561
    %v610 = vmul.f32 %v473, %v561
    %v611 = vmul.f32 %v478, %v561
    %v612 = vmul.f32 %v483, %v561
    %v613 = vmul.f32 %v488, %v561
    %v614 = vmul.f32 %v493, %v561
    %v615 = vmul.f32 %v498, %v561
    %v616 = vmul.f32 %v503, %v561
    %v617 = vmul.f32 %v508, %v561
    %v618 = vmul.f32 %v513, %v561
    %v619 = vmul.f32 %v518, %v561
    %v620 = vmul.f32 %v523, %v561
    %v621 = vmul.f32 %v528, %v561
    %v622 = vmul.f32 %v533, %v561
    %v623 = vmul.f32 %v538, %v561
    %v624 = vmul.f32 %v543, %v561
    %v625 = vmul.f32 %v548, %v561
    %v626 = vmul.f32 %v553, %v561
    %v627 = vld [vmem:[%s3] sm:$0x1]
    %v629 = vlaneseq
    %v630 = vshrl.u32 %v629, 7
    %v631 = vsub.s32 0, %v630
    %v632 = vrot.slane %v627, %v631
    %v634 = vadd.f32 %v563, %v632
    %v635 = vadd.f32 %v564, %v632
    %v636 = vadd.f32 %v565, %v632
    %v637 = vadd.f32 %v566, %v632
    %v638 = vadd.f32 %v567, %v632
    %v639 = vadd.f32 %v568, %v632
    %v640 = vadd.f32 %v569, %v632
    %v641 = vadd.f32 %v570, %v632
    %v642 = vadd.f32 %v571, %v632
    %v643 = vadd.f32 %v572, %v632
    %v644 = vadd.f32 %v573, %v632
    %v645 = vadd.f32 %v574, %v632
    %v646 = vadd.f32 %v575, %v632
    %v647 = vadd.f32 %v576, %v632
    %v648 = vadd.f32 %v577, %v632
    %v649 = vadd.f32 %v578, %v632
    %v650 = vadd.f32 %v579, %v632
    %v651 = vadd.f32 %v580, %v632
    %v652 = vadd.f32 %v581, %v632
    %v653 = vadd.f32 %v582, %v632
    %v654 = vadd.f32 %v583, %v632
    %v655 = vadd.f32 %v584, %v632
    %v656 = vadd.f32 %v585, %v632
    %v657 = vadd.f32 %v586, %v632
    %v658 = vadd.f32 %v587, %v632
    %v659 = vadd.f32 %v588, %v632
    %v660 = vadd.f32 %v589, %v632
    %v661 = vadd.f32 %v590, %v632
    %v662 = vadd.f32 %v591, %v632
    %v663 = vadd.f32 %v592, %v632
    %v664 = vadd.f32 %v593, %v632
    %v665 = vadd.f32 %v594, %v632
    %v666 = vadd.f32 %v595, %v632
    %v667 = vadd.f32 %v596, %v632
    %v668 = vadd.f32 %v597, %v632
    %v669 = vadd.f32 %v598, %v632
    %v670 = vadd.f32 %v599, %v632
    %v671 = vadd.f32 %v600, %v632
    %v672 = vadd.f32 %v601, %v632
    %v673 = vadd.f32 %v602, %v632
    %v674 = vadd.f32 %v603, %v632
    %v675 = vadd.f32 %v604, %v632
    %v676 = vadd.f32 %v605, %v632
    %v677 = vadd.f32 %v606, %v632
    %v678 = vadd.f32 %v607, %v632
    %v679 = vadd.f32 %v608, %v632
    %v680 = vadd.f32 %v609, %v632
    %v681 = vadd.f32 %v610, %v632
    %v682 = vadd.f32 %v611, %v632
    %v683 = vadd.f32 %v612, %v632
    %v684 = vadd.f32 %v613, %v632
    %v685 = vadd.f32 %v614, %v632
    %v686 = vadd.f32 %v615, %v632
    %v687 = vadd.f32 %v616, %v632
    %v688 = vadd.f32 %v617, %v632
    %v689 = vadd.f32 %v618, %v632
    %v690 = vadd.f32 %v619, %v632
    %v691 = vadd.f32 %v620, %v632
    %v692 = vadd.f32 %v621, %v632
    %v693 = vadd.f32 %v622, %v632
    %v694 = vadd.f32 %v623, %v632
    %v695 = vadd.f32 %v624, %v632
    %v696 = vadd.f32 %v625, %v632
    %v697 = vadd.f32 %v626, %v632
    %v698 = vmax.f32 %v634, 0.0
    %v699 = vmax.f32 %v635, 0.0
    %v700 = vmax.f32 %v636, 0.0
    %v701 = vmax.f32 %v637, 0.0
    %v702 = vmax.f32 %v638, 0.0
    %v703 = vmax.f32 %v639, 0.0
    %v704 = vmax.f32 %v640, 0.0
    %v705 = vmax.f32 %v641, 0.0
    %v706 = vmax.f32 %v642, 0.0
    %v707 = vmax.f32 %v643, 0.0
    %v708 = vmax.f32 %v644, 0.0
    %v709 = vmax.f32 %v645, 0.0
    %v710 = vmax.f32 %v646, 0.0
    %v711 = vmax.f32 %v647, 0.0
    %v712 = vmax.f32 %v648, 0.0
    %v713 = vmax.f32 %v649, 0.0
    %v714 = vmax.f32 %v650, 0.0
    %v715 = vmax.f32 %v651, 0.0
    %v716 = vmax.f32 %v652, 0.0
    %v717 = vmax.f32 %v653, 0.0
    %v718 = vmax.f32 %v654, 0.0
    %v719 = vmax.f32 %v655, 0.0
    %v720 = vmax.f32 %v656, 0.0
    %v721 = vmax.f32 %v657, 0.0
    %v722 = vmax.f32 %v658, 0.0
    %v723 = vmax.f32 %v659, 0.0
    %v724 = vmax.f32 %v660, 0.0
    %v725 = vmax.f32 %v661, 0.0
    %v726 = vmax.f32 %v662, 0.0
    %v727 = vmax.f32 %v663, 0.0
    %v728 = vmax.f32 %v664, 0.0
    %v729 = vmax.f32 %v665, 0.0
    %v730 = vmax.f32 %v666, 0.0
    %v731 = vmax.f32 %v667, 0.0
    %v732 = vmax.f32 %v668, 0.0
    %v733 = vmax.f32 %v669, 0.0
    %v734 = vmax.f32 %v670, 0.0
    %v735 = vmax.f32 %v671, 0.0
    %v736 = vmax.f32 %v672, 0.0
    %v737 = vmax.f32 %v673, 0.0
    %v738 = vmax.f32 %v674, 0.0
    %v739 = vmax.f32 %v675, 0.0
    %v740 = vmax.f32 %v676, 0.0
    %v741 = vmax.f32 %v677, 0.0
    %v742 = vmax.f32 %v678, 0.0
    %v743 = vmax.f32 %v679, 0.0
    %v744 = vmax.f32 %v680, 0.0
    %v745 = vmax.f32 %v681, 0.0
    %v746 = vmax.f32 %v682, 0.0
    %v747 = vmax.f32 %v683, 0.0
    %v748 = vmax.f32 %v684, 0.0
    %v749 = vmax.f32 %v685, 0.0
    %v750 = vmax.f32 %v686, 0.0
    %v751 = vmax.f32 %v687, 0.0
    %v752 = vmax.f32 %v688, 0.0
    %v753 = vmax.f32 %v689, 0.0
    %v754 = vmax.f32 %v690, 0.0
    %v755 = vmax.f32 %v691, 0.0
    %v756 = vmax.f32 %v692, 0.0
    %v757 = vmax.f32 %v693, 0.0
    %v758 = vmax.f32 %v694, 0.0
    %v759 = vmax.f32 %v695, 0.0
    %v760 = vmax.f32 %v696, 0.0
    %v761 = vmax.f32 %v697, 0.0
    %s762 = scalar_lea.vmem [#allocation2], 16
    %763 = vst [vmem:[%s762] sm:$0xff] %v698
    %764 = vst [vmem:[%s762 + $0x8] sm:$0xff] %v699
    %765 = vst [vmem:[%s762 + $0x10] sm:$0xff] %v700
    %766 = vst [vmem:[%s762 + $0x18] sm:$0xff] %v701
    %767 = vst [vmem:[%s762 + $0x20] sm:$0xff] %v702
    %768 = vst [vmem:[%s762 + $0x28] sm:$0xff] %v703
    %769 = vst [vmem:[%s762 + $0x30] sm:$0xff] %v704
    %770 = vst [vmem:[%s762 + $0x38] sm:$0xff] %v705
    %771 = vst [vmem:[%s762 + $0x40] sm:$0xff] %v706
    %772 = vst [vmem:[%s762 + $0x48] sm:$0xff] %v707
    %773 = vst [vmem:[%s762 + $0x50] sm:$0xff] %v708
    %774 = vst [vmem:[%s762 + $0x58] sm:$0xff] %v709
    %775 = vst [vmem:[%s762 + $0x60] sm:$0xff] %v710
    %776 = vst [vmem:[%s762 + $0x68] sm:$0xff] %v711
    %777 = vst [vmem:[%s762 + $0x70] sm:$0xff] %v712
    %778 = vst [vmem:[%s762 + $0x78] sm:$0xff] %v713
    %779 = vst [vmem:[%s762 + $0x80] sm:$0xff] %v714
    %780 = vst [vmem:[%s762 + $0x88] sm:$0xff] %v715
    %781 = vst [vmem:[%s762 + $0x90] sm:$0xff] %v716
    %782 = vst [vmem:[%s762 + $0x98] sm:$0xff] %v717
    %783 = vst [vmem:[%s762 + $0xa0] sm:$0xff] %v718
    %784 = vst [vmem:[%s762 + $0xa8] sm:$0xff] %v719
    %785 = vst [vmem:[%s762 + $0xb0] sm:$0xff] %v720
    %786 = vst [vmem:[%s762 + $0xb8] sm:$0xff] %v721
    %787 = vst [vmem:[%s762 + $0xc0] sm:$0xff] %v722
    %788 = vst [vmem:[%s762 + $0xc8] sm:$0xff] %v723
    %789 = vst [vmem:[%s762 + $0xd0] sm:$0xff] %v724
    %790 = vst [vmem:[%s762 + $0xd8] sm:$0xff] %v725
    %791 = vst [vmem:[%s762 + $0xe0] sm:$0xff] %v726
    %792 = vst [vmem:[%s762 + $0xe8] sm:$0xff] %v727
    %793 = vst [vmem:[%s762 + $0xf0] sm:$0xff] %v728
    %794 = vst [vmem:[%s762 + $0xf8] sm:$0xff] %v729
    %795 = vst [vmem:[%s762 + $0x120] sm:$0xff] %v730
    %796 = vst [vmem:[%s762 + $0x128] sm:$0xff] %v731
    %797 = vst [vmem:[%s762 + $0x130] sm:$0xff] %v732
    %798 = vst [vmem:[%s762 + $0x138] sm:$0xff] %v733
    %799 = vst [vmem:[%s762 + $0x140] sm:$0xff] %v734
    %800 = vst [vmem:[%s762 + $0x148] sm:$0xff] %v735
    %801 = vst [vmem:[%s762 + $0x150] sm:$0xff] %v736
    %802 = vst [vmem:[%s762 + $0x158] sm:$0xff] %v737
    %803 = vst [vmem:[%s762 + $0x160] sm:$0xff] %v738
    %804 = vst [vmem:[%s762 + $0x168] sm:$0xff] %v739
    %805 = vst [vmem:[%s762 + $0x170] sm:$0xff] %v740
    %806 = vst [vmem:[%s762 + $0x178] sm:$0xff] %v741
    %807 = vst [vmem:[%s762 + $0x180] sm:$0xff] %v742
    %808 = vst [vmem:[%s762 + $0x188] sm:$0xff] %v743
    %809 = vst [vmem:[%s762 + $0x190] sm:$0xff] %v744
    %810 = vst [vmem:[%s762 + $0x198] sm:$0xff] %v745
    %811 = vst [vmem:[%s762 + $0x1a0] sm:$0xff] %v746
    %812 = vst [vmem:[%s762 + $0x1a8] sm:$0xff] %v747
    %813 = vst [vmem:[%s762 + $0x1b0] sm:$0xff] %v748
    %814 = vst [vmem:[%s762 + $0x1b8] sm:$0xff] %v749
    %815 = vst [vmem:[%s762 + $0x1c0] sm:$0xff] %v750
    %816 = vst [vmem:[%s762 + $0x1c8] sm:$0xff] %v751
    %817 = vst [vmem:[%s762 + $0x1d0] sm:$0xff] %v752
    %818 = vst [vmem:[%s762 + $0x1d8] sm:$0xff] %v753
    %819 = vst [vmem:[%s762 + $0x1e0] sm:$0xff] %v754
    %820 = vst [vmem:[%s762 + $0x1e8] sm:$0xff] %v755
    %821 = vst [vmem:[%s762 + $0x1f0] sm:$0xff] %v756
    %822 = vst [vmem:[%s762 + $0x1f8] sm:$0xff] %v757
    %823 = vst [vmem:[%s762 + $0x200] sm:$0xff] %v758
    %824 = vst [vmem:[%s762 + $0x208] sm:$0xff] %v759
    %825 = vst [vmem:[%s762 + $0x210] sm:$0xff] %v760
    %826 = vst [vmem:[%s762 + $0x218] sm:$0xff] %v761
    %827 = vst [vmem:[#allocation2] sm:$0xff] 0.0
    %828 = vst [vmem:[#allocation2 + $0x8] sm:$0xff] 0.0
    %829 = vst [vmem:[#allocation2 + $0x120] sm:$0xff] 0.0
    %830 = vst [vmem:[#allocation2 + $0x128] sm:$0xff] 0.0
    %s831 = scalar_lea.vmem [#allocation2], 272
    %832 = vst [vmem:[%s831] sm:$0xff] 0.0
    %833 = vst [vmem:[%s831 + $0x8] sm:$0xff] 0.0
    %834 = vst [vmem:[%s831 + $0x120] sm:$0xff] 0.0
    %835 = vst [vmem:[%s831 + $0x128] sm:$0xff] 0.0
    %v836 = vld [vmem:[#allocation2] sm:$0xff]
    %v837 = vld [vmem:[#allocation2 + $0x8] sm:$0xff]
    %v838 = vld [vmem:[#allocation2 + $0x10] sm:$0xff]
    %v839 = vld [vmem:[#allocation2 + $0x18] sm:$0xff]
    %v840 = vld [vmem:[#allocation2 + $0x20] sm:$0xff]
    %v841 = vld [vmem:[#allocation2 + $0x28] sm:$0xff]
    %v842 = vld [vmem:[#allocation2 + $0x30] sm:$0xff]
    %v843 = vld [vmem:[#allocation2 + $0x38] sm:$0xff]
    %v844 = vld [vmem:[#allocation2 + $0x40] sm:$0xff]
    %v845 = vld [vmem:[#allocation2 + $0x48] sm:$0xff]
    %v846 = vld [vmem:[#allocation2 + $0x50] sm:$0xff]
    %v847 = vld [vmem:[#allocation2 + $0x58] sm:$0xff]
    %v848 = vld [vmem:[#allocation2 + $0x60] sm:$0xff]
    %v849 = vld [vmem:[#allocation2 + $0x68] sm:$0xff]
    %v850 = vld [vmem:[#allocation2 + $0x70] sm:$0xff]
    %v851 = vld [vmem:[#allocation2 + $0x78] sm:$0xff]
    %v852 = vld [vmem:[#allocation2 + $0x80] sm:$0xff]
    %v853 = vld [vmem:[#allocation2 + $0x88] sm:$0xff]
    %v854 = vld [vmem:[#allocation2 + $0x90] sm:$0xff]
    %v855 = vld [vmem:[#allocation2 + $0x98] sm:$0xff]
    %v856 = vld [vmem:[#allocation2 + $0xa0] sm:$0xff]
    %v857 = vld [vmem:[#allocation2 + $0xa8] sm:$0xff]
    %v858 = vld [vmem:[#allocation2 + $0xb0] sm:$0xff]
    %v859 = vld [vmem:[#allocation2 + $0xb8] sm:$0xff]
    %v860 = vld [vmem:[#allocation2 + $0xc0] sm:$0xff]
    %v861 = vld [vmem:[#allocation2 + $0xc8] sm:$0xff]
    %v862 = vld [vmem:[#allocation2 + $0xd0] sm:$0xff]
    %v863 = vld [vmem:[#allocation2 + $0xd8] sm:$0xff]
    %v864 = vld [vmem:[#allocation2 + $0xe0] sm:$0xff]
    %v865 = vld [vmem:[#allocation2 + $0xe8] sm:$0xff]
    %v866 = vld [vmem:[#allocation2 + $0xf0] sm:$0xff]
    %v867 = vld [vmem:[#allocation2 + $0xf8] sm:$0xff]
    %v868 = vld [vmem:[#allocation2 + $0x100] sm:$0xff]
    %v869 = vld [vmem:[#allocation2 + $0x108] sm:$0xff]
    %v870 = vld [vmem:[#allocation2 + $0x110] sm:$0xff]
    %v871 = vld [vmem:[#allocation2 + $0x118] sm:$0xff]
    %v872 = vld [vmem:[#allocation2 + $0x120] sm:$0xff]
    %v873 = vld [vmem:[#allocation2 + $0x128] sm:$0xff]
    %v874 = vld [vmem:[#allocation2 + $0x130] sm:$0xff]
    %v875 = vld [vmem:[#allocation2 + $0x138] sm:$0xff]
    %v876 = vld [vmem:[#allocation2 + $0x140] sm:$0xff]
    %v877 = vld [vmem:[#allocation2 + $0x148] sm:$0xff]
    %v878 = vld [vmem:[#allocation2 + $0x150] sm:$0xff]
    %v879 = vld [vmem:[#allocation2 + $0x158] sm:$0xff]
    %v880 = vld [vmem:[#allocation2 + $0x160] sm:$0xff]
    %v881 = vld [vmem:[#allocation2 + $0x168] sm:$0xff]
    %v882 = vld [vmem:[#allocation2 + $0x170] sm:$0xff]
    %v883 = vld [vmem:[#allocation2 + $0x178] sm:$0xff]
    %v884 = vld [vmem:[#allocation2 + $0x180] sm:$0xff]
    %v885 = vld [vmem:[#allocation2 + $0x188] sm:$0xff]
    %v886 = vld [vmem:[#allocation2 + $0x190] sm:$0xff]
    %v887 = vld [vmem:[#allocation2 + $0x198] sm:$0xff]
    %v888 = vld [vmem:[#allocation2 + $0x1a0] sm:$0xff]
    %v889 = vld [vmem:[#allocation2 + $0x1a8] sm:$0xff]
    %v890 = vld [vmem:[#allocation2 + $0x1b0] sm:$0xff]
    %v891 = vld [vmem:[#allocation2 + $0x1b8] sm:$0xff]
    %v892 = vld [vmem:[#allocation2 + $0x1c0] sm:$0xff]
    %v893 = vld [vmem:[#allocation2 + $0x1c8] sm:$0xff]
    %v894 = vld [vmem:[#allocation2 + $0x1d0] sm:$0xff]
    %v895 = vld [vmem:[#allocation2 + $0x1d8] sm:$0xff]
    %v896 = vld [vmem:[#allocation2 + $0x1e0] sm:$0xff]
    %v897 = vld [vmem:[#allocation2 + $0x1e8] sm:$0xff]
    %v898 = vld [vmem:[#allocation2 + $0x1f0] sm:$0xff]
    %v899 = vld [vmem:[#allocation2 + $0x1f8] sm:$0xff]
    %v900 = vld [vmem:[#allocation2 + $0x200] sm:$0xff]
    %v901 = vld [vmem:[#allocation2 + $0x208] sm:$0xff]
    %v902 = vld [vmem:[#allocation2 + $0x210] sm:$0xff]
    %v903 = vld [vmem:[#allocation2 + $0x218] sm:$0xff]
    %v904 = vld [vmem:[#allocation2 + $0x220] sm:$0xff]
    %v905 = vld [vmem:[#allocation2 + $0x228] sm:$0xff]
    %v906 = vld [vmem:[#allocation2 + $0x230] sm:$0xff]
    %v907 = vld [vmem:[#allocation2 + $0x238] sm:$0xff]
    %v908 = vlaneseq
    %v909 = vshrl.u32 %v908, 7
    %v910 = vadd.s32 %v909, 8
    %v911 = vrot.slane %v836, 7
    %v912 = vrot.slane %v838, 7
    %v913 = vrot.slane %v840, 7
    %v914 = vrot.slane %v842, 7
    %v915 = vrot.slane %v844, 7
    %v916 = vrot.slane %v846, 7
    %v917 = vrot.slane %v848, 7
    %v918 = vrot.slane %v850, 7
    %v919 = vrot.slane %v852, 7
    %v920 = vrot.slane %v854, 7
    %v921 = vrot.slane %v856, 7
    %v922 = vrot.slane %v858, 7
    %v923 = vrot.slane %v860, 7
    %v924 = vrot.slane %v862, 7
    %v925 = vrot.slane %v864, 7
    %v926 = vrot.slane %v866, 7
    %v927 = vrot.slane %v868, 7
    %v928 = vrot.slane %v870, 7
    %v929 = vrot.slane %v872, 7
    %v930 = vrot.slane %v874, 7
    %v931 = vrot.slane %v876, 7
    %v932 = vrot.slane %v878, 7
    %v933 = vrot.slane %v880, 7
    %v934 = vrot.slane %v882, 7
    %v935 = vrot.slane %v884, 7
    %v936 = vrot.slane %v886, 7
    %v937 = vrot.slane %v888, 7
    %v938 = vrot.slane %v890, 7
    %v939 = vrot.slane %v892, 7
    %v940 = vrot.slane %v894, 7
    %v941 = vrot.slane %v896, 7
    %v942 = vrot.slane %v898, 7
    %v943 = vrot.slane %v900, 7
    %v944 = vrot.slane %v902, 7
    %v945 = vrot.slane %v904, 7
    %v946 = vrot.slane %v906, 7
    %v947 = vrot.slane %v837, 7
    %v948 = vrot.slane %v839, 7
    %v949 = vrot.slane %v841, 7
    %v950 = vrot.slane %v843, 7
    %v951 = vrot.slane %v845, 7
    %v952 = vrot.slane %v847, 7
    %v953 = vrot.slane %v849, 7
    %v954 = vrot.slane %v851, 7
    %v955 = vrot.slane %v853, 7
    %v956 = vrot.slane %v855, 7
    %v957 = vrot.slane %v857, 7
    %v958 = vrot.slane %v859, 7
    %v959 = vrot.slane %v861, 7
    %v960 = vrot.slane %v863, 7
    %v961 = vrot.slane %v865, 7
    %v962 = vrot.slane %v867, 7
    %v963 = vrot.slane %v869, 7
    %v964 = vrot.slane %v871, 7
    %v965 = vrot.slane %v873, 7
    %v966 = vrot.slane %v875, 7
    %v967 = vrot.slane %v877, 7
    %v968 = vrot.slane %v879, 7
    %v969 = vrot.slane %v881, 7
    %v970 = vrot.slane %v883, 7
    %v971 = vrot.slane %v885, 7
    %v972 = vrot.slane %v887, 7
    %v973 = vrot.slane %v889, 7
    %v974 = vrot.slane %v891, 7
    %v975 = vrot.slane %v893, 7
    %v976 = vrot.slane %v895, 7
    %v977 = vrot.slane %v897, 7
    %v978 = vrot.slane %v899, 7
    %v979 = vrot.slane %v901, 7
    %v980 = vrot.slane %v903, 7
    %v981 = vrot.slane %v905, 7
    %v982 = vrot.slane %v907, 7
    %vm983 = vcmp.lt.s32.totalorder %v909, 1
    %v984 = vsel %vm983, %v911, %v947
    %v985 = vsel %vm983, %v912, %v948
    %v986 = vsel %vm983, %v913, %v949
    %v987 = vsel %vm983, %v914, %v950
    %v988 = vsel %vm983, %v915, %v951
    %v989 = vsel %vm983, %v916, %v952
    %v990 = vsel %vm983, %v917, %v953
    %v991 = vsel %vm983, %v918, %v954
    %v992 = vsel %vm983, %v919, %v955
    %v993 = vsel %vm983, %v920, %v956
    %v994 = vsel %vm983, %v921, %v957
    %v995 = vsel %vm983, %v922, %v958
    %v996 = vsel %vm983, %v923, %v959
    %v997 = vsel %vm983, %v924, %v960
    %v998 = vsel %vm983, %v925, %v961
    %v999 = vsel %vm983, %v926, %v962
    %v1000 = vsel %vm983, %v927, %v963
    %v1001 = vsel %vm983, %v928, %v964
    %v1002 = vsel %vm983, %v929, %v965
    %v1003 = vsel %vm983, %v930, %v966
    %v1004 = vsel %vm983, %v931, %v967
    %v1005 = vsel %vm983, %v932, %v968
    %v1006 = vsel %vm983, %v933, %v969
    %v1007 = vsel %vm983, %v934, %v970
    %v1008 = vsel %vm983, %v935, %v971
    %v1009 = vsel %vm983, %v936, %v972
    %v1010 = vsel %vm983, %v937, %v973
    %v1011 = vsel %vm983, %v938, %v974
    %v1012 = vsel %vm983, %v939, %v975
    %v1013 = vsel %vm983, %v940, %v976
    %v1014 = vsel %vm983, %v941, %v977
    %v1015 = vsel %vm983, %v942, %v978
    %v1016 = vsel %vm983, %v943, %v979
    %v1017 = vsel %vm983, %v944, %v980
    %v1018 = vsel %vm983, %v945, %v981
    %v1019 = vsel %vm983, %v946, %v982
    %v1020 = vsel %vm983, %v947, %v911
    %v1021 = vsel %vm983, %v948, %v912
    %v1022 = vsel %vm983, %v949, %v913
    %v1023 = vsel %vm983, %v950, %v914
    %v1024 = vsel %vm983, %v951, %v915
    %v1025 = vsel %vm983, %v952, %v916
    %v1026 = vsel %vm983, %v953, %v917
    %v1027 = vsel %vm983, %v954, %v918
    %v1028 = vsel %vm983, %v955, %v919
    %v1029 = vsel %vm983, %v956, %v920
    %v1030 = vsel %vm983, %v957, %v921
    %v1031 = vsel %vm983, %v958, %v922
    %v1032 = vsel %vm983, %v959, %v923
    %v1033 = vsel %vm983, %v960, %v924
    %v1034 = vsel %vm983, %v961, %v925
    %v1035 = vsel %vm983, %v962, %v926
    %v1036 = vsel %vm983, %v963, %v927
    %v1037 = vsel %vm983, %v964, %v928
    %v1038 = vsel %vm983, %v965, %v929
    %v1039 = vsel %vm983, %v966, %v930
    %v1040 = vsel %vm983, %v967, %v931
    %v1041 = vsel %vm983, %v968, %v932
    %v1042 = vsel %vm983, %v969, %v933
    %v1043 = vsel %vm983, %v970, %v934
    %v1044 = vsel %vm983, %v971, %v935
    %v1045 = vsel %vm983, %v972, %v936
    %v1046 = vsel %vm983, %v973, %v937
    %v1047 = vsel %vm983, %v974, %v938
    %v1048 = vsel %vm983, %v975, %v939
    %v1049 = vsel %vm983, %v976, %v940
    %v1050 = vsel %vm983, %v977, %v941
    %v1051 = vsel %vm983, %v978, %v942
    %v1052 = vsel %vm983, %v979, %v943
    %v1053 = vsel %vm983, %v980, %v944
    %v1054 = vsel %vm983, %v981, %v945
    %v1055 = vsel %vm983, %v982, %v946
    %vm1056 = vcmp.ge.s32.totalorder %v909, 1
    %vm1057 = vcmp.ge.s32.totalorder %v910, 1
    %v1058 = vsel %vm1056, 1, 0
    %v1059 = vsel %vm1057, 1, 0
    %vm1060 = vcmp.eq.s32.totalorder %v1058, 1
    %vm1061 = vcmp.eq.s32.totalorder %v1059, 1
    %v1062 = vsel %vm1060, %v1020, 0.0
    %v1063 = vsel %vm1061, %v984, 0.0
    %v1064 = vsel %vm1060, %v1021, 0.0
    %v1065 = vsel %vm1061, %v985, 0.0
    %v1066 = vsel %vm1060, %v1022, 0.0
    %v1067 = vsel %vm1061, %v986, 0.0
    %v1068 = vsel %vm1060, %v1023, 0.0
    %v1069 = vsel %vm1061, %v987, 0.0
    %v1070 = vsel %vm1060, %v1024, 0.0
    %v1071 = vsel %vm1061, %v988, 0.0
    %v1072 = vsel %vm1060, %v1025, 0.0
    %v1073 = vsel %vm1061, %v989, 0.0
    %v1074 = vsel %vm1060, %v1026, 0.0
    %v1075 = vsel %vm1061, %v990, 0.0
    %v1076 = vsel %vm1060, %v1027, 0.0
    %v1077 = vsel %vm1061, %v991, 0.0
    %v1078 = vsel %vm1060, %v1028, 0.0
    %v1079 = vsel %vm1061, %v992, 0.0
    %v1080 = vsel %vm1060, %v1029, 0.0
    %v1081 = vsel %vm1061, %v993, 0.0
    %v1082 = vsel %vm1060, %v1030, 0.0
    %v1083 = vsel %vm1061, %v994, 0.0
    %v1084 = vsel %vm1060, %v1031, 0.0
    %v1085 = vsel %vm1061, %v995, 0.0
    %v1086 = vsel %vm1060, %v1032, 0.0
    %v1087 = vsel %vm1061, %v996, 0.0
    %v1088 = vsel %vm1060, %v1033, 0.0
    %v1089 = vsel %vm1061, %v997, 0.0
    %v1090 = vsel %vm1060, %v1034, 0.0
    %v1091 = vsel %vm1061, %v998, 0.0
    %v1092 = vsel %vm1060, %v1035, 0.0
    %v1093 = vsel %vm1061, %v999, 0.0
    %v1094 = vsel %vm1060, %v1036, 0.0
    %v1095 = vsel %vm1061, %v1000, 0.0
    %v1096 = vsel %vm1060, %v1037, 0.0
    %v1097 = vsel %vm1061, %v1001, 0.0
    %v1098 = vsel %vm1060, %v1038, 0.0
    %v1099 = vsel %vm1061, %v1002, 0.0
    %v1100 = vsel %vm1060, %v1039, 0.0
    %v1101 = vsel %vm1061, %v1003, 0.0
    %v1102 = vsel %vm1060, %v1040, 0.0
    %v1103 = vsel %vm1061, %v1004, 0.0
    %v1104 = vsel %vm1060, %v1041, 0.0
    %v1105 = vsel %vm1061, %v1005, 0.0
    %v1106 = vsel %vm1060, %v1042, 0.0
    %v1107 = vsel %vm1061, %v1006, 0.0
    %v1108 = vsel %vm1060, %v1043, 0.0
    %v1109 = vsel %vm1061, %v1007, 0.0
    %v1110 = vsel %vm1060, %v1044, 0.0
    %v1111 = vsel %vm1061, %v1008, 0.0
    %v1112 = vsel %vm1060, %v1045, 0.0
    %v1113 = vsel %vm1061, %v1009, 0.0
    %v1114 = vsel %vm1060, %v1046, 0.0
    %v1115 = vsel %vm1061, %v1010, 0.0
    %v1116 = vsel %vm1060, %v1047, 0.0
    %v1117 = vsel %vm1061, %v1011, 0.0
    %v1118 = vsel %vm1060, %v1048, 0.0
    %v1119 = vsel %vm1061, %v1012, 0.0
    %v1120 = vsel %vm1060, %v1049, 0.0
    %v1121 = vsel %vm1061, %v1013, 0.0
    %v1122 = vsel %vm1060, %v1050, 0.0
    %v1123 = vsel %vm1061, %v1014, 0.0
    %v1124 = vsel %vm1060, %v1051, 0.0
    %v1125 = vsel %vm1061, %v1015, 0.0
    %v1126 = vsel %vm1060, %v1052, 0.0
    %v1127 = vsel %vm1061, %v1016, 0.0
    %v1128 = vsel %vm1060, %v1053, 0.0
    %v1129 = vsel %vm1061, %v1017, 0.0
    %v1130 = vsel %vm1060, %v1054, 0.0
    %v1131 = vsel %vm1061, %v1018, 0.0
    %v1132 = vsel %vm1060, %v1055, 0.0
    %v1133 = vsel %vm1061, %v1019, 0.0
    %v1134 = vrot.slane %v836, 1
    %v1135 = vrot.slane %v838, 1
    %v1136 = vrot.slane %v840, 1
    %v1137 = vrot.slane %v842, 1
    %v1138 = vrot.slane %v844, 1
    %v1139 = vrot.slane %v846, 1
    %v1140 = vrot.slane %v848, 1
    %v1141 = vrot.slane %v850, 1
    %v1142 = vrot.slane %v852, 1
    %v1143 = vrot.slane %v854, 1
    %v1144 = vrot.slane %v856, 1
    %v1145 = vrot.slane %v858, 1
    %v1146 = vrot.slane %v860, 1
    %v1147 = vrot.slane %v862, 1
    %v1148 = vrot.slane %v864, 1
    %v1149 = vrot.slane %v866, 1
    %v1150 = vrot.slane %v868, 1
    %v1151 = vrot.slane %v870, 1
    %v1152 = vrot.slane %v872, 1
    %v1153 = vrot.slane %v874, 1
    %v1154 = vrot.slane %v876, 1
    %v1155 = vrot.slane %v878, 1
    %v1156 = vrot.slane %v880, 1
    %v1157 = vrot.slane %v882, 1
    %v1158 = vrot.slane %v884, 1
    %v1159 = vrot.slane %v886, 1
    %v1160 = vrot.slane %v888, 1
    %v1161 = vrot.slane %v890, 1
    %v1162 = vrot.slane %v892, 1
    %v1163 = vrot.slane %v894, 1
    %v1164 = vrot.slane %v896, 1
    %v1165 = vrot.slane %v898, 1
    %v1166 = vrot.slane %v900, 1
    %v1167 = vrot.slane %v902, 1
    %v1168 = vrot.slane %v904, 1
    %v1169 = vrot.slane %v906, 1
    %v1170 = vrot.slane %v837, 1
    %v1171 = vrot.slane %v839, 1
    %v1172 = vrot.slane %v841, 1
    %v1173 = vrot.slane %v843, 1
    %v1174 = vrot.slane %v845, 1
    %v1175 = vrot.slane %v847, 1
    %v1176 = vrot.slane %v849, 1
    %v1177 = vrot.slane %v851, 1
    %v1178 = vrot.slane %v853, 1
    %v1179 = vrot.slane %v855, 1
    %v1180 = vrot.slane %v857, 1
    %v1181 = vrot.slane %v859, 1
    %v1182 = vrot.slane %v861, 1
    %v1183 = vrot.slane %v863, 1
    %v1184 = vrot.slane %v865, 1
    %v1185 = vrot.slane %v867, 1
    %v1186 = vrot.slane %v869, 1
    %v1187 = vrot.slane %v871, 1
    %v1188 = vrot.slane %v873, 1
    %v1189 = vrot.slane %v875, 1
    %v1190 = vrot.slane %v877, 1
    %v1191 = vrot.slane %v879, 1
    %v1192 = vrot.slane %v881, 1
    %v1193 = vrot.slane %v883, 1
    %v1194 = vrot.slane %v885, 1
    %v1195 = vrot.slane %v887, 1
    %v1196 = vrot.slane %v889, 1
    %v1197 = vrot.slane %v891, 1
    %v1198 = vrot.slane %v893, 1
    %v1199 = vrot.slane %v895, 1
    %v1200 = vrot.slane %v897, 1
    %v1201 = vrot.slane %v899, 1
    %v1202 = vrot.slane %v901, 1
    %v1203 = vrot.slane %v903, 1
    %v1204 = vrot.slane %v905, 1
    %v1205 = vrot.slane %v907, 1
    %vm1206 = vcmp.lt.s32.totalorder %v909, 7
    %v1207 = vsel %vm1206, %v1134, %v1170
    %v1208 = vsel %vm1206, %v1135, %v1171
    %v1209 = vsel %vm1206, %v1136, %v1172
    %v1210 = vsel %vm1206, %v1137, %v1173
    %v1211 = vsel %vm1206, %v1138, %v1174
    %v1212 = vsel %vm1206, %v1139, %v1175
    %v1213 = vsel %vm1206, %v1140, %v1176
    %v1214 = vsel %vm1206, %v1141, %v1177
    %v1215 = vsel %vm1206, %v1142, %v1178
    %v1216 = vsel %vm1206, %v1143, %v1179
    %v1217 = vsel %vm1206, %v1144, %v1180
    %v1218 = vsel %vm1206, %v1145, %v1181
    %v1219 = vsel %vm1206, %v1146, %v1182
    %v1220 = vsel %vm1206, %v1147, %v1183
    %v1221 = vsel %vm1206, %v1148, %v1184
    %v1222 = vsel %vm1206, %v1149, %v1185
    %v1223 = vsel %vm1206, %v1150, %v1186
    %v1224 = vsel %vm1206, %v1151, %v1187
    %v1225 = vsel %vm1206, %v1152, %v1188
    %v1226 = vsel %vm1206, %v1153, %v1189
    %v1227 = vsel %vm1206, %v1154, %v1190
    %v1228 = vsel %vm1206, %v1155, %v1191
    %v1229 = vsel %vm1206, %v1156, %v1192
    %v1230 = vsel %vm1206, %v1157, %v1193
    %v1231 = vsel %vm1206, %v1158, %v1194
    %v1232 = vsel %vm1206, %v1159, %v1195
    %v1233 = vsel %vm1206, %v1160, %v1196
    %v1234 = vsel %vm1206, %v1161, %v1197
    %v1235 = vsel %vm1206, %v1162, %v1198
    %v1236 = vsel %vm1206, %v1163, %v1199
    %v1237 = vsel %vm1206, %v1164, %v1200
    %v1238 = vsel %vm1206, %v1165, %v1201
    %v1239 = vsel %vm1206, %v1166, %v1202
    %v1240 = vsel %vm1206, %v1167, %v1203
    %v1241 = vsel %vm1206, %v1168, %v1204
    %v1242 = vsel %vm1206, %v1169, %v1205
    %v1243 = vsel %vm1206, %v1170, %v1134
    %v1244 = vsel %vm1206, %v1171, %v1135
    %v1245 = vsel %vm1206, %v1172, %v1136
    %v1246 = vsel %vm1206, %v1173, %v1137
    %v1247 = vsel %vm1206, %v1174, %v1138
    %v1248 = vsel %vm1206, %v1175, %v1139
    %v1249 = vsel %vm1206, %v1176, %v1140
    %v1250 = vsel %vm1206, %v1177, %v1141
    %v1251 = vsel %vm1206, %v1178, %v1142
    %v1252 = vsel %vm1206, %v1179, %v1143
    %v1253 = vsel %vm1206, %v1180, %v1144
    %v1254 = vsel %vm1206, %v1181, %v1145
    %v1255 = vsel %vm1206, %v1182, %v1146
    %v1256 = vsel %vm1206, %v1183, %v1147
    %v1257 = vsel %vm1206, %v1184, %v1148
    %v1258 = vsel %vm1206, %v1185, %v1149
    %v1259 = vsel %vm1206, %v1186, %v1150
    %v1260 = vsel %vm1206, %v1187, %v1151
    %v1261 = vsel %vm1206, %v1188, %v1152
    %v1262 = vsel %vm1206, %v1189, %v1153
    %v1263 = vsel %vm1206, %v1190, %v1154
    %v1264 = vsel %vm1206, %v1191, %v1155
    %v1265 = vsel %vm1206, %v1192, %v1156
    %v1266 = vsel %vm1206, %v1193, %v1157
    %v1267 = vsel %vm1206, %v1194, %v1158
    %v1268 = vsel %vm1206, %v1195, %v1159
    %v1269 = vsel %vm1206, %v1196, %v1160
    %v1270 = vsel %vm1206, %v1197, %v1161
    %v1271 = vsel %vm1206, %v1198, %v1162
    %v1272 = vsel %vm1206, %v1199, %v1163
    %v1273 = vsel %vm1206, %v1200, %v1164
    %v1274 = vsel %vm1206, %v1201, %v1165
    %v1275 = vsel %vm1206, %v1202, %v1166
    %v1276 = vsel %vm1206, %v1203, %v1167
    %v1277 = vsel %vm1206, %v1204, %v1168
    %v1278 = vsel %vm1206, %v1205, %v1169
    %vm1279 = vcmp.lt.s32.totalorder %v909, 15
    %vm1280 = vcmp.lt.s32.totalorder %v910, 15
    %v1281 = vsel %vm1279, 1, 0
    %v1282 = vsel %vm1280, 1, 0
    %vm1283 = vcmp.eq.s32.totalorder %v1281, 1
    %vm1284 = vcmp.eq.s32.totalorder %v1282, 1
    %v1285 = vsel %vm1283, %v1207, 0.0
    %v1286 = vsel %vm1284, %v1243, 0.0
    %v1287 = vsel %vm1283, %v1208, 0.0
    %v1288 = vsel %vm1284, %v1244, 0.0
    %v1289 = vsel %vm1283, %v1209, 0.0
    %v1290 = vsel %vm1284, %v1245, 0.0
    %v1291 = vsel %vm1283, %v1210, 0.0
    %v1292 = vsel %vm1284, %v1246, 0.0
    %v1293 = vsel %vm1283, %v1211, 0.0
    %v1294 = vsel %vm1284, %v1247, 0.0
    %v1295 = vsel %vm1283, %v1212, 0.0
    %v1296 = vsel %vm1284, %v1248, 0.0
    %v1297 = vsel %vm1283, %v1213, 0.0
    %v1298 = vsel %vm1284, %v1249, 0.0
    %v1299 = vsel %vm1283, %v1214, 0.0
    %v1300 = vsel %vm1284, %v1250, 0.0
    %v1301 = vsel %vm1283, %v1215, 0.0
    %v1302 = vsel %vm1284, %v1251, 0.0
    %v1303 = vsel %vm1283, %v1216, 0.0
    %v1304 = vsel %vm1284, %v1252, 0.0
    %v1305 = vsel %vm1283, %v1217, 0.0
    %v1306 = vsel %vm1284, %v1253, 0.0
    %v1307 = vsel %vm1283, %v1218, 0.0
    %v1308 = vsel %vm1284, %v1254, 0.0
    %v1309 = vsel %vm1283, %v1219, 0.0
    %v1310 = vsel %vm1284, %v1255, 0.0
    %v1311 = vsel %vm1283, %v1220, 0.0
    %v1312 = vsel %vm1284, %v1256, 0.0
    %v1313 = vsel %vm1283, %v1221, 0.0
    %v1314 = vsel %vm1284, %v1257, 0.0
    %v1315 = vsel %vm1283, %v1222, 0.0
    %v1316 = vsel %vm1284, %v1258, 0.0
    %v1317 = vsel %vm1283, %v1223, 0.0
    %v1318 = vsel %vm1284, %v1259, 0.0
    %v1319 = vsel %vm1283, %v1224, 0.0
    %v1320 = vsel %vm1284, %v1260, 0.0
    %v1321 = vsel %vm1283, %v1225, 0.0
    %v1322 = vsel %vm1284, %v1261, 0.0
    %v1323 = vsel %vm1283, %v1226, 0.0
    %v1324 = vsel %vm1284, %v1262, 0.0
    %v1325 = vsel %vm1283, %v1227, 0.0
    %v1326 = vsel %vm1284, %v1263, 0.0
    %v1327 = vsel %vm1283, %v1228, 0.0
    %v1328 = vsel %vm1284, %v1264, 0.0
    %v1329 = vsel %vm1283, %v1229, 0.0
    %v1330 = vsel %vm1284, %v1265, 0.0
    %v1331 = vsel %vm1283, %v1230, 0.0
    %v1332 = vsel %vm1284, %v1266, 0.0
    %v1333 = vsel %vm1283, %v1231, 0.0
    %v1334 = vsel %vm1284, %v1267, 0.0
    %v1335 = vsel %vm1283, %v1232, 0.0
    %v1336 = vsel %vm1284, %v1268, 0.0
    %v1337 = vsel %vm1283, %v1233, 0.0
    %v1338 = vsel %vm1284, %v1269, 0.0
    %v1339 = vsel %vm1283, %v1234, 0.0
    %v1340 = vsel %vm1284, %v1270, 0.0
    %v1341 = vsel %vm1283, %v1235, 0.0
    %v1342 = vsel %vm1284, %v1271, 0.0
    %v1343 = vsel %vm1283, %v1236, 0.0
    %v1344 = vsel %vm1284, %v1272, 0.0
    %v1345 = vsel %vm1283, %v1237, 0.0
    %v1346 = vsel %vm1284, %v1273, 0.0
    %v1347 = vsel %vm1283, %v1238, 0.0
    %v1348 = vsel %vm1284, %v1274, 0.0
    %v1349 = vsel %vm1283, %v1239, 0.0
    %v1350 = vsel %vm1284, %v1275, 0.0
    %v1351 = vsel %vm1283, %v1240, 0.0
    %v1352 = vsel %vm1284, %v1276, 0.0
    %v1353 = vsel %vm1283, %v1241, 0.0
    %v1354 = vsel %vm1284, %v1277, 0.0
    %v1355 = vsel %vm1283, %v1242, 0.0
    %v1356 = vsel %vm1284, %v1278, 0.0
    %v1357 = vld [vmem:[#allocation8] sm:$0xff]
    %v1358 = vld [vmem:[#allocation8 + $0x8] sm:$0xff]
    %v1359 = vld [vmem:[#allocation8 + $0x10] sm:$0xff]
    %v1360 = vld [vmem:[#allocation8 + $0x18] sm:$0xff]
    %v1361 = vld [vmem:[#allocation8 + $0x20] sm:$0xff]
    %v1362 = vld [vmem:[#allocation8 + $0x28] sm:$0xff]
    %v1363 = vld [vmem:[#allocation8 + $0x30] sm:$0xff]
    %v1364 = vld [vmem:[#allocation8 + $0x38] sm:$0xff]
    %v1365 = vld [vmem:[#allocation8 + $0x40] sm:$0xff]
    %v1366 = vld [vmem:[#allocation8 + $0x48] sm:$0xff]
    %v1367 = vld [vmem:[#allocation8 + $0x50] sm:$0xff]
    %v1368 = vld [vmem:[#allocation8 + $0x58] sm:$0xff]
    %v1369 = vld [vmem:[#allocation8 + $0x60] sm:$0xff]
    %v1370 = vld [vmem:[#allocation8 + $0x68] sm:$0xff]
    %v1371 = vld [vmem:[#allocation8 + $0x70] sm:$0xff]
    %v1372 = vld [vmem:[#allocation8 + $0x78] sm:$0xff]
    %v1373 = vld [vmem:[#allocation8 + $0x80] sm:$0xff]
    %v1374 = vld [vmem:[#allocation8 + $0x88] sm:$0xff]
    %v1375 = vld [vmem:[#allocation8 + $0x90] sm:$0xff]
    %v1376 = vld [vmem:[#allocation8 + $0x98] sm:$0xff]
    %v1377 = vld [vmem:[#allocation8 + $0xa0] sm:$0xff]
    %v1378 = vld [vmem:[#allocation8 + $0xa8] sm:$0xff]
    %v1379 = vld [vmem:[#allocation8 + $0xb0] sm:$0xff]
    %v1380 = vld [vmem:[#allocation8 + $0xb8] sm:$0xff]
    %v1381 = vld [vmem:[#allocation8 + $0xc0] sm:$0xff]
    %v1382 = vld [vmem:[#allocation8 + $0xc8] sm:$0xff]
    %v1383 = vld [vmem:[#allocation8 + $0xd0] sm:$0xff]
    %v1384 = vld [vmem:[#allocation8 + $0xd8] sm:$0xff]
    %v1385 = vld [vmem:[#allocation8 + $0xe0] sm:$0xff]
    %v1386 = vld [vmem:[#allocation8 + $0xe8] sm:$0xff]
    %v1387 = vld [vmem:[#allocation8 + $0xf0] sm:$0xff]
    %v1388 = vld [vmem:[#allocation8 + $0xf8] sm:$0xff]
    %v1389 = vld [vmem:[#allocation8 + $0x100] sm:$0xff]
    %v1390 = vld [vmem:[#allocation8 + $0x108] sm:$0xff]
    %v1391 = vld [vmem:[#allocation8 + $0x110] sm:$0xff]
    %v1392 = vld [vmem:[#allocation8 + $0x118] sm:$0xff]
    %v1393 = vld [vmem:[#allocation8 + $0x120] sm:$0xff]
    %v1394 = vld [vmem:[#allocation8 + $0x128] sm:$0xff]
    %v1395 = vld [vmem:[#allocation8 + $0x130] sm:$0xff]
    %v1396 = vld [vmem:[#allocation8 + $0x138] sm:$0xff]
    %v1397 = vld [vmem:[#allocation8 + $0x140] sm:$0xff]
    %v1398 = vld [vmem:[#allocation8 + $0x148] sm:$0xff]
    %v1399 = vld [vmem:[#allocation8 + $0x150] sm:$0xff]
    %v1400 = vld [vmem:[#allocation8 + $0x158] sm:$0xff]
    %v1401 = vld [vmem:[#allocation8 + $0x160] sm:$0xff]
    %v1402 = vld [vmem:[#allocation8 + $0x168] sm:$0xff]
    %v1403 = vld [vmem:[#allocation8 + $0x170] sm:$0xff]
    %v1404 = vld [vmem:[#allocation8 + $0x178] sm:$0xff]
    %v1405 = vld [vmem:[#allocation8 + $0x180] sm:$0xff]
    %v1406 = vld [vmem:[#allocation8 + $0x188] sm:$0xff]
    %v1407 = vld [vmem:[#allocation8 + $0x190] sm:$0xff]
    %v1408 = vld [vmem:[#allocation8 + $0x198] sm:$0xff]
    %v1409 = vld [vmem:[#allocation8 + $0x1a0] sm:$0xff]
    %v1410 = vld [vmem:[#allocation8 + $0x1a8] sm:$0xff]
    %v1411 = vld [vmem:[#allocation8 + $0x1b0] sm:$0xff]
    %v1412 = vld [vmem:[#allocation8 + $0x1b8] sm:$0xff]
    %v1413 = vld [vmem:[#allocation8 + $0x1c0] sm:$0xff]
    %v1414 = vld [vmem:[#allocation8 + $0x1c8] sm:$0xff]
    %v1415 = vld [vmem:[#allocation8 + $0x1d0] sm:$0xff]
    %v1416 = vld [vmem:[#allocation8 + $0x1d8] sm:$0xff]
    %v1417 = vld [vmem:[#allocation8 + $0x1e0] sm:$0xff]
    %v1418 = vld [vmem:[#allocation8 + $0x1e8] sm:$0xff]
    %v1419 = vld [vmem:[#allocation8 + $0x1f0] sm:$0xff]
    %v1420 = vld [vmem:[#allocation8 + $0x1f8] sm:$0xff]
    %v1421 = vld [vmem:[#allocation8 + $0x200] sm:$0xff]
    %v1422 = vld [vmem:[#allocation8 + $0x208] sm:$0xff]
    %v1423 = vld [vmem:[#allocation8 + $0x210] sm:$0xff]
    %v1424 = vld [vmem:[#allocation8 + $0x218] sm:$0xff]
    %v1425 = vld [vmem:[#allocation8 + $0x220] sm:$0xff]
    %v1426 = vld [vmem:[#allocation8 + $0x228] sm:$0xff]
    %v1427 = vld [vmem:[#allocation8 + $0x230] sm:$0xff]
    %v1428 = vld [vmem:[#allocation8 + $0x238] sm:$0xff]
    %v1429 = vld [vmem:[#allocation8 + $0x240] sm:$0xff]
    %v1430 = vld [vmem:[#allocation8 + $0x248] sm:$0xff]
    %v1431 = vld [vmem:[#allocation8 + $0x250] sm:$0xff]
    %v1432 = vld [vmem:[#allocation8 + $0x258] sm:$0xff]
    %v1433 = vld [vmem:[#allocation8 + $0x260] sm:$0xff]
    %v1434 = vld [vmem:[#allocation8 + $0x268] sm:$0xff]
    %v1435 = vld [vmem:[#allocation8 + $0x270] sm:$0xff]
    %v1436 = vld [vmem:[#allocation8 + $0x278] sm:$0xff]
    %v1437 = vld [vmem:[#allocation8 + $0x280] sm:$0xff]
    %v1438 = vld [vmem:[#allocation8 + $0x288] sm:$0xff]
    %v1439 = vld [vmem:[#allocation8 + $0x290] sm:$0xff]
    %v1440 = vld [vmem:[#allocation8 + $0x298] sm:$0xff]
    %v1441 = vld [vmem:[#allocation8 + $0x2a0] sm:$0xff]
    %v1442 = vld [vmem:[#allocation8 + $0x2a8] sm:$0xff]
    %v1443 = vld [vmem:[#allocation8 + $0x2b0] sm:$0xff]
    %v1444 = vld [vmem:[#allocation8 + $0x2b8] sm:$0xff]
    %v1445 = vld [vmem:[#allocation8 + $0x2c0] sm:$0xff]
    %v1446 = vld [vmem:[#allocation8 + $0x2c8] sm:$0xff]
    %v1447 = vld [vmem:[#allocation8 + $0x2d0] sm:$0xff]
    %v1448 = vld [vmem:[#allocation8 + $0x2d8] sm:$0xff]
    %v1449 = vld [vmem:[#allocation8 + $0x2e0] sm:$0xff]
    %v1450 = vld [vmem:[#allocation8 + $0x2e8] sm:$0xff]
    %v1451 = vld [vmem:[#allocation8 + $0x2f0] sm:$0xff]
    %v1452 = vld [vmem:[#allocation8 + $0x2f8] sm:$0xff]
    %v1453 = vld [vmem:[#allocation8 + $0x300] sm:$0xff]
    %v1454 = vld [vmem:[#allocation8 + $0x308] sm:$0xff]
    %v1455 = vld [vmem:[#allocation8 + $0x310] sm:$0xff]
    %v1456 = vld [vmem:[#allocation8 + $0x318] sm:$0xff]
    %v1457 = vld [vmem:[#allocation8 + $0x320] sm:$0xff]
    %v1458 = vld [vmem:[#allocation8 + $0x328] sm:$0xff]
    %v1459 = vld [vmem:[#allocation8 + $0x330] sm:$0xff]
    %v1460 = vld [vmem:[#allocation8 + $0x338] sm:$0xff]
    %v1461 = vld [vmem:[#allocation8 + $0x340] sm:$0xff]
    %v1462 = vld [vmem:[#allocation8 + $0x348] sm:$0xff]
    %v1463 = vld [vmem:[#allocation8 + $0x350] sm:$0xff]
    %v1464 = vld [vmem:[#allocation8 + $0x358] sm:$0xff]
    %v1465 = vld [vmem:[#allocation8 + $0x360] sm:$0xff]
    %v1466 = vld [vmem:[#allocation8 + $0x368] sm:$0xff]
    %v1467 = vld [vmem:[#allocation8 + $0x370] sm:$0xff]
    %v1468 = vld [vmem:[#allocation8 + $0x378] sm:$0xff]
    %v1469 = vld [vmem:[#allocation8 + $0x380] sm:$0xff]
    %v1470 = vld [vmem:[#allocation8 + $0x388] sm:$0xff]
    %v1471 = vld [vmem:[#allocation8 + $0x390] sm:$0xff]
    %v1472 = vld [vmem:[#allocation8 + $0x398] sm:$0xff]
    %v1473 = vld [vmem:[#allocation8 + $0x3a0] sm:$0xff]
    %v1474 = vld [vmem:[#allocation8 + $0x3a8] sm:$0xff]
    %v1475 = vld [vmem:[#allocation8 + $0x3b0] sm:$0xff]
    %v1476 = vld [vmem:[#allocation8 + $0x3b8] sm:$0xff]
    %v1477 = vld [vmem:[#allocation8 + $0x3c0] sm:$0xff]
    %v1478 = vld [vmem:[#allocation8 + $0x3c8] sm:$0xff]
    %v1479 = vld [vmem:[#allocation8 + $0x3d0] sm:$0xff]
    %v1480 = vld [vmem:[#allocation8 + $0x3d8] sm:$0xff]
    %v1481 = vld [vmem:[#allocation8 + $0x3e0] sm:$0xff]
    %v1482 = vld [vmem:[#allocation8 + $0x3e8] sm:$0xff]
    %v1483 = vld [vmem:[#allocation8 + $0x3f0] sm:$0xff]
    %v1484 = vld [vmem:[#allocation8 + $0x3f8] sm:$0xff]
    %v1485 = vld [vmem:[#allocation8 + $0x400] sm:$0xff]
    %v1486 = vld [vmem:[#allocation8 + $0x408] sm:$0xff]
    %v1487 = vld [vmem:[#allocation8 + $0x410] sm:$0xff]
    %v1488 = vld [vmem:[#allocation8 + $0x418] sm:$0xff]
    %v1489 = vld [vmem:[#allocation8 + $0x420] sm:$0xff]
    %v1490 = vld [vmem:[#allocation8 + $0x428] sm:$0xff]
    %v1491 = vld [vmem:[#allocation8 + $0x430] sm:$0xff]
    %v1492 = vld [vmem:[#allocation8 + $0x438] sm:$0xff]
    %v1493 = vld [vmem:[#allocation8 + $0x440] sm:$0xff]
    %v1494 = vld [vmem:[#allocation8 + $0x448] sm:$0xff]
    %v1495 = vld [vmem:[#allocation8 + $0x450] sm:$0xff]
    %v1496 = vld [vmem:[#allocation8 + $0x458] sm:$0xff]
    %v1497 = vld [vmem:[#allocation8 + $0x460] sm:$0xff]
    %v1498 = vld [vmem:[#allocation8 + $0x468] sm:$0xff]
    %v1499 = vld [vmem:[#allocation8 + $0x470] sm:$0xff]
    %v1500 = vld [vmem:[#allocation8 + $0x478] sm:$0xff]
    %1501 = vmatprep.subr.mxu0 0.0
    %1502 = vmatpush1.msra.mxu0 %v1357
    %1503 = vmatprep.subr.mxu0 0.0
    %1504 = vmatpush1.msra.mxu0 %v1358
    %1505 = vmatprep.subr.mxu0 0.0
    %1506 = vmatpush1.msra.mxu0 %v1359
    %1507 = vmatprep.subr.mxu0 0.0
    %1508 = vmatpush1.msra.mxu0 %v1360
    %1509 = vmatprep.subr.mxu0 0.0
    %1510 = vmatpush1.msra.mxu0 %v1361
    %1511 = vmatprep.subr.mxu0 0.0
    %1512 = vmatpush1.msra.mxu0 %v1362
    %1513 = vmatprep.subr.mxu0 0.0
    %1514 = vmatpush1.msra.mxu0 %v1363
    %1515 = vmatprep.subr.mxu0 0.0
    %1516 = vmatpush1.msra.mxu0 %v1364
    %1517 = vmatprep.subr.mxu0 0.0
    %1518 = vmatpush1.msra.mxu0 %v1365
    %1519 = vmatprep.subr.mxu0 0.0
    %1520 = vmatpush1.msra.mxu0 %v1366
    %1521 = vmatprep.subr.mxu0 0.0
    %1522 = vmatpush1.msra.mxu0 %v1367
    %1523 = vmatprep.subr.mxu0 0.0
    %1524 = vmatpush1.msra.mxu0 %v1368
    %1525 = vmatprep.subr.mxu0 0.0
    %1526 = vmatpush1.msra.mxu0 %v1369
    %1527 = vmatprep.subr.mxu0 0.0
    %1528 = vmatpush1.msra.mxu0 %v1370
    %1529 = vmatprep.subr.mxu0 0.0
    %1530 = vmatpush1.msra.mxu0 %v1371
    %1531 = vmatprep.subr.mxu0 0.0
    %1532 = vmatpush1.msra.mxu0 %v1372
    %1533 = vmatprep.subr.mxu0 0.0
    %1534 = vmatpush1.msra.mxu0 %v1373
    %1535 = vmatprep.subr.mxu0 0.0
    %1536 = vmatpush1.msra.mxu0 %v1374
    %1537 = vmatprep.subr.mxu0 0.0
    %1538 = vmatpush1.msra.mxu0 %v1375
    %1539 = vmatprep.subr.mxu0 0.0
    %1540 = vmatpush1.msra.mxu0 %v1376
    %1541 = vmatprep.subr.mxu0 0.0
    %1542 = vmatpush1.msra.mxu0 %v1377
    %1543 = vmatprep.subr.mxu0 0.0
    %1544 = vmatpush1.msra.mxu0 %v1378
    %1545 = vmatprep.subr.mxu0 0.0
    %1546 = vmatpush1.msra.mxu0 %v1379
    %1547 = vmatprep.subr.mxu0 0.0
    %1548 = vmatpush1.msra.mxu0 %v1380
    %1549 = vmatprep.subr.mxu0 0.0
    %1550 = vmatpush1.msra.mxu0 %v1381
    %1551 = vmatprep.subr.mxu0 0.0
    %1552 = vmatpush1.msra.mxu0 %v1382
    %1553 = vmatprep.subr.mxu0 0.0
    %1554 = vmatpush1.msra.mxu0 %v1383
    %1555 = vmatprep.subr.mxu0 0.0
    %1556 = vmatpush1.msra.mxu0 %v1384
    %1557 = vmatprep.subr.mxu0 0.0
    %1558 = vmatpush1.msra.mxu0 %v1385
    %1559 = vmatprep.subr.mxu0 0.0
    %1560 = vmatpush1.msra.mxu0 %v1386
    %1561 = vmatprep.subr.mxu0 0.0
    %1562 = vmatpush1.msra.mxu0 %v1387
    %1563 = vmatprep.subr.mxu0 0.0
    %1564 = vmatpush1.msra.mxu0 %v1388
    %1565 = vmatprep.mubr.f32.mxu0 %v836
    %1566 = vmatmul.mubr.f32.gmra.mrb[0].mxu0 %v1062
    %v1567 = vpop.f32.mrb[0].mxu0
    %v1568 = vadd.f32 0.0, %v1567
    %v1569 = vpop.f32.mrb[0].mxu0
    %1570 = vmatprep.mubr.f32.mxu0 %v837
    %1571 = vmatmul.mubr.f32.gmra.mrb[0].mxu0 %v1063
    %v1572 = vpop.f32.mrb[0].mxu0
    %v1573 = vadd.f32 0.0, %v1572
    %v1574 = vpop.f32.mrb[0].mxu0
    %1575 = vmatprep.mubr.f32.mxu0 %v838
    %1576 = vmatmul.mubr.f32.gmra.mrb[0].mxu0 %v1064
    %v1577 = vpop.f32.mrb[0].mxu0
    %v1578 = vadd.f32 0.0, %v1577
    %v1579 = vpop.f32.mrb[0].mxu0
    %1580 = vmatprep.mubr.f32.mxu0 %v839
    %1581 = vmatmul.mubr.f32.gmra.mrb[0].mxu0 %v1065
    %v1582 = vpop.f32.mrb[0].mxu0
    %v1583 = vadd.f32 0.0, %v1582
    %v1584 = vpop.f32.mrb[0].mxu0
    %1585 = vmatprep.mubr.f32.mxu0 %v840
    %1586 = vmatmul.mubr.f32.gmra.mrb[0].mxu0 %v1066
    %v1587 = vpop.f32.mrb[0].mxu0
    %v1588 = vadd.f32 0.0, %v1587
    %v1589 = vpop.f32.mrb[0].mxu0
    %1590 = vmatprep.mubr.f32.mxu0 %v841
    %1591 = vmatmul.mubr.f32.gmra.mrb[0].mxu0 %v1067
    %v1592 = vpop.f32.mrb[0].mxu0
    %v1593 = vadd.f32 0.0, %v1592
    %v1594 = vpop.f32.mrb[0].mxu0
    %1595 = vmatprep.mubr.f32.mxu0 %v842
    %1596 = vmatmul.mubr.f32.gmra.mrb[0].mxu0 %v1068
    %v1597 = vpop.f32.mrb[0].mxu0
    %v1598 = vadd.f32 0.0, %v1597
    %v1599 = vpop.f32.mrb[0].mxu0
    %1600 = vmatprep.mubr.f32.mxu0 %v843
    %1601 = vmatmul.mubr.f32.gmra.mrb[0].mxu0 %v1069
    %v1602 = vpop.f32.mrb[0].mxu0
    %v1603 = vadd.f32 0.0, %v1602
    %v1604 = vpop.f32.mrb[0].mxu0
    %1605 = vmatprep.mubr.f32.mxu0 %v844
    %1606 = vmatmul.mubr.f32.gmra.mrb[0].mxu0 %v1070
    %v1607 = vpop.f32.mrb[0].mxu0
    %v1608 = vadd.f32 0.0, %v1607
    %v1609 = vpop.f32.mrb[0].mxu0
    %1610 = vmatprep.mubr.f32.mxu0 %v845
    %1611 = vmatmul.mubr.f32.gmra.mrb[0].mxu0 %v1071
    %v1612 = vpop.f32.mrb[0].mxu0
    %v1613 = vadd.f32 0.0, %v1612
    %v1614 = vpop.f32.mrb[0].mxu0
    %1615 = vmatprep.mubr.f32.mxu0 %v846
    %1616 = vmatmul.mubr.f32.gmra.mrb[0].mxu0 %v1072
    %v1617 = vpop.f32.mrb[0].mxu0
    %v1618 = vadd.f32 0.0, %v1617
    %v1619 = vpop.f32.mrb[0].mxu0
    %1620 = vmatprep.mubr.f32.mxu0 %v847
    %1621 = vmatmul.mubr.f32.gmra.mrb[0].mxu0 %v1073
    %v1622 = vpop.f32.mrb[0].mxu0
    %v1623 = vadd.f32 0.0, %v1622
    %v1624 = vpop.f32.mrb[0].mxu0
    %1625 = vmatprep.mubr.f32.mxu0 %v848
    %1626 = vmatmul.mubr.f32.gmra.mrb[0].mxu0 %v1074
    %v1627 = vpop.f32.mrb[0].mxu0
    %v1628 = vadd.f32 0.0, %v1627
    %v1629 = vpop.f32.mrb[0].mxu0
    %1630 = vmatprep.mubr.f32.mxu0 %v849
    %1631 = vmatmul.mubr.f32.gmra.mrb[0].mxu0 %v1075
    %v1632 = vpop.f32.mrb[0].mxu0
    %v1633 = vadd.f32 0.0, %v1632
    %v1634 = vpop.f32.mrb[0].mxu0
    %1635 = vmatprep.mubr.f32.mxu0 %v850
    %1636 = vmatmul.mubr.f32.gmra.mrb[0].mxu0 %v1076
    %v1637 = vpop.f32.mrb[0].mxu0
    %v1638 = vadd.f32 0.0, %v1637
    %v1639 = vpop.f32.mrb[0].mxu0
    %1640 = vmatprep.mubr.f32.mxu0 %v851
    %1641 = vmatmul.mubr.f32.gmra.mrb[0].mxu0 %v1077
    %v1642 = vpop.f32.mrb[0].mxu0
    %v1643 = vadd.f32 0.0, %v1642
    %v1644 = vpop.f32.mrb[0].mxu0
    %1645 = vmatprep.mubr.f32.mxu0 %v852
    %1646 = vmatmul.mubr.f32.gmra.mrb[0].mxu0 %v1078
    %v1647 = vpop.f32.mrb[0].mxu0
    %v1648 = vadd.f32 0.0, %v1647
    %v1649 = vpop.f32.mrb[0].mxu0
    %1650 = vmatprep.mubr.f32.mxu0 %v853
    %1651 = vmatmul.mubr.f32.gmra.mrb[0].mxu0 %v1079
    %v1652 = vpop.f32.mrb[0].mxu0
    %v1653 = vadd.f32 0.0, %v1652
    %v1654 = vpop.f32.mrb[0].mxu0
    %1655 = vmatprep.mubr.f32.mxu0 %v854
    %1656 = vmatmul.mubr.f32.gmra.mrb[0].mxu0 %v1080
    %v1657 = vpop.f32.mrb[0].mxu0
    %v1658 = vadd.f32 0.0, %v1657
    %v1659 = vpop.f32.mrb[0].mxu0
    %1660 = vmatprep.mubr.f32.mxu0 %v855
    %1661 = vmatmul.mubr.f32.gmra.mrb[0].mxu0 %v1081
    %v1662 = vpop.f32.mrb[0].mxu0
    %v1663 = vadd.f32 0.0, %v1662
    %v1664 = vpop.f32.mrb[0].mxu0
    %1665 = vmatprep.mubr.f32.mxu0 %v856
    %1666 = vmatmul.mubr.f32.gmra.mrb[0].mxu0 %v1082
    %v1667 = vpop.f32.mrb[0].mxu0
    %v1668 = vadd.f32 0.0, %v1667
    %v1669 = vpop.f32.mrb[0].mxu0
    %1670 = vmatprep.mubr.f32.mxu0 %v857
    %1671 = vmatmul.mubr.f32.gmra.mrb[0].mxu0 %v1083
    %v1672 = vpop.f32.mrb[0].mxu0
    %v1673 = vadd.f32 0.0, %v1672
    %v1674 = vpop.f32.mrb[0].mxu0
    %1675 = vmatprep.mubr.f32.mxu0 %v858
    %1676 = vmatmul.mubr.f32.gmra.mrb[0].mxu0 %v1084
    %v1677 = vpop.f32.mrb[0].mxu0
    %v1678 = vadd.f32 0.0, %v1677
    %v1679 = vpop.f32.mrb[0].mxu0
    %1680 = vmatprep.mubr.f32.mxu0 %v859
    %1681 = vmatmul.mubr.f32.gmra.mrb[0].mxu0 %v1085
    %v1682 = vpop.f32.mrb[0].mxu0
    %v1683 = vadd.f32 0.0, %v1682
    %v1684 = vpop.f32.mrb[0].mxu0
    %1685 = vmatprep.mubr.f32.mxu0 %v860
    %1686 = vmatmul.mubr.f32.gmra.mrb[0].mxu0 %v1086
    %v1687 = vpop.f32.mrb[0].mxu0
    %v1688 = vadd.f32 0.0, %v1687
    %v1689 = vpop.f32.mrb[0].mxu0
    %1690 = vmatprep.mubr.f32.mxu0 %v861
    %1691 = vmatmul.mubr.f32.gmra.mrb[0].mxu0 %v1087
    %v1692 = vpop.f32.mrb[0].mxu0
    %v1693 = vadd.f32 0.0, %v1692
    %v1694 = vpop.f32.mrb[0].mxu0
    %1695 = vmatprep.mubr.f32.mxu0 %v862
    %1696 = vmatmul.mubr.f32.gmra.mrb[0].mxu0 %v1088
    %v1697 = vpop.f32.mrb[0].mxu0
    %v1698 = vadd.f32 0.0, %v1697
    %v1699 = vpop.f32.mrb[0].mxu0
    %1700 = vmatprep.mubr.f32.mxu0 %v863
    %1701 = vmatmul.mubr.f32.gmra.mrb[0].mxu0 %v1089
    %v1702 = vpop.f32.mrb[0].mxu0
    %v1703 = vadd.f32 0.0, %v1702
    %v1704 = vpop.f32.mrb[0].mxu0
    %1705 = vmatprep.mubr.f32.mxu0 %v864
    %1706 = vmatmul.mubr.f32.gmra.mrb[0].mxu0 %v1090
    %v1707 = vpop.f32.mrb[0].mxu0
    %v1708 = vadd.f32 0.0, %v1707
    %v1709 = vpop.f32.mrb[0].mxu0
    %1710 = vmatprep.mubr.f32.mxu0 %v865
    %1711 = vmatmul.mubr.f32.gmra.mrb[0].mxu0 %v1091
    %v1712 = vpop.f32.mrb[0].mxu0
    %v1713 = vadd.f32 0.0, %v1712
    %v1714 = vpop.f32.mrb[0].mxu0
    %1715 = vmatprep.mubr.f32.mxu0 %v866
    %1716 = vmatmul.mubr.f32.gmra.mrb[0].mxu0 %v1092
    %v1717 = vpop.f32.mrb[0].mxu0
    %v1718 = vadd.f32 0.0, %v1717
    %v1719 = vpop.f32.mrb[0].mxu0
    %1720 = vmatprep.mubr.f32.mxu0 %v867
    %1721 = vmatmul.mubr.f32.gmra.mrb[0].mxu0 %v1093
    %v1722 = vpop.f32.mrb[0].mxu0
    %v1723 = vadd.f32 0.0, %v1722
    %v1724 = vpop.f32.mrb[0].mxu0
    %1725 = vmatprep.mubr.f32.mxu0 %v872
    %1726 = vmatmul.mubr.f32.gmra.mrb[0].mxu0 %v1098
    %v1727 = vpop.f32.mrb[0].mxu0
    %v1728 = vadd.f32 0.0, %v1727
    %v1729 = vpop.f32.mrb[0].mxu0
    %1730 = vmatprep.mubr.f32.mxu0 %v873
    %1731 = vmatmul.mubr.f32.gmra.mrb[0].mxu0 %v1099
    %v1732 = vpop.f32.mrb[0].mxu0
    %v1733 = vadd.f32 0.0, %v1732
    %v1734 = vpop.f32.mrb[0].mxu0
    %1735 = vmatprep.mubr.f32.mxu0 %v874
    %1736 = vmatmul.mubr.f32.gmra.mrb[0].mxu0 %v1100
    %v1737 = vpop.f32.mrb[0].mxu0
    %v1738 = vadd.f32 0.0, %v1737
    %v1739 = vpop.f32.mrb[0].mxu0
    %1740 = vmatprep.mubr.f32.mxu0 %v875
    %1741 = vmatmul.mubr.f32.gmra.mrb[0].mxu0 %v1101
    %v1742 = vpop.f32.mrb[0].mxu0
    %v1743 = vadd.f32 0.0, %v1742
    %v1744 = vpop.f32.mrb[0].mxu0
    %1745 = vmatprep.mubr.f32.mxu0 %v876
    %1746 = vmatmul.mubr.f32.gmra.mrb[0].mxu0 %v1102
    %v1747 = vpop.f32.mrb[0].mxu0
    %v1748 = vadd.f32 0.0, %v1747
    %v1749 = vpop.f32.mrb[0].mxu0
    %1750 = vmatprep.mubr.f32.mxu0 %v877
    %1751 = vmatmul.mubr.f32.gmra.mrb[0].mxu0 %v1103
    %v1752 = vpop.f32.mrb[0].mxu0
    %v1753 = vadd.f32 0.0, %v1752
    %v1754 = vpop.f32.mrb[0].mxu0
    %1755 = vmatprep.mubr.f32.mxu0 %v878
    %1756 = vmatmul.mubr.f32.gmra.mrb[0].mxu0 %v1104
    %v1757 = vpop.f32.mrb[0].mxu0
    %v1758 = vadd.f32 0.0, %v1757
    %v1759 = vpop.f32.mrb[0].mxu0
    %1760 = vmatprep.mubr.f32.mxu0 %v879
    %1761 = vmatmul.mubr.f32.gmra.mrb[0].mxu0 %v1105
    %v1762 = vpop.f32.mrb[0].mxu0
    %v1763 = vadd.f32 0.0, %v1762
    %v1764 = vpop.f32.mrb[0].mxu0
    %1765 = vmatprep.mubr.f32.mxu0 %v880
    %1766 = vmatmul.mubr.f32.gmra.mrb[0].mxu0 %v1106
    %v1767 = vpop.f32.mrb[0].mxu0
    %v1768 = vadd.f32 0.0, %v1767
    %v1769 = vpop.f32.mrb[0].mxu0
    %1770 = vmatprep.mubr.f32.mxu0 %v881
    %1771 = vmatmul.mubr.f32.gmra.mrb[0].mxu0 %v1107
    %v1772 = vpop.f32.mrb[0].mxu0
    %v1773 = vadd.f32 0.0, %v1772
    %v1774 = vpop.f32.mrb[0].mxu0
    %1775 = vmatprep.mubr.f32.mxu0 %v882
    %1776 = vmatmul.mubr.f32.gmra.mrb[0].mxu0 %v1108
    %v1777 = vpop.f32.mrb[0].mxu0
    %v1778 = vadd.f32 0.0, %v1777
    %v1779 = vpop.f32.mrb[0].mxu0
    %1780 = vmatprep.mubr.f32.mxu0 %v883
    %1781 = vmatmul.mubr.f32.gmra.mrb[0].mxu0 %v1109
    %v1782 = vpop.f32.mrb[0].mxu0
    %v1783 = vadd.f32 0.0, %v1782
    %v1784 = vpop.f32.mrb[0].mxu0
    %1785 = vmatprep.mubr.f32.mxu0 %v884
    %1786 = vmatmul.mubr.f32.gmra.mrb[0].mxu0 %v1110
    %v1787 = vpop.f32.mrb[0].mxu0
    %v1788 = vadd.f32 0.0, %v1787
    %v1789 = vpop.f32.mrb[0].mxu0
    %1790 = vmatprep.mubr.f32.mxu0 %v885
    %1791 = vmatmul.mubr.f32.gmra.mrb[0].mxu0 %v1111
    %v1792 = vpop.f32.mrb[0].mxu0
    %v1793 = vadd.f32 0.0, %v1792
    %v1794 = vpop.f32.mrb[0].mxu0
    %1795 = vmatprep.mubr.f32.mxu0 %v886
    %1796 = vmatmul.mubr.f32.gmra.mrb[0].mxu0 %v1112
    %v1797 = vpop.f32.mrb[0].mxu0
    %v1798 = vadd.f32 0.0, %v1797
    %v1799 = vpop.f32.mrb[0].mxu0
    %1800 = vmatprep.mubr.f32.mxu0 %v887
    %1801 = vmatmul.mubr.f32.gmra.mrb[0].mxu0 %v1113
    %v1802 = vpop.f32.mrb[0].mxu0
    %v1803 = vadd.f32 0.0, %v1802
    %v1804 = vpop.f32.mrb[0].mxu0
    %1805 = vmatprep.mubr.f32.mxu0 %v888
    %1806 = vmatmul.mubr.f32.gmra.mrb[0].mxu0 %v1114
    %v1807 = vpop.f32.mrb[0].mxu0
    %v1808 = vadd.f32 0.0, %v1807
    %v1809 = vpop.f32.mrb[0].mxu0
    %1810 = vmatprep.mubr.f32.mxu0 %v889
    %1811 = vmatmul.mubr.f32.gmra.mrb[0].mxu0 %v1115
    %v1812 = vpop.f32.mrb[0].mxu0
    %v1813 = vadd.f32 0.0, %v1812
    %v1814 = vpop.f32.mrb[0].mxu0
    %1815 = vmatprep.mubr.f32.mxu0 %v890
    %1816 = vmatmul.mubr.f32.gmra.mrb[0].mxu0 %v1116
    %v1817 = vpop.f32.mrb[0].mxu0
    %v1818 = vadd.f32 0.0, %v1817
    %v1819 = vpop.f32.mrb[0].mxu0
    %1820 = vmatprep.mubr.f32.mxu0 %v891
    %1821 = vmatmul.mubr.f32.gmra.mrb[0].mxu0 %v1117
    %v1822 = vpop.f32.mrb[0].mxu0
    %v1823 = vadd.f32 0.0, %v1822
    %v1824 = vpop.f32.mrb[0].mxu0
    %1825 = vmatprep.mubr.f32.mxu0 %v892
    %1826 = vmatmul.mubr.f32.gmra.mrb[0].mxu0 %v1118
    %v1827 = vpop.f32.mrb[0].mxu0
    %v1828 = vadd.f32 0.0, %v1827
    %v1829 = vpop.f32.mrb[0].mxu0
    %1830 = vmatprep.mubr.f32.mxu0 %v893
    %1831 = vmatmul.mubr.f32.gmra.mrb[0].mxu0 %v1119
    %v1832 = vpop.f32.mrb[0].mxu0
    %v1833 = vadd.f32 0.0, %v1832
    %v1834 = vpop.f32.mrb[0].mxu0
    %1835 = vmatprep.mubr.f32.mxu0 %v894
    %1836 = vmatmul.mubr.f32.gmra.mrb[0].mxu0 %v1120
    %v1837 = vpop.f32.mrb[0].mxu0
    %v1838 = vadd.f32 0.0, %v1837
    %v1839 = vpop.f32.mrb[0].mxu0
    %1840 = vmatprep.mubr.f32.mxu0 %v895
    %1841 = vmatmul.mubr.f32.gmra.mrb[0].mxu0 %v1121
    %v1842 = vpop.f32.mrb[0].mxu0
    %v1843 = vadd.f32 0.0, %v1842
    %v1844 = vpop.f32.mrb[0].mxu0
    %1845 = vmatprep.mubr.f32.mxu0 %v896
    %1846 = vmatmul.mubr.f32.gmra.mrb[0].mxu0 %v1122
    %v1847 = vpop.f32.mrb[0].mxu0
    %v1848 = vadd.f32 0.0, %v1847
    %v1849 = vpop.f32.mrb[0].mxu0
    %1850 = vmatprep.mubr.f32.mxu0 %v897
    %1851 = vmatmul.mubr.f32.gmra.mrb[0].mxu0 %v1123
    %v1852 = vpop.f32.mrb[0].mxu0
    %v1853 = vadd.f32 0.0, %v1852
    %v1854 = vpop.f32.mrb[0].mxu0
    %1855 = vmatprep.mubr.f32.mxu0 %v898
    %1856 = vmatmul.mubr.f32.gmra.mrb[0].mxu0 %v1124
    %v1857 = vpop.f32.mrb[0].mxu0
    %v1858 = vadd.f32 0.0, %v1857
    %v1859 = vpop.f32.mrb[0].mxu0
    %1860 = vmatprep.mubr.f32.mxu0 %v899
    %1861 = vmatmul.mubr.f32.gmra.mrb[0].mxu0 %v1125
    %v1862 = vpop.f32.mrb[0].mxu0
    %v1863 = vadd.f32 0.0, %v1862
    %v1864 = vpop.f32.mrb[0].mxu0
    %1865 = vmatprep.mubr.f32.mxu0 %v900
    %1866 = vmatmul.mubr.f32.gmra.mrb[0].mxu0 %v1126
    %v1867 = vpop.f32.mrb[0].mxu0
    %v1868 = vadd.f32 0.0, %v1867
    %v1869 = vpop.f32.mrb[0].mxu0
    %1870 = vmatprep.mubr.f32.mxu0 %v901
    %1871 = vmatmul.mubr.f32.gmra.mrb[0].mxu0 %v1127
    %v1872 = vpop.f32.mrb[0].mxu0
    %v1873 = vadd.f32 0.0, %v1872
    %v1874 = vpop.f32.mrb[0].mxu0
    %1875 = vmatprep.mubr.f32.mxu0 %v902
    %1876 = vmatmul.mubr.f32.gmra.mrb[0].mxu0 %v1128
    %v1877 = vpop.f32.mrb[0].mxu0
    %v1878 = vadd.f32 0.0, %v1877
    %v1879 = vpop.f32.mrb[0].mxu0
    %1880 = vmatprep.mubr.f32.mxu0 %v903
    %1881 = vmatmul.mubr.f32.gmra.mrb[0].mxu0 %v1129
    %v1882 = vpop.f32.mrb[0].mxu0
    %v1883 = vadd.f32 0.0, %v1882
    %v1884 = vpop.f32.mrb[0].mxu0
    %1885 = vdwg.mxu0
    %1886 = vmatprep.subr.mxu0 0.0
    %1887 = vmatpush1.msra.mxu0 %v1389
    %1888 = vmatprep.subr.mxu0 0.0
    %1889 = vmatpush1.msra.mxu0 %v1390
    %1890 = vmatprep.subr.mxu0 0.0
    %1891 = vmatpush1.msra.mxu0 %v1391
    %1892 = vmatprep.subr.mxu0 0.0
    %1893 = vmatpush1.msra.mxu0 %v1392
    %1894 = vmatprep.subr.mxu0 0.0
    %1895 = vmatpush1.msra.mxu0 %v1393
    %1896 = vmatprep.subr.mxu0 0.0
    %1897 = vmatpush1.msra.mxu0 %v1394
    %1898 = vmatprep.subr.mxu0 0.0
    %1899 = vmatpush1.msra.mxu0 %v1395
    %1900 = vmatprep.subr.mxu0 0.0
    %1901 = vmatpush1.msra.mxu0 %v1396
    %1902 = vmatprep.subr.mxu0 0.0
    %1903 = vmatpush1.msra.mxu0 %v1397
    %1904 = vmatprep.subr.mxu0 0.0
    %1905 = vmatpush1.msra.mxu0 %v1398
    %1906 = vmatprep.subr.mxu0 0.0
    %1907 = vmatpush1.msra.mxu0 %v1399
    %1908 = vmatprep.subr.mxu0 0.0
    %1909 = vmatpush1.msra.mxu0 %v1400
    %1910 = vmatprep.subr.mxu0 0.0
    %1911 = vmatpush1.msra.mxu0 %v1401
    %1912 = vmatprep.subr.mxu0 0.0
    %1913 = vmatpush1.msra.mxu0 %v1402
    %1914 = vmatprep.subr.mxu0 0.0
    %1915 = vmatpush1.msra.mxu0 %v1403
    %1916 = vmatprep.subr.mxu0 0.0
    %1917 = vmatpush1.msra.mxu0 %v1404
    %1918 = vmatprep.subr.mxu0 0.0
    %1919 = vmatpush1.msra.mxu0 %v1405
    %1920 = vmatprep.subr.mxu0 0.0
    %1921 = vmatpush1.msra.mxu0 %v1406
    %1922 = vmatprep.subr.mxu0 0.0
    %1923 = vmatpush1.msra.mxu0 %v1407
    %1924 = vmatprep.subr.mxu0 0.0
    %1925 = vmatpush1.msra.mxu0 %v1408
    %1926 = vmatprep.subr.mxu0 0.0
    %1927 = vmatpush1.msra.mxu0 %v1409
    %1928 = vmatprep.subr.mxu0 0.0
    %1929 = vmatpush1.msra.mxu0 %v1410
    %1930 = vmatprep.subr.mxu0 0.0
    %1931 = vmatpush1.msra.mxu0 %v1411
    %1932 = vmatprep.subr.mxu0 0.0
    %1933 = vmatpush1.msra.mxu0 %v1412
    %1934 = vmatprep.subr.mxu0 0.0
    %1935 = vmatpush1.msra.mxu0 %v1413
    %1936 = vmatprep.subr.mxu0 0.0
    %1937 = vmatpush1.msra.mxu0 %v1414
    %1938 = vmatprep.subr.mxu0 0.0
    %1939 = vmatpush1.msra.mxu0 %v1415
    %1940 = vmatprep.subr.mxu0 0.0
    %1941 = vmatpush1.msra.mxu0 %v1416
    %1942 = vmatprep.subr.mxu0 0.0
    %1943 = vmatpush1.msra.mxu0 %v1417
    %1944 = vmatprep.subr.mxu0 0.0
    %1945 = vmatpush1.msra.mxu0 %v1418
    %1946 = vmatprep.subr.mxu0 0.0
    %1947 = vmatpush1.msra.mxu0 %v1419
    %1948 = vmatprep.subr.mxu0 0.0
    %1949 = vmatpush1.msra.mxu0 %v1420
    %1950 = vmatprep.mubr.f32.mxu0 %v1064
    %1951 = vmatmul.mubr.f32.gmra.mrb[0].mxu0 %v1285
    %v1952 = vpop.f32.mrb[0].mxu0
    %v1953 = vadd.f32 %v1568, %v1952
    %v1954 = vpop.f32.mrb[0].mxu0
    %1955 = vmatprep.mubr.f32.mxu0 %v1065
    %1956 = vmatmul.mubr.f32.gmra.mrb[0].mxu0 %v1286
    %v1957 = vpop.f32.mrb[0].mxu0
    %v1958 = vadd.f32 %v1573, %v1957
    %v1959 = vpop.f32.mrb[0].mxu0
    %1960 = vmatprep.mubr.f32.mxu0 %v1066
    %1961 = vmatmul.mubr.f32.gmra.mrb[0].mxu0 %v1287
    %v1962 = vpop.f32.mrb[0].mxu0
    %v1963 = vadd.f32 %v1578, %v1962
    %v1964 = vpop.f32.mrb[0].mxu0
    %1965 = vmatprep.mubr.f32.mxu0 %v1067
    %1966 = vmatmul.mubr.f32.gmra.mrb[0].mxu0 %v1288
    %v1967 = vpop.f32.mrb[0].mxu0
    %v1968 = vadd.f32 %v1583, %v1967
    %v1969 = vpop.f32.mrb[0].mxu0
    %1970 = vmatprep.mubr.f32.mxu0 %v1068
    %1971 = vmatmul.mubr.f32.gmra.mrb[0].mxu0 %v1289
    %v1972 = vpop.f32.mrb[0].mxu0
    %v1973 = vadd.f32 %v1588, %v1972
    %v1974 = vpop.f32.mrb[0].mxu0
    %1975 = vmatprep.mubr.f32.mxu0 %v1069
    %1976 = vmatmul.mubr.f32.gmra.mrb[0].mxu0 %v1290
    %v1977 = vpop.f32.mrb[0].mxu0
    %v1978 = vadd.f32 %v1593, %v1977
    %v1979 = vpop.f32.mrb[0].mxu0
    %1980 = vmatprep.mubr.f32.mxu0 %v1070
    %1981 = vmatmul.mubr.f32.gmra.mrb[0].mxu0 %v1291
    %v1982 = vpop.f32.mrb[0].mxu0
    %v1983 = vadd.f32 %v1598, %v1982
    %v1984 = vpop.f32.mrb[0].mxu0
    %1985 = vmatprep.mubr.f32.mxu0 %v1071
    %1986 = vmatmul.mubr.f32.gmra.mrb[0].mxu0 %v1292
    %v1987 = vpop.f32.mrb[0].mxu0
    %v1988 = vadd.f32 %v1603, %v1987
    %v1989 = vpop.f32.mrb[0].mxu0
    %1990 = vmatprep.mubr.f32.mxu0 %v1072
    %1991 = vmatmul.mubr.f32.gmra.mrb[0].mxu0 %v1293
    %v1992 = vpop.f32.mrb[0].mxu0
    %v1993 = vadd.f32 %v1608, %v1992
    %v1994 = vpop.f32.mrb[0].mxu0
    %1995 = vmatprep.mubr.f32.mxu0 %v1073
    %1996 = vmatmul.mubr.f32.gmra.mrb[0].mxu0 %v1294
    %v1997 = vpop.f32.mrb[0].mxu0
    %v1998 = vadd.f32 %v1613, %v1997
    %v1999 = vpop.f32.mrb[0].mxu0
    %2000 = vmatprep.mubr.f32.mxu0 %v1074
    %2001 = vmatmul.mubr.f32.gmra.mrb[0].mxu0 %v1295
    %v2002 = vpop.f32.mrb[0].mxu0
    %v2003 = vadd.f32 %v1618, %v2002
    %v2004 = vpop.f32.mrb[0].mxu0
    %2005 = vmatprep.mubr.f32.mxu0 %v1075
    %2006 = vmatmul.mubr.f32.gmra.mrb[0].mxu0 %v1296
    %v2007 = vpop.f32.mrb[0].mxu0
    %v2008 = vadd.f32 %v1623, %v2007
    %v2009 = vpop.f32.mrb[0].mxu0
    %2010 = vmatprep.mubr.f32.mxu0 %v1076
    %2011 = vmatmul.mubr.f32.gmra.mrb[0].mxu0 %v1297
    %v2012 = vpop.f32.mrb[0].mxu0
    %v2013 = vadd.f32 %v1628, %v2012
    %v2014 = vpop.f32.mrb[0].mxu0
    %2015 = vmatprep.mubr.f32.mxu0 %v1077
    %2016 = vmatmul.mubr.f32.gmra.mrb[0].mxu0 %v1298
    %v2017 = vpop.f32.mrb[0].mxu0
    %v2018 = vadd.f32 %v1633, %v2017
    %v2019 = vpop.f32.mrb[0].mxu0
    %2020 = vmatprep.mubr.f32.mxu0 %v1078
    %2021 = vmatmul.mubr.f32.gmra.mrb[0].mxu0 %v1299
    %v2022 = vpop.f32.mrb[0].mxu0
    %v2023 = vadd.f32 %v1638, %v2022
    %v2024 = vpop.f32.mrb[0].mxu0
    %2025 = vmatprep.mubr.f32.mxu0 %v1079
    %2026 = vmatmul.mubr.f32.gmra.mrb[0].mxu0 %v1300
    %v2027 = vpop.f32.mrb[0].mxu0
    %v2028 = vadd.f32 %v1643, %v2027
    %v2029 = vpop.f32.mrb[0].mxu0
    %2030 = vmatprep.mubr.f32.mxu0 %v1080
    %2031 = vmatmul.mubr.f32.gmra.mrb[0].mxu0 %v1301
    %v2032 = vpop.f32.mrb[0].mxu0
    %v2033 = vadd.f32 %v1648, %v2032
    %v2034 = vpop.f32.mrb[0].mxu0
    %2035 = vmatprep.mubr.f32.mxu0 %v1081
    %2036 = vmatmul.mubr.f32.gmra.mrb[0].mxu0 %v1302
    %v2037 = vpop.f32.mrb[0].mxu0
    %v2038 = vadd.f32 %v1653, %v2037
    %v2039 = vpop.f32.mrb[0].mxu0
    %2040 = vmatprep.mubr.f32.mxu0 %v1082
    %2041 = vmatmul.mubr.f32.gmra.mrb[0].mxu0 %v1303
    %v2042 = vpop.f32.mrb[0].mxu0
    %v2043 = vadd.f32 %v1658, %v2042
    %v2044 = vpop.f32.mrb[0].mxu0
    %2045 = vmatprep.mubr.f32.mxu0 %v1083
    %2046 = vmatmul.mubr.f32.gmra.mrb[0].mxu0 %v1304
    %v2047 = vpop.f32.mrb[0].mxu0
    %v2048 = vadd.f32 %v1663, %v2047
    %v2049 = vpop.f32.mrb[0].mxu0
    %2050 = vmatprep.mubr.f32.mxu0 %v1084
    %2051 = vmatmul.mubr.f32.gmra.mrb[0].mxu0 %v1305
    %v2052 = vpop.f32.mrb[0].mxu0
    %v2053 = vadd.f32 %v1668, %v2052
    %v2054 = vpop.f32.mrb[0].mxu0
    %2055 = vmatprep.mubr.f32.mxu0 %v1085
    %2056 = vmatmul.mubr.f32.gmra.mrb[0].mxu0 %v1306
    %v2057 = vpop.f32.mrb[0].mxu0
    %v2058 = vadd.f32 %v1673, %v2057
    %v2059 = vpop.f32.mrb[0].mxu0
    %2060 = vmatprep.mubr.f32.mxu0 %v1086
    %2061 = vmatmul.mubr.f32.gmra.mrb[0].mxu0 %v1307
    %v2062 = vpop.f32.mrb[0].mxu0
    %v2063 = vadd.f32 %v1678, %v2062
    %v2064 = vpop.f32.mrb[0].mxu0
    %2065 = vmatprep.mubr.f32.mxu0 %v1087
    %2066 = vmatmul.mubr.f32.gmra.mrb[0].mxu0 %v1308
    %v2067 = vpop.f32.mrb[0].mxu0
    %v2068 = vadd.f32 %v1683, %v2067
    %v2069 = vpop.f32.mrb[0].mxu0
    %2070 = vmatprep.mubr.f32.mxu0 %v1088
    %2071 = vmatmul.mubr.f32.gmra.mrb[0].mxu0 %v1309
    %v2072 = vpop.f32.mrb[0].mxu0
    %v2073 = vadd.f32 %v1688, %v2072
    %v2074 = vpop.f32.mrb[0].mxu0
    %2075 = vmatprep.mubr.f32.mxu0 %v1089
    %2076 = vmatmul.mubr.f32.gmra.mrb[0].mxu0 %v1310
    %v2077 = vpop.f32.mrb[0].mxu0
    %v2078 = vadd.f32 %v1693, %v2077
    %v2079 = vpop.f32.mrb[0].mxu0
    %2080 = vmatprep.mubr.f32.mxu0 %v1090
    %2081 = vmatmul.mubr.f32.gmra.mrb[0].mxu0 %v1311
    %v2082 = vpop.f32.mrb[0].mxu0
    %v2083 = vadd.f32 %v1698, %v2082
    %v2084 = vpop.f32.mrb[0].mxu0
    %2085 = vmatprep.mubr.f32.mxu0 %v1091
    %2086 = vmatmul.mubr.f32.gmra.mrb[0].mxu0 %v1312
    %v2087 = vpop.f32.mrb[0].mxu0
    %v2088 = vadd.f32 %v1703, %v2087
    %v2089 = vpop.f32.mrb[0].mxu0
    %2090 = vmatprep.mubr.f32.mxu0 %v1092
    %2091 = vmatmul.mubr.f32.gmra.mrb[0].mxu0 %v1313
    %v2092 = vpop.f32.mrb[0].mxu0
    %v2093 = vadd.f32 %v1708, %v2092
    %v2094 = vpop.f32.mrb[0].mxu0
    %2095 = vmatprep.mubr.f32.mxu0 %v1093
    %2096 = vmatmul.mubr.f32.gmra.mrb[0].mxu0 %v1314
    %v2097 = vpop.f32.mrb[0].mxu0
    %v2098 = vadd.f32 %v1713, %v2097
    %v2099 = vpop.f32.mrb[0].mxu0
    %2100 = vmatprep.mubr.f32.mxu0 %v1094
    %2101 = vmatmul.mubr.f32.gmra.mrb[0].mxu0 %v1315
    %v2102 = vpop.f32.mrb[0].mxu0
    %v2103 = vadd.f32 %v1718, %v2102
    %v2104 = vpop.f32.mrb[0].mxu0
    %2105 = vmatprep.mubr.f32.mxu0 %v1095
    %2106 = vmatmul.mubr.f32.gmra.mrb[0].mxu0 %v1316
    %v2107 = vpop.f32.mrb[0].mxu0
    %v2108 = vadd.f32 %v1723, %v2107
    %v2109 = vpop.f32.mrb[0].mxu0
    %2110 = vmatprep.mubr.f32.mxu0 %v1100
    %2111 = vmatmul.mubr.f32.gmra.mrb[0].mxu0 %v1321
    %v2112 = vpop.f32.mrb[0].mxu0
    %v2113 = vadd.f32 %v1728, %v2112
    %v2114 = vpop.f32.mrb[0].mxu0
    %2115 = vmatprep.mubr.f32.mxu0 %v1101
    %2116 = vmatmul.mubr.f32.gmra.mrb[0].mxu0 %v1322
    %v2117 = vpop.f32.mrb[0].mxu0
    %v2118 = vadd.f32 %v1733, %v2117
    %v2119 = vpop.f32.mrb[0].mxu0
    %2120 = vmatprep.mubr.f32.mxu0 %v1102
    %2121 = vmatmul.mubr.f32.gmra.mrb[0].mxu0 %v1323
    %v2122 = vpop.f32.mrb[0].mxu0
    %v2123 = vadd.f32 %v1738, %v2122
    %v2124 = vpop.f32.mrb[0].mxu0
    %2125 = vmatprep.mubr.f32.mxu0 %v1103
    %2126 = vmatmul.mubr.f32.gmra.mrb[0].mxu0 %v1324
    %v2127 = vpop.f32.mrb[0].mxu0
    %v2128 = vadd.f32 %v1743, %v2127
    %v2129 = vpop.f32.mrb[0].mxu0
    %2130 = vmatprep.mubr.f32.mxu0 %v1104
    %2131 = vmatmul.mubr.f32.gmra.mrb[0].mxu0 %v1325
    %v2132 = vpop.f32.mrb[0].mxu0
    %v2133 = vadd.f32 %v1748, %v2132
    %v2134 = vpop.f32.mrb[0].mxu0
    %2135 = vmatprep.mubr.f32.mxu0 %v1105
    %2136 = vmatmul.mubr.f32.gmra.mrb[0].mxu0 %v1326
    %v2137 = vpop.f32.mrb[0].mxu0
    %v2138 = vadd.f32 %v1753, %v2137
    %v2139 = vpop.f32.mrb[0].mxu0
    %2140 = vmatprep.mubr.f32.mxu0 %v1106
    %2141 = vmatmul.mubr.f32.gmra.mrb[0].mxu0 %v1327
    %v2142 = vpop.f32.mrb[0].mxu0
    %v2143 = vadd.f32 %v1758, %v2142
    %v2144 = vpop.f32.mrb[0].mxu0
    %2145 = vmatprep.mubr.f32.mxu0 %v1107
    %2146 = vmatmul.mubr.f32.gmra.mrb[0].mxu0 %v1328
    %v2147 = vpop.f32.mrb[0].mxu0
    %v2148 = vadd.f32 %v1763, %v2147
    %v2149 = vpop.f32.mrb[0].mxu0
    %2150 = vmatprep.mubr.f32.mxu0 %v1108
    %2151 = vmatmul.mubr.f32.gmra.mrb[0].mxu0 %v1329
    %v2152 = vpop.f32.mrb[0].mxu0
    %v2153 = vadd.f32 %v1768, %v2152
    %v2154 = vpop.f32.mrb[0].mxu0
    %2155 = vmatprep.mubr.f32.mxu0 %v1109
    %2156 = vmatmul.mubr.f32.gmra.mrb[0].mxu0 %v1330
    %v2157 = vpop.f32.mrb[0].mxu0
    %v2158 = vadd.f32 %v1773, %v2157
    %v2159 = vpop.f32.mrb[0].mxu0
    %2160 = vmatprep.mubr.f32.mxu0 %v1110
    %2161 = vmatmul.mubr.f32.gmra.mrb[0].mxu0 %v1331
    %v2162 = vpop.f32.mrb[0].mxu0
    %v2163 = vadd.f32 %v1778, %v2162
    %v2164 = vpop.f32.mrb[0].mxu0
    %2165 = vmatprep.mubr.f32.mxu0 %v1111
    %2166 = vmatmul.mubr.f32.gmra.mrb[0].mxu0 %v1332
    %v2167 = vpop.f32.mrb[0].mxu0
    %v2168 = vadd.f32 %v1783, %v2167
    %v2169 = vpop.f32.mrb[0].mxu0
    %2170 = vmatprep.mubr.f32.mxu0 %v1112
    %2171 = vmatmul.mubr.f32.gmra.mrb[0].mxu0 %v1333
    %v2172 = vpop.f32.mrb[0].mxu0
    %v2173 = vadd.f32 %v1788, %v2172
    %v2174 = vpop.f32.mrb[0].mxu0
    %2175 = vmatprep.mubr.f32.mxu0 %v1113
    %2176 = vmatmul.mubr.f32.gmra.mrb[0].mxu0 %v1334
    %v2177 = vpop.f32.mrb[0].mxu0
    %v2178 = vadd.f32 %v1793, %v2177
    %v2179 = vpop.f32.mrb[0].mxu0
    %2180 = vmatprep.mubr.f32.mxu0 %v1114
    %2181 = vmatmul.mubr.f32.gmra.mrb[0].mxu0 %v1335
    %v2182 = vpop.f32.mrb[0].mxu0
    %v2183 = vadd.f32 %v1798, %v2182
    %v2184 = vpop.f32.mrb[0].mxu0
    %2185 = vmatprep.mubr.f32.mxu0 %v1115
    %2186 = vmatmul.mubr.f32.gmra.mrb[0].mxu0 %v1336
    %v2187 = vpop.f32.mrb[0].mxu0
    %v2188 = vadd.f32 %v1803, %v2187
    %v2189 = vpop.f32.mrb[0].mxu0
    %2190 = vmatprep.mubr.f32.mxu0 %v1116
    %2191 = vmatmul.mubr.f32.gmra.mrb[0].mxu0 %v1337
    %v2192 = vpop.f32.mrb[0].mxu0
    %v2193 = vadd.f32 %v1808, %v2192
    %v2194 = vpop.f32.mrb[0].mxu0
    %2195 = vmatprep.mubr.f32.mxu0 %v1117
    %2196 = vmatmul.mubr.f32.gmra.mrb[0].mxu0 %v1338
    %v2197 = vpop.f32.mrb[0].mxu0
    %v2198 = vadd.f32 %v1813, %v2197
    %v2199 = vpop.f32.mrb[0].mxu0
    %2200 = vmatprep.mubr.f32.mxu0 %v1118
    %2201 = vmatmul.mubr.f32.gmra.mrb[0].mxu0 %v1339
    %v2202 = vpop.f32.mrb[0].mxu0
    %v2203 = vadd.f32 %v1818, %v2202
    %v2204 = vpop.f32.mrb[0].mxu0
    %2205 = vmatprep.mubr.f32.mxu0 %v1119
    %2206 = vmatmul.mubr.f32.gmra.mrb[0].mxu0 %v1340
    %v2207 = vpop.f32.mrb[0].mxu0
    %v2208 = vadd.f32 %v1823, %v2207
    %v2209 = vpop.f32.mrb[0].mxu0
    %2210 = vmatprep.mubr.f32.mxu0 %v1120
    %2211 = vmatmul.mubr.f32.gmra.mrb[0].mxu0 %v1341
    %v2212 = vpop.f32.mrb[0].mxu0
    %v2213 = vadd.f32 %v1828, %v2212
    %v2214 = vpop.f32.mrb[0].mxu0
    %2215 = vmatprep.mubr.f32.mxu0 %v1121
    %2216 = vmatmul.mubr.f32.gmra.mrb[0].mxu0 %v1342
    %v2217 = vpop.f32.mrb[0].mxu0
    %v2218 = vadd.f32 %v1833, %v2217
    %v2219 = vpop.f32.mrb[0].mxu0
    %2220 = vmatprep.mubr.f32.mxu0 %v1122
    %2221 = vmatmul.mubr.f32.gmra.mrb[0].mxu0 %v1343
    %v2222 = vpop.f32.mrb[0].mxu0
    %v2223 = vadd.f32 %v1838, %v2222
    %v2224 = vpop.f32.mrb[0].mxu0
    %2225 = vmatprep.mubr.f32.mxu0 %v1123
    %2226 = vmatmul.mubr.f32.gmra.mrb[0].mxu0 %v1344
    %v2227 = vpop.f32.mrb[0].mxu0
    %v2228 = vadd.f32 %v1843, %v2227
    %v2229 = vpop.f32.mrb[0].mxu0
    %2230 = vmatprep.mubr.f32.mxu0 %v1124
    %2231 = vmatmul.mubr.f32.gmra.mrb[0].mxu0 %v1345
    %v2232 = vpop.f32.mrb[0].mxu0
    %v2233 = vadd.f32 %v1848, %v2232
    %v2234 = vpop.f32.mrb[0].mxu0
    %2235 = vmatprep.mubr.f32.mxu0 %v1125
    %2236 = vmatmul.mubr.f32.gmra.mrb[0].mxu0 %v1346
    %v2237 = vpop.f32.mrb[0].mxu0
    %v2238 = vadd.f32 %v1853, %v2237
    %v2239 = vpop.f32.mrb[0].mxu0
    %2240 = vmatprep.mubr.f32.mxu0 %v1126
    %2241 = vmatmul.mubr.f32.gmra.mrb[0].mxu0 %v1347
    %v2242 = vpop.f32.mrb[0].mxu0
    %v2243 = vadd.f32 %v1858, %v2242
    %v2244 = vpop.f32.mrb[0].mxu0
    %2245 = vmatprep.mubr.f32.mxu0 %v1127
    %2246 = vmatmul.mubr.f32.gmra.mrb[0].mxu0 %v1348
    %v2247 = vpop.f32.mrb[0].mxu0
    %v2248 = vadd.f32 %v1863, %v2247
    %v2249 = vpop.f32.mrb[0].mxu0
    %2250 = vmatprep.mubr.f32.mxu0 %v1128
    %2251 = vmatmul.mubr.f32.gmra.mrb[0].mxu0 %v1349
    %v2252 = vpop.f32.mrb[0].mxu0
    %v2253 = vadd.f32 %v1868, %v2252
    %v2254 = vpop.f32.mrb[0].mxu0
    %2255 = vmatprep.mubr.f32.mxu0 %v1129
    %2256 = vmatmul.mubr.f32.gmra.mrb[0].mxu0 %v1350
    %v2257 = vpop.f32.mrb[0].mxu0
    %v2258 = vadd.f32 %v1873, %v2257
    %v2259 = vpop.f32.mrb[0].mxu0
    %2260 = vmatprep.mubr.f32.mxu0 %v1130
    %2261 = vmatmul.mubr.f32.gmra.mrb[0].mxu0 %v1351
    %v2262 = vpop.f32.mrb[0].mxu0
    %v2263 = vadd.f32 %v1878, %v2262
    %v2264 = vpop.f32.mrb[0].mxu0
    %2265 = vmatprep.mubr.f32.mxu0 %v1131
    %2266 = vmatmul.mubr.f32.gmra.mrb[0].mxu0 %v1352
    %v2267 = vpop.f32.mrb[0].mxu0
    %v2268 = vadd.f32 %v1883, %v2267
    %v2269 = vpop.f32.mrb[0].mxu0
    %2270 = vdwg.mxu0
    %2271 = vmatprep.subr.mxu0 0.0
    %2272 = vmatpush1.msra.mxu0 %v1421
    %2273 = vmatprep.subr.mxu0 0.0
    %2274 = vmatpush1.msra.mxu0 %v1422
    %2275 = vmatprep.subr.mxu0 0.0
    %2276 = vmatpush1.msra.mxu0 %v1423
    %2277 = vmatprep.subr.mxu0 0.0
    %2278 = vmatpush1.msra.mxu0 %v1424
    %2279 = vmatprep.subr.mxu0 0.0
    %2280 = vmatpush1.msra.mxu0 %v1425
    %2281 = vmatprep.subr.mxu0 0.0
    %2282 = vmatpush1.msra.mxu0 %v1426
    %2283 = vmatprep.subr.mxu0 0.0
    %2284 = vmatpush1.msra.mxu0 %v1427
    %2285 = vmatprep.subr.mxu0 0.0
    %2286 = vmatpush1.msra.mxu0 %v1428
    %2287 = vmatprep.subr.mxu0 0.0
    %2288 = vmatpush1.msra.mxu0 %v1429
    %2289 = vmatprep.subr.mxu0 0.0
    %2290 = vmatpush1.msra.mxu0 %v1430
    %2291 = vmatprep.subr.mxu0 0.0
    %2292 = vmatpush1.msra.mxu0 %v1431
    %2293 = vmatprep.subr.mxu0 0.0
    %2294 = vmatpush1.msra.mxu0 %v1432
    %2295 = vmatprep.subr.mxu0 0.0
    %2296 = vmatpush1.msra.mxu0 %v1433
    %2297 = vmatprep.subr.mxu0 0.0
    %2298 = vmatpush1.msra.mxu0 %v1434
    %2299 = vmatprep.subr.mxu0 0.0
    %2300 = vmatpush1.msra.mxu0 %v1435
    %2301 = vmatprep.subr.mxu0 0.0
    %2302 = vmatpush1.msra.mxu0 %v1436
    %2303 = vmatprep.subr.mxu0 0.0
    %2304 = vmatpush1.msra.mxu0 %v1437
    %2305 = vmatprep.subr.mxu0 0.0
    %2306 = vmatpush1.msra.mxu0 %v1438
    %2307 = vmatprep.subr.mxu0 0.0
    %2308 = vmatpush1.msra.mxu0 %v1439
    %2309 = vmatprep.subr.mxu0 0.0
    %2310 = vmatpush1.msra.mxu0 %v1440
    %2311 = vmatprep.subr.mxu0 0.0
    %2312 = vmatpush1.msra.mxu0 %v1441
    %2313 = vmatprep.subr.mxu0 0.0
    %2314 = vmatpush1.msra.mxu0 %v1442
    %2315 = vmatprep.subr.mxu0 0.0
    %2316 = vmatpush1.msra.mxu0 %v1443
    %2317 = vmatprep.subr.mxu0 0.0
    %2318 = vmatpush1.msra.mxu0 %v1444
    %2319 = vmatprep.subr.mxu0 0.0
    %2320 = vmatpush1.msra.mxu0 %v1445
    %2321 = vmatprep.subr.mxu0 0.0
    %2322 = vmatpush1.msra.mxu0 %v1446
    %2323 = vmatprep.subr.mxu0 0.0
    %2324 = vmatpush1.msra.mxu0 %v1447
    %2325 = vmatprep.subr.mxu0 0.0
    %2326 = vmatpush1.msra.mxu0 %v1448
    %2327 = vmatprep.subr.mxu0 0.0
    %2328 = vmatpush1.msra.mxu0 %v1449
    %2329 = vmatprep.subr.mxu0 0.0
    %2330 = vmatpush1.msra.mxu0 %v1450
    %2331 = vmatprep.subr.mxu0 0.0
    %2332 = vmatpush1.msra.mxu0 %v1451
    %2333 = vmatprep.subr.mxu0 0.0
    %2334 = vmatpush1.msra.mxu0 %v1452
    %2335 = vmatprep.mubr.f32.mxu0 %v1287
    %2336 = vmatmul.mubr.f32.gmra.mrb[0].mxu0 %v838
    %v2337 = vpop.f32.mrb[0].mxu0
    %v2338 = vadd.f32 %v1953, %v2337
    %v2339 = vpop.f32.mrb[0].mxu0
    %2340 = vmatprep.mubr.f32.mxu0 %v1288
    %2341 = vmatmul.mubr.f32.gmra.mrb[0].mxu0 %v839
    %v2342 = vpop.f32.mrb[0].mxu0
    %v2343 = vadd.f32 %v1958, %v2342
    %v2344 = vpop.f32.mrb[0].mxu0
    %2345 = vmatprep.mubr.f32.mxu0 %v1289
    %2346 = vmatmul.mubr.f32.gmra.mrb[0].mxu0 %v840
    %v2347 = vpop.f32.mrb[0].mxu0
    %v2348 = vadd.f32 %v1963, %v2347
    %v2349 = vpop.f32.mrb[0].mxu0
    %2350 = vmatprep.mubr.f32.mxu0 %v1290
    %2351 = vmatmul.mubr.f32.gmra.mrb[0].mxu0 %v841
    %v2352 = vpop.f32.mrb[0].mxu0
    %v2353 = vadd.f32 %v1968, %v2352
    %v2354 = vpop.f32.mrb[0].mxu0
    %2355 = vmatprep.mubr.f32.mxu0 %v1291
    %2356 = vmatmul.mubr.f32.gmra.mrb[0].mxu0 %v842
    %v2357 = vpop.f32.mrb[0].mxu0
    %v2358 = vadd.f32 %v1973, %v2357
    %v2359 = vpop.f32.mrb[0].mxu0
    %2360 = vmatprep.mubr.f32.mxu0 %v1292
    %2361 = vmatmul.mubr.f32.gmra.mrb[0].mxu0 %v843
    %v2362 = vpop.f32.mrb[0].mxu0
    %v2363 = vadd.f32 %v1978, %v2362
    %v2364 = vpop.f32.mrb[0].mxu0
    %2365 = vmatprep.mubr.f32.mxu0 %v1293
    %2366 = vmatmul.mubr.f32.gmra.mrb[0].mxu0 %v844
    %v2367 = vpop.f32.mrb[0].mxu0
    %v2368 = vadd.f32 %v1983, %v2367
    %v2369 = vpop.f32.mrb[0].mxu0
    %2370 = vmatprep.mubr.f32.mxu0 %v1294
    %2371 = vmatmul.mubr.f32.gmra.mrb[0].mxu0 %v845
    %v2372 = vpop.f32.mrb[0].mxu0
    %v2373 = vadd.f32 %v1988, %v2372
    %v2374 = vpop.f32.mrb[0].mxu0
    %2375 = vmatprep.mubr.f32.mxu0 %v1295
    %2376 = vmatmul.mubr.f32.gmra.mrb[0].mxu0 %v846
    %v2377 = vpop.f32.mrb[0].mxu0
    %v2378 = vadd.f32 %v1993, %v2377
    %v2379 = vpop.f32.mrb[0].mxu0
    %2380 = vmatprep.mubr.f32.mxu0 %v1296
    %2381 = vmatmul.mubr.f32.gmra.mrb[0].mxu0 %v847
    %v2382 = vpop.f32.mrb[0].mxu0
    %v2383 = vadd.f32 %v1998, %v2382
    %v2384 = vpop.f32.mrb[0].mxu0
    %2385 = vmatprep.mubr.f32.mxu0 %v1297
    %2386 = vmatmul.mubr.f32.gmra.mrb[0].mxu0 %v848
    %v2387 = vpop.f32.mrb[0].mxu0
    %v2388 = vadd.f32 %v2003, %v2387
    %v2389 = vpop.f32.mrb[0].mxu0
    %2390 = vmatprep.mubr.f32.mxu0 %v1298
    %2391 = vmatmul.mubr.f32.gmra.mrb[0].mxu0 %v849
    %v2392 = vpop.f32.mrb[0].mxu0
    %v2393 = vadd.f32 %v2008, %v2392
    %v2394 = vpop.f32.mrb[0].mxu0
    %2395 = vmatprep.mubr.f32.mxu0 %v1299
    %2396 = vmatmul.mubr.f32.gmra.mrb[0].mxu0 %v850
    %v2397 = vpop.f32.mrb[0].mxu0
    %v2398 = vadd.f32 %v2013, %v2397
    %v2399 = vpop.f32.mrb[0].mxu0
    %2400 = vmatprep.mubr.f32.mxu0 %v1300
    %2401 = vmatmul.mubr.f32.gmra.mrb[0].mxu0 %v851
    %v2402 = vpop.f32.mrb[0].mxu0
    %v2403 = vadd.f32 %v2018, %v2402
    %v2404 = vpop.f32.mrb[0].mxu0
    %2405 = vmatprep.mubr.f32.mxu0 %v1301
    %2406 = vmatmul.mubr.f32.gmra.mrb[0].mxu0 %v852
    %v2407 = vpop.f32.mrb[0].mxu0
    %v2408 = vadd.f32 %v2023, %v2407
    %v2409 = vpop.f32.mrb[0].mxu0
    %2410 = vmatprep.mubr.f32.mxu0 %v1302
    %2411 = vmatmul.mubr.f32.gmra.mrb[0].mxu0 %v853
    %v2412 = vpop.f32.mrb[0].mxu0
    %v2413 = vadd.f32 %v2028, %v2412
    %v2414 = vpop.f32.mrb[0].mxu0
    %2415 = vmatprep.mubr.f32.mxu0 %v1303
    %2416 = vmatmul.mubr.f32.gmra.mrb[0].mxu0 %v854
    %v2417 = vpop.f32.mrb[0].mxu0
    %v2418 = vadd.f32 %v2033, %v2417
    %v2419 = vpop.f32.mrb[0].mxu0
    %2420 = vmatprep.mubr.f32.mxu0 %v1304
    %2421 = vmatmul.mubr.f32.gmra.mrb[0].mxu0 %v855
    %v2422 = vpop.f32.mrb[0].mxu0
    %v2423 = vadd.f32 %v2038, %v2422
    %v2424 = vpop.f32.mrb[0].mxu0
    %2425 = vmatprep.mubr.f32.mxu0 %v1305
    %2426 = vmatmul.mubr.f32.gmra.mrb[0].mxu0 %v856
    %v2427 = vpop.f32.mrb[0].mxu0
    %v2428 = vadd.f32 %v2043, %v2427
    %v2429 = vpop.f32.mrb[0].mxu0
    %2430 = vmatprep.mubr.f32.mxu0 %v1306
    %2431 = vmatmul.mubr.f32.gmra.mrb[0].mxu0 %v857
    %v2432 = vpop.f32.mrb[0].mxu0
    %v2433 = vadd.f32 %v2048, %v2432
    %v2434 = vpop.f32.mrb[0].mxu0
    %2435 = vmatprep.mubr.f32.mxu0 %v1307
    %2436 = vmatmul.mubr.f32.gmra.mrb[0].mxu0 %v858
    %v2437 = vpop.f32.mrb[0].mxu0
    %v2438 = vadd.f32 %v2053, %v2437
    %v2439 = vpop.f32.mrb[0].mxu0
    %2440 = vmatprep.mubr.f32.mxu0 %v1308
    %2441 = vmatmul.mubr.f32.gmra.mrb[0].mxu0 %v859
    %v2442 = vpop.f32.mrb[0].mxu0
    %v2443 = vadd.f32 %v2058, %v2442
    %v2444 = vpop.f32.mrb[0].mxu0
    %2445 = vmatprep.mubr.f32.mxu0 %v1309
    %2446 = vmatmul.mubr.f32.gmra.mrb[0].mxu0 %v860
    %v2447 = vpop.f32.mrb[0].mxu0
    %v2448 = vadd.f32 %v2063, %v2447
    %v2449 = vpop.f32.mrb[0].mxu0
    %2450 = vmatprep.mubr.f32.mxu0 %v1310
    %2451 = vmatmul.mubr.f32.gmra.mrb[0].mxu0 %v861
    %v2452 = vpop.f32.mrb[0].mxu0
    %v2453 = vadd.f32 %v2068, %v2452
    %v2454 = vpop.f32.mrb[0].mxu0
    %2455 = vmatprep.mubr.f32.mxu0 %v1311
    %2456 = vmatmul.mubr.f32.gmra.mrb[0].mxu0 %v862
    %v2457 = vpop.f32.mrb[0].mxu0
    %v2458 = vadd.f32 %v2073, %v2457
    %v2459 = vpop.f32.mrb[0].mxu0
    %2460 = vmatprep.mubr.f32.mxu0 %v1312
    %2461 = vmatmul.mubr.f32.gmra.mrb[0].mxu0 %v863
    %v2462 = vpop.f32.mrb[0].mxu0
    %v2463 = vadd.f32 %v2078, %v2462
    %v2464 = vpop.f32.mrb[0].mxu0
    %2465 = vmatprep.mubr.f32.mxu0 %v1313
    %2466 = vmatmul.mubr.f32.gmra.mrb[0].mxu0 %v864
    %v2467 = vpop.f32.mrb[0].mxu0
    %v2468 = vadd.f32 %v2083, %v2467
    %v2469 = vpop.f32.mrb[0].mxu0
    %2470 = vmatprep.mubr.f32.mxu0 %v1314
    %2471 = vmatmul.mubr.f32.gmra.mrb[0].mxu0 %v865
    %v2472 = vpop.f32.mrb[0].mxu0
    %v2473 = vadd.f32 %v2088, %v2472
    %v2474 = vpop.f32.mrb[0].mxu0
    %2475 = vmatprep.mubr.f32.mxu0 %v1315
    %2476 = vmatmul.mubr.f32.gmra.mrb[0].mxu0 %v866
    %v2477 = vpop.f32.mrb[0].mxu0
    %v2478 = vadd.f32 %v2093, %v2477
    %v2479 = vpop.f32.mrb[0].mxu0
    %2480 = vmatprep.mubr.f32.mxu0 %v1316
    %2481 = vmatmul.mubr.f32.gmra.mrb[0].mxu0 %v867
    %v2482 = vpop.f32.mrb[0].mxu0
    %v2483 = vadd.f32 %v2098, %v2482
    %v2484 = vpop.f32.mrb[0].mxu0
    %2485 = vmatprep.mubr.f32.mxu0 %v1317
    %2486 = vmatmul.mubr.f32.gmra.mrb[0].mxu0 %v868
    %v2487 = vpop.f32.mrb[0].mxu0
    %v2488 = vadd.f32 %v2103, %v2487
    %v2489 = vpop.f32.mrb[0].mxu0
    %2490 = vmatprep.mubr.f32.mxu0 %v1318
    %2491 = vmatmul.mubr.f32.gmra.mrb[0].mxu0 %v869
    %v2492 = vpop.f32.mrb[0].mxu0
    %v2493 = vadd.f32 %v2108, %v2492
    %v2494 = vpop.f32.mrb[0].mxu0
    %2495 = vmatprep.mubr.f32.mxu0 %v1323
    %2496 = vmatmul.mubr.f32.gmra.mrb[0].mxu0 %v874
    %v2497 = vpop.f32.mrb[0].mxu0
    %v2498 = vadd.f32 %v2113, %v2497
    %v2499 = vpop.f32.mrb[0].mxu0
    %2500 = vmatprep.mubr.f32.mxu0 %v1324
    %2501 = vmatmul.mubr.f32.gmra.mrb[0].mxu0 %v875
    %v2502 = vpop.f32.mrb[0].mxu0
    %v2503 = vadd.f32 %v2118, %v2502
    %v2504 = vpop.f32.mrb[0].mxu0
    %2505 = vmatprep.mubr.f32.mxu0 %v1325
    %2506 = vmatmul.mubr.f32.gmra.mrb[0].mxu0 %v876
    %v2507 = vpop.f32.mrb[0].mxu0
    %v2508 = vadd.f32 %v2123, %v2507
    %v2509 = vpop.f32.mrb[0].mxu0
    %2510 = vmatprep.mubr.f32.mxu0 %v1326
    %2511 = vmatmul.mubr.f32.gmra.mrb[0].mxu0 %v877
    %v2512 = vpop.f32.mrb[0].mxu0
    %v2513 = vadd.f32 %v2128, %v2512
    %v2514 = vpop.f32.mrb[0].mxu0
    %2515 = vmatprep.mubr.f32.mxu0 %v1327
    %2516 = vmatmul.mubr.f32.gmra.mrb[0].mxu0 %v878
    %v2517 = vpop.f32.mrb[0].mxu0
    %v2518 = vadd.f32 %v2133, %v2517
    %v2519 = vpop.f32.mrb[0].mxu0
    %2520 = vmatprep.mubr.f32.mxu0 %v1328
    %2521 = vmatmul.mubr.f32.gmra.mrb[0].mxu0 %v879
    %v2522 = vpop.f32.mrb[0].mxu0
    %v2523 = vadd.f32 %v2138, %v2522
    %v2524 = vpop.f32.mrb[0].mxu0
    %2525 = vmatprep.mubr.f32.mxu0 %v1329
    %2526 = vmatmul.mubr.f32.gmra.mrb[0].mxu0 %v880
    %v2527 = vpop.f32.mrb[0].mxu0
    %v2528 = vadd.f32 %v2143, %v2527
    %v2529 = vpop.f32.mrb[0].mxu0
    %2530 = vmatprep.mubr.f32.mxu0 %v1330
    %2531 = vmatmul.mubr.f32.gmra.mrb[0].mxu0 %v881
    %v2532 = vpop.f32.mrb[0].mxu0
    %v2533 = vadd.f32 %v2148, %v2532
    %v2534 = vpop.f32.mrb[0].mxu0
    %2535 = vmatprep.mubr.f32.mxu0 %v1331
    %2536 = vmatmul.mubr.f32.gmra.mrb[0].mxu0 %v882
    %v2537 = vpop.f32.mrb[0].mxu0
    %v2538 = vadd.f32 %v2153, %v2537
    %v2539 = vpop.f32.mrb[0].mxu0
    %2540 = vmatprep.mubr.f32.mxu0 %v1332
    %2541 = vmatmul.mubr.f32.gmra.mrb[0].mxu0 %v883
    %v2542 = vpop.f32.mrb[0].mxu0
    %v2543 = vadd.f32 %v2158, %v2542
    %v2544 = vpop.f32.mrb[0].mxu0
    %2545 = vmatprep.mubr.f32.mxu0 %v1333
    %2546 = vmatmul.mubr.f32.gmra.mrb[0].mxu0 %v884
    %v2547 = vpop.f32.mrb[0].mxu0
    %v2548 = vadd.f32 %v2163, %v2547
    %v2549 = vpop.f32.mrb[0].mxu0
    %2550 = vmatprep.mubr.f32.mxu0 %v1334
    %2551 = vmatmul.mubr.f32.gmra.mrb[0].mxu0 %v885
    %v2552 = vpop.f32.mrb[0].mxu0
    %v2553 = vadd.f32 %v2168, %v2552
    %v2554 = vpop.f32.mrb[0].mxu0
    %2555 = vmatprep.mubr.f32.mxu0 %v1335
    %2556 = vmatmul.mubr.f32.gmra.mrb[0].mxu0 %v886
    %v2557 = vpop.f32.mrb[0].mxu0
    %v2558 = vadd.f32 %v2173, %v2557
    %v2559 = vpop.f32.mrb[0].mxu0
    %2560 = vmatprep.mubr.f32.mxu0 %v1336
    %2561 = vmatmul.mubr.f32.gmra.mrb[0].mxu0 %v887
    %v2562 = vpop.f32.mrb[0].mxu0
    %v2563 = vadd.f32 %v2178, %v2562
    %v2564 = vpop.f32.mrb[0].mxu0
    %2565 = vmatprep.mubr.f32.mxu0 %v1337
    %2566 = vmatmul.mubr.f32.gmra.mrb[0].mxu0 %v888
    %v2567 = vpop.f32.mrb[0].mxu0
    %v2568 = vadd.f32 %v2183, %v2567
    %v2569 = vpop.f32.mrb[0].mxu0
    %2570 = vmatprep.mubr.f32.mxu0 %v1338
    %2571 = vmatmul.mubr.f32.gmra.mrb[0].mxu0 %v889
    %v2572 = vpop.f32.mrb[0].mxu0
    %v2573 = vadd.f32 %v2188, %v2572
    %v2574 = vpop.f32.mrb[0].mxu0
    %2575 = vmatprep.mubr.f32.mxu0 %v1339
    %2576 = vmatmul.mubr.f32.gmra.mrb[0].mxu0 %v890
    %v2577 = vpop.f32.mrb[0].mxu0
    %v2578 = vadd.f32 %v2193, %v2577
    %v2579 = vpop.f32.mrb[0].mxu0
    %2580 = vmatprep.mubr.f32.mxu0 %v1340
    %2581 = vmatmul.mubr.f32.gmra.mrb[0].mxu0 %v891
    %v2582 = vpop.f32.mrb[0].mxu0
    %v2583 = vadd.f32 %v2198, %v2582
    %v2584 = vpop.f32.mrb[0].mxu0
    %2585 = vmatprep.mubr.f32.mxu0 %v1341
    %2586 = vmatmul.mubr.f32.gmra.mrb[0].mxu0 %v892
    %v2587 = vpop.f32.mrb[0].mxu0
    %v2588 = vadd.f32 %v2203, %v2587
    %v2589 = vpop.f32.mrb[0].mxu0
    %2590 = vmatprep.mubr.f32.mxu0 %v1342
    %2591 = vmatmul.mubr.f32.gmra.mrb[0].mxu0 %v893
    %v2592 = vpop.f32.mrb[0].mxu0
    %v2593 = vadd.f32 %v2208, %v2592
    %v2594 = vpop.f32.mrb[0].mxu0
    %2595 = vmatprep.mubr.f32.mxu0 %v1343
    %2596 = vmatmul.mubr.f32.gmra.mrb[0].mxu0 %v894
    %v2597 = vpop.f32.mrb[0].mxu0
    %v2598 = vadd.f32 %v2213, %v2597
    %v2599 = vpop.f32.mrb[0].mxu0
    %2600 = vmatprep.mubr.f32.mxu0 %v1344
    %2601 = vmatmul.mubr.f32.gmra.mrb[0].mxu0 %v895
    %v2602 = vpop.f32.mrb[0].mxu0
    %v2603 = vadd.f32 %v2218, %v2602
    %v2604 = vpop.f32.mrb[0].mxu0
    %2605 = vmatprep.mubr.f32.mxu0 %v1345
    %2606 = vmatmul.mubr.f32.gmra.mrb[0].mxu0 %v896
    %v2607 = vpop.f32.mrb[0].mxu0
    %v2608 = vadd.f32 %v2223, %v2607
    %v2609 = vpop.f32.mrb[0].mxu0
    %2610 = vmatprep.mubr.f32.mxu0 %v1346
    %2611 = vmatmul.mubr.f32.gmra.mrb[0].mxu0 %v897
    %v2612 = vpop.f32.mrb[0].mxu0
    %v2613 = vadd.f32 %v2228, %v2612
    %v2614 = vpop.f32.mrb[0].mxu0
    %2615 = vmatprep.mubr.f32.mxu0 %v1347
    %2616 = vmatmul.mubr.f32.gmra.mrb[0].mxu0 %v898
    %v2617 = vpop.f32.mrb[0].mxu0
    %v2618 = vadd.f32 %v2233, %v2617
    %v2619 = vpop.f32.mrb[0].mxu0
    %2620 = vmatprep.mubr.f32.mxu0 %v1348
    %2621 = vmatmul.mubr.f32.gmra.mrb[0].mxu0 %v899
    %v2622 = vpop.f32.mrb[0].mxu0
    %v2623 = vadd.f32 %v2238, %v2622
    %v2624 = vpop.f32.mrb[0].mxu0
    %2625 = vmatprep.mubr.f32.mxu0 %v1349
    %2626 = vmatmul.mubr.f32.gmra.mrb[0].mxu0 %v900
    %v2627 = vpop.f32.mrb[0].mxu0
    %v2628 = vadd.f32 %v2243, %v2627
    %v2629 = vpop.f32.mrb[0].mxu0
    %2630 = vmatprep.mubr.f32.mxu0 %v1350
    %2631 = vmatmul.mubr.f32.gmra.mrb[0].mxu0 %v901
    %v2632 = vpop.f32.mrb[0].mxu0
    %v2633 = vadd.f32 %v2248, %v2632
    %v2634 = vpop.f32.mrb[0].mxu0
    %2635 = vmatprep.mubr.f32.mxu0 %v1351
    %2636 = vmatmul.mubr.f32.gmra.mrb[0].mxu0 %v902
    %v2637 = vpop.f32.mrb[0].mxu0
    %v2638 = vadd.f32 %v2253, %v2637
    %v2639 = vpop.f32.mrb[0].mxu0
    %2640 = vmatprep.mubr.f32.mxu0 %v1352
    %2641 = vmatmul.mubr.f32.gmra.mrb[0].mxu0 %v903
    %v2642 = vpop.f32.mrb[0].mxu0
    %v2643 = vadd.f32 %v2258, %v2642
    %v2644 = vpop.f32.mrb[0].mxu0
    %2645 = vmatprep.mubr.f32.mxu0 %v1353
    %2646 = vmatmul.mubr.f32.gmra.mrb[0].mxu0 %v904
    %v2647 = vpop.f32.mrb[0].mxu0
    %v2648 = vadd.f32 %v2263, %v2647
    %v2649 = vpop.f32.mrb[0].mxu0
    %2650 = vmatprep.mubr.f32.mxu0 %v1354
    %2651 = vmatmul.mubr.f32.gmra.mrb[0].mxu0 %v905
    %v2652 = vpop.f32.mrb[0].mxu0
    %v2653 = vadd.f32 %v2268, %v2652
    %v2654 = vpop.f32.mrb[0].mxu0
    %2655 = vdwg.mxu0
    %2656 = vmatprep.subr.mxu0 0.0
    %2657 = vmatpush1.msra.mxu0 %v1453
    %2658 = vmatprep.subr.mxu0 0.0
    %2659 = vmatpush1.msra.mxu0 %v1454
    %2660 = vmatprep.subr.mxu0 0.0
    %2661 = vmatpush1.msra.mxu0 %v1455
    %2662 = vmatprep.subr.mxu0 0.0
    %2663 = vmatpush1.msra.mxu0 %v1456
    %2664 = vmatprep.subr.mxu0 0.0
    %2665 = vmatpush1.msra.mxu0 %v1457
    %2666 = vmatprep.subr.mxu0 0.0
    %2667 = vmatpush1.msra.mxu0 %v1458
    %2668 = vmatprep.subr.mxu0 0.0
    %2669 = vmatpush1.msra.mxu0 %v1459
    %2670 = vmatprep.subr.mxu0 0.0
    %2671 = vmatpush1.msra.mxu0 %v1460
    %2672 = vmatprep.subr.mxu0 0.0
    %2673 = vmatpush1.msra.mxu0 %v1461
    %2674 = vmatprep.subr.mxu0 0.0
    %2675 = vmatpush1.msra.mxu0 %v1462
    %2676 = vmatprep.subr.mxu0 0.0
    %2677 = vmatpush1.msra.mxu0 %v1463
    %2678 = vmatprep.subr.mxu0 0.0
    %2679 = vmatpush1.msra.mxu0 %v1464
    %2680 = vmatprep.subr.mxu0 0.0
    %2681 = vmatpush1.msra.mxu0 %v1465
    %2682 = vmatprep.subr.mxu0 0.0
    %2683 = vmatpush1.msra.mxu0 %v1466
    %2684 = vmatprep.subr.mxu0 0.0
    %2685 = vmatpush1.msra.mxu0 %v1467
    %2686 = vmatprep.subr.mxu0 0.0
    %2687 = vmatpush1.msra.mxu0 %v1468
    %2688 = vmatprep.subr.mxu0 0.0
    %2689 = vmatpush1.msra.mxu0 %v1469
    %2690 = vmatprep.subr.mxu0 0.0
    %2691 = vmatpush1.msra.mxu0 %v1470
    %2692 = vmatprep.subr.mxu0 0.0
    %2693 = vmatpush1.msra.mxu0 %v1471
    %2694 = vmatprep.subr.mxu0 0.0
    %2695 = vmatpush1.msra.mxu0 %v1472
    %2696 = vmatprep.subr.mxu0 0.0
    %2697 = vmatpush1.msra.mxu0 %v1473
    %2698 = vmatprep.subr.mxu0 0.0
    %2699 = vmatpush1.msra.mxu0 %v1474
    %2700 = vmatprep.subr.mxu0 0.0
    %2701 = vmatpush1.msra.mxu0 %v1475
    %2702 = vmatprep.subr.mxu0 0.0
    %2703 = vmatpush1.msra.mxu0 %v1476
    %2704 = vmatprep.subr.mxu0 0.0
    %2705 = vmatpush1.msra.mxu0 %v1477
    %2706 = vmatprep.subr.mxu0 0.0
    %2707 = vmatpush1.msra.mxu0 %v1478
    %2708 = vmatprep.subr.mxu0 0.0
    %2709 = vmatpush1.msra.mxu0 %v1479
    %2710 = vmatprep.subr.mxu0 0.0
    %2711 = vmatpush1.msra.mxu0 %v1480
    %2712 = vmatprep.subr.mxu0 0.0
    %2713 = vmatpush1.msra.mxu0 %v1481
    %2714 = vmatprep.subr.mxu0 0.0
    %2715 = vmatpush1.msra.mxu0 %v1482
    %2716 = vmatprep.subr.mxu0 0.0
    %2717 = vmatpush1.msra.mxu0 %v1483
    %2718 = vmatprep.subr.mxu0 0.0
    %2719 = vmatpush1.msra.mxu0 %v1484
    %2720 = vmatprep.mubr.f32.mxu0 %v840
    %2721 = vmatmul.mubr.f32.gmra.mrb[0].mxu0 %v1066
    %v2722 = vpop.f32.mrb[0].mxu0
    %v2723 = vadd.f32 %v2338, %v2722
    %v2724 = vpop.f32.mrb[0].mxu0
    %2725 = vmatprep.mubr.f32.mxu0 %v841
    %2726 = vmatmul.mubr.f32.gmra.mrb[0].mxu0 %v1067
    %v2727 = vpop.f32.mrb[0].mxu0
    %v2728 = vadd.f32 %v2343, %v2727
    %v2729 = vpop.f32.mrb[0].mxu0
    %2730 = vmatprep.mubr.f32.mxu0 %v842
    %2731 = vmatmul.mubr.f32.gmra.mrb[0].mxu0 %v1068
    %v2732 = vpop.f32.mrb[0].mxu0
    %v2733 = vadd.f32 %v2348, %v2732
    %v2734 = vpop.f32.mrb[0].mxu0
    %2735 = vmatprep.mubr.f32.mxu0 %v843
    %2736 = vmatmul.mubr.f32.gmra.mrb[0].mxu0 %v1069
    %v2737 = vpop.f32.mrb[0].mxu0
    %v2738 = vadd.f32 %v2353, %v2737
    %v2739 = vpop.f32.mrb[0].mxu0
    %2740 = vmatprep.mubr.f32.mxu0 %v844
    %2741 = vmatmul.mubr.f32.gmra.mrb[0].mxu0 %v1070
    %v2742 = vpop.f32.mrb[0].mxu0
    %v2743 = vadd.f32 %v2358, %v2742
    %v2744 = vpop.f32.mrb[0].mxu0
    %2745 = vmatprep.mubr.f32.mxu0 %v845
    %2746 = vmatmul.mubr.f32.gmra.mrb[0].mxu0 %v1071
    %v2747 = vpop.f32.mrb[0].mxu0
    %v2748 = vadd.f32 %v2363, %v2747
    %v2749 = vpop.f32.mrb[0].mxu0
    %2750 = vmatprep.mubr.f32.mxu0 %v846
    %2751 = vmatmul.mubr.f32.gmra.mrb[0].mxu0 %v1072
    %v2752 = vpop.f32.mrb[0].mxu0
    %v2753 = vadd.f32 %v2368, %v2752
    %v2754 = vpop.f32.mrb[0].mxu0
    %2755 = vmatprep.mubr.f32.mxu0 %v847
    %2756 = vmatmul.mubr.f32.gmra.mrb[0].mxu0 %v1073
    %v2757 = vpop.f32.mrb[0].mxu0
    %v2758 = vadd.f32 %v2373, %v2757
    %v2759 = vpop.f32.mrb[0].mxu0
    %2760 = vmatprep.mubr.f32.mxu0 %v848
    %2761 = vmatmul.mubr.f32.gmra.mrb[0].mxu0 %v1074
    %v2762 = vpop.f32.mrb[0].mxu0
    %v2763 = vadd.f32 %v2378, %v2762
    %v2764 = vpop.f32.mrb[0].mxu0
    %2765 = vmatprep.mubr.f32.mxu0 %v849
    %2766 = vmatmul.mubr.f32.gmra.mrb[0].mxu0 %v1075
    %v2767 = vpop.f32.mrb[0].mxu0
    %v2768 = vadd.f32 %v2383, %v2767
    %v2769 = vpop.f32.mrb[0].mxu0
    %2770 = vmatprep.mubr.f32.mxu0 %v850
    %2771 = vmatmul.mubr.f32.gmra.mrb[0].mxu0 %v1076
    %v2772 = vpop.f32.mrb[0].mxu0
    %v2773 = vadd.f32 %v2388, %v2772
    %v2774 = vpop.f32.mrb[0].mxu0
    %2775 = vmatprep.mubr.f32.mxu0 %v851
    %2776 = vmatmul.mubr.f32.gmra.mrb[0].mxu0 %v1077
    %v2777 = vpop.f32.mrb[0].mxu0
    %v2778 = vadd.f32 %v2393, %v2777
    %v2779 = vpop.f32.mrb[0].mxu0
    %2780 = vmatprep.mubr.f32.mxu0 %v852
    %2781 = vmatmul.mubr.f32.gmra.mrb[0].mxu0 %v1078
    %v2782 = vpop.f32.mrb[0].mxu0
    %v2783 = vadd.f32 %v2398, %v2782
    %v2784 = vpop.f32.mrb[0].mxu0
    %2785 = vmatprep.mubr.f32.mxu0 %v853
    %2786 = vmatmul.mubr.f32.gmra.mrb[0].mxu0 %v1079
    %v2787 = vpop.f32.mrb[0].mxu0
    %v2788 = vadd.f32 %v2403, %v2787
    %v2789 = vpop.f32.mrb[0].mxu0
    %2790 = vmatprep.mubr.f32.mxu0 %v854
    %2791 = vmatmul.mubr.f32.gmra.mrb[0].mxu0 %v1080
    %v2792 = vpop.f32.mrb[0].mxu0
    %v2793 = vadd.f32 %v2408, %v2792
    %v2794 = vpop.f32.mrb[0].mxu0
    %2795 = vmatprep.mubr.f32.mxu0 %v855
    %2796 = vmatmul.mubr.f32.gmra.mrb[0].mxu0 %v1081
    %v2797 = vpop.f32.mrb[0].mxu0
    %v2798 = vadd.f32 %v2413, %v2797
    %v2799 = vpop.f32.mrb[0].mxu0
    %2800 = vmatprep.mubr.f32.mxu0 %v856
    %2801 = vmatmul.mubr.f32.gmra.mrb[0].mxu0 %v1082
    %v2802 = vpop.f32.mrb[0].mxu0
    %v2803 = vadd.f32 %v2418, %v2802
    %v2804 = vpop.f32.mrb[0].mxu0
    %2805 = vmatprep.mubr.f32.mxu0 %v857
    %2806 = vmatmul.mubr.f32.gmra.mrb[0].mxu0 %v1083
    %v2807 = vpop.f32.mrb[0].mxu0
    %v2808 = vadd.f32 %v2423, %v2807
    %v2809 = vpop.f32.mrb[0].mxu0
    %2810 = vmatprep.mubr.f32.mxu0 %v858
    %2811 = vmatmul.mubr.f32.gmra.mrb[0].mxu0 %v1084
    %v2812 = vpop.f32.mrb[0].mxu0
    %v2813 = vadd.f32 %v2428, %v2812
    %v2814 = vpop.f32.mrb[0].mxu0
    %2815 = vmatprep.mubr.f32.mxu0 %v859
    %2816 = vmatmul.mubr.f32.gmra.mrb[0].mxu0 %v1085
    %v2817 = vpop.f32.mrb[0].mxu0
    %v2818 = vadd.f32 %v2433, %v2817
    %v2819 = vpop.f32.mrb[0].mxu0
    %2820 = vmatprep.mubr.f32.mxu0 %v860
    %2821 = vmatmul.mubr.f32.gmra.mrb[0].mxu0 %v1086
    %v2822 = vpop.f32.mrb[0].mxu0
    %v2823 = vadd.f32 %v2438, %v2822
    %v2824 = vpop.f32.mrb[0].mxu0
    %2825 = vmatprep.mubr.f32.mxu0 %v861
    %2826 = vmatmul.mubr.f32.gmra.mrb[0].mxu0 %v1087
    %v2827 = vpop.f32.mrb[0].mxu0
    %v2828 = vadd.f32 %v2443, %v2827
    %v2829 = vpop.f32.mrb[0].mxu0
    %2830 = vmatprep.mubr.f32.mxu0 %v862
    %2831 = vmatmul.mubr.f32.gmra.mrb[0].mxu0 %v1088
    %v2832 = vpop.f32.mrb[0].mxu0
    %v2833 = vadd.f32 %v2448, %v2832
    %v2834 = vpop.f32.mrb[0].mxu0
    %2835 = vmatprep.mubr.f32.mxu0 %v863
    %2836 = vmatmul.mubr.f32.gmra.mrb[0].mxu0 %v1089
    %v2837 = vpop.f32.mrb[0].mxu0
    %v2838 = vadd.f32 %v2453, %v2837
    %v2839 = vpop.f32.mrb[0].mxu0
    %2840 = vmatprep.mubr.f32.mxu0 %v864
    %2841 = vmatmul.mubr.f32.gmra.mrb[0].mxu0 %v1090
    %v2842 = vpop.f32.mrb[0].mxu0
    %v2843 = vadd.f32 %v2458, %v2842
    %v2844 = vpop.f32.mrb[0].mxu0
    %2845 = vmatprep.mubr.f32.mxu0 %v865
    %2846 = vmatmul.mubr.f32.gmra.mrb[0].mxu0 %v1091
    %v2847 = vpop.f32.mrb[0].mxu0
    %v2848 = vadd.f32 %v2463, %v2847
    %v2849 = vpop.f32.mrb[0].mxu0
    %2850 = vmatprep.mubr.f32.mxu0 %v866
    %2851 = vmatmul.mubr.f32.gmra.mrb[0].mxu0 %v1092
    %v2852 = vpop.f32.mrb[0].mxu0
    %v2853 = vadd.f32 %v2468, %v2852
    %v2854 = vpop.f32.mrb[0].mxu0
    %2855 = vmatprep.mubr.f32.mxu0 %v867
    %2856 = vmatmul.mubr.f32.gmra.mrb[0].mxu0 %v1093
    %v2857 = vpop.f32.mrb[0].mxu0
    %v2858 = vadd.f32 %v2473, %v2857
    %v2859 = vpop.f32.mrb[0].mxu0
    %2860 = vmatprep.mubr.f32.mxu0 %v868
    %2861 = vmatmul.mubr.f32.gmra.mrb[0].mxu0 %v1094
    %v2862 = vpop.f32.mrb[0].mxu0
    %v2863 = vadd.f32 %v2478, %v2862
    %v2864 = vpop.f32.mrb[0].mxu0
    %2865 = vmatprep.mubr.f32.mxu0 %v869
    %2866 = vmatmul.mubr.f32.gmra.mrb[0].mxu0 %v1095
    %v2867 = vpop.f32.mrb[0].mxu0
    %v2868 = vadd.f32 %v2483, %v2867
    %v2869 = vpop.f32.mrb[0].mxu0
    %2870 = vmatprep.mubr.f32.mxu0 %v870
    %2871 = vmatmul.mubr.f32.gmra.mrb[0].mxu0 %v1096
    %v2872 = vpop.f32.mrb[0].mxu0
    %v2873 = vadd.f32 %v2488, %v2872
    %v2874 = vpop.f32.mrb[0].mxu0
    %2875 = vmatprep.mubr.f32.mxu0 %v871
    %2876 = vmatmul.mubr.f32.gmra.mrb[0].mxu0 %v1097
    %v2877 = vpop.f32.mrb[0].mxu0
    %v2878 = vadd.f32 %v2493, %v2877
    %v2879 = vpop.f32.mrb[0].mxu0
    %2880 = vmatprep.mubr.f32.mxu0 %v876
    %2881 = vmatmul.mubr.f32.gmra.mrb[0].mxu0 %v1102
    %v2882 = vpop.f32.mrb[0].mxu0
    %v2883 = vadd.f32 %v2498, %v2882
    %v2884 = vpop.f32.mrb[0].mxu0
    %2885 = vmatprep.mubr.f32.mxu0 %v877
    %2886 = vmatmul.mubr.f32.gmra.mrb[0].mxu0 %v1103
    %v2887 = vpop.f32.mrb[0].mxu0
    %v2888 = vadd.f32 %v2503, %v2887
    %v2889 = vpop.f32.mrb[0].mxu0
    %2890 = vmatprep.mubr.f32.mxu0 %v878
    %2891 = vmatmul.mubr.f32.gmra.mrb[0].mxu0 %v1104
    %v2892 = vpop.f32.mrb[0].mxu0
    %v2893 = vadd.f32 %v2508, %v2892
    %v2894 = vpop.f32.mrb[0].mxu0
    %2895 = vmatprep.mubr.f32.mxu0 %v879
    %2896 = vmatmul.mubr.f32.gmra.mrb[0].mxu0 %v1105
    %v2897 = vpop.f32.mrb[0].mxu0
    %v2898 = vadd.f32 %v2513, %v2897
    %v2899 = vpop.f32.mrb[0].mxu0
    %2900 = vmatprep.mubr.f32.mxu0 %v880
    %2901 = vmatmul.mubr.f32.gmra.mrb[0].mxu0 %v1106
    %v2902 = vpop.f32.mrb[0].mxu0
    %v2903 = vadd.f32 %v2518, %v2902
    %v2904 = vpop.f32.mrb[0].mxu0
    %2905 = vmatprep.mubr.f32.mxu0 %v881
    %2906 = vmatmul.mubr.f32.gmra.mrb[0].mxu0 %v1107
    %v2907 = vpop.f32.mrb[0].mxu0
    %v2908 = vadd.f32 %v2523, %v2907
    %v2909 = vpop.f32.mrb[0].mxu0
    %2910 = vmatprep.mubr.f32.mxu0 %v882
    %2911 = vmatmul.mubr.f32.gmra.mrb[0].mxu0 %v1108
    %v2912 = vpop.f32.mrb[0].mxu0
    %v2913 = vadd.f32 %v2528, %v2912
    %v2914 = vpop.f32.mrb[0].mxu0
    %2915 = vmatprep.mubr.f32.mxu0 %v883
    %2916 = vmatmul.mubr.f32.gmra.mrb[0].mxu0 %v1109
    %v2917 = vpop.f32.mrb[0].mxu0
    %v2918 = vadd.f32 %v2533, %v2917
    %v2919 = vpop.f32.mrb[0].mxu0
    %2920 = vmatprep.mubr.f32.mxu0 %v884
    %2921 = vmatmul.mubr.f32.gmra.mrb[0].mxu0 %v1110
    %v2922 = vpop.f32.mrb[0].mxu0
    %v2923 = vadd.f32 %v2538, %v2922
    %v2924 = vpop.f32.mrb[0].mxu0
    %2925 = vmatprep.mubr.f32.mxu0 %v885
    %2926 = vmatmul.mubr.f32.gmra.mrb[0].mxu0 %v1111
    %v2927 = vpop.f32.mrb[0].mxu0
    %v2928 = vadd.f32 %v2543, %v2927
    %v2929 = vpop.f32.mrb[0].mxu0
    %2930 = vmatprep.mubr.f32.mxu0 %v886
    %2931 = vmatmul.mubr.f32.gmra.mrb[0].mxu0 %v1112
    %v2932 = vpop.f32.mrb[0].mxu0
    %v2933 = vadd.f32 %v2548, %v2932
    %v2934 = vpop.f32.mrb[0].mxu0
    %2935 = vmatprep.mubr.f32.mxu0 %v887
    %2936 = vmatmul.mubr.f32.gmra.mrb[0].mxu0 %v1113
    %v2937 = vpop.f32.mrb[0].mxu0
    %v2938 = vadd.f32 %v2553, %v2937
    %v2939 = vpop.f32.mrb[0].mxu0
    %2940 = vmatprep.mubr.f32.mxu0 %v888
    %2941 = vmatmul.mubr.f32.gmra.mrb[0].mxu0 %v1114
    %v2942 = vpop.f32.mrb[0].mxu0
    %v2943 = vadd.f32 %v2558, %v2942
    %v2944 = vpop.f32.mrb[0].mxu0
    %2945 = vmatprep.mubr.f32.mxu0 %v889
    %2946 = vmatmul.mubr.f32.gmra.mrb[0].mxu0 %v1115
    %v2947 = vpop.f32.mrb[0].mxu0
    %v2948 = vadd.f32 %v2563, %v2947
    %v2949 = vpop.f32.mrb[0].mxu0
    %2950 = vmatprep.mubr.f32.mxu0 %v890
    %2951 = vmatmul.mubr.f32.gmra.mrb[0].mxu0 %v1116
    %v2952 = vpop.f32.mrb[0].mxu0
    %v2953 = vadd.f32 %v2568, %v2952
    %v2954 = vpop.f32.mrb[0].mxu0
    %2955 = vmatprep.mubr.f32.mxu0 %v891
    %2956 = vmatmul.mubr.f32.gmra.mrb[0].mxu0 %v1117
    %v2957 = vpop.f32.mrb[0].mxu0
    %v2958 = vadd.f32 %v2573, %v2957
    %v2959 = vpop.f32.mrb[0].mxu0
    %2960 = vmatprep.mubr.f32.mxu0 %v892
    %2961 = vmatmul.mubr.f32.gmra.mrb[0].mxu0 %v1118
    %v2962 = vpop.f32.mrb[0].mxu0
    %v2963 = vadd.f32 %v2578, %v2962
    %v2964 = vpop.f32.mrb[0].mxu0
    %2965 = vmatprep.mubr.f32.mxu0 %v893
    %2966 = vmatmul.mubr.f32.gmra.mrb[0].mxu0 %v1119
    %v2967 = vpop.f32.mrb[0].mxu0
    %v2968 = vadd.f32 %v2583, %v2967
    %v2969 = vpop.f32.mrb[0].mxu0
    %2970 = vmatprep.mubr.f32.mxu0 %v894
    %2971 = vmatmul.mubr.f32.gmra.mrb[0].mxu0 %v1120
    %v2972 = vpop.f32.mrb[0].mxu0
    %v2973 = vadd.f32 %v2588, %v2972
    %v2974 = vpop.f32.mrb[0].mxu0
    %2975 = vmatprep.mubr.f32.mxu0 %v895
    %2976 = vmatmul.mubr.f32.gmra.mrb[0].mxu0 %v1121
    %v2977 = vpop.f32.mrb[0].mxu0
    %v2978 = vadd.f32 %v2593, %v2977
    %v2979 = vpop.f32.mrb[0].mxu0
    %2980 = vmatprep.mubr.f32.mxu0 %v896
    %2981 = vmatmul.mubr.f32.gmra.mrb[0].mxu0 %v1122
    %v2982 = vpop.f32.mrb[0].mxu0
    %v2983 = vadd.f32 %v2598, %v2982
    %v2984 = vpop.f32.mrb[0].mxu0
    %2985 = vmatprep.mubr.f32.mxu0 %v897
    %2986 = vmatmul.mubr.f32.gmra.mrb[0].mxu0 %v1123
    %v2987 = vpop.f32.mrb[0].mxu0
    %v2988 = vadd.f32 %v2603, %v2987
    %v2989 = vpop.f32.mrb[0].mxu0
    %2990 = vmatprep.mubr.f32.mxu0 %v898
    %2991 = vmatmul.mubr.f32.gmra.mrb[0].mxu0 %v1124
    %v2992 = vpop.f32.mrb[0].mxu0
    %v2993 = vadd.f32 %v2608, %v2992
    %v2994 = vpop.f32.mrb[0].mxu0
    %2995 = vmatprep.mubr.f32.mxu0 %v899
    %2996 = vmatmul.mubr.f32.gmra.mrb[0].mxu0 %v1125
    %v2997 = vpop.f32.mrb[0].mxu0
    %v2998 = vadd.f32 %v2613, %v2997
    %v2999 = vpop.f32.mrb[0].mxu0
    %3000 = vmatprep.mubr.f32.mxu0 %v900
    %3001 = vmatmul.mubr.f32.gmra.mrb[0].mxu0 %v1126
    %v3002 = vpop.f32.mrb[0].mxu0
    %v3003 = vadd.f32 %v2618, %v3002
    %v3004 = vpop.f32.mrb[0].mxu0
    %3005 = vmatprep.mubr.f32.mxu0 %v901
    %3006 = vmatmul.mubr.f32.gmra.mrb[0].mxu0 %v1127
    %v3007 = vpop.f32.mrb[0].mxu0
    %v3008 = vadd.f32 %v2623, %v3007
    %v3009 = vpop.f32.mrb[0].mxu0
    %3010 = vmatprep.mubr.f32.mxu0 %v902
    %3011 = vmatmul.mubr.f32.gmra.mrb[0].mxu0 %v1128
    %v3012 = vpop.f32.mrb[0].mxu0
    %v3013 = vadd.f32 %v2628, %v3012
    %v3014 = vpop.f32.mrb[0].mxu0
    %3015 = vmatprep.mubr.f32.mxu0 %v903
    %3016 = vmatmul.mubr.f32.gmra.mrb[0].mxu0 %v1129
    %v3017 = vpop.f32.mrb[0].mxu0
    %v3018 = vadd.f32 %v2633, %v3017
    %v3019 = vpop.f32.mrb[0].mxu0
    %3020 = vmatprep.mubr.f32.mxu0 %v904
    %3021 = vmatmul.mubr.f32.gmra.mrb[0].mxu0 %v1130
    %v3022 = vpop.f32.mrb[0].mxu0
    %v3023 = vadd.f32 %v2638, %v3022
    %v3024 = vpop.f32.mrb[0].mxu0
    %3025 = vmatprep.mubr.f32.mxu0 %v905
    %3026 = vmatmul.mubr.f32.gmra.mrb[0].mxu0 %v1131
    %v3027 = vpop.f32.mrb[0].mxu0
    %v3028 = vadd.f32 %v2643, %v3027
    %v3029 = vpop.f32.mrb[0].mxu0
    %3030 = vmatprep.mubr.f32.mxu0 %v906
    %3031 = vmatmul.mubr.f32.gmra.mrb[0].mxu0 %v1132
    %v3032 = vpop.f32.mrb[0].mxu0
    %v3033 = vadd.f32 %v2648, %v3032
    %v3034 = vpop.f32.mrb[0].mxu0
    %3035 = vmatprep.mubr.f32.mxu0 %v907
    %3036 = vmatmul.mubr.f32.gmra.mrb[0].mxu0 %v1133
    %v3037 = vpop.f32.mrb[0].mxu0
    %v3038 = vadd.f32 %v2653, %v3037
    %v3039 = vpop.f32.mrb[0].mxu0
    %3040 = vdwg.mxu0
    %3041 = vmatprep.subr.mxu0 0.0
    %3042 = vmatpush1.msra.mxu0 %v1485
    %3043 = vmatprep.subr.mxu0 0.0
    %3044 = vmatpush1.msra.mxu0 %v1486
    %3045 = vmatprep.subr.mxu0 0.0
    %3046 = vmatpush1.msra.mxu0 %v1487
    %3047 = vmatprep.subr.mxu0 0.0
    %3048 = vmatpush1.msra.mxu0 %v1488
    %3049 = vmatprep.subr.mxu0 0.0
    %3050 = vmatpush1.msra.mxu0 %v1489
    %3051 = vmatprep.subr.mxu0 0.0
    %3052 = vmatpush1.msra.mxu0 %v1490
    %3053 = vmatprep.subr.mxu0 0.0
    %3054 = vmatpush1.msra.mxu0 %v1491
    %3055 = vmatprep.subr.mxu0 0.0
    %3056 = vmatpush1.msra.mxu0 %v1492
    %3057 = vmatprep.subr.mxu0 0.0
    %3058 = vmatpush1.msra.mxu0 %v1493
    %3059 = vmatprep.subr.mxu0 0.0
    %3060 = vmatpush1.msra.mxu0 %v1494
    %3061 = vmatprep.subr.mxu0 0.0
    %3062 = vmatpush1.msra.mxu0 %v1495
    %3063 = vmatprep.subr.mxu0 0.0
    %3064 = vmatpush1.msra.mxu0 %v1496
    %3065 = vmatprep.subr.mxu0 0.0
    %3066 = vmatpush1.msra.mxu0 %v1497
    %3067 = vmatprep.subr.mxu0 0.0
    %3068 = vmatpush1.msra.mxu0 %v1498
    %3069 = vmatprep.subr.mxu0 0.0
    %3070 = vmatpush1.msra.mxu0 %v1499
    %3071 = vmatprep.subr.mxu0 0.0
    %3072 = vmatpush1.msra.mxu0 %v1500
    %3073 = vmatprep.subr.mxu0 0.0
    %3074 = vmatpush1.msra.mxu0 0.0
    %3075 = vmatprep.subr.mxu0 0.0
    %3076 = vmatpush1.msra.mxu0 0.0
    %3077 = vmatprep.subr.mxu0 0.0
    %3078 = vmatpush1.msra.mxu0 0.0
    %3079 = vmatprep.subr.mxu0 0.0
    %3080 = vmatpush1.msra.mxu0 0.0
    %3081 = vmatprep.subr.mxu0 0.0
    %3082 = vmatpush1.msra.mxu0 0.0
    %3083 = vmatprep.subr.mxu0 0.0
    %3084 = vmatpush1.msra.mxu0 0.0
    %3085 = vmatprep.subr.mxu0 0.0
    %3086 = vmatpush1.msra.mxu0 0.0
    %3087 = vmatprep.subr.mxu0 0.0
    %3088 = vmatpush1.msra.mxu0 0.0
    %3089 = vmatprep.subr.mxu0 0.0
    %3090 = vmatpush1.msra.mxu0 0.0
    %3091 = vmatprep.subr.mxu0 0.0
    %3092 = vmatpush1.msra.mxu0 0.0
    %3093 = vmatprep.subr.mxu0 0.0
    %3094 = vmatpush1.msra.mxu0 0.0
    %3095 = vmatprep.subr.mxu0 0.0
    %3096 = vmatpush1.msra.mxu0 0.0
    %3097 = vmatprep.subr.mxu0 0.0
    %3098 = vmatpush1.msra.mxu0 0.0
    %3099 = vmatprep.subr.mxu0 0.0
    %3100 = vmatpush1.msra.mxu0 0.0
    %3101 = vmatprep.subr.mxu0 0.0
    %3102 = vmatpush1.msra.mxu0 0.0
    %3103 = vmatprep.subr.mxu0 0.0
    %3104 = vmatpush1.msra.mxu0 0.0
    %3105 = vmatprep.mubr.f32.mxu0 0.0
    %3106 = vmatmul.mubr.f32.gmra.mrb[0].mxu0 %v1289
    %v3107 = vpop.f32.mrb[0].mxu0
    %v3108 = vadd.f32 %v2723, %v3107
    %v3109 = vpop.f32.mrb[0].mxu0
    %3110 = vmatprep.mubr.f32.mxu0 0.0
    %3111 = vmatmul.mubr.f32.gmra.mrb[0].mxu0 %v1290
    %v3112 = vpop.f32.mrb[0].mxu0
    %v3113 = vadd.f32 %v2728, %v3112
    %v3114 = vpop.f32.mrb[0].mxu0
    %3115 = vmatprep.mubr.f32.mxu0 0.0
    %3116 = vmatmul.mubr.f32.gmra.mrb[0].mxu0 %v1291
    %v3117 = vpop.f32.mrb[0].mxu0
    %v3118 = vadd.f32 %v2733, %v3117
    %v3119 = vpop.f32.mrb[0].mxu0
    %3120 = vmatprep.mubr.f32.mxu0 0.0
    %3121 = vmatmul.mubr.f32.gmra.mrb[0].mxu0 %v1292
    %v3122 = vpop.f32.mrb[0].mxu0
    %v3123 = vadd.f32 %v2738, %v3122
    %v3124 = vpop.f32.mrb[0].mxu0
    %3125 = vmatprep.mubr.f32.mxu0 0.0
    %3126 = vmatmul.mubr.f32.gmra.mrb[0].mxu0 %v1293
    %v3127 = vpop.f32.mrb[0].mxu0
    %v3128 = vadd.f32 %v2743, %v3127
    %v3129 = vpop.f32.mrb[0].mxu0
    %3130 = vmatprep.mubr.f32.mxu0 0.0
    %3131 = vmatmul.mubr.f32.gmra.mrb[0].mxu0 %v1294
    %v3132 = vpop.f32.mrb[0].mxu0
    %v3133 = vadd.f32 %v2748, %v3132
    %v3134 = vpop.f32.mrb[0].mxu0
    %3135 = vmatprep.mubr.f32.mxu0 0.0
    %3136 = vmatmul.mubr.f32.gmra.mrb[0].mxu0 %v1295
    %v3137 = vpop.f32.mrb[0].mxu0
    %v3138 = vadd.f32 %v2753, %v3137
    %v3139 = vpop.f32.mrb[0].mxu0
    %3140 = vmatprep.mubr.f32.mxu0 0.0
    %3141 = vmatmul.mubr.f32.gmra.mrb[0].mxu0 %v1296
    %v3142 = vpop.f32.mrb[0].mxu0
    %v3143 = vadd.f32 %v2758, %v3142
    %v3144 = vpop.f32.mrb[0].mxu0
    %3145 = vmatprep.mubr.f32.mxu0 0.0
    %3146 = vmatmul.mubr.f32.gmra.mrb[0].mxu0 %v1297
    %v3147 = vpop.f32.mrb[0].mxu0
    %v3148 = vadd.f32 %v2763, %v3147
    %v3149 = vpop.f32.mrb[0].mxu0
    %3150 = vmatprep.mubr.f32.mxu0 0.0
    %3151 = vmatmul.mubr.f32.gmra.mrb[0].mxu0 %v1298
    %v3152 = vpop.f32.mrb[0].mxu0
    %v3153 = vadd.f32 %v2768, %v3152
    %v3154 = vpop.f32.mrb[0].mxu0
    %3155 = vmatprep.mubr.f32.mxu0 0.0
    %3156 = vmatmul.mubr.f32.gmra.mrb[0].mxu0 %v1299
    %v3157 = vpop.f32.mrb[0].mxu0
    %v3158 = vadd.f32 %v2773, %v3157
    %v3159 = vpop.f32.mrb[0].mxu0
    %3160 = vmatprep.mubr.f32.mxu0 0.0
    %3161 = vmatmul.mubr.f32.gmra.mrb[0].mxu0 %v1300
    %v3162 = vpop.f32.mrb[0].mxu0
    %v3163 = vadd.f32 %v2778, %v3162
    %v3164 = vpop.f32.mrb[0].mxu0
    %3165 = vmatprep.mubr.f32.mxu0 0.0
    %3166 = vmatmul.mubr.f32.gmra.mrb[0].mxu0 %v1301
    %v3167 = vpop.f32.mrb[0].mxu0
    %v3168 = vadd.f32 %v2783, %v3167
    %v3169 = vpop.f32.mrb[0].mxu0
    %3170 = vmatprep.mubr.f32.mxu0 0.0
    %3171 = vmatmul.mubr.f32.gmra.mrb[0].mxu0 %v1302
    %v3172 = vpop.f32.mrb[0].mxu0
    %v3173 = vadd.f32 %v2788, %v3172
    %v3174 = vpop.f32.mrb[0].mxu0
    %3175 = vmatprep.mubr.f32.mxu0 0.0
    %3176 = vmatmul.mubr.f32.gmra.mrb[0].mxu0 %v1303
    %v3177 = vpop.f32.mrb[0].mxu0
    %v3178 = vadd.f32 %v2793, %v3177
    %v3179 = vpop.f32.mrb[0].mxu0
    %3180 = vmatprep.mubr.f32.mxu0 0.0
    %3181 = vmatmul.mubr.f32.gmra.mrb[0].mxu0 %v1304
    %v3182 = vpop.f32.mrb[0].mxu0
    %v3183 = vadd.f32 %v2798, %v3182
    %v3184 = vpop.f32.mrb[0].mxu0
    %3185 = vmatprep.mubr.f32.mxu0 0.0
    %3186 = vmatmul.mubr.f32.gmra.mrb[0].mxu0 %v1305
    %v3187 = vpop.f32.mrb[0].mxu0
    %v3188 = vadd.f32 %v2803, %v3187
    %v3189 = vpop.f32.mrb[0].mxu0
    %3190 = vmatprep.mubr.f32.mxu0 0.0
    %3191 = vmatmul.mubr.f32.gmra.mrb[0].mxu0 %v1306
    %v3192 = vpop.f32.mrb[0].mxu0
    %v3193 = vadd.f32 %v2808, %v3192
    %v3194 = vpop.f32.mrb[0].mxu0
    %3195 = vmatprep.mubr.f32.mxu0 0.0
    %3196 = vmatmul.mubr.f32.gmra.mrb[0].mxu0 %v1307
    %v3197 = vpop.f32.mrb[0].mxu0
    %v3198 = vadd.f32 %v2813, %v3197
    %v3199 = vpop.f32.mrb[0].mxu0
    %3200 = vmatprep.mubr.f32.mxu0 0.0
    %3201 = vmatmul.mubr.f32.gmra.mrb[0].mxu0 %v1308
    %v3202 = vpop.f32.mrb[0].mxu0
    %v3203 = vadd.f32 %v2818, %v3202
    %v3204 = vpop.f32.mrb[0].mxu0
    %3205 = vmatprep.mubr.f32.mxu0 0.0
    %3206 = vmatmul.mubr.f32.gmra.mrb[0].mxu0 %v1309
    %v3207 = vpop.f32.mrb[0].mxu0
    %v3208 = vadd.f32 %v2823, %v3207
    %v3209 = vpop.f32.mrb[0].mxu0
    %3210 = vmatprep.mubr.f32.mxu0 0.0
    %3211 = vmatmul.mubr.f32.gmra.mrb[0].mxu0 %v1310
    %v3212 = vpop.f32.mrb[0].mxu0
    %v3213 = vadd.f32 %v2828, %v3212
    %v3214 = vpop.f32.mrb[0].mxu0
    %3215 = vmatprep.mubr.f32.mxu0 0.0
    %3216 = vmatmul.mubr.f32.gmra.mrb[0].mxu0 %v1311
    %v3217 = vpop.f32.mrb[0].mxu0
    %v3218 = vadd.f32 %v2833, %v3217
    %v3219 = vpop.f32.mrb[0].mxu0
    %3220 = vmatprep.mubr.f32.mxu0 0.0
    %3221 = vmatmul.mubr.f32.gmra.mrb[0].mxu0 %v1312
    %v3222 = vpop.f32.mrb[0].mxu0
    %v3223 = vadd.f32 %v2838, %v3222
    %v3224 = vpop.f32.mrb[0].mxu0
    %3225 = vmatprep.mubr.f32.mxu0 0.0
    %3226 = vmatmul.mubr.f32.gmra.mrb[0].mxu0 %v1313
    %v3227 = vpop.f32.mrb[0].mxu0
    %v3228 = vadd.f32 %v2843, %v3227
    %v3229 = vpop.f32.mrb[0].mxu0
    %3230 = vmatprep.mubr.f32.mxu0 0.0
    %3231 = vmatmul.mubr.f32.gmra.mrb[0].mxu0 %v1314
    %v3232 = vpop.f32.mrb[0].mxu0
    %v3233 = vadd.f32 %v2848, %v3232
    %v3234 = vpop.f32.mrb[0].mxu0
    %3235 = vmatprep.mubr.f32.mxu0 0.0
    %3236 = vmatmul.mubr.f32.gmra.mrb[0].mxu0 %v1315
    %v3237 = vpop.f32.mrb[0].mxu0
    %v3238 = vadd.f32 %v2853, %v3237
    %v3239 = vpop.f32.mrb[0].mxu0
    %3240 = vmatprep.mubr.f32.mxu0 0.0
    %3241 = vmatmul.mubr.f32.gmra.mrb[0].mxu0 %v1316
    %v3242 = vpop.f32.mrb[0].mxu0
    %v3243 = vadd.f32 %v2858, %v3242
    %v3244 = vpop.f32.mrb[0].mxu0
    %3245 = vmatprep.mubr.f32.mxu0 0.0
    %3246 = vmatmul.mubr.f32.gmra.mrb[0].mxu0 %v1317
    %v3247 = vpop.f32.mrb[0].mxu0
    %v3248 = vadd.f32 %v2863, %v3247
    %v3249 = vpop.f32.mrb[0].mxu0
    %3250 = vmatprep.mubr.f32.mxu0 0.0
    %3251 = vmatmul.mubr.f32.gmra.mrb[0].mxu0 %v1318
    %v3252 = vpop.f32.mrb[0].mxu0
    %v3253 = vadd.f32 %v2868, %v3252
    %v3254 = vpop.f32.mrb[0].mxu0
    %3255 = vmatprep.mubr.f32.mxu0 0.0
    %3256 = vmatmul.mubr.f32.gmra.mrb[0].mxu0 %v1319
    %v3257 = vpop.f32.mrb[0].mxu0
    %v3258 = vadd.f32 %v2873, %v3257
    %v3259 = vpop.f32.mrb[0].mxu0
    %3260 = vmatprep.mubr.f32.mxu0 0.0
    %3261 = vmatmul.mubr.f32.gmra.mrb[0].mxu0 %v1320
    %v3262 = vpop.f32.mrb[0].mxu0
    %v3263 = vadd.f32 %v2878, %v3262
    %v3264 = vpop.f32.mrb[0].mxu0
    %3265 = vmatprep.mubr.f32.mxu0 0.0
    %3266 = vmatmul.mubr.f32.gmra.mrb[0].mxu0 %v1325
    %v3267 = vpop.f32.mrb[0].mxu0
    %v3268 = vadd.f32 %v2883, %v3267
    %v3269 = vpop.f32.mrb[0].mxu0
    %3270 = vmatprep.mubr.f32.mxu0 0.0
    %3271 = vmatmul.mubr.f32.gmra.mrb[0].mxu0 %v1326
    %v3272 = vpop.f32.mrb[0].mxu0
    %v3273 = vadd.f32 %v2888, %v3272
    %v3274 = vpop.f32.mrb[0].mxu0
    %3275 = vmatprep.mubr.f32.mxu0 0.0
    %3276 = vmatmul.mubr.f32.gmra.mrb[0].mxu0 %v1327
    %v3277 = vpop.f32.mrb[0].mxu0
    %v3278 = vadd.f32 %v2893, %v3277
    %v3279 = vpop.f32.mrb[0].mxu0
    %3280 = vmatprep.mubr.f32.mxu0 0.0
    %3281 = vmatmul.mubr.f32.gmra.mrb[0].mxu0 %v1328
    %v3282 = vpop.f32.mrb[0].mxu0
    %v3283 = vadd.f32 %v2898, %v3282
    %v3284 = vpop.f32.mrb[0].mxu0
    %3285 = vmatprep.mubr.f32.mxu0 0.0
    %3286 = vmatmul.mubr.f32.gmra.mrb[0].mxu0 %v1329
    %v3287 = vpop.f32.mrb[0].mxu0
    %v3288 = vadd.f32 %v2903, %v3287
    %v3289 = vpop.f32.mrb[0].mxu0
    %3290 = vmatprep.mubr.f32.mxu0 0.0
    %3291 = vmatmul.mubr.f32.gmra.mrb[0].mxu0 %v1330
    %v3292 = vpop.f32.mrb[0].mxu0
    %v3293 = vadd.f32 %v2908, %v3292
    %v3294 = vpop.f32.mrb[0].mxu0
    %3295 = vmatprep.mubr.f32.mxu0 0.0
    %3296 = vmatmul.mubr.f32.gmra.mrb[0].mxu0 %v1331
    %v3297 = vpop.f32.mrb[0].mxu0
    %v3298 = vadd.f32 %v2913, %v3297
    %v3299 = vpop.f32.mrb[0].mxu0
    %3300 = vmatprep.mubr.f32.mxu0 0.0
    %3301 = vmatmul.mubr.f32.gmra.mrb[0].mxu0 %v1332
    %v3302 = vpop.f32.mrb[0].mxu0
    %v3303 = vadd.f32 %v2918, %v3302
    %v3304 = vpop.f32.mrb[0].mxu0
    %3305 = vmatprep.mubr.f32.mxu0 0.0
    %3306 = vmatmul.mubr.f32.gmra.mrb[0].mxu0 %v1333
    %v3307 = vpop.f32.mrb[0].mxu0
    %v3308 = vadd.f32 %v2923, %v3307
    %v3309 = vpop.f32.mrb[0].mxu0
    %3310 = vmatprep.mubr.f32.mxu0 0.0
    %3311 = vmatmul.mubr.f32.gmra.mrb[0].mxu0 %v1334
    %v3312 = vpop.f32.mrb[0].mxu0
    %v3313 = vadd.f32 %v2928, %v3312
    %v3314 = vpop.f32.mrb[0].mxu0
    %3315 = vmatprep.mubr.f32.mxu0 0.0
    %3316 = vmatmul.mubr.f32.gmra.mrb[0].mxu0 %v1335
    %v3317 = vpop.f32.mrb[0].mxu0
    %v3318 = vadd.f32 %v2933, %v3317
    %v3319 = vpop.f32.mrb[0].mxu0
    %3320 = vmatprep.mubr.f32.mxu0 0.0
    %3321 = vmatmul.mubr.f32.gmra.mrb[0].mxu0 %v1336
    %v3322 = vpop.f32.mrb[0].mxu0
    %v3323 = vadd.f32 %v2938, %v3322
    %v3324 = vpop.f32.mrb[0].mxu0
    %3325 = vmatprep.mubr.f32.mxu0 0.0
    %3326 = vmatmul.mubr.f32.gmra.mrb[0].mxu0 %v1337
    %v3327 = vpop.f32.mrb[0].mxu0
    %v3328 = vadd.f32 %v2943, %v3327
    %v3329 = vpop.f32.mrb[0].mxu0
    %3330 = vmatprep.mubr.f32.mxu0 0.0
    %3331 = vmatmul.mubr.f32.gmra.mrb[0].mxu0 %v1338
    %v3332 = vpop.f32.mrb[0].mxu0
    %v3333 = vadd.f32 %v2948, %v3332
    %v3334 = vpop.f32.mrb[0].mxu0
    %3335 = vmatprep.mubr.f32.mxu0 0.0
    %3336 = vmatmul.mubr.f32.gmra.mrb[0].mxu0 %v1339
    %v3337 = vpop.f32.mrb[0].mxu0
    %v3338 = vadd.f32 %v2953, %v3337
    %v3339 = vpop.f32.mrb[0].mxu0
    %3340 = vmatprep.mubr.f32.mxu0 0.0
    %3341 = vmatmul.mubr.f32.gmra.mrb[0].mxu0 %v1340
    %v3342 = vpop.f32.mrb[0].mxu0
    %v3343 = vadd.f32 %v2958, %v3342
    %v3344 = vpop.f32.mrb[0].mxu0
    %3345 = vmatprep.mubr.f32.mxu0 0.0
    %3346 = vmatmul.mubr.f32.gmra.mrb[0].mxu0 %v1341
    %v3347 = vpop.f32.mrb[0].mxu0
    %v3348 = vadd.f32 %v2963, %v3347
    %v3349 = vpop.f32.mrb[0].mxu0
    %3350 = vmatprep.mubr.f32.mxu0 0.0
    %3351 = vmatmul.mubr.f32.gmra.mrb[0].mxu0 %v1342
    %v3352 = vpop.f32.mrb[0].mxu0
    %v3353 = vadd.f32 %v2968, %v3352
    %v3354 = vpop.f32.mrb[0].mxu0
    %3355 = vmatprep.mubr.f32.mxu0 0.0
    %3356 = vmatmul.mubr.f32.gmra.mrb[0].mxu0 %v1343
    %v3357 = vpop.f32.mrb[0].mxu0
    %v3358 = vadd.f32 %v2973, %v3357
    %v3359 = vpop.f32.mrb[0].mxu0
    %3360 = vmatprep.mubr.f32.mxu0 0.0
    %3361 = vmatmul.mubr.f32.gmra.mrb[0].mxu0 %v1344
    %v3362 = vpop.f32.mrb[0].mxu0
    %v3363 = vadd.f32 %v2978, %v3362
    %v3364 = vpop.f32.mrb[0].mxu0
    %3365 = vmatprep.mubr.f32.mxu0 0.0
    %3366 = vmatmul.mubr.f32.gmra.mrb[0].mxu0 %v1345
    %v3367 = vpop.f32.mrb[0].mxu0
    %v3368 = vadd.f32 %v2983, %v3367
    %v3369 = vpop.f32.mrb[0].mxu0
    %3370 = vmatprep.mubr.f32.mxu0 0.0
    %3371 = vmatmul.mubr.f32.gmra.mrb[0].mxu0 %v1346
    %v3372 = vpop.f32.mrb[0].mxu0
    %v3373 = vadd.f32 %v2988, %v3372
    %v3374 = vpop.f32.mrb[0].mxu0
    %3375 = vmatprep.mubr.f32.mxu0 0.0
    %3376 = vmatmul.mubr.f32.gmra.mrb[0].mxu0 %v1347
    %v3377 = vpop.f32.mrb[0].mxu0
    %v3378 = vadd.f32 %v2993, %v3377
    %v3379 = vpop.f32.mrb[0].mxu0
    %3380 = vmatprep.mubr.f32.mxu0 0.0
    %3381 = vmatmul.mubr.f32.gmra.mrb[0].mxu0 %v1348
    %v3382 = vpop.f32.mrb[0].mxu0
    %v3383 = vadd.f32 %v2998, %v3382
    %v3384 = vpop.f32.mrb[0].mxu0
    %3385 = vmatprep.mubr.f32.mxu0 0.0
    %3386 = vmatmul.mubr.f32.gmra.mrb[0].mxu0 %v1349
    %v3387 = vpop.f32.mrb[0].mxu0
    %v3388 = vadd.f32 %v3003, %v3387
    %v3389 = vpop.f32.mrb[0].mxu0
    %3390 = vmatprep.mubr.f32.mxu0 0.0
    %3391 = vmatmul.mubr.f32.gmra.mrb[0].mxu0 %v1350
    %v3392 = vpop.f32.mrb[0].mxu0
    %v3393 = vadd.f32 %v3008, %v3392
    %v3394 = vpop.f32.mrb[0].mxu0
    %3395 = vmatprep.mubr.f32.mxu0 0.0
    %3396 = vmatmul.mubr.f32.gmra.mrb[0].mxu0 %v1351
    %v3397 = vpop.f32.mrb[0].mxu0
    %v3398 = vadd.f32 %v3013, %v3397
    %v3399 = vpop.f32.mrb[0].mxu0
    %3400 = vmatprep.mubr.f32.mxu0 0.0
    %3401 = vmatmul.mubr.f32.gmra.mrb[0].mxu0 %v1352
    %v3402 = vpop.f32.mrb[0].mxu0
    %v3403 = vadd.f32 %v3018, %v3402
    %v3404 = vpop.f32.mrb[0].mxu0
    %3405 = vmatprep.mubr.f32.mxu0 0.0
    %3406 = vmatmul.mubr.f32.gmra.mrb[0].mxu0 %v1353
    %v3407 = vpop.f32.mrb[0].mxu0
    %v3408 = vadd.f32 %v3023, %v3407
    %v3409 = vpop.f32.mrb[0].mxu0
    %3410 = vmatprep.mubr.f32.mxu0 0.0
    %3411 = vmatmul.mubr.f32.gmra.mrb[0].mxu0 %v1354
    %v3412 = vpop.f32.mrb[0].mxu0
    %v3413 = vadd.f32 %v3028, %v3412
    %v3414 = vpop.f32.mrb[0].mxu0
    %3415 = vmatprep.mubr.f32.mxu0 0.0
    %3416 = vmatmul.mubr.f32.gmra.mrb[0].mxu0 %v1355
    %v3417 = vpop.f32.mrb[0].mxu0
    %v3418 = vadd.f32 %v3033, %v3417
    %v3419 = vpop.f32.mrb[0].mxu0
    %3420 = vmatprep.mubr.f32.mxu0 0.0
    %3421 = vmatmul.mubr.f32.gmra.mrb[0].mxu0 %v1356
    %v3422 = vpop.f32.mrb[0].mxu0
    %v3423 = vadd.f32 %v3038, %v3422
    %v3424 = vpop.f32.mrb[0].mxu0
    %3425 = vdwg.mxu0
    %v3426 = vld [vmem:[%s5] sm:$0x1]
    %v3428 = vlaneseq
    %v3429 = vshrl.u32 %v3428, 7
    %v3430 = vsub.s32 0, %v3429
    %v3431 = vrot.slane %v3426, %v3430
    %v3433 = vmul.f32 %v3108, %v3431
    %v3434 = vmul.f32 %v3113, %v3431
    %v3435 = vmul.f32 %v3118, %v3431
    %v3436 = vmul.f32 %v3123, %v3431
    %v3437 = vmul.f32 %v3128, %v3431
    %v3438 = vmul.f32 %v3133, %v3431
    %v3439 = vmul.f32 %v3138, %v3431
    %v3440 = vmul.f32 %v3143, %v3431
    %v3441 = vmul.f32 %v3148, %v3431
    %v3442 = vmul.f32 %v3153, %v3431
    %v3443 = vmul.f32 %v3158, %v3431
    %v3444 = vmul.f32 %v3163, %v3431
    %v3445 = vmul.f32 %v3168, %v3431
    %v3446 = vmul.f32 %v3173, %v3431
    %v3447 = vmul.f32 %v3178, %v3431
    %v3448 = vmul.f32 %v3183, %v3431
    %v3449 = vmul.f32 %v3188, %v3431
    %v3450 = vmul.f32 %v3193, %v3431
    %v3451 = vmul.f32 %v3198, %v3431
    %v3452 = vmul.f32 %v3203, %v3431
    %v3453 = vmul.f32 %v3208, %v3431
    %v3454 = vmul.f32 %v3213, %v3431
    %v3455 = vmul.f32 %v3218, %v3431
    %v3456 = vmul.f32 %v3223, %v3431
    %v3457 = vmul.f32 %v3228, %v3431
    %v3458 = vmul.f32 %v3233, %v3431
    %v3459 = vmul.f32 %v3238, %v3431
    %v3460 = vmul.f32 %v3243, %v3431
    %v3461 = vmul.f32 %v3248, %v3431
    %v3462 = vmul.f32 %v3253, %v3431
    %v3463 = vmul.f32 %v3258, %v3431
    %v3464 = vmul.f32 %v3263, %v3431
    %v3465 = vmul.f32 %v3268, %v3431
    %v3466 = vmul.f32 %v3273, %v3431
    %v3467 = vmul.f32 %v3278, %v3431
    %v3468 = vmul.f32 %v3283, %v3431
    %v3469 = vmul.f32 %v3288, %v3431
    %v3470 = vmul.f32 %v3293, %v3431
    %v3471 = vmul.f32 %v3298, %v3431
    %v3472 = vmul.f32 %v3303, %v3431
    %v3473 = vmul.f32 %v3308, %v3431
    %v3474 = vmul.f32 %v3313, %v3431
    %v3475 = vmul.f32 %v3318, %v3431
    %v3476 = vmul.f32 %v3323, %v3431
    %v3477 = vmul.f32 %v3328, %v3431
    %v3478 = vmul.f32 %v3333, %v3431
    %v3479 = vmul.f32 %v3338, %v3431
    %v3480 = vmul.f32 %v3343, %v3431
    %v3481 = vmul.f32 %v3348, %v3431
    %v3482 = vmul.f32 %v3353, %v3431
    %v3483 = vmul.f32 %v3358, %v3431
    %v3484 = vmul.f32 %v3363, %v3431
    %v3485 = vmul.f32 %v3368, %v3431
    %v3486 = vmul.f32 %v3373, %v3431
    %v3487 = vmul.f32 %v3378, %v3431
    %v3488 = vmul.f32 %v3383, %v3431
    %v3489 = vmul.f32 %v3388, %v3431
    %v3490 = vmul.f32 %v3393, %v3431
    %v3491 = vmul.f32 %v3398, %v3431
    %v3492 = vmul.f32 %v3403, %v3431
    %v3493 = vmul.f32 %v3408, %v3431
    %v3494 = vmul.f32 %v3413, %v3431
    %v3495 = vmul.f32 %v3418, %v3431
    %v3496 = vmul.f32 %v3423, %v3431
    %v3497 = vld [vmem:[%s6] sm:$0x1]
    %v3499 = vlaneseq
    %v3500 = vshrl.u32 %v3499, 7
    %v3501 = vsub.s32 0, %v3500
    %v3502 = vrot.slane %v3497, %v3501
    %v3504 = vadd.f32 %v3433, %v3502
    %v3505 = vadd.f32 %v3434, %v3502
    %v3506 = vadd.f32 %v3435, %v3502
    %v3507 = vadd.f32 %v3436, %v3502
    %v3508 = vadd.f32 %v3437, %v3502
    %v3509 = vadd.f32 %v3438, %v3502
    %v3510 = vadd.f32 %v3439, %v3502
    %v3511 = vadd.f32 %v3440, %v3502
    %v3512 = vadd.f32 %v3441, %v3502
    %v3513 = vadd.f32 %v3442, %v3502
    %v3514 = vadd.f32 %v3443, %v3502
    %v3515 = vadd.f32 %v3444, %v3502
    %v3516 = vadd.f32 %v3445, %v3502
    %v3517 = vadd.f32 %v3446, %v3502
    %v3518 = vadd.f32 %v3447, %v3502
    %v3519 = vadd.f32 %v3448, %v3502
    %v3520 = vadd.f32 %v3449, %v3502
    %v3521 = vadd.f32 %v3450, %v3502
    %v3522 = vadd.f32 %v3451, %v3502
    %v3523 = vadd.f32 %v3452, %v3502
    %v3524 = vadd.f32 %v3453, %v3502
    %v3525 = vadd.f32 %v3454, %v3502
    %v3526 = vadd.f32 %v3455, %v3502
    %v3527 = vadd.f32 %v3456, %v3502
    %v3528 = vadd.f32 %v3457, %v3502
    %v3529 = vadd.f32 %v3458, %v3502
    %v3530 = vadd.f32 %v3459, %v3502
    %v3531 = vadd.f32 %v3460, %v3502
    %v3532 = vadd.f32 %v3461, %v3502
    %v3533 = vadd.f32 %v3462, %v3502
    %v3534 = vadd.f32 %v3463, %v3502
    %v3535 = vadd.f32 %v3464, %v3502
    %v3536 = vadd.f32 %v3465, %v3502
    %v3537 = vadd.f32 %v3466, %v3502
    %v3538 = vadd.f32 %v3467, %v3502
    %v3539 = vadd.f32 %v3468, %v3502
    %v3540 = vadd.f32 %v3469, %v3502
    %v3541 = vadd.f32 %v3470, %v3502
    %v3542 = vadd.f32 %v3471, %v3502
    %v3543 = vadd.f32 %v3472, %v3502
    %v3544 = vadd.f32 %v3473, %v3502
    %v3545 = vadd.f32 %v3474, %v3502
    %v3546 = vadd.f32 %v3475, %v3502
    %v3547 = vadd.f32 %v3476, %v3502
    %v3548 = vadd.f32 %v3477, %v3502
    %v3549 = vadd.f32 %v3478, %v3502
    %v3550 = vadd.f32 %v3479, %v3502
    %v3551 = vadd.f32 %v3480, %v3502
    %v3552 = vadd.f32 %v3481, %v3502
    %v3553 = vadd.f32 %v3482, %v3502
    %v3554 = vadd.f32 %v3483, %v3502
    %v3555 = vadd.f32 %v3484, %v3502
    %v3556 = vadd.f32 %v3485, %v3502
    %v3557 = vadd.f32 %v3486, %v3502
    %v3558 = vadd.f32 %v3487, %v3502
    %v3559 = vadd.f32 %v3488, %v3502
    %v3560 = vadd.f32 %v3489, %v3502
    %v3561 = vadd.f32 %v3490, %v3502
    %v3562 = vadd.f32 %v3491, %v3502
    %v3563 = vadd.f32 %v3492, %v3502
    %v3564 = vadd.f32 %v3493, %v3502
    %v3565 = vadd.f32 %v3494, %v3502
    %v3566 = vadd.f32 %v3495, %v3502
    %v3567 = vadd.f32 %v3496, %v3502
    %v3568 = vmax.f32 %v3504, 0.0
    %v3569 = vmax.f32 %v3505, 0.0
    %v3570 = vmax.f32 %v3506, 0.0
    %v3571 = vmax.f32 %v3507, 0.0
    %v3572 = vmax.f32 %v3508, 0.0
    %v3573 = vmax.f32 %v3509, 0.0
    %v3574 = vmax.f32 %v3510, 0.0
    %v3575 = vmax.f32 %v3511, 0.0
    %v3576 = vmax.f32 %v3512, 0.0
    %v3577 = vmax.f32 %v3513, 0.0
    %v3578 = vmax.f32 %v3514, 0.0
    %v3579 = vmax.f32 %v3515, 0.0
    %v3580 = vmax.f32 %v3516, 0.0
    %v3581 = vmax.f32 %v3517, 0.0
    %v3582 = vmax.f32 %v3518, 0.0
    %v3583 = vmax.f32 %v3519, 0.0
    %v3584 = vmax.f32 %v3520, 0.0
    %v3585 = vmax.f32 %v3521, 0.0
    %v3586 = vmax.f32 %v3522, 0.0
    %v3587 = vmax.f32 %v3523, 0.0
    %v3588 = vmax.f32 %v3524, 0.0
    %v3589 = vmax.f32 %v3525, 0.0
    %v3590 = vmax.f32 %v3526, 0.0
    %v3591 = vmax.f32 %v3527, 0.0
    %v3592 = vmax.f32 %v3528, 0.0
    %v3593 = vmax.f32 %v3529, 0.0
    %v3594 = vmax.f32 %v3530, 0.0
    %v3595 = vmax.f32 %v3531, 0.0
    %v3596 = vmax.f32 %v3532, 0.0
    %v3597 = vmax.f32 %v3533, 0.0
    %v3598 = vmax.f32 %v3534, 0.0
    %v3599 = vmax.f32 %v3535, 0.0
    %v3600 = vmax.f32 %v3536, 0.0
    %v3601 = vmax.f32 %v3537, 0.0
    %v3602 = vmax.f32 %v3538, 0.0
    %v3603 = vmax.f32 %v3539, 0.0
    %v3604 = vmax.f32 %v3540, 0.0
    %v3605 = vmax.f32 %v3541, 0.0
    %v3606 = vmax.f32 %v3542, 0.0
    %v3607 = vmax.f32 %v3543, 0.0
    %v3608 = vmax.f32 %v3544, 0.0
    %v3609 = vmax.f32 %v3545, 0.0
    %v3610 = vmax.f32 %v3546, 0.0
    %v3611 = vmax.f32 %v3547, 0.0
    %v3612 = vmax.f32 %v3548, 0.0
    %v3613 = vmax.f32 %v3549, 0.0
    %v3614 = vmax.f32 %v3550, 0.0
    %v3615 = vmax.f32 %v3551, 0.0
    %v3616 = vmax.f32 %v3552, 0.0
    %v3617 = vmax.f32 %v3553, 0.0
    %v3618 = vmax.f32 %v3554, 0.0
    %v3619 = vmax.f32 %v3555, 0.0
    %v3620 = vmax.f32 %v3556, 0.0
    %v3621 = vmax.f32 %v3557, 0.0
    %v3622 = vmax.f32 %v3558, 0.0
    %v3623 = vmax.f32 %v3559, 0.0
    %v3624 = vmax.f32 %v3560, 0.0
    %v3625 = vmax.f32 %v3561, 0.0
    %v3626 = vmax.f32 %v3562, 0.0
    %v3627 = vmax.f32 %v3563, 0.0
    %v3628 = vmax.f32 %v3564, 0.0
    %v3629 = vmax.f32 %v3565, 0.0
    %v3630 = vmax.f32 %v3566, 0.0
    %v3631 = vmax.f32 %v3567, 0.0
    %v3632 = vld [vmem:[#allocation9] sm:$0xff]
    %v3633 = vld [vmem:[#allocation9 + $0x8] sm:$0xff]
    %v3634 = vld [vmem:[#allocation9 + $0x10] sm:$0xff]
    %v3635 = vld [vmem:[#allocation9 + $0x18] sm:$0xff]
    %v3636 = vld [vmem:[#allocation9 + $0x20] sm:$0xff]
    %v3637 = vld [vmem:[#allocation9 + $0x28] sm:$0xff]
    %v3638 = vld [vmem:[#allocation9 + $0x30] sm:$0xff]
    %v3639 = vld [vmem:[#allocation9 + $0x38] sm:$0xff]
    %v3640 = vld [vmem:[#allocation9 + $0x40] sm:$0xff]
    %v3641 = vld [vmem:[#allocation9 + $0x48] sm:$0xff]
    %v3642 = vld [vmem:[#allocation9 + $0x50] sm:$0xff]
    %v3643 = vld [vmem:[#allocation9 + $0x58] sm:$0xff]
    %v3644 = vld [vmem:[#allocation9 + $0x60] sm:$0xff]
    %v3645 = vld [vmem:[#allocation9 + $0x68] sm:$0xff]
    %v3646 = vld [vmem:[#allocation9 + $0x70] sm:$0xff]
    %v3647 = vld [vmem:[#allocation9 + $0x78] sm:$0xff]
    %3648 = vmatprep.subr.mxu0 0.0
    %3649 = vmatpush1.msra.mxu0 %v3632
    %3650 = vmatprep.subr.mxu0 0.0
    %3651 = vmatpush1.msra.mxu0 %v3633
    %3652 = vmatprep.subr.mxu0 0.0
    %3653 = vmatpush1.msra.mxu0 %v3634
    %3654 = vmatprep.subr.mxu0 0.0
    %3655 = vmatpush1.msra.mxu0 %v3635
    %3656 = vmatprep.subr.mxu0 0.0
    %3657 = vmatpush1.msra.mxu0 %v3636
    %3658 = vmatprep.subr.mxu0 0.0
    %3659 = vmatpush1.msra.mxu0 %v3637
    %3660 = vmatprep.subr.mxu0 0.0
    %3661 = vmatpush1.msra.mxu0 %v3638
    %3662 = vmatprep.subr.mxu0 0.0
    %3663 = vmatpush1.msra.mxu0 %v3639
    %3664 = vmatprep.subr.mxu0 0.0
    %3665 = vmatpush1.msra.mxu0 %v3640
    %3666 = vmatprep.subr.mxu0 0.0
    %3667 = vmatpush1.msra.mxu0 %v3641
    %3668 = vmatprep.subr.mxu0 0.0
    %3669 = vmatpush1.msra.mxu0 %v3642
    %3670 = vmatprep.subr.mxu0 0.0
    %3671 = vmatpush1.msra.mxu0 %v3643
    %3672 = vmatprep.subr.mxu0 0.0
    %3673 = vmatpush1.msra.mxu0 %v3644
    %3674 = vmatprep.subr.mxu0 0.0
    %3675 = vmatpush1.msra.mxu0 %v3645
    %3676 = vmatprep.subr.mxu0 0.0
    %3677 = vmatpush1.msra.mxu0 %v3646
    %3678 = vmatprep.subr.mxu0 0.0
    %3679 = vmatpush1.msra.mxu0 %v3647
    %3680 = vmatprep.subr.mxu0 0.0
    %3681 = vmatpush1.msra.mxu0 0.0
    %3682 = vmatprep.subr.mxu0 0.0
    %3683 = vmatpush1.msra.mxu0 0.0
    %3684 = vmatprep.subr.mxu0 0.0
    %3685 = vmatpush1.msra.mxu0 0.0
    %3686 = vmatprep.subr.mxu0 0.0
    %3687 = vmatpush1.msra.mxu0 0.0
    %3688 = vmatprep.subr.mxu0 0.0
    %3689 = vmatpush1.msra.mxu0 0.0
    %3690 = vmatprep.subr.mxu0 0.0
    %3691 = vmatpush1.msra.mxu0 0.0
    %3692 = vmatprep.subr.mxu0 0.0
    %3693 = vmatpush1.msra.mxu0 0.0
    %3694 = vmatprep.subr.mxu0 0.0
    %3695 = vmatpush1.msra.mxu0 0.0
    %3696 = vmatprep.subr.mxu0 0.0
    %3697 = vmatpush1.msra.mxu0 0.0
    %3698 = vmatprep.subr.mxu0 0.0
    %3699 = vmatpush1.msra.mxu0 0.0
    %3700 = vmatprep.subr.mxu0 0.0
    %3701 = vmatpush1.msra.mxu0 0.0
    %3702 = vmatprep.subr.mxu0 0.0
    %3703 = vmatpush1.msra.mxu0 0.0
    %3704 = vmatprep.subr.mxu0 0.0
    %3705 = vmatpush1.msra.mxu0 0.0
    %3706 = vmatprep.subr.mxu0 0.0
    %3707 = vmatpush1.msra.mxu0 0.0
    %3708 = vmatprep.subr.mxu0 0.0
    %3709 = vmatpush1.msra.mxu0 0.0
    %3710 = vmatprep.subr.mxu0 0.0
    %3711 = vmatpush1.msra.mxu0 0.0
    %3712 = vmatprep.mubr.f32.mxu0 0.0
    %3713 = vmatmul.mubr.f32.gmra.mrb[0].mxu0 %v3568
    %v3714 = vpop.f32.mrb[0].mxu0
    %v3715 = vadd.f32 0.0, %v3714
    %v3716 = vpop.f32.mrb[0].mxu0
    %3717 = vmatprep.mubr.f32.mxu0 0.0
    %3718 = vmatmul.mubr.f32.gmra.mrb[0].mxu0 %v3569
    %v3719 = vpop.f32.mrb[0].mxu0
    %v3720 = vadd.f32 0.0, %v3719
    %v3721 = vpop.f32.mrb[0].mxu0
    %3722 = vmatprep.mubr.f32.mxu0 0.0
    %3723 = vmatmul.mubr.f32.gmra.mrb[0].mxu0 %v3570
    %v3724 = vpop.f32.mrb[0].mxu0
    %v3725 = vadd.f32 0.0, %v3724
    %v3726 = vpop.f32.mrb[0].mxu0
    %3727 = vmatprep.mubr.f32.mxu0 0.0
    %3728 = vmatmul.mubr.f32.gmra.mrb[0].mxu0 %v3571
    %v3729 = vpop.f32.mrb[0].mxu0
    %v3730 = vadd.f32 0.0, %v3729
    %v3731 = vpop.f32.mrb[0].mxu0
    %3732 = vmatprep.mubr.f32.mxu0 0.0
    %3733 = vmatmul.mubr.f32.gmra.mrb[0].mxu0 %v3572
    %v3734 = vpop.f32.mrb[0].mxu0
    %v3735 = vadd.f32 0.0, %v3734
    %v3736 = vpop.f32.mrb[0].mxu0
    %3737 = vmatprep.mubr.f32.mxu0 0.0
    %3738 = vmatmul.mubr.f32.gmra.mrb[0].mxu0 %v3573
    %v3739 = vpop.f32.mrb[0].mxu0
    %v3740 = vadd.f32 0.0, %v3739
    %v3741 = vpop.f32.mrb[0].mxu0
    %3742 = vmatprep.mubr.f32.mxu0 0.0
    %3743 = vmatmul.mubr.f32.gmra.mrb[0].mxu0 %v3574
    %v3744 = vpop.f32.mrb[0].mxu0
    %v3745 = vadd.f32 0.0, %v3744
    %v3746 = vpop.f32.mrb[0].mxu0
    %3747 = vmatprep.mubr.f32.mxu0 0.0
    %3748 = vmatmul.mubr.f32.gmra.mrb[0].mxu0 %v3575
    %v3749 = vpop.f32.mrb[0].mxu0
    %v3750 = vadd.f32 0.0, %v3749
    %v3751 = vpop.f32.mrb[0].mxu0
    %3752 = vmatprep.mubr.f32.mxu0 0.0
    %3753 = vmatmul.mubr.f32.gmra.mrb[0].mxu0 %v3576
    %v3754 = vpop.f32.mrb[0].mxu0
    %v3755 = vadd.f32 0.0, %v3754
    %v3756 = vpop.f32.mrb[0].mxu0
    %3757 = vmatprep.mubr.f32.mxu0 0.0
    %3758 = vmatmul.mubr.f32.gmra.mrb[0].mxu0 %v3577
    %v3759 = vpop.f32.mrb[0].mxu0
    %v3760 = vadd.f32 0.0, %v3759
    %v3761 = vpop.f32.mrb[0].mxu0
    %3762 = vmatprep.mubr.f32.mxu0 0.0
    %3763 = vmatmul.mubr.f32.gmra.mrb[0].mxu0 %v3578
    %v3764 = vpop.f32.mrb[0].mxu0
    %v3765 = vadd.f32 0.0, %v3764
    %v3766 = vpop.f32.mrb[0].mxu0
    %3767 = vmatprep.mubr.f32.mxu0 0.0
    %3768 = vmatmul.mubr.f32.gmra.mrb[0].mxu0 %v3579
    %v3769 = vpop.f32.mrb[0].mxu0
    %v3770 = vadd.f32 0.0, %v3769
    %v3771 = vpop.f32.mrb[0].mxu0
    %3772 = vmatprep.mubr.f32.mxu0 0.0
    %3773 = vmatmul.mubr.f32.gmra.mrb[0].mxu0 %v3580
    %v3774 = vpop.f32.mrb[0].mxu0
    %v3775 = vadd.f32 0.0, %v3774
    %v3776 = vpop.f32.mrb[0].mxu0
    %3777 = vmatprep.mubr.f32.mxu0 0.0
    %3778 = vmatmul.mubr.f32.gmra.mrb[0].mxu0 %v3581
    %v3779 = vpop.f32.mrb[0].mxu0
    %v3780 = vadd.f32 0.0, %v3779
    %v3781 = vpop.f32.mrb[0].mxu0
    %3782 = vmatprep.mubr.f32.mxu0 0.0
    %3783 = vmatmul.mubr.f32.gmra.mrb[0].mxu0 %v3582
    %v3784 = vpop.f32.mrb[0].mxu0
    %v3785 = vadd.f32 0.0, %v3784
    %v3786 = vpop.f32.mrb[0].mxu0
    %3787 = vmatprep.mubr.f32.mxu0 0.0
    %3788 = vmatmul.mubr.f32.gmra.mrb[0].mxu0 %v3583
    %v3789 = vpop.f32.mrb[0].mxu0
    %v3790 = vadd.f32 0.0, %v3789
    %v3791 = vpop.f32.mrb[0].mxu0
    %3792 = vmatprep.mubr.f32.mxu0 0.0
    %3793 = vmatmul.mubr.f32.gmra.mrb[0].mxu0 %v3584
    %v3794 = vpop.f32.mrb[0].mxu0
    %v3795 = vadd.f32 0.0, %v3794
    %v3796 = vpop.f32.mrb[0].mxu0
    %3797 = vmatprep.mubr.f32.mxu0 0.0
    %3798 = vmatmul.mubr.f32.gmra.mrb[0].mxu0 %v3585
    %v3799 = vpop.f32.mrb[0].mxu0
    %v3800 = vadd.f32 0.0, %v3799
    %v3801 = vpop.f32.mrb[0].mxu0
    %3802 = vmatprep.mubr.f32.mxu0 0.0
    %3803 = vmatmul.mubr.f32.gmra.mrb[0].mxu0 %v3586
    %v3804 = vpop.f32.mrb[0].mxu0
    %v3805 = vadd.f32 0.0, %v3804
    %v3806 = vpop.f32.mrb[0].mxu0
    %3807 = vmatprep.mubr.f32.mxu0 0.0
    %3808 = vmatmul.mubr.f32.gmra.mrb[0].mxu0 %v3587
    %v3809 = vpop.f32.mrb[0].mxu0
    %v3810 = vadd.f32 0.0, %v3809
    %v3811 = vpop.f32.mrb[0].mxu0
    %3812 = vmatprep.mubr.f32.mxu0 0.0
    %3813 = vmatmul.mubr.f32.gmra.mrb[0].mxu0 %v3588
    %v3814 = vpop.f32.mrb[0].mxu0
    %v3815 = vadd.f32 0.0, %v3814
    %v3816 = vpop.f32.mrb[0].mxu0
    %3817 = vmatprep.mubr.f32.mxu0 0.0
    %3818 = vmatmul.mubr.f32.gmra.mrb[0].mxu0 %v3589
    %v3819 = vpop.f32.mrb[0].mxu0
    %v3820 = vadd.f32 0.0, %v3819
    %v3821 = vpop.f32.mrb[0].mxu0
    %3822 = vmatprep.mubr.f32.mxu0 0.0
    %3823 = vmatmul.mubr.f32.gmra.mrb[0].mxu0 %v3590
    %v3824 = vpop.f32.mrb[0].mxu0
    %v3825 = vadd.f32 0.0, %v3824
    %v3826 = vpop.f32.mrb[0].mxu0
    %3827 = vmatprep.mubr.f32.mxu0 0.0
    %3828 = vmatmul.mubr.f32.gmra.mrb[0].mxu0 %v3591
    %v3829 = vpop.f32.mrb[0].mxu0
    %v3830 = vadd.f32 0.0, %v3829
    %v3831 = vpop.f32.mrb[0].mxu0
    %3832 = vmatprep.mubr.f32.mxu0 0.0
    %3833 = vmatmul.mubr.f32.gmra.mrb[0].mxu0 %v3592
    %v3834 = vpop.f32.mrb[0].mxu0
    %v3835 = vadd.f32 0.0, %v3834
    %v3836 = vpop.f32.mrb[0].mxu0
    %3837 = vmatprep.mubr.f32.mxu0 0.0
    %3838 = vmatmul.mubr.f32.gmra.mrb[0].mxu0 %v3593
    %v3839 = vpop.f32.mrb[0].mxu0
    %v3840 = vadd.f32 0.0, %v3839
    %v3841 = vpop.f32.mrb[0].mxu0
    %3842 = vmatprep.mubr.f32.mxu0 0.0
    %3843 = vmatmul.mubr.f32.gmra.mrb[0].mxu0 %v3594
    %v3844 = vpop.f32.mrb[0].mxu0
    %v3845 = vadd.f32 0.0, %v3844
    %v3846 = vpop.f32.mrb[0].mxu0
    %3847 = vmatprep.mubr.f32.mxu0 0.0
    %3848 = vmatmul.mubr.f32.gmra.mrb[0].mxu0 %v3595
    %v3849 = vpop.f32.mrb[0].mxu0
    %v3850 = vadd.f32 0.0, %v3849
    %v3851 = vpop.f32.mrb[0].mxu0
    %3852 = vmatprep.mubr.f32.mxu0 0.0
    %3853 = vmatmul.mubr.f32.gmra.mrb[0].mxu0 %v3596
    %v3854 = vpop.f32.mrb[0].mxu0
    %v3855 = vadd.f32 0.0, %v3854
    %v3856 = vpop.f32.mrb[0].mxu0
    %3857 = vmatprep.mubr.f32.mxu0 0.0
    %3858 = vmatmul.mubr.f32.gmra.mrb[0].mxu0 %v3597
    %v3859 = vpop.f32.mrb[0].mxu0
    %v3860 = vadd.f32 0.0, %v3859
    %v3861 = vpop.f32.mrb[0].mxu0
    %3862 = vmatprep.mubr.f32.mxu0 0.0
    %3863 = vmatmul.mubr.f32.gmra.mrb[0].mxu0 %v3598
    %v3864 = vpop.f32.mrb[0].mxu0
    %v3865 = vadd.f32 0.0, %v3864
    %v3866 = vpop.f32.mrb[0].mxu0
    %3867 = vmatprep.mubr.f32.mxu0 0.0
    %3868 = vmatmul.mubr.f32.gmra.mrb[0].mxu0 %v3599
    %v3869 = vpop.f32.mrb[0].mxu0
    %v3870 = vadd.f32 0.0, %v3869
    %v3871 = vpop.f32.mrb[0].mxu0
    %3872 = vmatprep.mubr.f32.mxu0 0.0
    %3873 = vmatmul.mubr.f32.gmra.mrb[0].mxu0 %v3600
    %v3874 = vpop.f32.mrb[0].mxu0
    %v3875 = vadd.f32 0.0, %v3874
    %v3876 = vpop.f32.mrb[0].mxu0
    %3877 = vmatprep.mubr.f32.mxu0 0.0
    %3878 = vmatmul.mubr.f32.gmra.mrb[0].mxu0 %v3601
    %v3879 = vpop.f32.mrb[0].mxu0
    %v3880 = vadd.f32 0.0, %v3879
    %v3881 = vpop.f32.mrb[0].mxu0
    %3882 = vmatprep.mubr.f32.mxu0 0.0
    %3883 = vmatmul.mubr.f32.gmra.mrb[0].mxu0 %v3602
    %v3884 = vpop.f32.mrb[0].mxu0
    %v3885 = vadd.f32 0.0, %v3884
    %v3886 = vpop.f32.mrb[0].mxu0
    %3887 = vmatprep.mubr.f32.mxu0 0.0
    %3888 = vmatmul.mubr.f32.gmra.mrb[0].mxu0 %v3603
    %v3889 = vpop.f32.mrb[0].mxu0
    %v3890 = vadd.f32 0.0, %v3889
    %v3891 = vpop.f32.mrb[0].mxu0
    %3892 = vmatprep.mubr.f32.mxu0 0.0
    %3893 = vmatmul.mubr.f32.gmra.mrb[0].mxu0 %v3604
    %v3894 = vpop.f32.mrb[0].mxu0
    %v3895 = vadd.f32 0.0, %v3894
    %v3896 = vpop.f32.mrb[0].mxu0
    %3897 = vmatprep.mubr.f32.mxu0 0.0
    %3898 = vmatmul.mubr.f32.gmra.mrb[0].mxu0 %v3605
    %v3899 = vpop.f32.mrb[0].mxu0
    %v3900 = vadd.f32 0.0, %v3899
    %v3901 = vpop.f32.mrb[0].mxu0
    %3902 = vmatprep.mubr.f32.mxu0 0.0
    %3903 = vmatmul.mubr.f32.gmra.mrb[0].mxu0 %v3606
    %v3904 = vpop.f32.mrb[0].mxu0
    %v3905 = vadd.f32 0.0, %v3904
    %v3906 = vpop.f32.mrb[0].mxu0
    %3907 = vmatprep.mubr.f32.mxu0 0.0
    %3908 = vmatmul.mubr.f32.gmra.mrb[0].mxu0 %v3607
    %v3909 = vpop.f32.mrb[0].mxu0
    %v3910 = vadd.f32 0.0, %v3909
    %v3911 = vpop.f32.mrb[0].mxu0
    %3912 = vmatprep.mubr.f32.mxu0 0.0
    %3913 = vmatmul.mubr.f32.gmra.mrb[0].mxu0 %v3608
    %v3914 = vpop.f32.mrb[0].mxu0
    %v3915 = vadd.f32 0.0, %v3914
    %v3916 = vpop.f32.mrb[0].mxu0
    %3917 = vmatprep.mubr.f32.mxu0 0.0
    %3918 = vmatmul.mubr.f32.gmra.mrb[0].mxu0 %v3609
    %v3919 = vpop.f32.mrb[0].mxu0
    %v3920 = vadd.f32 0.0, %v3919
    %v3921 = vpop.f32.mrb[0].mxu0
    %3922 = vmatprep.mubr.f32.mxu0 0.0
    %3923 = vmatmul.mubr.f32.gmra.mrb[0].mxu0 %v3610
    %v3924 = vpop.f32.mrb[0].mxu0
    %v3925 = vadd.f32 0.0, %v3924
    %v3926 = vpop.f32.mrb[0].mxu0
    %3927 = vmatprep.mubr.f32.mxu0 0.0
    %3928 = vmatmul.mubr.f32.gmra.mrb[0].mxu0 %v3611
    %v3929 = vpop.f32.mrb[0].mxu0
    %v3930 = vadd.f32 0.0, %v3929
    %v3931 = vpop.f32.mrb[0].mxu0
    %3932 = vmatprep.mubr.f32.mxu0 0.0
    %3933 = vmatmul.mubr.f32.gmra.mrb[0].mxu0 %v3612
    %v3934 = vpop.f32.mrb[0].mxu0
    %v3935 = vadd.f32 0.0, %v3934
    %v3936 = vpop.f32.mrb[0].mxu0
    %3937 = vmatprep.mubr.f32.mxu0 0.0
    %3938 = vmatmul.mubr.f32.gmra.mrb[0].mxu0 %v3613
    %v3939 = vpop.f32.mrb[0].mxu0
    %v3940 = vadd.f32 0.0, %v3939
    %v3941 = vpop.f32.mrb[0].mxu0
    %3942 = vmatprep.mubr.f32.mxu0 0.0
    %3943 = vmatmul.mubr.f32.gmra.mrb[0].mxu0 %v3614
    %v3944 = vpop.f32.mrb[0].mxu0
    %v3945 = vadd.f32 0.0, %v3944
    %v3946 = vpop.f32.mrb[0].mxu0
    %3947 = vmatprep.mubr.f32.mxu0 0.0
    %3948 = vmatmul.mubr.f32.gmra.mrb[0].mxu0 %v3615
    %v3949 = vpop.f32.mrb[0].mxu0
    %v3950 = vadd.f32 0.0, %v3949
    %v3951 = vpop.f32.mrb[0].mxu0
    %3952 = vmatprep.mubr.f32.mxu0 0.0
    %3953 = vmatmul.mubr.f32.gmra.mrb[0].mxu0 %v3616
    %v3954 = vpop.f32.mrb[0].mxu0
    %v3955 = vadd.f32 0.0, %v3954
    %v3956 = vpop.f32.mrb[0].mxu0
    %3957 = vmatprep.mubr.f32.mxu0 0.0
    %3958 = vmatmul.mubr.f32.gmra.mrb[0].mxu0 %v3617
    %v3959 = vpop.f32.mrb[0].mxu0
    %v3960 = vadd.f32 0.0, %v3959
    %v3961 = vpop.f32.mrb[0].mxu0
    %3962 = vmatprep.mubr.f32.mxu0 0.0
    %3963 = vmatmul.mubr.f32.gmra.mrb[0].mxu0 %v3618
    %v3964 = vpop.f32.mrb[0].mxu0
    %v3965 = vadd.f32 0.0, %v3964
    %v3966 = vpop.f32.mrb[0].mxu0
    %3967 = vmatprep.mubr.f32.mxu0 0.0
    %3968 = vmatmul.mubr.f32.gmra.mrb[0].mxu0 %v3619
    %v3969 = vpop.f32.mrb[0].mxu0
    %v3970 = vadd.f32 0.0, %v3969
    %v3971 = vpop.f32.mrb[0].mxu0
    %3972 = vmatprep.mubr.f32.mxu0 0.0
    %3973 = vmatmul.mubr.f32.gmra.mrb[0].mxu0 %v3620
    %v3974 = vpop.f32.mrb[0].mxu0
    %v3975 = vadd.f32 0.0, %v3974
    %v3976 = vpop.f32.mrb[0].mxu0
    %3977 = vmatprep.mubr.f32.mxu0 0.0
    %3978 = vmatmul.mubr.f32.gmra.mrb[0].mxu0 %v3621
    %v3979 = vpop.f32.mrb[0].mxu0
    %v3980 = vadd.f32 0.0, %v3979
    %v3981 = vpop.f32.mrb[0].mxu0
    %3982 = vmatprep.mubr.f32.mxu0 0.0
    %3983 = vmatmul.mubr.f32.gmra.mrb[0].mxu0 %v3622
    %v3984 = vpop.f32.mrb[0].mxu0
    %v3985 = vadd.f32 0.0, %v3984
    %v3986 = vpop.f32.mrb[0].mxu0
    %3987 = vmatprep.mubr.f32.mxu0 0.0
    %3988 = vmatmul.mubr.f32.gmra.mrb[0].mxu0 %v3623
    %v3989 = vpop.f32.mrb[0].mxu0
    %v3990 = vadd.f32 0.0, %v3989
    %v3991 = vpop.f32.mrb[0].mxu0
    %3992 = vmatprep.mubr.f32.mxu0 0.0
    %3993 = vmatmul.mubr.f32.gmra.mrb[0].mxu0 %v3624
    %v3994 = vpop.f32.mrb[0].mxu0
    %v3995 = vadd.f32 0.0, %v3994
    %v3996 = vpop.f32.mrb[0].mxu0
    %3997 = vmatprep.mubr.f32.mxu0 0.0
    %3998 = vmatmul.mubr.f32.gmra.mrb[0].mxu0 %v3625
    %v3999 = vpop.f32.mrb[0].mxu0
    %v4000 = vadd.f32 0.0, %v3999
    %v4001 = vpop.f32.mrb[0].mxu0
    %4002 = vmatprep.mubr.f32.mxu0 0.0
    %4003 = vmatmul.mubr.f32.gmra.mrb[0].mxu0 %v3626
    %v4004 = vpop.f32.mrb[0].mxu0
    %v4005 = vadd.f32 0.0, %v4004
    %v4006 = vpop.f32.mrb[0].mxu0
    %4007 = vmatprep.mubr.f32.mxu0 0.0
    %4008 = vmatmul.mubr.f32.gmra.mrb[0].mxu0 %v3627
    %v4009 = vpop.f32.mrb[0].mxu0
    %v4010 = vadd.f32 0.0, %v4009
    %v4011 = vpop.f32.mrb[0].mxu0
    %4012 = vmatprep.mubr.f32.mxu0 0.0
    %4013 = vmatmul.mubr.f32.gmra.mrb[0].mxu0 %v3628
    %v4014 = vpop.f32.mrb[0].mxu0
    %v4015 = vadd.f32 0.0, %v4014
    %v4016 = vpop.f32.mrb[0].mxu0
    %4017 = vmatprep.mubr.f32.mxu0 0.0
    %4018 = vmatmul.mubr.f32.gmra.mrb[0].mxu0 %v3629
    %v4019 = vpop.f32.mrb[0].mxu0
    %v4020 = vadd.f32 0.0, %v4019
    %v4021 = vpop.f32.mrb[0].mxu0
    %4022 = vmatprep.mubr.f32.mxu0 0.0
    %4023 = vmatmul.mubr.f32.gmra.mrb[0].mxu0 %v3630
    %v4024 = vpop.f32.mrb[0].mxu0
    %v4025 = vadd.f32 0.0, %v4024
    %v4026 = vpop.f32.mrb[0].mxu0
    %4027 = vmatprep.mubr.f32.mxu0 0.0
    %4028 = vmatmul.mubr.f32.gmra.mrb[0].mxu0 %v3631
    %v4029 = vpop.f32.mrb[0].mxu0
    %v4030 = vadd.f32 0.0, %v4029
    %v4031 = vpop.f32.mrb[0].mxu0
    %4032 = vdwg.mxu0
    %v4033 = vld [vmem:[%s8] sm:$0x1]
    %v4035 = vlaneseq
    %v4036 = vshrl.u32 %v4035, 7
    %v4037 = vsub.s32 0, %v4036
    %v4038 = vrot.slane %v4033, %v4037
    %v4040 = vmul.f32 %v3715, %v4038
    %v4041 = vmul.f32 %v3720, %v4038
    %v4042 = vmul.f32 %v3725, %v4038
    %v4043 = vmul.f32 %v3730, %v4038
    %v4044 = vmul.f32 %v3735, %v4038
    %v4045 = vmul.f32 %v3740, %v4038
    %v4046 = vmul.f32 %v3745, %v4038
    %v4047 = vmul.f32 %v3750, %v4038
    %v4048 = vmul.f32 %v3755, %v4038
    %v4049 = vmul.f32 %v3760, %v4038
    %v4050 = vmul.f32 %v3765, %v4038
    %v4051 = vmul.f32 %v3770, %v4038
    %v4052 = vmul.f32 %v3775, %v4038
    %v4053 = vmul.f32 %v3780, %v4038
    %v4054 = vmul.f32 %v3785, %v4038
    %v4055 = vmul.f32 %v3790, %v4038
    %v4056 = vmul.f32 %v3795, %v4038
    %v4057 = vmul.f32 %v3800, %v4038
    %v4058 = vmul.f32 %v3805, %v4038
    %v4059 = vmul.f32 %v3810, %v4038
    %v4060 = vmul.f32 %v3815, %v4038
    %v4061 = vmul.f32 %v3820, %v4038
    %v4062 = vmul.f32 %v3825, %v4038
    %v4063 = vmul.f32 %v3830, %v4038
    %v4064 = vmul.f32 %v3835, %v4038
    %v4065 = vmul.f32 %v3840, %v4038
    %v4066 = vmul.f32 %v3845, %v4038
    %v4067 = vmul.f32 %v3850, %v4038
    %v4068 = vmul.f32 %v3855, %v4038
    %v4069 = vmul.f32 %v3860, %v4038
    %v4070 = vmul.f32 %v3865, %v4038
    %v4071 = vmul.f32 %v3870, %v4038
    %v4072 = vmul.f32 %v3875, %v4038
    %v4073 = vmul.f32 %v3880, %v4038
    %v4074 = vmul.f32 %v3885, %v4038
    %v4075 = vmul.f32 %v3890, %v4038
    %v4076 = vmul.f32 %v3895, %v4038
    %v4077 = vmul.f32 %v3900, %v4038
    %v4078 = vmul.f32 %v3905, %v4038
    %v4079 = vmul.f32 %v3910, %v4038
    %v4080 = vmul.f32 %v3915, %v4038
    %v4081 = vmul.f32 %v3920, %v4038
    %v4082 = vmul.f32 %v3925, %v4038
    %v4083 = vmul.f32 %v3930, %v4038
    %v4084 = vmul.f32 %v3935, %v4038
    %v4085 = vmul.f32 %v3940, %v4038
    %v4086 = vmul.f32 %v3945, %v4038
    %v4087 = vmul.f32 %v3950, %v4038
    %v4088 = vmul.f32 %v3955, %v4038
    %v4089 = vmul.f32 %v3960, %v4038
    %v4090 = vmul.f32 %v3965, %v4038
    %v4091 = vmul.f32 %v3970, %v4038
    %v4092 = vmul.f32 %v3975, %v4038
    %v4093 = vmul.f32 %v3980, %v4038
    %v4094 = vmul.f32 %v3985, %v4038
    %v4095 = vmul.f32 %v3990, %v4038
    %v4096 = vmul.f32 %v3995, %v4038
    %v4097 = vmul.f32 %v4000, %v4038
    %v4098 = vmul.f32 %v4005, %v4038
    %v4099 = vmul.f32 %v4010, %v4038
    %v4100 = vmul.f32 %v4015, %v4038
    %v4101 = vmul.f32 %v4020, %v4038
    %v4102 = vmul.f32 %v4025, %v4038
    %v4103 = vmul.f32 %v4030, %v4038
    %v4104 = vld [vmem:[%s9] sm:$0x1]
    %v4106 = vlaneseq
    %v4107 = vshrl.u32 %v4106, 7
    %v4108 = vsub.s32 0, %v4107
    %v4109 = vrot.slane %v4104, %v4108
    %v4111 = vadd.f32 %v4040, %v4109
    %v4112 = vadd.f32 %v4041, %v4109
    %v4113 = vadd.f32 %v4042, %v4109
    %v4114 = vadd.f32 %v4043, %v4109
    %v4115 = vadd.f32 %v4044, %v4109
    %v4116 = vadd.f32 %v4045, %v4109
    %v4117 = vadd.f32 %v4046, %v4109
    %v4118 = vadd.f32 %v4047, %v4109
    %v4119 = vadd.f32 %v4048, %v4109
    %v4120 = vadd.f32 %v4049, %v4109
    %v4121 = vadd.f32 %v4050, %v4109
    %v4122 = vadd.f32 %v4051, %v4109
    %v4123 = vadd.f32 %v4052, %v4109
    %v4124 = vadd.f32 %v4053, %v4109
    %v4125 = vadd.f32 %v4054, %v4109
    %v4126 = vadd.f32 %v4055, %v4109
    %v4127 = vadd.f32 %v4056, %v4109
    %v4128 = vadd.f32 %v4057, %v4109
    %v4129 = vadd.f32 %v4058, %v4109
    %v4130 = vadd.f32 %v4059, %v4109
    %v4131 = vadd.f32 %v4060, %v4109
    %v4132 = vadd.f32 %v4061, %v4109
    %v4133 = vadd.f32 %v4062, %v4109
    %v4134 = vadd.f32 %v4063, %v4109
    %v4135 = vadd.f32 %v4064, %v4109
    %v4136 = vadd.f32 %v4065, %v4109
    %v4137 = vadd.f32 %v4066, %v4109
    %v4138 = vadd.f32 %v4067, %v4109
    %v4139 = vadd.f32 %v4068, %v4109
    %v4140 = vadd.f32 %v4069, %v4109
    %v4141 = vadd.f32 %v4070, %v4109
    %v4142 = vadd.f32 %v4071, %v4109
    %v4143 = vadd.f32 %v4072, %v4109
    %v4144 = vadd.f32 %v4073, %v4109
    %v4145 = vadd.f32 %v4074, %v4109
    %v4146 = vadd.f32 %v4075, %v4109
    %v4147 = vadd.f32 %v4076, %v4109
    %v4148 = vadd.f32 %v4077, %v4109
    %v4149 = vadd.f32 %v4078, %v4109
    %v4150 = vadd.f32 %v4079, %v4109
    %v4151 = vadd.f32 %v4080, %v4109
    %v4152 = vadd.f32 %v4081, %v4109
    %v4153 = vadd.f32 %v4082, %v4109
    %v4154 = vadd.f32 %v4083, %v4109
    %v4155 = vadd.f32 %v4084, %v4109
    %v4156 = vadd.f32 %v4085, %v4109
    %v4157 = vadd.f32 %v4086, %v4109
    %v4158 = vadd.f32 %v4087, %v4109
    %v4159 = vadd.f32 %v4088, %v4109
    %v4160 = vadd.f32 %v4089, %v4109
    %v4161 = vadd.f32 %v4090, %v4109
    %v4162 = vadd.f32 %v4091, %v4109
    %v4163 = vadd.f32 %v4092, %v4109
    %v4164 = vadd.f32 %v4093, %v4109
    %v4165 = vadd.f32 %v4094, %v4109
    %v4166 = vadd.f32 %v4095, %v4109
    %v4167 = vadd.f32 %v4096, %v4109
    %v4168 = vadd.f32 %v4097, %v4109
    %v4169 = vadd.f32 %v4098, %v4109
    %v4170 = vadd.f32 %v4099, %v4109
    %v4171 = vadd.f32 %v4100, %v4109
    %v4172 = vadd.f32 %v4101, %v4109
    %v4173 = vadd.f32 %v4102, %v4109
    %v4174 = vadd.f32 %v4103, %v4109
    %v4175 = vadd.f32 %v4111, %v91
    %v4176 = vadd.f32 %v4112, %v92
    %v4177 = vadd.f32 %v4113, %v93
    %v4178 = vadd.f32 %v4114, %v94
    %v4179 = vadd.f32 %v4115, %v95
    %v4180 = vadd.f32 %v4116, %v96
    %v4181 = vadd.f32 %v4117, %v97
    %v4182 = vadd.f32 %v4118, %v98
    %v4183 = vadd.f32 %v4119, %v99
    %v4184 = vadd.f32 %v4120, %v100
    %v4185 = vadd.f32 %v4121, %v101
    %v4186 = vadd.f32 %v4122, %v102
    %v4187 = vadd.f32 %v4123, %v103
    %v4188 = vadd.f32 %v4124, %v104
    %v4189 = vadd.f32 %v4125, %v105
    %v4190 = vadd.f32 %v4126, %v106
    %v4191 = vadd.f32 %v4127, %v107
    %v4192 = vadd.f32 %v4128, %v108
    %v4193 = vadd.f32 %v4129, %v109
    %v4194 = vadd.f32 %v4130, %v110
    %v4195 = vadd.f32 %v4131, %v111
    %v4196 = vadd.f32 %v4132, %v112
    %v4197 = vadd.f32 %v4133, %v113
    %v4198 = vadd.f32 %v4134, %v114
    %v4199 = vadd.f32 %v4135, %v115
    %v4200 = vadd.f32 %v4136, %v116
    %v4201 = vadd.f32 %v4137, %v117
    %v4202 = vadd.f32 %v4138, %v118
    %v4203 = vadd.f32 %v4139, %v119
    %v4204 = vadd.f32 %v4140, %v120
    %v4205 = vadd.f32 %v4141, %v121
    %v4206 = vadd.f32 %v4142, %v122
    %v4207 = vadd.f32 %v4143, %v123
    %v4208 = vadd.f32 %v4144, %v124
    %v4209 = vadd.f32 %v4145, %v125
    %v4210 = vadd.f32 %v4146, %v126
    %v4211 = vadd.f32 %v4147, %v127
    %v4212 = vadd.f32 %v4148, %v128
    %v4213 = vadd.f32 %v4149, %v129
    %v4214 = vadd.f32 %v4150, %v130
    %v4215 = vadd.f32 %v4151, %v131
    %v4216 = vadd.f32 %v4152, %v132
    %v4217 = vadd.f32 %v4153, %v133
    %v4218 = vadd.f32 %v4154, %v134
    %v4219 = vadd.f32 %v4155, %v135
    %v4220 = vadd.f32 %v4156, %v136
    %v4221 = vadd.f32 %v4157, %v137
    %v4222 = vadd.f32 %v4158, %v138
    %v4223 = vadd.f32 %v4159, %v139
    %v4224 = vadd.f32 %v4160, %v140
    %v4225 = vadd.f32 %v4161, %v141
    %v4226 = vadd.f32 %v4162, %v142
    %v4227 = vadd.f32 %v4163, %v143
    %v4228 = vadd.f32 %v4164, %v144
    %v4229 = vadd.f32 %v4165, %v145
    %v4230 = vadd.f32 %v4166, %v146
    %v4231 = vadd.f32 %v4167, %v147
    %v4232 = vadd.f32 %v4168, %v148
    %v4233 = vadd.f32 %v4169, %v149
    %v4234 = vadd.f32 %v4170, %v150
    %v4235 = vadd.f32 %v4171, %v151
    %v4236 = vadd.f32 %v4172, %v152
    %v4237 = vadd.f32 %v4173, %v153
    %v4238 = vadd.f32 %v4174, %v154
    %v4239 = vmax.f32 %v4175, 0.0
    %v4240 = vmax.f32 %v4176, 0.0
    %v4241 = vmax.f32 %v4177, 0.0
    %v4242 = vmax.f32 %v4178, 0.0
    %v4243 = vmax.f32 %v4179, 0.0
    %v4244 = vmax.f32 %v4180, 0.0
    %v4245 = vmax.f32 %v4181, 0.0
    %v4246 = vmax.f32 %v4182, 0.0
    %v4247 = vmax.f32 %v4183, 0.0
    %v4248 = vmax.f32 %v4184, 0.0
    %v4249 = vmax.f32 %v4185, 0.0
    %v4250 = vmax.f32 %v4186, 0.0
    %v4251 = vmax.f32 %v4187, 0.0
    %v4252 = vmax.f32 %v4188, 0.0
    %v4253 = vmax.f32 %v4189, 0.0
    %v4254 = vmax.f32 %v4190, 0.0
    %v4255 = vmax.f32 %v4191, 0.0
    %v4256 = vmax.f32 %v4192, 0.0
    %v4257 = vmax.f32 %v4193, 0.0
    %v4258 = vmax.f32 %v4194, 0.0
    %v4259 = vmax.f32 %v4195, 0.0
    %v4260 = vmax.f32 %v4196, 0.0
    %v4261 = vmax.f32 %v4197, 0.0
    %v4262 = vmax.f32 %v4198, 0.0
    %v4263 = vmax.f32 %v4199, 0.0
    %v4264 = vmax.f32 %v4200, 0.0
    %v4265 = vmax.f32 %v4201, 0.0
    %v4266 = vmax.f32 %v4202, 0.0
    %v4267 = vmax.f32 %v4203, 0.0
    %v4268 = vmax.f32 %v4204, 0.0
    %v4269 = vmax.f32 %v4205, 0.0
    %v4270 = vmax.f32 %v4206, 0.0
    %v4271 = vmax.f32 %v4207, 0.0
    %v4272 = vmax.f32 %v4208, 0.0
    %v4273 = vmax.f32 %v4209, 0.0
    %v4274 = vmax.f32 %v4210, 0.0
    %v4275 = vmax.f32 %v4211, 0.0
    %v4276 = vmax.f32 %v4212, 0.0
    %v4277 = vmax.f32 %v4213, 0.0
    %v4278 = vmax.f32 %v4214, 0.0
    %v4279 = vmax.f32 %v4215, 0.0
    %v4280 = vmax.f32 %v4216, 0.0
    %v4281 = vmax.f32 %v4217, 0.0
    %v4282 = vmax.f32 %v4218, 0.0
    %v4283 = vmax.f32 %v4219, 0.0
    %v4284 = vmax.f32 %v4220, 0.0
    %v4285 = vmax.f32 %v4221, 0.0
    %v4286 = vmax.f32 %v4222, 0.0
    %v4287 = vmax.f32 %v4223, 0.0
    %v4288 = vmax.f32 %v4224, 0.0
    %v4289 = vmax.f32 %v4225, 0.0
    %v4290 = vmax.f32 %v4226, 0.0
    %v4291 = vmax.f32 %v4227, 0.0
    %v4292 = vmax.f32 %v4228, 0.0
    %v4293 = vmax.f32 %v4229, 0.0
    %v4294 = vmax.f32 %v4230, 0.0
    %v4295 = vmax.f32 %v4231, 0.0
    %v4296 = vmax.f32 %v4232, 0.0
    %v4297 = vmax.f32 %v4233, 0.0
    %v4298 = vmax.f32 %v4234, 0.0
    %v4299 = vmax.f32 %v4235, 0.0
    %v4300 = vmax.f32 %v4236, 0.0
    %v4301 = vmax.f32 %v4237, 0.0
    %v4302 = vmax.f32 %v4238, 0.0
    %4303 = vst [vmem:[#allocation11] sm:$0xff] %v4239
    %4304 = vst [vmem:[#allocation11 + $0x8] sm:$0xff] %v4240
    %4305 = vst [vmem:[#allocation11 + $0x10] sm:$0xff] %v4241
    %4306 = vst [vmem:[#allocation11 + $0x18] sm:$0xff] %v4242
    %4307 = vst [vmem:[#allocation11 + $0x20] sm:$0xff] %v4243
    %4308 = vst [vmem:[#allocation11 + $0x28] sm:$0xff] %v4244
    %4309 = vst [vmem:[#allocation11 + $0x30] sm:$0xff] %v4245
    %4310 = vst [vmem:[#allocation11 + $0x38] sm:$0xff] %v4246
    %4311 = vst [vmem:[#allocation11 + $0x40] sm:$0xff] %v4247
    %4312 = vst [vmem:[#allocation11 + $0x48] sm:$0xff] %v4248
    %4313 = vst [vmem:[#allocation11 + $0x50] sm:$0xff] %v4249
    %4314 = vst [vmem:[#allocation11 + $0x58] sm:$0xff] %v4250
    %4315 = vst [vmem:[#allocation11 + $0x60] sm:$0xff] %v4251
    %4316 = vst [vmem:[#allocation11 + $0x68] sm:$0xff] %v4252
    %4317 = vst [vmem:[#allocation11 + $0x70] sm:$0xff] %v4253
    %4318 = vst [vmem:[#allocation11 + $0x78] sm:$0xff] %v4254
    %4319 = vst [vmem:[#allocation11 + $0x80] sm:$0xff] %v4255
    %4320 = vst [vmem:[#allocation11 + $0x88] sm:$0xff] %v4256
    %4321 = vst [vmem:[#allocation11 + $0x90] sm:$0xff] %v4257
    %4322 = vst [vmem:[#allocation11 + $0x98] sm:$0xff] %v4258
    %4323 = vst [vmem:[#allocation11 + $0xa0] sm:$0xff] %v4259
    %4324 = vst [vmem:[#allocation11 + $0xa8] sm:$0xff] %v4260
    %4325 = vst [vmem:[#allocation11 + $0xb0] sm:$0xff] %v4261
    %4326 = vst [vmem:[#allocation11 + $0xb8] sm:$0xff] %v4262
    %4327 = vst [vmem:[#allocation11 + $0xc0] sm:$0xff] %v4263
    %4328 = vst [vmem:[#allocation11 + $0xc8] sm:$0xff] %v4264
    %4329 = vst [vmem:[#allocation11 + $0xd0] sm:$0xff] %v4265
    %4330 = vst [vmem:[#allocation11 + $0xd8] sm:$0xff] %v4266
    %4331 = vst [vmem:[#allocation11 + $0xe0] sm:$0xff] %v4267
    %4332 = vst [vmem:[#allocation11 + $0xe8] sm:$0xff] %v4268
    %4333 = vst [vmem:[#allocation11 + $0xf0] sm:$0xff] %v4269
    %4334 = vst [vmem:[#allocation11 + $0xf8] sm:$0xff] %v4270
    %4335 = vst [vmem:[#allocation11 + $0x100] sm:$0xff] %v4271
    %4336 = vst [vmem:[#allocation11 + $0x108] sm:$0xff] %v4272
    %4337 = vst [vmem:[#allocation11 + $0x110] sm:$0xff] %v4273
    %4338 = vst [vmem:[#allocation11 + $0x118] sm:$0xff] %v4274
    %4339 = vst [vmem:[#allocation11 + $0x120] sm:$0xff] %v4275
    %4340 = vst [vmem:[#allocation11 + $0x128] sm:$0xff] %v4276
    %4341 = vst [vmem:[#allocation11 + $0x130] sm:$0xff] %v4277
    %4342 = vst [vmem:[#allocation11 + $0x138] sm:$0xff] %v4278
    %4343 = vst [vmem:[#allocation11 + $0x140] sm:$0xff] %v4279
    %4344 = vst [vmem:[#allocation11 + $0x148] sm:$0xff] %v4280
    %4345 = vst [vmem:[#allocation11 + $0x150] sm:$0xff] %v4281
    %4346 = vst [vmem:[#allocation11 + $0x158] sm:$0xff] %v4282
    %4347 = vst [vmem:[#allocation11 + $0x160] sm:$0xff] %v4283
    %4348 = vst [vmem:[#allocation11 + $0x168] sm:$0xff] %v4284
    %4349 = vst [vmem:[#allocation11 + $0x170] sm:$0xff] %v4285
    %4350 = vst [vmem:[#allocation11 + $0x178] sm:$0xff] %v4286
    %4351 = vst [vmem:[#allocation11 + $0x180] sm:$0xff] %v4287
    %4352 = vst [vmem:[#allocation11 + $0x188] sm:$0xff] %v4288
    %4353 = vst [vmem:[#allocation11 + $0x190] sm:$0xff] %v4289
    %4354 = vst [vmem:[#allocation11 + $0x198] sm:$0xff] %v4290
    %4355 = vst [vmem:[#allocation11 + $0x1a0] sm:$0xff] %v4291
    %4356 = vst [vmem:[#allocation11 + $0x1a8] sm:$0xff] %v4292
    %4357 = vst [vmem:[#allocation11 + $0x1b0] sm:$0xff] %v4293
    %4358 = vst [vmem:[#allocation11 + $0x1b8] sm:$0xff] %v4294
    %4359 = vst [vmem:[#allocation11 + $0x1c0] sm:$0xff] %v4295
    %4360 = vst [vmem:[#allocation11 + $0x1c8] sm:$0xff] %v4296
    %4361 = vst [vmem:[#allocation11 + $0x1d0] sm:$0xff] %v4297
    %4362 = vst [vmem:[#allocation11 + $0x1d8] sm:$0xff] %v4298
    %4363 = vst [vmem:[#allocation11 + $0x1e0] sm:$0xff] %v4299
    %4364 = vst [vmem:[#allocation11 + $0x1e8] sm:$0xff] %v4300
    %4365 = vst [vmem:[#allocation11 + $0x1f0] sm:$0xff] %v4301
    %4366 = vst [vmem:[#allocation11 + $0x1f8] sm:$0xff] %v4302
    // Predicated region
    $region58: #{tpu_custom_call.1} parent=1 // pred_check
      _
    $region59: #{tpu_custom_call.1} parent=1 // pred_check_branch
      %4368 = sbr.rel (0) target = $region61
    $region60: #{tpu_custom_call.1} parent=1 // pred_region
      %s4370 = ssub.s32 8192, 8192
      %4371 = vsyncadd [#allocation5], %s4370
      %s4372 = sshll.u32 [#allocation11], 4
      %s4373 = int_to_ptr.vmem [resolvable:$true] %s4372
      %4378 = dma.vmem_to_hbm [thread:$0]  %s4373, 8192, %s10, [#allocation5], 128, 128, 8
    $region61: #{tpu_custom_call.1} parent=1 // pred_fallthru
      _
    // Predicated region
    $region62: #{tpu_custom_call.1} parent=1 // pred_check
      _
    $region63: #{tpu_custom_call.1} parent=1 // pred_check_branch
      %4380 = sbr.rel (0) target = $region65
    $region64: #{tpu_custom_call.1} parent=1 // pred_region
      %4381 = dma.done [#allocation5], 8192
    $region65: #{tpu_custom_call.1} parent=1 // pred_fallthru
      _
    %4382 = vsyncpa [#allocation4], 1
    %4383 = vsyncpa [#allocation7], 1
    %4384 = vsyncpa [#allocation10], 1
    %4385 = vsyncpa [#allocation5], 1

</llo_original>
